<compile_context>
chip_gen: v6e
topology: v6e:2x2x1
jax: 0.10.0
libtpu: 0.0.40
codegen_flags: <defaults>
</compile_context>

<pallas_src>
import math

import numpy as np
import jax
import jax.numpy as jnp
from jax.experimental import pallas as pl
from jax.experimental.pallas import tpu as pltpu

# ----------------------------- config (small synthetic shapes) -----------------------------
BATCH = 2
IN_CHANNELS = 1          # adversary uses Linear(size*size, .) on x.view(B,-1) => 1 channel
INPUT_SIZE = 16          # must be divisible by 16 (encoder downsamples x16)
Z_DIM = 16
ENC_FILTERS = 8
EPS_BASIS = 16
EPS_DIM = 32
V_HIDDEN = 128
ADV_HIDDEN = 256         # original 1024, shrunk for a small synthetic example
ADV_THETA = 512          # original 8192, shrunk for a small synthetic example
DEC_HIDDEN = 256

LEAKY_SLOPE = 0.2
BN_EPS = 1e-5
VAR_FLOOR = 1e-6         # Varz = a^2 * var(v) can be ~0 -> floor for the posterior NLL
S2 = IN_CHANNELS * INPUT_SIZE * INPUT_SIZE
_LOG2PI = math.log(2.0 * math.pi)
N_OUTPUTS = 4


# ----------------------------- init-time constant builders -----------------------------
def _conv_dense_matrix(w_oihw, h_in, w_in, stride=2, pad=1):
    """Fold Conv2d(k=4, s=2, p=1) into a dense (Hin*Win*Cin, Hout*Wout*Cout) matrix.

    Both sides use NHWC-flattened ordering: idx = (h*W + w)*C + c.  Exact (a conv at a
    fixed spatial size is a linear map); built once at init, never in the hot path."""
    c_out, c_in, kh, kw = w_oihw.shape
    h_out = (h_in + 2 * pad - kh) // stride + 1
    w_out = (w_in + 2 * pad - kw) // stride + 1
    mat = np.zeros((h_in * w_in * c_in, h_out * w_out * c_out), np.float32)
    w_np = np.asarray(w_oihw, np.float32)
    for oh in range(h_out):
        for ow in range(w_out):
            out_base = (oh * w_out + ow) * c_out
            for ki in range(kh):
                ih = oh * stride + ki - pad
                if ih < 0 or ih >= h_in:
                    continue
                for kj in range(kw):
                    iw = ow * stride + kj - pad
                    if iw < 0 or iw >= w_in:
                        continue
                    for ci in range(c_in):
                        in_idx = (ih * w_in + iw) * c_in + ci
                        mat[in_idx, out_base:out_base + c_out] = w_np[:, ci, ki, kj]
    return mat, h_out, w_out


def _linear_params(key, fan_in, fan_out):
    w = jax.random.normal(key, (fan_in, fan_out), jnp.float32) / math.sqrt(float(fan_in))
    return w.astype(jnp.bfloat16), jnp.zeros((1, fan_out), jnp.float32)


def init_params(key):
    """Build the flat, ordered operand list consumed by the fused kernel."""
    keys = iter(jax.random.split(key, 32))
    flat = []
    nf = ENC_FILTERS

    # -- encoder convs (dense-matrix form) + per-layer BN channel reduce/broadcast constants --
    h = w = INPUT_SIZE
    for c_in, c_out in [(IN_CHANNELS, nf), (nf, 2 * nf), (2 * nf, 4 * nf), (4 * nf, 8 * nf)]:
        cw = jax.random.normal(next(keys), (c_out, c_in, 4, 4), jnp.float32)
        cw = cw / math.sqrt(float(c_in * 16))
        dense, h, w = _conv_dense_matrix(np.asarray(cw), h, w)
        s_spatial = dense.shape[1] // c_out
        bias_cols = np.zeros((1, s_spatial * c_out), np.float32)           # Conv2d bias (zero-init)
        red = np.tile(np.eye(c_out, dtype=np.float32), (s_spatial, 1))     # (S*C, C) channel-sum
        bcast = np.tile(np.eye(c_out, dtype=np.float32), (1, s_spatial))   # (C, S*C) channel-bcast
        flat += [jnp.asarray(dense, jnp.bfloat16), jnp.asarray(bias_cols),
                 jnp.asarray(red), jnp.asarray(bcast)]
    flat_enc = 8 * nf * h * w                                              # == 64

    # -- encoder projectors (z0, a) --
    flat += list(_linear_params(next(keys), flat_enc, Z_DIM))              # z0_projector
    flat += list(_linear_params(next(keys), flat_enc, Z_DIM))              # a_projector

    # -- v_network --
    for fi, fo in [(EPS_DIM, V_HIDDEN), (V_HIDDEN, V_HIDDEN), (V_HIDDEN, Z_DIM)]:
        flat += list(_linear_params(next(keys), fi, fo))

    # -- eps-basis sum matrix: (B, EPS_BASIS*B), row-index of eps_flat = e*B + b --
    flat.append(jnp.asarray(np.tile(np.eye(BATCH, dtype=np.float32), (1, EPS_BASIS))))

    # -- batch pack/unpack constants (avoid in-kernel sublane concat/slice) --
    eye_b = np.eye(BATCH, dtype=np.float32)
    zero_b = np.zeros((BATCH, BATCH), np.float32)
    p_top = np.concatenate([eye_b, zero_b], axis=0)                        # (2B, B)
    p_bot = np.concatenate([zero_b, eye_b], axis=0)                        # (2B, B)
    flat += [jnp.asarray(p_top), jnp.asarray(p_bot),
             jnp.asarray(np.ascontiguousarray(p_top.T)),
             jnp.asarray(np.ascontiguousarray(p_bot.T))]

    # -- adversary (first layers sharing an input are column-fused) --
    wt0, bt0 = _linear_params(next(keys), S2, ADV_HIDDEN)                  # theta_net L0
    wx0, bx0 = _linear_params(next(keys), S2, ADV_HIDDEN)                  # x_stat L0
    flat += [jnp.concatenate([wt0, wx0], axis=1), jnp.concatenate([bt0, bx0], axis=1)]
    for fi, fo in [(ADV_HIDDEN, ADV_HIDDEN), (ADV_HIDDEN, ADV_HIDDEN), (ADV_HIDDEN, ADV_THETA)]:
        flat += list(_linear_params(next(keys), fi, fo))                   # theta_net L1..3
    for fi, fo in [(ADV_HIDDEN, ADV_HIDDEN), (ADV_HIDDEN, ADV_HIDDEN), (ADV_HIDDEN, 1)]:
        flat += list(_linear_params(next(keys), fi, fo))                   # x_stat L1..3
    ws0, bs0 = _linear_params(next(keys), Z_DIM, ADV_HIDDEN)               # s_net L0
    wz0, bz0 = _linear_params(next(keys), Z_DIM, ADV_HIDDEN)               # z_stat L0
    flat += [jnp.concatenate([ws0, wz0], axis=1), jnp.concatenate([bs0, bz0], axis=1)]
    for fi, fo in [(ADV_HIDDEN, ADV_HIDDEN), (ADV_HIDDEN, ADV_HIDDEN), (ADV_HIDDEN, ADV_THETA)]:
        flat += list(_linear_params(next(keys), fi, fo))                   # s_net L1..3
    for fi, fo in [(ADV_HIDDEN, ADV_HIDDEN), (ADV_HIDDEN, ADV_HIDDEN), (ADV_HIDDEN, 1)]:
        flat += list(_linear_params(next(keys), fi, fo))                   # z_stat L1..3

    # -- decoder  TODO(synk): Decoder source not in repo; MLP decoder with sigmoid output --
    for fi, fo in [(Z_DIM, DEC_HIDDEN), (DEC_HIDDEN, DEC_HIDDEN), (DEC_HIDDEN, S2)]:
        flat += list(_linear_params(next(keys), fi, fo))

    return flat


# ----------------------------- the single fused Pallas kernel -----------------------------
def _avae_kernel(*refs):
    """Entire MnistAVAE forward; refs = [ordered inputs ..., recon, recon_nll, kl, adv_loss]."""
    n_in = len(refs) - N_OUTPUTS
    it = iter(refs[:n_in])
    recon_ref, rnll_ref, kl_ref, adv_ref = refs[n_in:]

    def leaky(h):
        return jnp.where(h > 0.0, h, LEAKY_SLOPE * h)

    def lin(h, w_ref, b_ref):
        # bf16 weights + bf16 LHS cast (MXU path), fp32 accumulation / epilogues.
        return jnp.dot(h.astype(jnp.bfloat16), w_ref[...],
                       preferred_element_type=jnp.float32) + b_ref[...]

    def fdot(a, b):
        return jnp.dot(a, b, preferred_element_type=jnp.float32)

    def softplus(u):
        return jnp.maximum(u, 0.0) + jnp.log(1.0 + jnp.exp(-jnp.abs(u)))

    x = next(it)[...]                       # (B, S2) fp32, NHWC-flat (C==1)
    eps = next(it)[...]                     # (EPS_BASIS*B, EPS_DIM)
    z_samp = next(it)[...]                  # (B, Z_DIM) prior sample
    b_sz = x.shape[0]

    # ---- encoder: 4 x [dense-conv matmul + LeakyReLU + training-mode BatchNorm2d] ----
    h = x
    for _ in range(4):
        wc, bc, red, bcast = next(it), next(it), next(it), next(it)
        h = leaky(lin(h, wc, bc))                              # (B, Ho*Wo*C), NHWC-flat
        c_out = red.shape[1]
        n = float(b_sz * (h.shape[1] // c_out))                # BN count = B*Ho*Wo
        col_sum = jnp.sum(h, axis=0, keepdims=True)
        col_sq = jnp.sum(h * h, axis=0, keepdims=True)
        ch_mean = fdot(col_sum, red[...]) / n                  # (1, C) per-channel mean
        ch_sq = fdot(col_sq, red[...]) / n
        ch_var = jnp.maximum(ch_sq - ch_mean * ch_mean, 0.0)   # biased var (train mode)
        ch_inv = jax.lax.rsqrt(ch_var + BN_EPS)
        h = (h - fdot(ch_mean, bcast[...])) * fdot(ch_inv, bcast[...])   # gamma=1, beta=0

    net = h                                                    # (B, FLAT_ENC)

    # ---- z0 / a projectors + v_network ----
    w, b = next(it), next(it)
    z0 = leaky(lin(net, w, b))                                 # (B, Z)
    w, b = next(it), next(it)
    a = leaky(lin(net, w, b))                                  # (B, Z)
    v = eps
    for _ in range(3):
        w, b = next(it), next(it)
        v = leaky(lin(v, w, b))                                # (EPS_BASIS*B, Z)
    s_eps = next(it)[...]                                      # (B, EPS_BASIS*B) 0/1 basis-sum
    v_sum = fdot(s_eps, v)
    v_sq = fdot(s_eps, v * v)
    eb = float(EPS_BASIS)
    v_mean = v_sum / eb
    v_var = (v_sq - eb * v_mean * v_mean) / (eb - 1.0)         # torch.var default (unbiased)
    z = z0 + v_sum                                             # latent sample
    ez = z0 + a * v_mean
    varz = a * a * v_var

    # ---- batch pack/unpack constants ----
    p_top = next(it)[...]                                      # (2B, B) selects rows 0..B-1
    p_bot = next(it)[...]                                      # (2B, B) selects rows B..2B-1
    p_top_t = next(it)[...]                                    # (B, 2B)
    p_bot_t = next(it)[...]                                    # (B, 2B)
    p_rep = p_top + p_bot

    # ---- adversary: x branch computed once, z branch batched over [latent_z ; sampled_z] ----
    w, b = next(it), next(it)
    hx = leaky(lin(x, w, b))                                   # (B, 2*AH): theta_L0 | x_stat_L0
    ht = hx[:, :ADV_HIDDEN]
    hxs = hx[:, ADV_HIDDEN:]
    for li in range(3):                                        # theta_net layers 1..3
        w, b = next(it), next(it)
        ht = lin(ht, w, b)
        if li < 2:
            ht = leaky(ht)
    theta = ht                                                 # (B, ADV_THETA)
    for li in range(3):                                        # x_stat layers 1..3
        w, b = next(it), next(it)
        hxs = lin(hxs, w, b)
        if li < 2:
            hxs = leaky(hxs)
    t_x = hxs                                                  # (B, 1)

    z_cat = fdot(p_top, z) + fdot(p_bot, z_samp)               # (2B, Z) = [z ; sampled_z]
    w, b = next(it), next(it)
    hz = leaky(lin(z_cat, w, b))                               # (2B, 2*AH): s_L0 | z_stat_L0
    hs = hz[:, :ADV_HIDDEN]
    hzs = hz[:, ADV_HIDDEN:]
    for li in range(3):                                        # s_net layers 1..3
        w, b = next(it), next(it)
        hs = lin(hs, w, b)
        if li < 2:
            hs = leaky(hs)
    s_both = hs                                                # (2B, ADV_THETA)
    for li in range(3):                                        # z_stat layers 1..3
        w, b = next(it), next(it)
        hzs = lin(hzs, w, b)
        if li < 2:
            hzs = leaky(hzs)
    t_z_both = hzs                                             # (2B, 1)

    theta2 = fdot(p_rep, theta)                                # theta replicated for d/i rows
    t_x2 = fdot(p_rep, t_x)
    t_both = jnp.sum(theta2 * s_both, axis=1, keepdims=True) + t_x2 + t_z_both   # (2B, 1)
    t_d = fdot(p_top_t, t_both)                                # (B, 1)
    t_i = fdot(p_bot_t, t_both)                                # (B, 1)

    # ---- decoder  TODO(synk): Decoder source not in repo; MLP + sigmoid output used ----
    d = z
    for li in range(3):
        w, b = next(it), next(it)
        d = lin(d, w, b)
        d = leaky(d) if li < 2 else 1.0 / (1.0 + jnp.exp(-d))  # sigmoid
    recon = d                                                  # (B, S2)

    # ---- losses ----
    # TODO(synk): DiagonalGaussian not in repo; unit-variance recon NLL and standard
    # diagonal-Gaussian posterior NLL (with variance floor) are used.
    rnll = 0.5 * jnp.sum((x - recon) ** 2 + _LOG2PI, axis=1, keepdims=True)       # (B, 1)
    varz_c = jnp.maximum(varz, VAR_FLOOR)
    post_nll = 0.5 * jnp.sum((z - ez) ** 2 / varz_c + jnp.log(varz_c) + _LOG2PI,
                             axis=1, keepdims=True)                               # (B, 1)
    kl = t_d + post_nll
    # BCE(sigmoid(T_d), 1) + BCE(sigmoid(T_i), 0), exact math via softplus.
    adv = (jnp.mean(softplus(-t_d), axis=0, keepdims=True)
           + jnp.mean(softplus(t_i), axis=0, keepdims=True))                      # (1, 1)

    recon_ref[...] = recon
    rnll_ref[...] = rnll
    kl_ref[...] = kl
    adv_ref[...] = adv


# ----------------------------- wrapper -----------------------------
@jax.jit
def mnist_avae_forward(params, x, key_eps, key_prior):
    b = x.shape[0]
    eps = jax.random.normal(key_eps, (EPS_BASIS * b, EPS_DIM), jnp.float32)
    sampled_z = jax.random.normal(key_prior, (b, Z_DIM), jnp.float32)   # prior N(0, I) sample
    x_flat = x.reshape(b, -1)       # C == 1 so NCHW flatten == NHWC flatten used by the convs

    recon_flat, recon_nll, kl, adv = pl.pallas_call(
        _avae_kernel,
        out_shape=(
            jax.ShapeDtypeStruct((b, S2), jnp.float32),     # recon (lane-dense, 256 wide)
            jax.ShapeDtypeStruct((b, 1), jnp.float32),      # recon NLL
            jax.ShapeDtypeStruct((b, 1), jnp.float32),      # KL estimate
            jax.ShapeDtypeStruct((1, 1), jnp.float32),      # adversary loss
        ),
        compiler_params=pltpu.CompilerParams(vmem_limit_bytes=32 * 1024 * 1024),
    )(x_flat, eps, sampled_z, *params)

    recon = recon_flat.reshape(b, IN_CHANNELS, INPUT_SIZE, INPUT_SIZE)
    return recon, recon_nll, kl, adv[0, 0]


if __name__ == "__main__":
    key = jax.random.PRNGKey(0)
    kx, keps, kprior = jax.random.split(key, 3)
    x = jax.random.normal(kx, (BATCH, IN_CHANNELS, INPUT_SIZE, INPUT_SIZE), jnp.float32)

    params = init_params(jax.random.PRNGKey(42))

    recon, recon_nll, kl, adv_loss = mnist_avae_forward(params, x, keps, kprior)
    jax.block_until_ready((recon, recon_nll, kl, adv_loss))

    assert recon.shape == (BATCH, IN_CHANNELS, INPUT_SIZE, INPUT_SIZE)
    assert recon_nll.shape == (BATCH, 1)
    assert kl.shape == (BATCH, 1)
    assert adv_loss.shape == ()
    assert bool(jnp.all(jnp.isfinite(recon)))
    assert bool(jnp.all(jnp.isfinite(recon_nll)))
    assert bool(jnp.all(jnp.isfinite(kl)))
    assert bool(jnp.isfinite(adv_loss))
    print("KERNEL_OK")
</pallas_src>

<mosaic_0001>
module attributes {stable_mosaic.version = 11 : i64} {
  func.func @_avae_kernel(%arg0: memref<2x256xf32, #tpu.memory_space<vmem>>, %arg1: memref<32x32xf32, #tpu.memory_space<vmem>>, %arg2: memref<2x16xf32, #tpu.memory_space<vmem>>, %arg3: memref<256x512xbf16, #tpu.memory_space<vmem>>, %arg4: memref<1x512xf32, #tpu.memory_space<vmem>>, %arg5: memref<512x8xf32, #tpu.memory_space<vmem>>, %arg6: memref<8x512xf32, #tpu.memory_space<vmem>>, %arg7: memref<512x256xbf16, #tpu.memory_space<vmem>>, %arg8: memref<1x256xf32, #tpu.memory_space<vmem>>, %arg9: memref<256x16xf32, #tpu.memory_space<vmem>>, %arg10: memref<16x256xf32, #tpu.memory_space<vmem>>, %arg11: memref<256x128xbf16, #tpu.memory_space<vmem>>, %arg12: memref<1x128xf32, #tpu.memory_space<vmem>>, %arg13: memref<128x32xf32, #tpu.memory_space<vmem>>, %arg14: memref<32x128xf32, #tpu.memory_space<vmem>>, %arg15: memref<128x64xbf16, #tpu.memory_space<vmem>>, %arg16: memref<1x64xf32, #tpu.memory_space<vmem>>, %arg17: memref<64x64xf32, #tpu.memory_space<vmem>>, %arg18: memref<64x64xf32, #tpu.memory_space<vmem>>, %arg19: memref<64x16xbf16, #tpu.memory_space<vmem>>, %arg20: memref<1x16xf32, #tpu.memory_space<vmem>>, %arg21: memref<64x16xbf16, #tpu.memory_space<vmem>>, %arg22: memref<1x16xf32, #tpu.memory_space<vmem>>, %arg23: memref<32x128xbf16, #tpu.memory_space<vmem>>, %arg24: memref<1x128xf32, #tpu.memory_space<vmem>>, %arg25: memref<128x128xbf16, #tpu.memory_space<vmem>>, %arg26: memref<1x128xf32, #tpu.memory_space<vmem>>, %arg27: memref<128x16xbf16, #tpu.memory_space<vmem>>, %arg28: memref<1x16xf32, #tpu.memory_space<vmem>>, %arg29: memref<2x32xf32, #tpu.memory_space<vmem>>, %arg30: memref<4x2xf32, #tpu.memory_space<vmem>>, %arg31: memref<4x2xf32, #tpu.memory_space<vmem>>, %arg32: memref<2x4xf32, #tpu.memory_space<vmem>>, %arg33: memref<2x4xf32, #tpu.memory_space<vmem>>, %arg34: memref<256x512xbf16, #tpu.memory_space<vmem>>, %arg35: memref<1x512xf32, #tpu.memory_space<vmem>>, %arg36: memref<256x256xbf16, #tpu.memory_space<vmem>>, %arg37: memref<1x256xf32, #tpu.memory_space<vmem>>, %arg38: memref<256x256xbf16, #tpu.memory_space<vmem>>, %arg39: memref<1x256xf32, #tpu.memory_space<vmem>>, %arg40: memref<256x512xbf16, #tpu.memory_space<vmem>>, %arg41: memref<1x512xf32, #tpu.memory_space<vmem>>, %arg42: memref<256x256xbf16, #tpu.memory_space<vmem>>, %arg43: memref<1x256xf32, #tpu.memory_space<vmem>>, %arg44: memref<256x256xbf16, #tpu.memory_space<vmem>>, %arg45: memref<1x256xf32, #tpu.memory_space<vmem>>, %arg46: memref<256x1xbf16, #tpu.memory_space<vmem>>, %arg47: memref<1x1xf32, #tpu.memory_space<vmem>>, %arg48: memref<16x512xbf16, #tpu.memory_space<vmem>>, %arg49: memref<1x512xf32, #tpu.memory_space<vmem>>, %arg50: memref<256x256xbf16, #tpu.memory_space<vmem>>, %arg51: memref<1x256xf32, #tpu.memory_space<vmem>>, %arg52: memref<256x256xbf16, #tpu.memory_space<vmem>>, %arg53: memref<1x256xf32, #tpu.memory_space<vmem>>, %arg54: memref<256x512xbf16, #tpu.memory_space<vmem>>, %arg55: memref<1x512xf32, #tpu.memory_space<vmem>>, %arg56: memref<256x256xbf16, #tpu.memory_space<vmem>>, %arg57: memref<1x256xf32, #tpu.memory_space<vmem>>, %arg58: memref<256x256xbf16, #tpu.memory_space<vmem>>, %arg59: memref<1x256xf32, #tpu.memory_space<vmem>>, %arg60: memref<256x1xbf16, #tpu.memory_space<vmem>>, %arg61: memref<1x1xf32, #tpu.memory_space<vmem>>, %arg62: memref<16x256xbf16, #tpu.memory_space<vmem>>, %arg63: memref<1x256xf32, #tpu.memory_space<vmem>>, %arg64: memref<256x256xbf16, #tpu.memory_space<vmem>>, %arg65: memref<1x256xf32, #tpu.memory_space<vmem>>, %arg66: memref<256x256xbf16, #tpu.memory_space<vmem>>, %arg67: memref<1x256xf32, #tpu.memory_space<vmem>>, %arg68: memref<2x256xf32, #tpu.memory_space<vmem>>, %arg69: memref<2x1xf32, #tpu.memory_space<vmem>>, %arg70: memref<2x1xf32, #tpu.memory_space<vmem>>, %arg71: memref<1x1xf32, #tpu.memory_space<vmem>>) attributes {dimension_semantics = [], scalar_prefetch = 0 : i64, scratch_operands = 0 : i64, tpu.core_type = #tpu.core_type<tc>} {
    %c0 = arith.constant 0 : index
    %c0_0 = arith.constant 0 : index
    %0 = vector.load %arg0[%c0, %c0_0] : memref<2x256xf32, #tpu.memory_space<vmem>>, vector<2x256xf32>
    %c0_1 = arith.constant 0 : index
    %c0_2 = arith.constant 0 : index
    %1 = vector.load %arg1[%c0_1, %c0_2] : memref<32x32xf32, #tpu.memory_space<vmem>>, vector<32x32xf32>
    %c0_3 = arith.constant 0 : index
    %c0_4 = arith.constant 0 : index
    %2 = vector.load %arg2[%c0_3, %c0_4] : memref<2x16xf32, #tpu.memory_space<vmem>>, vector<2x16xf32>
    %3 = arith.truncf %0 : vector<2x256xf32> to vector<2x256xbf16>
    %c0_5 = arith.constant 0 : index
    %c0_6 = arith.constant 0 : index
    %4 = vector.load %arg3[%c0_5, %c0_6] : memref<256x512xbf16, #tpu.memory_space<vmem>>, vector<256x512xbf16>
    %cst = arith.constant dense<0.000000e+00> : vector<2x512xf32>
    %5 = tpu.matmul %3, %4, %cst {dimension_numbers = #tpu.dot_dimension_numbers<[1], [0], [0], [1], [0, 0, 1, 1], [], []>} : vector<2x256xbf16>, vector<256x512xbf16>, vector<2x512xf32> -> vector<2x512xf32>
    %c0_7 = arith.constant 0 : index
    %c0_8 = arith.constant 0 : index
    %6 = vector.load %arg4[%c0_7, %c0_8] : memref<1x512xf32, #tpu.memory_space<vmem>>, vector<1x512xf32>
    %7 = vector.broadcast %6 : vector<1x512xf32> to vector<2x512xf32>
    %8 = arith.addf %5, %7 : vector<2x512xf32>
    %cst_9 = arith.constant 0.000000e+00 : f32
    %9 = vector.broadcast %cst_9 : f32 to vector<2x512xf32>
    %10 = arith.cmpf ogt, %8, %9 : vector<2x512xf32>
    %cst_10 = arith.constant 2.000000e-01 : f32
    %11 = vector.broadcast %cst_10 : f32 to vector<2x512xf32>
    %12 = arith.mulf %11, %8 : vector<2x512xf32>
    %13 = arith.select %10, %8, %12 : vector<2x512xi1>, vector<2x512xf32>
    %cst_11 = arith.constant dense<0.000000e+00> : vector<512xf32>
    %14 = vector.multi_reduction <add>, %13, %cst_11 [0] : vector<2x512xf32> to vector<512xf32>
    %15 = vector.shape_cast %14 : vector<512xf32> to vector<1x512xf32>
    %16 = arith.mulf %13, %13 : vector<2x512xf32>
    %cst_12 = arith.constant dense<0.000000e+00> : vector<512xf32>
    %17 = vector.multi_reduction <add>, %16, %cst_12 [0] : vector<2x512xf32> to vector<512xf32>
    %18 = vector.shape_cast %17 : vector<512xf32> to vector<1x512xf32>
    %c0_13 = arith.constant 0 : index
    %c0_14 = arith.constant 0 : index
    %19 = vector.load %arg5[%c0_13, %c0_14] : memref<512x8xf32, #tpu.memory_space<vmem>>, vector<512x8xf32>
    %cst_15 = arith.constant dense<0.000000e+00> : vector<1x8xf32>
    %20 = tpu.matmul %15, %19, %cst_15 {dimension_numbers = #tpu.dot_dimension_numbers<[1], [0], [0], [1], [0, 0, 1, 1], [], []>} : vector<1x512xf32>, vector<512x8xf32>, vector<1x8xf32> -> vector<1x8xf32>
    %cst_16 = arith.constant 1.280000e+02 : f32
    %21 = vector.broadcast %cst_16 : f32 to vector<1x8xf32>
    %22 = arith.divf %20, %21 : vector<1x8xf32>
    %c0_17 = arith.constant 0 : index
    %c0_18 = arith.constant 0 : index
    %23 = vector.load %arg5[%c0_17, %c0_18] : memref<512x8xf32, #tpu.memory_space<vmem>>, vector<512x8xf32>
    %cst_19 = arith.constant dense<0.000000e+00> : vector<1x8xf32>
    %24 = tpu.matmul %18, %23, %cst_19 {dimension_numbers = #tpu.dot_dimension_numbers<[1], [0], [0], [1], [0, 0, 1, 1], [], []>} : vector<1x512xf32>, vector<512x8xf32>, vector<1x8xf32> -> vector<1x8xf32>
    %cst_20 = arith.constant 1.280000e+02 : f32
    %25 = vector.broadcast %cst_20 : f32 to vector<1x8xf32>
    %26 = arith.divf %24, %25 : vector<1x8xf32>
    %27 = arith.mulf %22, %22 : vector<1x8xf32>
    %28 = arith.subf %26, %27 : vector<1x8xf32>
    %cst_21 = arith.constant 0.000000e+00 : f32
    %29 = vector.broadcast %cst_21 : f32 to vector<1x8xf32>
    %30 = arith.maximumf %28, %29 : vector<1x8xf32>
    %cst_22 = arith.constant 9.99999974E-6 : f32
    %31 = vector.broadcast %cst_22 : f32 to vector<1x8xf32>
    %32 = arith.addf %30, %31 : vector<1x8xf32>
    %33 = math.rsqrt %32 : vector<1x8xf32>
    %c0_23 = arith.constant 0 : index
    %c0_24 = arith.constant 0 : index
    %34 = vector.load %arg6[%c0_23, %c0_24] : memref<8x512xf32, #tpu.memory_space<vmem>>, vector<8x512xf32>
    %cst_25 = arith.constant dense<0.000000e+00> : vector<1x512xf32>
    %35 = tpu.matmul %22, %34, %cst_25 {dimension_numbers = #tpu.dot_dimension_numbers<[1], [0], [0], [1], [0, 0, 1, 1], [], []>} : vector<1x8xf32>, vector<8x512xf32>, vector<1x512xf32> -> vector<1x512xf32>
    %36 = vector.broadcast %35 : vector<1x512xf32> to vector<2x512xf32>
    %37 = arith.subf %13, %36 : vector<2x512xf32>
    %c0_26 = arith.constant 0 : index
    %c0_27 = arith.constant 0 : index
    %38 = vector.load %arg6[%c0_26, %c0_27] : memref<8x512xf32, #tpu.memory_space<vmem>>, vector<8x512xf32>
    %cst_28 = arith.constant dense<0.000000e+00> : vector<1x512xf32>
    %39 = tpu.matmul %33, %38, %cst_28 {dimension_numbers = #tpu.dot_dimension_numbers<[1], [0], [0], [1], [0, 0, 1, 1], [], []>} : vector<1x8xf32>, vector<8x512xf32>, vector<1x512xf32> -> vector<1x512xf32>
    %40 = vector.broadcast %39 : vector<1x512xf32> to vector<2x512xf32>
    %41 = arith.mulf %37, %40 : vector<2x512xf32>
    %42 = arith.truncf %41 : vector<2x512xf32> to vector<2x512xbf16>
    %c0_29 = arith.constant 0 : index
    %c0_30 = arith.constant 0 : index
    %43 = vector.load %arg7[%c0_29, %c0_30] : memref<512x256xbf16, #tpu.memory_space<vmem>>, vector<512x256xbf16>
    %cst_31 = arith.constant dense<0.000000e+00> : vector<2x256xf32>
    %44 = tpu.matmul %42, %43, %cst_31 {dimension_numbers = #tpu.dot_dimension_numbers<[1], [0], [0], [1], [0, 0, 1, 1], [], []>} : vector<2x512xbf16>, vector<512x256xbf16>, vector<2x256xf32> -> vector<2x256xf32>
    %c0_32 = arith.constant 0 : index
    %c0_33 = arith.constant 0 : index
    %45 = vector.load %arg8[%c0_32, %c0_33] : memref<1x256xf32, #tpu.memory_space<vmem>>, vector<1x256xf32>
    %46 = vector.broadcast %45 : vector<1x256xf32> to vector<2x256xf32>
    %47 = arith.addf %44, %46 : vector<2x256xf32>
    %cst_34 = arith.constant 0.000000e+00 : f32
    %48 = vector.broadcast %cst_34 : f32 to vector<2x256xf32>
    %49 = arith.cmpf ogt, %47, %48 : vector<2x256xf32>
    %cst_35 = arith.constant 2.000000e-01 : f32
    %50 = vector.broadcast %cst_35 : f32 to vector<2x256xf32>
    %51 = arith.mulf %50, %47 : vector<2x256xf32>
    %52 = arith.select %49, %47, %51 : vector<2x256xi1>, vector<2x256xf32>
    %cst_36 = arith.constant dense<0.000000e+00> : vector<256xf32>
    %53 = vector.multi_reduction <add>, %52, %cst_36 [0] : vector<2x256xf32> to vector<256xf32>
    %54 = vector.shape_cast %53 : vector<256xf32> to vector<1x256xf32>
    %55 = arith.mulf %52, %52 : vector<2x256xf32>
    %cst_37 = arith.constant dense<0.000000e+00> : vector<256xf32>
    %56 = vector.multi_reduction <add>, %55, %cst_37 [0] : vector<2x256xf32> to vector<256xf32>
    %57 = vector.shape_cast %56 : vector<256xf32> to vector<1x256xf32>
    %c0_38 = arith.constant 0 : index
    %c0_39 = arith.constant 0 : index
    %58 = vector.load %arg9[%c0_38, %c0_39] : memref<256x16xf32, #tpu.memory_space<vmem>>, vector<256x16xf32>
    %cst_40 = arith.constant dense<0.000000e+00> : vector<1x16xf32>
    %59 = tpu.matmul %54, %58, %cst_40 {dimension_numbers = #tpu.dot_dimension_numbers<[1], [0], [0], [1], [0, 0, 1, 1], [], []>} : vector<1x256xf32>, vector<256x16xf32>, vector<1x16xf32> -> vector<1x16xf32>
    %cst_41 = arith.constant 3.200000e+01 : f32
    %60 = vector.broadcast %cst_41 : f32 to vector<1x16xf32>
    %61 = arith.divf %59, %60 : vector<1x16xf32>
    %c0_42 = arith.constant 0 : index
    %c0_43 = arith.constant 0 : index
    %62 = vector.load %arg9[%c0_42, %c0_43] : memref<256x16xf32, #tpu.memory_space<vmem>>, vector<256x16xf32>
    %cst_44 = arith.constant dense<0.000000e+00> : vector<1x16xf32>
    %63 = tpu.matmul %57, %62, %cst_44 {dimension_numbers = #tpu.dot_dimension_numbers<[1], [0], [0], [1], [0, 0, 1, 1], [], []>} : vector<1x256xf32>, vector<256x16xf32>, vector<1x16xf32> -> vector<1x16xf32>
    %cst_45 = arith.constant 3.200000e+01 : f32
    %64 = vector.broadcast %cst_45 : f32 to vector<1x16xf32>
    %65 = arith.divf %63, %64 : vector<1x16xf32>
    %66 = arith.mulf %61, %61 : vector<1x16xf32>
    %67 = arith.subf %65, %66 : vector<1x16xf32>
    %cst_46 = arith.constant 0.000000e+00 : f32
    %68 = vector.broadcast %cst_46 : f32 to vector<1x16xf32>
    %69 = arith.maximumf %67, %68 : vector<1x16xf32>
    %cst_47 = arith.constant 9.99999974E-6 : f32
    %70 = vector.broadcast %cst_47 : f32 to vector<1x16xf32>
    %71 = arith.addf %69, %70 : vector<1x16xf32>
    %72 = math.rsqrt %71 : vector<1x16xf32>
    %c0_48 = arith.constant 0 : index
    %c0_49 = arith.constant 0 : index
    %73 = vector.load %arg10[%c0_48, %c0_49] : memref<16x256xf32, #tpu.memory_space<vmem>>, vector<16x256xf32>
    %cst_50 = arith.constant dense<0.000000e+00> : vector<1x256xf32>
    %74 = tpu.matmul %61, %73, %cst_50 {dimension_numbers = #tpu.dot_dimension_numbers<[1], [0], [0], [1], [0, 0, 1, 1], [], []>} : vector<1x16xf32>, vector<16x256xf32>, vector<1x256xf32> -> vector<1x256xf32>
    %75 = vector.broadcast %74 : vector<1x256xf32> to vector<2x256xf32>
    %76 = arith.subf %52, %75 : vector<2x256xf32>
    %c0_51 = arith.constant 0 : index
    %c0_52 = arith.constant 0 : index
    %77 = vector.load %arg10[%c0_51, %c0_52] : memref<16x256xf32, #tpu.memory_space<vmem>>, vector<16x256xf32>
    %cst_53 = arith.constant dense<0.000000e+00> : vector<1x256xf32>
    %78 = tpu.matmul %72, %77, %cst_53 {dimension_numbers = #tpu.dot_dimension_numbers<[1], [0], [0], [1], [0, 0, 1, 1], [], []>} : vector<1x16xf32>, vector<16x256xf32>, vector<1x256xf32> -> vector<1x256xf32>
    %79 = vector.broadcast %78 : vector<1x256xf32> to vector<2x256xf32>
    %80 = arith.mulf %76, %79 : vector<2x256xf32>
    %81 = arith.truncf %80 : vector<2x256xf32> to vector<2x256xbf16>
    %c0_54 = arith.constant 0 : index
    %c0_55 = arith.constant 0 : index
    %82 = vector.load %arg11[%c0_54, %c0_55] : memref<256x128xbf16, #tpu.memory_space<vmem>>, vector<256x128xbf16>
    %cst_56 = arith.constant dense<0.000000e+00> : vector<2x128xf32>
    %83 = tpu.matmul %81, %82, %cst_56 {dimension_numbers = #tpu.dot_dimension_numbers<[1], [0], [0], [1], [0, 0, 1, 1], [], []>} : vector<2x256xbf16>, vector<256x128xbf16>, vector<2x128xf32> -> vector<2x128xf32>
    %c0_57 = arith.constant 0 : index
    %c0_58 = arith.constant 0 : index
    %84 = vector.load %arg12[%c0_57, %c0_58] : memref<1x128xf32, #tpu.memory_space<vmem>>, vector<1x128xf32>
    %85 = vector.broadcast %84 : vector<1x128xf32> to vector<2x128xf32>
    %86 = arith.addf %83, %85 : vector<2x128xf32>
    %cst_59 = arith.constant 0.000000e+00 : f32
    %87 = vector.broadcast %cst_59 : f32 to vector<2x128xf32>
    %88 = arith.cmpf ogt, %86, %87 : vector<2x128xf32>
    %cst_60 = arith.constant 2.000000e-01 : f32
    %89 = vector.broadcast %cst_60 : f32 to vector<2x128xf32>
    %90 = arith.mulf %89, %86 : vector<2x128xf32>
    %91 = arith.select %88, %86, %90 : vector<2x128xi1>, vector<2x128xf32>
    %cst_61 = arith.constant dense<0.000000e+00> : vector<128xf32>
    %92 = vector.multi_reduction <add>, %91, %cst_61 [0] : vector<2x128xf32> to vector<128xf32>
    %93 = vector.shape_cast %92 : vector<128xf32> to vector<1x128xf32>
    %94 = arith.mulf %91, %91 : vector<2x128xf32>
    %cst_62 = arith.constant dense<0.000000e+00> : vector<128xf32>
    %95 = vector.multi_reduction <add>, %94, %cst_62 [0] : vector<2x128xf32> to vector<128xf32>
    %96 = vector.shape_cast %95 : vector<128xf32> to vector<1x128xf32>
    %c0_63 = arith.constant 0 : index
    %c0_64 = arith.constant 0 : index
    %97 = vector.load %arg13[%c0_63, %c0_64] : memref<128x32xf32, #tpu.memory_space<vmem>>, vector<128x32xf32>
    %cst_65 = arith.constant dense<0.000000e+00> : vector<1x32xf32>
    %98 = tpu.matmul %93, %97, %cst_65 {dimension_numbers = #tpu.dot_dimension_numbers<[1], [0], [0], [1], [0, 0, 1, 1], [], []>} : vector<1x128xf32>, vector<128x32xf32>, vector<1x32xf32> -> vector<1x32xf32>
    %cst_66 = arith.constant 8.000000e+00 : f32
    %99 = vector.broadcast %cst_66 : f32 to vector<1x32xf32>
    %100 = arith.divf %98, %99 : vector<1x32xf32>
    %c0_67 = arith.constant 0 : index
    %c0_68 = arith.constant 0 : index
    %101 = vector.load %arg13[%c0_67, %c0_68] : memref<128x32xf32, #tpu.memory_space<vmem>>, vector<128x32xf32>
    %cst_69 = arith.constant dense<0.000000e+00> : vector<1x32xf32>
    %102 = tpu.matmul %96, %101, %cst_69 {dimension_numbers = #tpu.dot_dimension_numbers<[1], [0], [0], [1], [0, 0, 1, 1], [], []>} : vector<1x128xf32>, vector<128x32xf32>, vector<1x32xf32> -> vector<1x32xf32>
    %cst_70 = arith.constant 8.000000e+00 : f32
    %103 = vector.broadcast %cst_70 : f32 to vector<1x32xf32>
    %104 = arith.divf %102, %103 : vector<1x32xf32>
    %105 = arith.mulf %100, %100 : vector<1x32xf32>
    %106 = arith.subf %104, %105 : vector<1x32xf32>
    %cst_71 = arith.constant 0.000000e+00 : f32
    %107 = vector.broadcast %cst_71 : f32 to vector<1x32xf32>
    %108 = arith.maximumf %106, %107 : vector<1x32xf32>
    %cst_72 = arith.constant 9.99999974E-6 : f32
    %109 = vector.broadcast %cst_72 : f32 to vector<1x32xf32>
    %110 = arith.addf %108, %109 : vector<1x32xf32>
    %111 = math.rsqrt %110 : vector<1x32xf32>
    %c0_73 = arith.constant 0 : index
    %c0_74 = arith.constant 0 : index
    %112 = vector.load %arg14[%c0_73, %c0_74] : memref<32x128xf32, #tpu.memory_space<vmem>>, vector<32x128xf32>
    %cst_75 = arith.constant dense<0.000000e+00> : vector<1x128xf32>
    %113 = tpu.matmul %100, %112, %cst_75 {dimension_numbers = #tpu.dot_dimension_numbers<[1], [0], [0], [1], [0, 0, 1, 1], [], []>} : vector<1x32xf32>, vector<32x128xf32>, vector<1x128xf32> -> vector<1x128xf32>
    %114 = vector.broadcast %113 : vector<1x128xf32> to vector<2x128xf32>
    %115 = arith.subf %91, %114 : vector<2x128xf32>
    %c0_76 = arith.constant 0 : index
    %c0_77 = arith.constant 0 : index
    %116 = vector.load %arg14[%c0_76, %c0_77] : memref<32x128xf32, #tpu.memory_space<vmem>>, vector<32x128xf32>
    %cst_78 = arith.constant dense<0.000000e+00> : vector<1x128xf32>
    %117 = tpu.matmul %111, %116, %cst_78 {dimension_numbers = #tpu.dot_dimension_numbers<[1], [0], [0], [1], [0, 0, 1, 1], [], []>} : vector<1x32xf32>, vector<32x128xf32>, vector<1x128xf32> -> vector<1x128xf32>
    %118 = vector.broadcast %117 : vector<1x128xf32> to vector<2x128xf32>
    %119 = arith.mulf %115, %118 : vector<2x128xf32>
    %120 = arith.truncf %119 : vector<2x128xf32> to vector<2x128xbf16>
    %c0_79 = arith.constant 0 : index
    %c0_80 = arith.constant 0 : index
    %121 = vector.load %arg15[%c0_79, %c0_80] : memref<128x64xbf16, #tpu.memory_space<vmem>>, vector<128x64xbf16>
    %cst_81 = arith.constant dense<0.000000e+00> : vector<2x64xf32>
    %122 = tpu.matmul %120, %121, %cst_81 {dimension_numbers = #tpu.dot_dimension_numbers<[1], [0], [0], [1], [0, 0, 1, 1], [], []>} : vector<2x128xbf16>, vector<128x64xbf16>, vector<2x64xf32> -> vector<2x64xf32>
    %c0_82 = arith.constant 0 : index
    %c0_83 = arith.constant 0 : index
    %123 = vector.load %arg16[%c0_82, %c0_83] : memref<1x64xf32, #tpu.memory_space<vmem>>, vector<1x64xf32>
    %124 = vector.broadcast %123 : vector<1x64xf32> to vector<2x64xf32>
    %125 = arith.addf %122, %124 : vector<2x64xf32>
    %cst_84 = arith.constant 0.000000e+00 : f32
    %126 = vector.broadcast %cst_84 : f32 to vector<2x64xf32>
    %127 = arith.cmpf ogt, %125, %126 : vector<2x64xf32>
    %cst_85 = arith.constant 2.000000e-01 : f32
    %128 = vector.broadcast %cst_85 : f32 to vector<2x64xf32>
    %129 = arith.mulf %128, %125 : vector<2x64xf32>
    %130 = arith.select %127, %125, %129 : vector<2x64xi1>, vector<2x64xf32>
    %cst_86 = arith.constant dense<0.000000e+00> : vector<64xf32>
    %131 = vector.multi_reduction <add>, %130, %cst_86 [0] : vector<2x64xf32> to vector<64xf32>
    %132 = vector.shape_cast %131 : vector<64xf32> to vector<1x64xf32>
    %133 = arith.mulf %130, %130 : vector<2x64xf32>
    %cst_87 = arith.constant dense<0.000000e+00> : vector<64xf32>
    %134 = vector.multi_reduction <add>, %133, %cst_87 [0] : vector<2x64xf32> to vector<64xf32>
    %135 = vector.shape_cast %134 : vector<64xf32> to vector<1x64xf32>
    %c0_88 = arith.constant 0 : index
    %c0_89 = arith.constant 0 : index
    %136 = vector.load %arg17[%c0_88, %c0_89] : memref<64x64xf32, #tpu.memory_space<vmem>>, vector<64x64xf32>
    %cst_90 = arith.constant dense<0.000000e+00> : vector<1x64xf32>
    %137 = tpu.matmul %132, %136, %cst_90 {dimension_numbers = #tpu.dot_dimension_numbers<[1], [0], [0], [1], [0, 0, 1, 1], [], []>} : vector<1x64xf32>, vector<64x64xf32>, vector<1x64xf32> -> vector<1x64xf32>
    %cst_91 = arith.constant 2.000000e+00 : f32
    %138 = vector.broadcast %cst_91 : f32 to vector<1x64xf32>
    %139 = arith.divf %137, %138 : vector<1x64xf32>
    %c0_92 = arith.constant 0 : index
    %c0_93 = arith.constant 0 : index
    %140 = vector.load %arg17[%c0_92, %c0_93] : memref<64x64xf32, #tpu.memory_space<vmem>>, vector<64x64xf32>
    %cst_94 = arith.constant dense<0.000000e+00> : vector<1x64xf32>
    %141 = tpu.matmul %135, %140, %cst_94 {dimension_numbers = #tpu.dot_dimension_numbers<[1], [0], [0], [1], [0, 0, 1, 1], [], []>} : vector<1x64xf32>, vector<64x64xf32>, vector<1x64xf32> -> vector<1x64xf32>
    %cst_95 = arith.constant 2.000000e+00 : f32
    %142 = vector.broadcast %cst_95 : f32 to vector<1x64xf32>
    %143 = arith.divf %141, %142 : vector<1x64xf32>
    %144 = arith.mulf %139, %139 : vector<1x64xf32>
    %145 = arith.subf %143, %144 : vector<1x64xf32>
    %cst_96 = arith.constant 0.000000e+00 : f32
    %146 = vector.broadcast %cst_96 : f32 to vector<1x64xf32>
    %147 = arith.maximumf %145, %146 : vector<1x64xf32>
    %cst_97 = arith.constant 9.99999974E-6 : f32
    %148 = vector.broadcast %cst_97 : f32 to vector<1x64xf32>
    %149 = arith.addf %147, %148 : vector<1x64xf32>
    %150 = math.rsqrt %149 : vector<1x64xf32>
    %c0_98 = arith.constant 0 : index
    %c0_99 = arith.constant 0 : index
    %151 = vector.load %arg18[%c0_98, %c0_99] : memref<64x64xf32, #tpu.memory_space<vmem>>, vector<64x64xf32>
    %cst_100 = arith.constant dense<0.000000e+00> : vector<1x64xf32>
    %152 = tpu.matmul %139, %151, %cst_100 {dimension_numbers = #tpu.dot_dimension_numbers<[1], [0], [0], [1], [0, 0, 1, 1], [], []>} : vector<1x64xf32>, vector<64x64xf32>, vector<1x64xf32> -> vector<1x64xf32>
    %153 = vector.broadcast %152 : vector<1x64xf32> to vector<2x64xf32>
    %154 = arith.subf %130, %153 : vector<2x64xf32>
    %c0_101 = arith.constant 0 : index
    %c0_102 = arith.constant 0 : index
    %155 = vector.load %arg18[%c0_101, %c0_102] : memref<64x64xf32, #tpu.memory_space<vmem>>, vector<64x64xf32>
    %cst_103 = arith.constant dense<0.000000e+00> : vector<1x64xf32>
    %156 = tpu.matmul %150, %155, %cst_103 {dimension_numbers = #tpu.dot_dimension_numbers<[1], [0], [0], [1], [0, 0, 1, 1], [], []>} : vector<1x64xf32>, vector<64x64xf32>, vector<1x64xf32> -> vector<1x64xf32>
    %157 = vector.broadcast %156 : vector<1x64xf32> to vector<2x64xf32>
    %158 = arith.mulf %154, %157 : vector<2x64xf32>
    %159 = arith.truncf %158 : vector<2x64xf32> to vector<2x64xbf16>
    %c0_104 = arith.constant 0 : index
    %c0_105 = arith.constant 0 : index
    %160 = vector.load %arg19[%c0_104, %c0_105] : memref<64x16xbf16, #tpu.memory_space<vmem>>, vector<64x16xbf16>
    %cst_106 = arith.constant dense<0.000000e+00> : vector<2x16xf32>
    %161 = tpu.matmul %159, %160, %cst_106 {dimension_numbers = #tpu.dot_dimension_numbers<[1], [0], [0], [1], [0, 0, 1, 1], [], []>} : vector<2x64xbf16>, vector<64x16xbf16>, vector<2x16xf32> -> vector<2x16xf32>
    %c0_107 = arith.constant 0 : index
    %c0_108 = arith.constant 0 : index
    %162 = vector.load %arg20[%c0_107, %c0_108] : memref<1x16xf32, #tpu.memory_space<vmem>>, vector<1x16xf32>
    %163 = vector.broadcast %162 : vector<1x16xf32> to vector<2x16xf32>
    %164 = arith.addf %161, %163 : vector<2x16xf32>
    %cst_109 = arith.constant 0.000000e+00 : f32
    %165 = vector.broadcast %cst_109 : f32 to vector<2x16xf32>
    %166 = arith.cmpf ogt, %164, %165 : vector<2x16xf32>
    %cst_110 = arith.constant 2.000000e-01 : f32
    %167 = vector.broadcast %cst_110 : f32 to vector<2x16xf32>
    %168 = arith.mulf %167, %164 : vector<2x16xf32>
    %169 = arith.select %166, %164, %168 : vector<2x16xi1>, vector<2x16xf32>
    %170 = arith.truncf %158 : vector<2x64xf32> to vector<2x64xbf16>
    %c0_111 = arith.constant 0 : index
    %c0_112 = arith.constant 0 : index
    %171 = vector.load %arg21[%c0_111, %c0_112] : memref<64x16xbf16, #tpu.memory_space<vmem>>, vector<64x16xbf16>
    %cst_113 = arith.constant dense<0.000000e+00> : vector<2x16xf32>
    %172 = tpu.matmul %170, %171, %cst_113 {dimension_numbers = #tpu.dot_dimension_numbers<[1], [0], [0], [1], [0, 0, 1, 1], [], []>} : vector<2x64xbf16>, vector<64x16xbf16>, vector<2x16xf32> -> vector<2x16xf32>
    %c0_114 = arith.constant 0 : index
    %c0_115 = arith.constant 0 : index
    %173 = vector.load %arg22[%c0_114, %c0_115] : memref<1x16xf32, #tpu.memory_space<vmem>>, vector<1x16xf32>
    %174 = vector.broadcast %173 : vector<1x16xf32> to vector<2x16xf32>
    %175 = arith.addf %172, %174 : vector<2x16xf32>
    %cst_116 = arith.constant 0.000000e+00 : f32
    %176 = vector.broadcast %cst_116 : f32 to vector<2x16xf32>
    %177 = arith.cmpf ogt, %175, %176 : vector<2x16xf32>
    %cst_117 = arith.constant 2.000000e-01 : f32
    %178 = vector.broadcast %cst_117 : f32 to vector<2x16xf32>
    %179 = arith.mulf %178, %175 : vector<2x16xf32>
    %180 = arith.select %177, %175, %179 : vector<2x16xi1>, vector<2x16xf32>
    %181 = arith.truncf %1 : vector<32x32xf32> to vector<32x32xbf16>
    %c0_118 = arith.constant 0 : index
    %c0_119 = arith.constant 0 : index
    %182 = vector.load %arg23[%c0_118, %c0_119] : memref<32x128xbf16, #tpu.memory_space<vmem>>, vector<32x128xbf16>
    %cst_120 = arith.constant dense<0.000000e+00> : vector<32x128xf32>
    %183 = tpu.matmul %181, %182, %cst_120 {dimension_numbers = #tpu.dot_dimension_numbers<[1], [0], [0], [1], [0, 0, 1, 1], [], []>} : vector<32x32xbf16>, vector<32x128xbf16>, vector<32x128xf32> -> vector<32x128xf32>
    %c0_121 = arith.constant 0 : index
    %c0_122 = arith.constant 0 : index
    %184 = vector.load %arg24[%c0_121, %c0_122] : memref<1x128xf32, #tpu.memory_space<vmem>>, vector<1x128xf32>
    %185 = vector.broadcast %184 : vector<1x128xf32> to vector<32x128xf32>
    %186 = arith.addf %183, %185 : vector<32x128xf32>
    %cst_123 = arith.constant 0.000000e+00 : f32
    %187 = vector.broadcast %cst_123 : f32 to vector<32x128xf32>
    %188 = arith.cmpf ogt, %186, %187 : vector<32x128xf32>
    %cst_124 = arith.constant 2.000000e-01 : f32
    %189 = vector.broadcast %cst_124 : f32 to vector<32x128xf32>
    %190 = arith.mulf %189, %186 : vector<32x128xf32>
    %191 = arith.select %188, %186, %190 : vector<32x128xi1>, vector<32x128xf32>
    %192 = arith.truncf %191 : vector<32x128xf32> to vector<32x128xbf16>
    %c0_125 = arith.constant 0 : index
    %c0_126 = arith.constant 0 : index
    %193 = vector.load %arg25[%c0_125, %c0_126] : memref<128x128xbf16, #tpu.memory_space<vmem>>, vector<128x128xbf16>
    %cst_127 = arith.constant dense<0.000000e+00> : vector<32x128xf32>
    %194 = tpu.matmul %192, %193, %cst_127 {dimension_numbers = #tpu.dot_dimension_numbers<[1], [0], [0], [1], [0, 0, 1, 1], [], []>} : vector<32x128xbf16>, vector<128x128xbf16>, vector<32x128xf32> -> vector<32x128xf32>
    %c0_128 = arith.constant 0 : index
    %c0_129 = arith.constant 0 : index
    %195 = vector.load %arg26[%c0_128, %c0_129] : memref<1x128xf32, #tpu.memory_space<vmem>>, vector<1x128xf32>
    %196 = vector.broadcast %195 : vector<1x128xf32> to vector<32x128xf32>
    %197 = arith.addf %194, %196 : vector<32x128xf32>
    %cst_130 = arith.constant 0.000000e+00 : f32
    %198 = vector.broadcast %cst_130 : f32 to vector<32x128xf32>
    %199 = arith.cmpf ogt, %197, %198 : vector<32x128xf32>
    %cst_131 = arith.constant 2.000000e-01 : f32
    %200 = vector.broadcast %cst_131 : f32 to vector<32x128xf32>
    %201 = arith.mulf %200, %197 : vector<32x128xf32>
    %202 = arith.select %199, %197, %201 : vector<32x128xi1>, vector<32x128xf32>
    %203 = arith.truncf %202 : vector<32x128xf32> to vector<32x128xbf16>
    %c0_132 = arith.constant 0 : index
    %c0_133 = arith.constant 0 : index
    %204 = vector.load %arg27[%c0_132, %c0_133] : memref<128x16xbf16, #tpu.memory_space<vmem>>, vector<128x16xbf16>
    %cst_134 = arith.constant dense<0.000000e+00> : vector<32x16xf32>
    %205 = tpu.matmul %203, %204, %cst_134 {dimension_numbers = #tpu.dot_dimension_numbers<[1], [0], [0], [1], [0, 0, 1, 1], [], []>} : vector<32x128xbf16>, vector<128x16xbf16>, vector<32x16xf32> -> vector<32x16xf32>
    %c0_135 = arith.constant 0 : index
    %c0_136 = arith.constant 0 : index
    %206 = vector.load %arg28[%c0_135, %c0_136] : memref<1x16xf32, #tpu.memory_space<vmem>>, vector<1x16xf32>
    %207 = vector.broadcast %206 : vector<1x16xf32> to vector<32x16xf32>
    %208 = arith.addf %205, %207 : vector<32x16xf32>
    %cst_137 = arith.constant 0.000000e+00 : f32
    %209 = vector.broadcast %cst_137 : f32 to vector<32x16xf32>
    %210 = arith.cmpf ogt, %208, %209 : vector<32x16xf32>
    %cst_138 = arith.constant 2.000000e-01 : f32
    %211 = vector.broadcast %cst_138 : f32 to vector<32x16xf32>
    %212 = arith.mulf %211, %208 : vector<32x16xf32>
    %213 = arith.select %210, %208, %212 : vector<32x16xi1>, vector<32x16xf32>
    %c0_139 = arith.constant 0 : index
    %c0_140 = arith.constant 0 : index
    %214 = vector.load %arg29[%c0_139, %c0_140] : memref<2x32xf32, #tpu.memory_space<vmem>>, vector<2x32xf32>
    %cst_141 = arith.constant dense<0.000000e+00> : vector<2x16xf32>
    %215 = tpu.matmul %214, %213, %cst_141 {dimension_numbers = #tpu.dot_dimension_numbers<[1], [0], [0], [1], [0, 0, 1, 1], [], []>} : vector<2x32xf32>, vector<32x16xf32>, vector<2x16xf32> -> vector<2x16xf32>
    %216 = arith.mulf %213, %213 : vector<32x16xf32>
    %cst_142 = arith.constant dense<0.000000e+00> : vector<2x16xf32>
    %217 = tpu.matmul %214, %216, %cst_142 {dimension_numbers = #tpu.dot_dimension_numbers<[1], [0], [0], [1], [0, 0, 1, 1], [], []>} : vector<2x32xf32>, vector<32x16xf32>, vector<2x16xf32> -> vector<2x16xf32>
    %cst_143 = arith.constant 1.600000e+01 : f32
    %218 = vector.broadcast %cst_143 : f32 to vector<2x16xf32>
    %219 = arith.divf %215, %218 : vector<2x16xf32>
    %cst_144 = arith.constant 1.600000e+01 : f32
    %220 = vector.broadcast %cst_144 : f32 to vector<2x16xf32>
    %221 = arith.mulf %220, %219 : vector<2x16xf32>
    %222 = arith.mulf %221, %219 : vector<2x16xf32>
    %223 = arith.subf %217, %222 : vector<2x16xf32>
    %cst_145 = arith.constant 1.500000e+01 : f32
    %224 = vector.broadcast %cst_145 : f32 to vector<2x16xf32>
    %225 = arith.divf %223, %224 : vector<2x16xf32>
    %226 = arith.addf %169, %215 : vector<2x16xf32>
    %227 = arith.mulf %180, %219 : vector<2x16xf32>
    %228 = arith.addf %169, %227 : vector<2x16xf32>
    %229 = arith.mulf %180, %180 : vector<2x16xf32>
    %230 = arith.mulf %229, %225 : vector<2x16xf32>
    %c0_146 = arith.constant 0 : index
    %c0_147 = arith.constant 0 : index
    %231 = vector.load %arg30[%c0_146, %c0_147] : memref<4x2xf32, #tpu.memory_space<vmem>>, vector<4x2xf32>
    %c0_148 = arith.constant 0 : index
    %c0_149 = arith.constant 0 : index
    %232 = vector.load %arg31[%c0_148, %c0_149] : memref<4x2xf32, #tpu.memory_space<vmem>>, vector<4x2xf32>
    %c0_150 = arith.constant 0 : index
    %c0_151 = arith.constant 0 : index
    %233 = vector.load %arg32[%c0_150, %c0_151] : memref<2x4xf32, #tpu.memory_space<vmem>>, vector<2x4xf32>
    %c0_152 = arith.constant 0 : index
    %c0_153 = arith.constant 0 : index
    %234 = vector.load %arg33[%c0_152, %c0_153] : memref<2x4xf32, #tpu.memory_space<vmem>>, vector<2x4xf32>
    %235 = arith.addf %231, %232 : vector<4x2xf32>
    %236 = arith.truncf %0 : vector<2x256xf32> to vector<2x256xbf16>
    %c0_154 = arith.constant 0 : index
    %c0_155 = arith.constant 0 : index
    %237 = vector.load %arg34[%c0_154, %c0_155] : memref<256x512xbf16, #tpu.memory_space<vmem>>, vector<256x512xbf16>
    %cst_156 = arith.constant dense<0.000000e+00> : vector<2x512xf32>
    %238 = tpu.matmul %236, %237, %cst_156 {dimension_numbers = #tpu.dot_dimension_numbers<[1], [0], [0], [1], [0, 0, 1, 1], [], []>} : vector<2x256xbf16>, vector<256x512xbf16>, vector<2x512xf32> -> vector<2x512xf32>
    %c0_157 = arith.constant 0 : index
    %c0_158 = arith.constant 0 : index
    %239 = vector.load %arg35[%c0_157, %c0_158] : memref<1x512xf32, #tpu.memory_space<vmem>>, vector<1x512xf32>
    %240 = vector.broadcast %239 : vector<1x512xf32> to vector<2x512xf32>
    %241 = arith.addf %238, %240 : vector<2x512xf32>
    %cst_159 = arith.constant 0.000000e+00 : f32
    %242 = vector.broadcast %cst_159 : f32 to vector<2x512xf32>
    %243 = arith.cmpf ogt, %241, %242 : vector<2x512xf32>
    %cst_160 = arith.constant 2.000000e-01 : f32
    %244 = vector.broadcast %cst_160 : f32 to vector<2x512xf32>
    %245 = arith.mulf %244, %241 : vector<2x512xf32>
    %246 = arith.select %243, %241, %245 : vector<2x512xi1>, vector<2x512xf32>
    %247 = vector.extract_strided_slice %246 {offsets = [0, 0], sizes = [2, 256], strides = [1, 1]} : vector<2x512xf32> to vector<2x256xf32>
    %248 = vector.extract_strided_slice %246 {offsets = [0, 256], sizes = [2, 256], strides = [1, 1]} : vector<2x512xf32> to vector<2x256xf32>
    %249 = arith.truncf %247 : vector<2x256xf32> to vector<2x256xbf16>
    %c0_161 = arith.constant 0 : index
    %c0_162 = arith.constant 0 : index
    %250 = vector.load %arg36[%c0_161, %c0_162] : memref<256x256xbf16, #tpu.memory_space<vmem>>, vector<256x256xbf16>
    %cst_163 = arith.constant dense<0.000000e+00> : vector<2x256xf32>
    %251 = tpu.matmul %249, %250, %cst_163 {dimension_numbers = #tpu.dot_dimension_numbers<[1], [0], [0], [1], [0, 0, 1, 1], [], []>} : vector<2x256xbf16>, vector<256x256xbf16>, vector<2x256xf32> -> vector<2x256xf32>
    %c0_164 = arith.constant 0 : index
    %c0_165 = arith.constant 0 : index
    %252 = vector.load %arg37[%c0_164, %c0_165] : memref<1x256xf32, #tpu.memory_space<vmem>>, vector<1x256xf32>
    %253 = vector.broadcast %252 : vector<1x256xf32> to vector<2x256xf32>
    %254 = arith.addf %251, %253 : vector<2x256xf32>
    %cst_166 = arith.constant 0.000000e+00 : f32
    %255 = vector.broadcast %cst_166 : f32 to vector<2x256xf32>
    %256 = arith.cmpf ogt, %254, %255 : vector<2x256xf32>
    %cst_167 = arith.constant 2.000000e-01 : f32
    %257 = vector.broadcast %cst_167 : f32 to vector<2x256xf32>
    %258 = arith.mulf %257, %254 : vector<2x256xf32>
    %259 = arith.select %256, %254, %258 : vector<2x256xi1>, vector<2x256xf32>
    %260 = arith.truncf %259 : vector<2x256xf32> to vector<2x256xbf16>
    %c0_168 = arith.constant 0 : index
    %c0_169 = arith.constant 0 : index
    %261 = vector.load %arg38[%c0_168, %c0_169] : memref<256x256xbf16, #tpu.memory_space<vmem>>, vector<256x256xbf16>
    %cst_170 = arith.constant dense<0.000000e+00> : vector<2x256xf32>
    %262 = tpu.matmul %260, %261, %cst_170 {dimension_numbers = #tpu.dot_dimension_numbers<[1], [0], [0], [1], [0, 0, 1, 1], [], []>} : vector<2x256xbf16>, vector<256x256xbf16>, vector<2x256xf32> -> vector<2x256xf32>
    %c0_171 = arith.constant 0 : index
    %c0_172 = arith.constant 0 : index
    %263 = vector.load %arg39[%c0_171, %c0_172] : memref<1x256xf32, #tpu.memory_space<vmem>>, vector<1x256xf32>
    %264 = vector.broadcast %263 : vector<1x256xf32> to vector<2x256xf32>
    %265 = arith.addf %262, %264 : vector<2x256xf32>
    %cst_173 = arith.constant 0.000000e+00 : f32
    %266 = vector.broadcast %cst_173 : f32 to vector<2x256xf32>
    %267 = arith.cmpf ogt, %265, %266 : vector<2x256xf32>
    %cst_174 = arith.constant 2.000000e-01 : f32
    %268 = vector.broadcast %cst_174 : f32 to vector<2x256xf32>
    %269 = arith.mulf %268, %265 : vector<2x256xf32>
    %270 = arith.select %267, %265, %269 : vector<2x256xi1>, vector<2x256xf32>
    %271 = arith.truncf %270 : vector<2x256xf32> to vector<2x256xbf16>
    %c0_175 = arith.constant 0 : index
    %c0_176 = arith.constant 0 : index
    %272 = vector.load %arg40[%c0_175, %c0_176] : memref<256x512xbf16, #tpu.memory_space<vmem>>, vector<256x512xbf16>
    %cst_177 = arith.constant dense<0.000000e+00> : vector<2x512xf32>
    %273 = tpu.matmul %271, %272, %cst_177 {dimension_numbers = #tpu.dot_dimension_numbers<[1], [0], [0], [1], [0, 0, 1, 1], [], []>} : vector<2x256xbf16>, vector<256x512xbf16>, vector<2x512xf32> -> vector<2x512xf32>
    %c0_178 = arith.constant 0 : index
    %c0_179 = arith.constant 0 : index
    %274 = vector.load %arg41[%c0_178, %c0_179] : memref<1x512xf32, #tpu.memory_space<vmem>>, vector<1x512xf32>
    %275 = vector.broadcast %274 : vector<1x512xf32> to vector<2x512xf32>
    %276 = arith.addf %273, %275 : vector<2x512xf32>
    %277 = arith.truncf %248 : vector<2x256xf32> to vector<2x256xbf16>
    %c0_180 = arith.constant 0 : index
    %c0_181 = arith.constant 0 : index
    %278 = vector.load %arg42[%c0_180, %c0_181] : memref<256x256xbf16, #tpu.memory_space<vmem>>, vector<256x256xbf16>
    %cst_182 = arith.constant dense<0.000000e+00> : vector<2x256xf32>
    %279 = tpu.matmul %277, %278, %cst_182 {dimension_numbers = #tpu.dot_dimension_numbers<[1], [0], [0], [1], [0, 0, 1, 1], [], []>} : vector<2x256xbf16>, vector<256x256xbf16>, vector<2x256xf32> -> vector<2x256xf32>
    %c0_183 = arith.constant 0 : index
    %c0_184 = arith.constant 0 : index
    %280 = vector.load %arg43[%c0_183, %c0_184] : memref<1x256xf32, #tpu.memory_space<vmem>>, vector<1x256xf32>
    %281 = vector.broadcast %280 : vector<1x256xf32> to vector<2x256xf32>
    %282 = arith.addf %279, %281 : vector<2x256xf32>
    %cst_185 = arith.constant 0.000000e+00 : f32
    %283 = vector.broadcast %cst_185 : f32 to vector<2x256xf32>
    %284 = arith.cmpf ogt, %282, %283 : vector<2x256xf32>
    %cst_186 = arith.constant 2.000000e-01 : f32
    %285 = vector.broadcast %cst_186 : f32 to vector<2x256xf32>
    %286 = arith.mulf %285, %282 : vector<2x256xf32>
    %287 = arith.select %284, %282, %286 : vector<2x256xi1>, vector<2x256xf32>
    %288 = arith.truncf %287 : vector<2x256xf32> to vector<2x256xbf16>
    %c0_187 = arith.constant 0 : index
    %c0_188 = arith.constant 0 : index
    %289 = vector.load %arg44[%c0_187, %c0_188] : memref<256x256xbf16, #tpu.memory_space<vmem>>, vector<256x256xbf16>
    %cst_189 = arith.constant dense<0.000000e+00> : vector<2x256xf32>
    %290 = tpu.matmul %288, %289, %cst_189 {dimension_numbers = #tpu.dot_dimension_numbers<[1], [0], [0], [1], [0, 0, 1, 1], [], []>} : vector<2x256xbf16>, vector<256x256xbf16>, vector<2x256xf32> -> vector<2x256xf32>
    %c0_190 = arith.constant 0 : index
    %c0_191 = arith.constant 0 : index
    %291 = vector.load %arg45[%c0_190, %c0_191] : memref<1x256xf32, #tpu.memory_space<vmem>>, vector<1x256xf32>
    %292 = vector.broadcast %291 : vector<1x256xf32> to vector<2x256xf32>
    %293 = arith.addf %290, %292 : vector<2x256xf32>
    %cst_192 = arith.constant 0.000000e+00 : f32
    %294 = vector.broadcast %cst_192 : f32 to vector<2x256xf32>
    %295 = arith.cmpf ogt, %293, %294 : vector<2x256xf32>
    %cst_193 = arith.constant 2.000000e-01 : f32
    %296 = vector.broadcast %cst_193 : f32 to vector<2x256xf32>
    %297 = arith.mulf %296, %293 : vector<2x256xf32>
    %298 = arith.select %295, %293, %297 : vector<2x256xi1>, vector<2x256xf32>
    %299 = arith.truncf %298 : vector<2x256xf32> to vector<2x256xbf16>
    %c0_194 = arith.constant 0 : index
    %c0_195 = arith.constant 0 : index
    %300 = vector.load %arg46[%c0_194, %c0_195] : memref<256x1xbf16, #tpu.memory_space<vmem>>, vector<256x1xbf16>
    %cst_196 = arith.constant dense<0.000000e+00> : vector<2x1xf32>
    %301 = tpu.matmul %299, %300, %cst_196 {dimension_numbers = #tpu.dot_dimension_numbers<[1], [0], [0], [1], [0, 0, 1, 1], [], []>} : vector<2x256xbf16>, vector<256x1xbf16>, vector<2x1xf32> -> vector<2x1xf32>
    %c0_197 = arith.constant 0 : index
    %c0_198 = arith.constant 0 : index
    %302 = vector.load %arg47[%c0_197, %c0_198] : memref<1x1xf32, #tpu.memory_space<vmem>>, vector<1x1xf32>
    %303 = vector.broadcast %302 : vector<1x1xf32> to vector<2x1xf32>
    %304 = arith.addf %301, %303 : vector<2x1xf32>
    %cst_199 = arith.constant dense<0.000000e+00> : vector<4x16xf32>
    %305 = tpu.matmul %231, %226, %cst_199 {dimension_numbers = #tpu.dot_dimension_numbers<[1], [0], [0], [1], [0, 0, 1, 1], [], []>} : vector<4x2xf32>, vector<2x16xf32>, vector<4x16xf32> -> vector<4x16xf32>
    %cst_200 = arith.constant dense<0.000000e+00> : vector<4x16xf32>
    %306 = tpu.matmul %232, %2, %cst_200 {dimension_numbers = #tpu.dot_dimension_numbers<[1], [0], [0], [1], [0, 0, 1, 1], [], []>} : vector<4x2xf32>, vector<2x16xf32>, vector<4x16xf32> -> vector<4x16xf32>
    %307 = arith.addf %305, %306 : vector<4x16xf32>
    %308 = arith.truncf %307 : vector<4x16xf32> to vector<4x16xbf16>
    %c0_201 = arith.constant 0 : index
    %c0_202 = arith.constant 0 : index
    %309 = vector.load %arg48[%c0_201, %c0_202] : memref<16x512xbf16, #tpu.memory_space<vmem>>, vector<16x512xbf16>
    %cst_203 = arith.constant dense<0.000000e+00> : vector<4x512xf32>
    %310 = tpu.matmul %308, %309, %cst_203 {dimension_numbers = #tpu.dot_dimension_numbers<[1], [0], [0], [1], [0, 0, 1, 1], [], []>} : vector<4x16xbf16>, vector<16x512xbf16>, vector<4x512xf32> -> vector<4x512xf32>
    %c0_204 = arith.constant 0 : index
    %c0_205 = arith.constant 0 : index
    %311 = vector.load %arg49[%c0_204, %c0_205] : memref<1x512xf32, #tpu.memory_space<vmem>>, vector<1x512xf32>
    %312 = vector.broadcast %311 : vector<1x512xf32> to vector<4x512xf32>
    %313 = arith.addf %310, %312 : vector<4x512xf32>
    %cst_206 = arith.constant 0.000000e+00 : f32
    %314 = vector.broadcast %cst_206 : f32 to vector<4x512xf32>
    %315 = arith.cmpf ogt, %313, %314 : vector<4x512xf32>
    %cst_207 = arith.constant 2.000000e-01 : f32
    %316 = vector.broadcast %cst_207 : f32 to vector<4x512xf32>
    %317 = arith.mulf %316, %313 : vector<4x512xf32>
    %318 = arith.select %315, %313, %317 : vector<4x512xi1>, vector<4x512xf32>
    %319 = vector.extract_strided_slice %318 {offsets = [0, 0], sizes = [4, 256], strides = [1, 1]} : vector<4x512xf32> to vector<4x256xf32>
    %320 = vector.extract_strided_slice %318 {offsets = [0, 256], sizes = [4, 256], strides = [1, 1]} : vector<4x512xf32> to vector<4x256xf32>
    %321 = arith.truncf %319 : vector<4x256xf32> to vector<4x256xbf16>
    %c0_208 = arith.constant 0 : index
    %c0_209 = arith.constant 0 : index
    %322 = vector.load %arg50[%c0_208, %c0_209] : memref<256x256xbf16, #tpu.memory_space<vmem>>, vector<256x256xbf16>
    %cst_210 = arith.constant dense<0.000000e+00> : vector<4x256xf32>
    %323 = tpu.matmul %321, %322, %cst_210 {dimension_numbers = #tpu.dot_dimension_numbers<[1], [0], [0], [1], [0, 0, 1, 1], [], []>} : vector<4x256xbf16>, vector<256x256xbf16>, vector<4x256xf32> -> vector<4x256xf32>
    %c0_211 = arith.constant 0 : index
    %c0_212 = arith.constant 0 : index
    %324 = vector.load %arg51[%c0_211, %c0_212] : memref<1x256xf32, #tpu.memory_space<vmem>>, vector<1x256xf32>
    %325 = vector.broadcast %324 : vector<1x256xf32> to vector<4x256xf32>
    %326 = arith.addf %323, %325 : vector<4x256xf32>
    %cst_213 = arith.constant 0.000000e+00 : f32
    %327 = vector.broadcast %cst_213 : f32 to vector<4x256xf32>
    %328 = arith.cmpf ogt, %326, %327 : vector<4x256xf32>
    %cst_214 = arith.constant 2.000000e-01 : f32
    %329 = vector.broadcast %cst_214 : f32 to vector<4x256xf32>
    %330 = arith.mulf %329, %326 : vector<4x256xf32>
    %331 = arith.select %328, %326, %330 : vector<4x256xi1>, vector<4x256xf32>
    %332 = arith.truncf %331 : vector<4x256xf32> to vector<4x256xbf16>
    %c0_215 = arith.constant 0 : index
    %c0_216 = arith.constant 0 : index
    %333 = vector.load %arg52[%c0_215, %c0_216] : memref<256x256xbf16, #tpu.memory_space<vmem>>, vector<256x256xbf16>
    %cst_217 = arith.constant dense<0.000000e+00> : vector<4x256xf32>
    %334 = tpu.matmul %332, %333, %cst_217 {dimension_numbers = #tpu.dot_dimension_numbers<[1], [0], [0], [1], [0, 0, 1, 1], [], []>} : vector<4x256xbf16>, vector<256x256xbf16>, vector<4x256xf32> -> vector<4x256xf32>
    %c0_218 = arith.constant 0 : index
    %c0_219 = arith.constant 0 : index
    %335 = vector.load %arg53[%c0_218, %c0_219] : memref<1x256xf32, #tpu.memory_space<vmem>>, vector<1x256xf32>
    %336 = vector.broadcast %335 : vector<1x256xf32> to vector<4x256xf32>
    %337 = arith.addf %334, %336 : vector<4x256xf32>
    %cst_220 = arith.constant 0.000000e+00 : f32
    %338 = vector.broadcast %cst_220 : f32 to vector<4x256xf32>
    %339 = arith.cmpf ogt, %337, %338 : vector<4x256xf32>
    %cst_221 = arith.constant 2.000000e-01 : f32
    %340 = vector.broadcast %cst_221 : f32 to vector<4x256xf32>
    %341 = arith.mulf %340, %337 : vector<4x256xf32>
    %342 = arith.select %339, %337, %341 : vector<4x256xi1>, vector<4x256xf32>
    %343 = arith.truncf %342 : vector<4x256xf32> to vector<4x256xbf16>
    %c0_222 = arith.constant 0 : index
    %c0_223 = arith.constant 0 : index
    %344 = vector.load %arg54[%c0_222, %c0_223] : memref<256x512xbf16, #tpu.memory_space<vmem>>, vector<256x512xbf16>
    %cst_224 = arith.constant dense<0.000000e+00> : vector<4x512xf32>
    %345 = tpu.matmul %343, %344, %cst_224 {dimension_numbers = #tpu.dot_dimension_numbers<[1], [0], [0], [1], [0, 0, 1, 1], [], []>} : vector<4x256xbf16>, vector<256x512xbf16>, vector<4x512xf32> -> vector<4x512xf32>
    %c0_225 = arith.constant 0 : index
    %c0_226 = arith.constant 0 : index
    %346 = vector.load %arg55[%c0_225, %c0_226] : memref<1x512xf32, #tpu.memory_space<vmem>>, vector<1x512xf32>
    %347 = vector.broadcast %346 : vector<1x512xf32> to vector<4x512xf32>
    %348 = arith.addf %345, %347 : vector<4x512xf32>
    %349 = arith.truncf %320 : vector<4x256xf32> to vector<4x256xbf16>
    %c0_227 = arith.constant 0 : index
    %c0_228 = arith.constant 0 : index
    %350 = vector.load %arg56[%c0_227, %c0_228] : memref<256x256xbf16, #tpu.memory_space<vmem>>, vector<256x256xbf16>
    %cst_229 = arith.constant dense<0.000000e+00> : vector<4x256xf32>
    %351 = tpu.matmul %349, %350, %cst_229 {dimension_numbers = #tpu.dot_dimension_numbers<[1], [0], [0], [1], [0, 0, 1, 1], [], []>} : vector<4x256xbf16>, vector<256x256xbf16>, vector<4x256xf32> -> vector<4x256xf32>
    %c0_230 = arith.constant 0 : index
    %c0_231 = arith.constant 0 : index
    %352 = vector.load %arg57[%c0_230, %c0_231] : memref<1x256xf32, #tpu.memory_space<vmem>>, vector<1x256xf32>
    %353 = vector.broadcast %352 : vector<1x256xf32> to vector<4x256xf32>
    %354 = arith.addf %351, %353 : vector<4x256xf32>
    %cst_232 = arith.constant 0.000000e+00 : f32
    %355 = vector.broadcast %cst_232 : f32 to vector<4x256xf32>
    %356 = arith.cmpf ogt, %354, %355 : vector<4x256xf32>
    %cst_233 = arith.constant 2.000000e-01 : f32
    %357 = vector.broadcast %cst_233 : f32 to vector<4x256xf32>
    %358 = arith.mulf %357, %354 : vector<4x256xf32>
    %359 = arith.select %356, %354, %358 : vector<4x256xi1>, vector<4x256xf32>
    %360 = arith.truncf %359 : vector<4x256xf32> to vector<4x256xbf16>
    %c0_234 = arith.constant 0 : index
    %c0_235 = arith.constant 0 : index
    %361 = vector.load %arg58[%c0_234, %c0_235] : memref<256x256xbf16, #tpu.memory_space<vmem>>, vector<256x256xbf16>
    %cst_236 = arith.constant dense<0.000000e+00> : vector<4x256xf32>
    %362 = tpu.matmul %360, %361, %cst_236 {dimension_numbers = #tpu.dot_dimension_numbers<[1], [0], [0], [1], [0, 0, 1, 1], [], []>} : vector<4x256xbf16>, vector<256x256xbf16>, vector<4x256xf32> -> vector<4x256xf32>
    %c0_237 = arith.constant 0 : index
    %c0_238 = arith.constant 0 : index
    %363 = vector.load %arg59[%c0_237, %c0_238] : memref<1x256xf32, #tpu.memory_space<vmem>>, vector<1x256xf32>
    %364 = vector.broadcast %363 : vector<1x256xf32> to vector<4x256xf32>
    %365 = arith.addf %362, %364 : vector<4x256xf32>
    %cst_239 = arith.constant 0.000000e+00 : f32
    %366 = vector.broadcast %cst_239 : f32 to vector<4x256xf32>
    %367 = arith.cmpf ogt, %365, %366 : vector<4x256xf32>
    %cst_240 = arith.constant 2.000000e-01 : f32
    %368 = vector.broadcast %cst_240 : f32 to vector<4x256xf32>
    %369 = arith.mulf %368, %365 : vector<4x256xf32>
    %370 = arith.select %367, %365, %369 : vector<4x256xi1>, vector<4x256xf32>
    %371 = arith.truncf %370 : vector<4x256xf32> to vector<4x256xbf16>
    %c0_241 = arith.constant 0 : index
    %c0_242 = arith.constant 0 : index
    %372 = vector.load %arg60[%c0_241, %c0_242] : memref<256x1xbf16, #tpu.memory_space<vmem>>, vector<256x1xbf16>
    %cst_243 = arith.constant dense<0.000000e+00> : vector<4x1xf32>
    %373 = tpu.matmul %371, %372, %cst_243 {dimension_numbers = #tpu.dot_dimension_numbers<[1], [0], [0], [1], [0, 0, 1, 1], [], []>} : vector<4x256xbf16>, vector<256x1xbf16>, vector<4x1xf32> -> vector<4x1xf32>
    %c0_244 = arith.constant 0 : index
    %c0_245 = arith.constant 0 : index
    %374 = vector.load %arg61[%c0_244, %c0_245] : memref<1x1xf32, #tpu.memory_space<vmem>>, vector<1x1xf32>
    %375 = vector.broadcast %374 : vector<1x1xf32> to vector<4x1xf32>
    %376 = arith.addf %373, %375 : vector<4x1xf32>
    %cst_246 = arith.constant dense<0.000000e+00> : vector<4x512xf32>
    %377 = tpu.matmul %235, %276, %cst_246 {dimension_numbers = #tpu.dot_dimension_numbers<[1], [0], [0], [1], [0, 0, 1, 1], [], []>} : vector<4x2xf32>, vector<2x512xf32>, vector<4x512xf32> -> vector<4x512xf32>
    %cst_247 = arith.constant dense<0.000000e+00> : vector<4x1xf32>
    %378 = tpu.matmul %235, %304, %cst_247 {dimension_numbers = #tpu.dot_dimension_numbers<[1], [0], [0], [1], [0, 0, 1, 1], [], []>} : vector<4x2xf32>, vector<2x1xf32>, vector<4x1xf32> -> vector<4x1xf32>
    %379 = arith.mulf %377, %348 : vector<4x512xf32>
    %cst_248 = arith.constant dense<0.000000e+00> : vector<4xf32>
    %380 = vector.multi_reduction <add>, %379, %cst_248 [1] : vector<4x512xf32> to vector<4xf32>
    %381 = vector.shape_cast %380 : vector<4xf32> to vector<4x1xf32>
    %382 = arith.addf %381, %378 : vector<4x1xf32>
    %383 = arith.addf %382, %376 : vector<4x1xf32>
    %cst_249 = arith.constant dense<0.000000e+00> : vector<2x1xf32>
    %384 = tpu.matmul %233, %383, %cst_249 {dimension_numbers = #tpu.dot_dimension_numbers<[1], [0], [0], [1], [0, 0, 1, 1], [], []>} : vector<2x4xf32>, vector<4x1xf32>, vector<2x1xf32> -> vector<2x1xf32>
    %cst_250 = arith.constant dense<0.000000e+00> : vector<2x1xf32>
    %385 = tpu.matmul %234, %383, %cst_250 {dimension_numbers = #tpu.dot_dimension_numbers<[1], [0], [0], [1], [0, 0, 1, 1], [], []>} : vector<2x4xf32>, vector<4x1xf32>, vector<2x1xf32> -> vector<2x1xf32>
    %386 = arith.truncf %226 : vector<2x16xf32> to vector<2x16xbf16>
    %c0_251 = arith.constant 0 : index
    %c0_252 = arith.constant 0 : index
    %387 = vector.load %arg62[%c0_251, %c0_252] : memref<16x256xbf16, #tpu.memory_space<vmem>>, vector<16x256xbf16>
    %cst_253 = arith.constant dense<0.000000e+00> : vector<2x256xf32>
    %388 = tpu.matmul %386, %387, %cst_253 {dimension_numbers = #tpu.dot_dimension_numbers<[1], [0], [0], [1], [0, 0, 1, 1], [], []>} : vector<2x16xbf16>, vector<16x256xbf16>, vector<2x256xf32> -> vector<2x256xf32>
    %c0_254 = arith.constant 0 : index
    %c0_255 = arith.constant 0 : index
    %389 = vector.load %arg63[%c0_254, %c0_255] : memref<1x256xf32, #tpu.memory_space<vmem>>, vector<1x256xf32>
    %390 = vector.broadcast %389 : vector<1x256xf32> to vector<2x256xf32>
    %391 = arith.addf %388, %390 : vector<2x256xf32>
    %cst_256 = arith.constant 0.000000e+00 : f32
    %392 = vector.broadcast %cst_256 : f32 to vector<2x256xf32>
    %393 = arith.cmpf ogt, %391, %392 : vector<2x256xf32>
    %cst_257 = arith.constant 2.000000e-01 : f32
    %394 = vector.broadcast %cst_257 : f32 to vector<2x256xf32>
    %395 = arith.mulf %394, %391 : vector<2x256xf32>
    %396 = arith.select %393, %391, %395 : vector<2x256xi1>, vector<2x256xf32>
    %397 = arith.truncf %396 : vector<2x256xf32> to vector<2x256xbf16>
    %c0_258 = arith.constant 0 : index
    %c0_259 = arith.constant 0 : index
    %398 = vector.load %arg64[%c0_258, %c0_259] : memref<256x256xbf16, #tpu.memory_space<vmem>>, vector<256x256xbf16>
    %cst_260 = arith.constant dense<0.000000e+00> : vector<2x256xf32>
    %399 = tpu.matmul %397, %398, %cst_260 {dimension_numbers = #tpu.dot_dimension_numbers<[1], [0], [0], [1], [0, 0, 1, 1], [], []>} : vector<2x256xbf16>, vector<256x256xbf16>, vector<2x256xf32> -> vector<2x256xf32>
    %c0_261 = arith.constant 0 : index
    %c0_262 = arith.constant 0 : index
    %400 = vector.load %arg65[%c0_261, %c0_262] : memref<1x256xf32, #tpu.memory_space<vmem>>, vector<1x256xf32>
    %401 = vector.broadcast %400 : vector<1x256xf32> to vector<2x256xf32>
    %402 = arith.addf %399, %401 : vector<2x256xf32>
    %cst_263 = arith.constant 0.000000e+00 : f32
    %403 = vector.broadcast %cst_263 : f32 to vector<2x256xf32>
    %404 = arith.cmpf ogt, %402, %403 : vector<2x256xf32>
    %cst_264 = arith.constant 2.000000e-01 : f32
    %405 = vector.broadcast %cst_264 : f32 to vector<2x256xf32>
    %406 = arith.mulf %405, %402 : vector<2x256xf32>
    %407 = arith.select %404, %402, %406 : vector<2x256xi1>, vector<2x256xf32>
    %408 = arith.truncf %407 : vector<2x256xf32> to vector<2x256xbf16>
    %c0_265 = arith.constant 0 : index
    %c0_266 = arith.constant 0 : index
    %409 = vector.load %arg66[%c0_265, %c0_266] : memref<256x256xbf16, #tpu.memory_space<vmem>>, vector<256x256xbf16>
    %cst_267 = arith.constant dense<0.000000e+00> : vector<2x256xf32>
    %410 = tpu.matmul %408, %409, %cst_267 {dimension_numbers = #tpu.dot_dimension_numbers<[1], [0], [0], [1], [0, 0, 1, 1], [], []>} : vector<2x256xbf16>, vector<256x256xbf16>, vector<2x256xf32> -> vector<2x256xf32>
    %c0_268 = arith.constant 0 : index
    %c0_269 = arith.constant 0 : index
    %411 = vector.load %arg67[%c0_268, %c0_269] : memref<1x256xf32, #tpu.memory_space<vmem>>, vector<1x256xf32>
    %412 = vector.broadcast %411 : vector<1x256xf32> to vector<2x256xf32>
    %413 = arith.addf %410, %412 : vector<2x256xf32>
    %cst_270 = arith.constant 0.000000e+00 : f32
    %414 = vector.broadcast %cst_270 : f32 to vector<2x256xf32>
    %415 = arith.subf %414, %413 : vector<2x256xf32>
    %416 = math.exp %415 : vector<2x256xf32>
    %cst_271 = arith.constant 1.000000e+00 : f32
    %417 = vector.broadcast %cst_271 : f32 to vector<2x256xf32>
    %418 = arith.addf %417, %416 : vector<2x256xf32>
    %cst_272 = arith.constant 1.000000e+00 : f32
    %419 = vector.broadcast %cst_272 : f32 to vector<2x256xf32>
    %420 = arith.divf %419, %418 : vector<2x256xf32>
    %421 = arith.subf %0, %420 : vector<2x256xf32>
    %422 = arith.mulf %421, %421 : vector<2x256xf32>
    %cst_273 = arith.constant 1.83787704 : f32
    %423 = vector.broadcast %cst_273 : f32 to vector<2x256xf32>
    %424 = arith.addf %422, %423 : vector<2x256xf32>
    %cst_274 = arith.constant dense<0.000000e+00> : vector<2xf32>
    %425 = vector.multi_reduction <add>, %424, %cst_274 [1] : vector<2x256xf32> to vector<2xf32>
    %426 = vector.shape_cast %425 : vector<2xf32> to vector<2x1xf32>
    %cst_275 = arith.constant 5.000000e-01 : f32
    %427 = vector.broadcast %cst_275 : f32 to vector<2x1xf32>
    %428 = arith.mulf %427, %426 : vector<2x1xf32>
    %cst_276 = arith.constant 9.99999997E-7 : f32
    %429 = vector.broadcast %cst_276 : f32 to vector<2x16xf32>
    %430 = arith.maximumf %230, %429 : vector<2x16xf32>
    %431 = arith.subf %226, %228 : vector<2x16xf32>
    %432 = arith.mulf %431, %431 : vector<2x16xf32>
    %433 = arith.divf %432, %430 : vector<2x16xf32>
    %434 = math.log %430 : vector<2x16xf32>
    %435 = arith.addf %433, %434 : vector<2x16xf32>
    %cst_277 = arith.constant 1.83787704 : f32
    %436 = vector.broadcast %cst_277 : f32 to vector<2x16xf32>
    %437 = arith.addf %435, %436 : vector<2x16xf32>
    %cst_278 = arith.constant dense<0.000000e+00> : vector<2xf32>
    %438 = vector.multi_reduction <add>, %437, %cst_278 [1] : vector<2x16xf32> to vector<2xf32>
    %439 = vector.shape_cast %438 : vector<2xf32> to vector<2x1xf32>
    %cst_279 = arith.constant 5.000000e-01 : f32
    %440 = vector.broadcast %cst_279 : f32 to vector<2x1xf32>
    %441 = arith.mulf %440, %439 : vector<2x1xf32>
    %442 = arith.addf %384, %441 : vector<2x1xf32>
    %cst_280 = arith.constant 0.000000e+00 : f32
    %443 = vector.broadcast %cst_280 : f32 to vector<2x1xf32>
    %444 = arith.subf %443, %384 : vector<2x1xf32>
    %cst_281 = arith.constant 0.000000e+00 : f32
    %445 = vector.broadcast %cst_281 : f32 to vector<2x1xf32>
    %446 = arith.maximumf %444, %445 : vector<2x1xf32>
    %447 = math.absf %444 : vector<2x1xf32>
    %cst_282 = arith.constant 0.000000e+00 : f32
    %448 = vector.broadcast %cst_282 : f32 to vector<2x1xf32>
    %449 = arith.subf %448, %447 : vector<2x1xf32>
    %450 = math.exp %449 : vector<2x1xf32>
    %cst_283 = arith.constant 1.000000e+00 : f32
    %451 = vector.broadcast %cst_283 : f32 to vector<2x1xf32>
    %452 = arith.addf %451, %450 : vector<2x1xf32>
    %453 = math.log %452 : vector<2x1xf32>
    %454 = arith.addf %446, %453 : vector<2x1xf32>
    %cst_284 = arith.constant dense<0.000000e+00> : vector<1xf32>
    %455 = vector.multi_reduction <add>, %454, %cst_284 [0] : vector<2x1xf32> to vector<1xf32>
    %456 = vector.shape_cast %455 : vector<1xf32> to vector<1x1xf32>
    %cst_285 = arith.constant 2.000000e+00 : f32
    %457 = vector.broadcast %cst_285 : f32 to vector<1x1xf32>
    %458 = arith.divf %456, %457 : vector<1x1xf32>
    %cst_286 = arith.constant 0.000000e+00 : f32
    %459 = vector.broadcast %cst_286 : f32 to vector<2x1xf32>
    %460 = arith.maximumf %385, %459 : vector<2x1xf32>
    %461 = math.absf %385 : vector<2x1xf32>
    %cst_287 = arith.constant 0.000000e+00 : f32
    %462 = vector.broadcast %cst_287 : f32 to vector<2x1xf32>
    %463 = arith.subf %462, %461 : vector<2x1xf32>
    %464 = math.exp %463 : vector<2x1xf32>
    %cst_288 = arith.constant 1.000000e+00 : f32
    %465 = vector.broadcast %cst_288 : f32 to vector<2x1xf32>
    %466 = arith.addf %465, %464 : vector<2x1xf32>
    %467 = math.log %466 : vector<2x1xf32>
    %468 = arith.addf %460, %467 : vector<2x1xf32>
    %cst_289 = arith.constant dense<0.000000e+00> : vector<1xf32>
    %469 = vector.multi_reduction <add>, %468, %cst_289 [0] : vector<2x1xf32> to vector<1xf32>
    %470 = vector.shape_cast %469 : vector<1xf32> to vector<1x1xf32>
    %cst_290 = arith.constant 2.000000e+00 : f32
    %471 = vector.broadcast %cst_290 : f32 to vector<1x1xf32>
    %472 = arith.divf %470, %471 : vector<1x1xf32>
    %473 = arith.addf %458, %472 : vector<1x1xf32>
    %c0_291 = arith.constant 0 : index
    %c0_292 = arith.constant 0 : index
    %474 = vector.load %arg68[%c0_291, %c0_292] : memref<2x256xf32, #tpu.memory_space<vmem>>, vector<2x256xf32>
    tpu.vector_store %arg68[%c0_291, %c0_292], %420 {strides = array<i32>} : memref<2x256xf32, #tpu.memory_space<vmem>>, vector<2x256xf32>,
    %c0_293 = arith.constant 0 : index
    %c0_294 = arith.constant 0 : index
    %475 = vector.load %arg69[%c0_293, %c0_294] : memref<2x1xf32, #tpu.memory_space<vmem>>, vector<2x1xf32>
    tpu.vector_store %arg69[%c0_293, %c0_294], %428 {strides = array<i32>} : memref<2x1xf32, #tpu.memory_space<vmem>>, vector<2x1xf32>,
    %c0_295 = arith.constant 0 : index
    %c0_296 = arith.constant 0 : index
    %476 = vector.load %arg70[%c0_295, %c0_296] : memref<2x1xf32, #tpu.memory_space<vmem>>, vector<2x1xf32>
    tpu.vector_store %arg70[%c0_295, %c0_296], %442 {strides = array<i32>} : memref<2x1xf32, #tpu.memory_space<vmem>>, vector<2x1xf32>,
    %c0_297 = arith.constant 0 : index
    %c0_298 = arith.constant 0 : index
    %477 = vector.load %arg71[%c0_297, %c0_298] : memref<1x1xf32, #tpu.memory_space<vmem>>, vector<1x1xf32>
    tpu.vector_store %arg71[%c0_297, %c0_298], %473 {strides = array<i32>} : memref<1x1xf32, #tpu.memory_space<vmem>>, vector<1x1xf32>,
    return
  }
}

</mosaic_0001>

<llo_original>
// kernel: mnist_avae_forward.1
$region0: #{mnist_avae_forward.1}
  #allocation0 [shape = 'u32[]', space=smem, size = 0x4, offset = 0x4, fixed_abs, tag = 'smem constant byte address 0x4 - core index']
  #allocation1 [shape = 'u32[144,128]{1,0:T(1,128)}', space=vmem, size = 0x12000, scoped, tag = 'internal scratch']
  #allocation2 [shape = 'f32[1,1]{1,0:T(1,128)S(1)}', space=vmem, size = 0x200, scoped, tag = 'scoped memory for mnist_avae_forward.1']
  #allocation3 [shape = 'f32[1,1]{1,0:T(1,128)S(1)}', space=vmem, size = 0x200, scoped, tag = 'scoped memory for mnist_avae_forward.1']
  %s0 = inlined_call_operand.smem [shape: u32[72], index: -1, kind: input, shape index: {}]
  %s1 = sld [smem:[%s0]]
  %s2 = scalar_lea.smem %s0, 1
  %s3 = sld [smem:[%s2]]
  %s4 = scalar_lea.smem %s0, 2
  %s5 = sld [smem:[%s4]]
  %s6 = scalar_lea.smem %s0, 3
  %s7 = sld [smem:[%s6]]
  %s8 = scalar_lea.smem %s0, 4
  %s9 = sld [smem:[%s8]]
  %s10 = scalar_lea.smem %s0, 5
  %s11 = sld [smem:[%s10]]
  %s12 = scalar_lea.smem %s0, 6
  %s13 = sld [smem:[%s12]]
  %s14 = scalar_lea.smem %s0, 7
  %s15 = sld [smem:[%s14]]
  %s16 = scalar_lea.smem %s0, 8
  %s17 = sld [smem:[%s16]]
  %s18 = scalar_lea.smem %s0, 9
  %s19 = sld [smem:[%s18]]
  %s20 = scalar_lea.smem %s0, 10
  %s21 = sld [smem:[%s20]]
  %s22 = scalar_lea.smem %s0, 11
  %s23 = sld [smem:[%s22]]
  %s24 = scalar_lea.smem %s0, 12
  %s25 = sld [smem:[%s24]]
  %s26 = scalar_lea.smem %s0, 13
  %s27 = sld [smem:[%s26]]
  %s28 = scalar_lea.smem %s0, 14
  %s29 = sld [smem:[%s28]]
  %s30 = scalar_lea.smem %s0, 15
  %s31 = sld [smem:[%s30]]
  %s32 = scalar_lea.smem %s0, 16
  %s33 = sld [smem:[%s32]]
  %s34 = scalar_lea.smem %s0, 17
  %s35 = sld [smem:[%s34]]
  %s36 = scalar_lea.smem %s0, 18
  %s37 = sld [smem:[%s36]]
  %s38 = scalar_lea.smem %s0, 19
  %s39 = sld [smem:[%s38]]
  %s40 = scalar_lea.smem %s0, 20
  %s41 = sld [smem:[%s40]]
  %s42 = scalar_lea.smem %s0, 21
  %s43 = sld [smem:[%s42]]
  %s44 = scalar_lea.smem %s0, 22
  %s45 = sld [smem:[%s44]]
  %s46 = scalar_lea.smem %s0, 23
  %s47 = sld [smem:[%s46]]
  %s48 = scalar_lea.smem %s0, 24
  %s49 = sld [smem:[%s48]]
  %s50 = scalar_lea.smem %s0, 25
  %s51 = sld [smem:[%s50]]
  %s52 = scalar_lea.smem %s0, 26
  %s53 = sld [smem:[%s52]]
  %s54 = scalar_lea.smem %s0, 27
  %s55 = sld [smem:[%s54]]
  %s56 = scalar_lea.smem %s0, 28
  %s57 = sld [smem:[%s56]]
  %s58 = scalar_lea.smem %s0, 29
  %s59 = sld [smem:[%s58]]
  %s60 = scalar_lea.smem %s0, 30
  %s61 = sld [smem:[%s60]]
  %s62 = scalar_lea.smem %s0, 31
  %s63 = sld [smem:[%s62]]
  %s64 = scalar_lea.smem %s0, 32
  %s65 = sld [smem:[%s64]]
  %s66 = scalar_lea.smem %s0, 33
  %s67 = sld [smem:[%s66]]
  %s68 = scalar_lea.smem %s0, 34
  %s69 = sld [smem:[%s68]]
  %s70 = scalar_lea.smem %s0, 35
  %s71 = sld [smem:[%s70]]
  %s72 = scalar_lea.smem %s0, 36
  %s73 = sld [smem:[%s72]]
  %s74 = scalar_lea.smem %s0, 37
  %s75 = sld [smem:[%s74]]
  %s76 = scalar_lea.smem %s0, 38
  %s77 = sld [smem:[%s76]]
  %s78 = scalar_lea.smem %s0, 39
  %s79 = sld [smem:[%s78]]
  %s80 = scalar_lea.smem %s0, 40
  %s81 = sld [smem:[%s80]]
  %s82 = scalar_lea.smem %s0, 41
  %s83 = sld [smem:[%s82]]
  %s84 = scalar_lea.smem %s0, 42
  %s85 = sld [smem:[%s84]]
  %s86 = scalar_lea.smem %s0, 43
  %s87 = sld [smem:[%s86]]
  %s88 = scalar_lea.smem %s0, 44
  %s89 = sld [smem:[%s88]]
  %s90 = scalar_lea.smem %s0, 45
  %s91 = sld [smem:[%s90]]
  %s92 = scalar_lea.smem %s0, 46
  %s93 = sld [smem:[%s92]]
  %s94 = scalar_lea.smem %s0, 47
  %s95 = sld [smem:[%s94]]
  %s96 = scalar_lea.smem %s0, 48
  %s97 = sld [smem:[%s96]]
  %s98 = scalar_lea.smem %s0, 49
  %s99 = sld [smem:[%s98]]
  %s100 = scalar_lea.smem %s0, 50
  %s101 = sld [smem:[%s100]]
  %s102 = scalar_lea.smem %s0, 51
  %s103 = sld [smem:[%s102]]
  %s104 = scalar_lea.smem %s0, 52
  %s105 = sld [smem:[%s104]]
  %s106 = scalar_lea.smem %s0, 53
  %s107 = sld [smem:[%s106]]
  %s108 = scalar_lea.smem %s0, 54
  %s109 = sld [smem:[%s108]]
  %s110 = scalar_lea.smem %s0, 55
  %s111 = sld [smem:[%s110]]
  %s112 = scalar_lea.smem %s0, 56
  %s113 = sld [smem:[%s112]]
  %s114 = scalar_lea.smem %s0, 57
  %s115 = sld [smem:[%s114]]
  %s116 = scalar_lea.smem %s0, 58
  %s117 = sld [smem:[%s116]]
  %s118 = scalar_lea.smem %s0, 59
  %s119 = sld [smem:[%s118]]
  %s120 = scalar_lea.smem %s0, 60
  %s121 = sld [smem:[%s120]]
  %s122 = scalar_lea.smem %s0, 61
  %s123 = sld [smem:[%s122]]
  %s124 = scalar_lea.smem %s0, 62
  %s125 = sld [smem:[%s124]]
  %s126 = scalar_lea.smem %s0, 63
  %s127 = sld [smem:[%s126]]
  %s128 = scalar_lea.smem %s0, 64
  %s129 = sld [smem:[%s128]]
  %s130 = scalar_lea.smem %s0, 65
  %s131 = sld [smem:[%s130]]
  %s132 = scalar_lea.smem %s0, 66
  %s133 = sld [smem:[%s132]]
  %s134 = scalar_lea.smem %s0, 67
  %s135 = sld [smem:[%s134]]
  %s136 = scalar_lea.smem %s0, 68
  %s137 = sld [smem:[%s136]]
  %s138 = scalar_lea.smem %s0, 69
  %s139 = sld [smem:[%s138]]
  %s140 = scalar_lea.smem %s0, 70
  %s141 = sld [smem:[%s140]]
  %s142 = scalar_lea.smem %s0, 71
  %s143 = sld [smem:[%s142]]
  %144 = xla_tuple %s137, %s139, %s141, %s143
  %s145 = sld [smem:[#allocation0]]
  $region442: #{mnist_avae_forward.1} parent=0
    _
  %s147 = ssub.s32 1, %s145
  %s148 = scalar_select 0, %s147, %s145
  %v149 = vstv %s95
  %150 = vst [vmem:[#allocation2] sm:$0x1] %v149
  %v151 = vstv %s123
  %152 = vst [vmem:[#allocation3] sm:$0x1] %v151
  $region1: #{mnist_avae_forward.1} parent=0
    #allocation4 [shape = 'u8[2048]{0}', space=vmem, size = 0x800, scoped, tag = 'input window, operand 4, single buffered']
    #allocation5 [shape = 's32[1]{0}', space=sflag, size = 0x4, scoped, tag = 'scoped memory for mnist_avae_forward.1']
    #allocation6 [shape = 's32[1]{0}', space=sflag, size = 0x4, scoped, tag = 'scoped memory for mnist_avae_forward.1']
    #allocation7 [shape = 'u8[16384]{0}', space=vmem, size = 0x4000, scoped, tag = 'input window, operand 6, single buffered']
    #allocation8 [shape = 's32[1]{0}', space=sflag, size = 0x4, scoped, tag = 'scoped memory for mnist_avae_forward.1']
    #allocation9 [shape = 'u8[1024]{0}', space=vmem, size = 0x400, scoped, tag = 'input window, operand 8, single buffered']
    #allocation10 [shape = 'u8[16384]{0}', space=vmem, size = 0x4000, scoped, tag = 'input window, operand 10, single buffered']
    #allocation11 [shape = 's32[1]{0}', space=sflag, size = 0x4, scoped, tag = 'scoped memory for mnist_avae_forward.1']
    #allocation12 [shape = 'u8[65536]{0}', space=vmem, size = 0x10000, scoped, tag = 'input window, operand 11, single buffered']
    #allocation13 [shape = 'u8[16384]{0}', space=vmem, size = 0x4000, scoped, tag = 'input window, operand 14, single buffered']
    #allocation14 [shape = 's32[1]{0}', space=sflag, size = 0x4, scoped, tag = 'scoped memory for mnist_avae_forward.1']
    #allocation15 [shape = 'u8[512]{0}', space=vmem, size = 0x400, scoped, tag = 'input window, operand 16, single buffered']
    #allocation16 [shape = 'u8[512]{0}', space=vmem, size = 0x400, scoped, tag = 'input window, operand 20, single buffered']
    #allocation17 [shape = 's32[1]{0}', space=sflag, size = 0x4, scoped, tag = 'scoped memory for mnist_avae_forward.1']
    #allocation18 [shape = 'u8[512]{0}', space=vmem, size = 0x400, scoped, tag = 'input window, operand 22, single buffered']
    #allocation19 [shape = 'u8[8192]{0}', space=vmem, size = 0x2000, scoped, tag = 'input window, operand 23, single buffered']
    #allocation20 [shape = 's32[1]{0}', space=sflag, size = 0x4, scoped, tag = 'scoped memory for mnist_avae_forward.1']
    #allocation21 [shape = 'u8[512]{0}', space=vmem, size = 0x400, scoped, tag = 'input window, operand 24, single buffered']
    #allocation22 [shape = 'u8[32768]{0}', space=vmem, size = 0x8000, scoped, tag = 'input window, operand 25, single buffered']
    #allocation23 [shape = 's32[1]{0}', space=sflag, size = 0x4, scoped, tag = 'scoped memory for mnist_avae_forward.1']
    #allocation24 [shape = 'u8[512]{0}', space=vmem, size = 0x400, scoped, tag = 'input window, operand 26, single buffered']
    #allocation25 [shape = 'u8[512]{0}', space=vmem, size = 0x400, scoped, tag = 'input window, operand 28, single buffered']
    #allocation26 [shape = 's32[1]{0}', space=sflag, size = 0x4, scoped, tag = 'scoped memory for mnist_avae_forward.1']
    #allocation27 [shape = 'u8[1024]{0}', space=vmem, size = 0x400, scoped, tag = 'input window, operand 29, single buffered']
    #allocation28 [shape = 'u8[1024]{0}', space=vmem, size = 0x400, scoped, tag = 'input window, operand 32, single buffered']
    #allocation29 [shape = 's32[1]{0}', space=sflag, size = 0x4, scoped, tag = 'scoped memory for mnist_avae_forward.1']
    #allocation30 [shape = 'u8[1024]{0}', space=vmem, size = 0x400, scoped, tag = 'input window, operand 33, single buffered']
    #allocation31 [shape = 'u8[2048]{0}', space=vmem, size = 0x800, scoped, tag = 'input window, operand 35, single buffered']
    #allocation32 [shape = 's32[1]{0}', space=sflag, size = 0x4, scoped, tag = 'scoped memory for mnist_avae_forward.1']
    #allocation33 [shape = 'u8[131072]{0}', space=vmem, size = 0x20000, scoped, tag = 'input window, operand 36, single buffered']
    #allocation34 [shape = 'u8[1024]{0}', space=vmem, size = 0x400, scoped, tag = 'input window, operand 37, single buffered']
    #allocation35 [shape = 's32[1]{0}', space=sflag, size = 0x4, scoped, tag = 'scoped memory for mnist_avae_forward.1']
    #allocation36 [shape = 'u8[131072]{0}', space=vmem, size = 0x20000, scoped, tag = 'input window, operand 38, single buffered']
    #allocation37 [shape = 'u8[1024]{0}', space=vmem, size = 0x400, scoped, tag = 'input window, operand 39, single buffered']
    #allocation38 [shape = 's32[1]{0}', space=sflag, size = 0x4, scoped, tag = 'scoped memory for mnist_avae_forward.1']
    #allocation39 [shape = 'u8[262144]{0}', space=vmem, size = 0x40000, scoped, tag = 'input window, operand 40, single buffered']
    #allocation40 [shape = 'u8[131072]{0}', space=vmem, size = 0x20000, scoped, tag = 'input window, operand 42, single buffered']
    #allocation41 [shape = 's32[1]{0}', space=sflag, size = 0x4, scoped, tag = 'scoped memory for mnist_avae_forward.1']
    #allocation42 [shape = 'u8[1024]{0}', space=vmem, size = 0x400, scoped, tag = 'input window, operand 43, single buffered']
    #allocation43 [shape = 'u8[131072]{0}', space=vmem, size = 0x20000, scoped, tag = 'input window, operand 44, single buffered']
    #allocation44 [shape = 's32[1]{0}', space=sflag, size = 0x4, scoped, tag = 'scoped memory for mnist_avae_forward.1']
    #allocation45 [shape = 'u8[1024]{0}', space=vmem, size = 0x400, scoped, tag = 'input window, operand 45, single buffered']
    #allocation46 [shape = 'u8[131072]{0}', space=vmem, size = 0x20000, scoped, tag = 'input window, operand 50, single buffered']
    #allocation47 [shape = 's32[1]{0}', space=sflag, size = 0x4, scoped, tag = 'scoped memory for mnist_avae_forward.1']
    #allocation48 [shape = 'u8[131072]{0}', space=vmem, size = 0x20000, scoped, tag = 'input window, operand 52, single buffered']
    #allocation49 [shape = 'u8[262144]{0}', space=vmem, size = 0x40000, scoped, tag = 'input window, operand 54, single buffered']
    #allocation50 [shape = 's32[1]{0}', space=sflag, size = 0x4, scoped, tag = 'scoped memory for mnist_avae_forward.1']
    #allocation51 [shape = 'u8[131072]{0}', space=vmem, size = 0x20000, scoped, tag = 'input window, operand 56, single buffered']
    #allocation52 [shape = 'u8[131072]{0}', space=vmem, size = 0x20000, scoped, tag = 'input window, operand 58, single buffered']
    #allocation53 [shape = 's32[1]{0}', space=sflag, size = 0x4, scoped, tag = 'scoped memory for mnist_avae_forward.1']
    #allocation54 [shape = 'u8[131072]{0}', space=vmem, size = 0x20000, scoped, tag = 'input window, operand 64, single buffered']
    #allocation55 [shape = 'u8[131072]{0}', space=vmem, size = 0x20000, scoped, tag = 'input window, operand 66, single buffered']
    #allocation56 [shape = 's32[1]{0}', space=sflag, size = 0x4, scoped, tag = 'scoped memory for mnist_avae_forward.1']
    #allocation57 [shape = 'u8[512]{0}', space=vmem, size = 0x400, scoped, tag = 'output window, operand 3, single buffered']
    %153 = vsyncpa [#allocation5], 0
    %154 = vsyncpa [#allocation8], 0
    %155 = vsyncpa [#allocation11], 0
    %156 = vsyncpa [#allocation14], 0
    %157 = vsyncpa [#allocation17], 0
    %158 = vsyncpa [#allocation20], 0
    %159 = vsyncpa [#allocation23], 0
    %160 = vsyncpa [#allocation26], 0
    %161 = vsyncpa [#allocation29], 0
    %162 = vsyncpa [#allocation32], 0
    %163 = vsyncpa [#allocation35], 0
    %164 = vsyncpa [#allocation38], 0
    %165 = vsyncpa [#allocation41], 0
    %166 = vsyncpa [#allocation44], 0
    %167 = vsyncpa [#allocation47], 0
    %168 = vsyncpa [#allocation50], 0
    %169 = vsyncpa [#allocation53], 0
    %170 = vsyncpa [#allocation56], 0
    %171 = vsyncpa [#allocation6], 0
    // Predicated region
    $region2: #{mnist_avae_forward.1} parent=1 // pred_check
      _
    $region3: #{mnist_avae_forward.1} parent=1 // pred_check_branch
      %173 = sbr.rel (0) target = $region5
    $region4: #{mnist_avae_forward.1} parent=1 // pred_region
      _
    $region5: #{mnist_avae_forward.1} parent=1 // pred_fallthru
      _
    // Predicated region
    $region6: #{mnist_avae_forward.1} parent=1 // pred_check
      _
    $region7: #{mnist_avae_forward.1} parent=1 // pred_check_branch
      %175 = sbr.rel (0) target = $region9
    $region8: #{mnist_avae_forward.1} parent=1 // pred_region
      _
    $region9: #{mnist_avae_forward.1} parent=1 // pred_fallthru
      _
    // Predicated region
    $region10: #{mnist_avae_forward.1} parent=1 // pred_check
      _
    $region11: #{mnist_avae_forward.1} parent=1 // pred_check_branch
      %177 = sbr.rel (0) target = $region13
    $region12: #{mnist_avae_forward.1} parent=1 // pred_region
      _
    $region13: #{mnist_avae_forward.1} parent=1 // pred_fallthru
      _
    // Predicated region
    $region14: #{mnist_avae_forward.1} parent=1 // pred_check
      _
    $region15: #{mnist_avae_forward.1} parent=1 // pred_check_branch
      %179 = sbr.rel (0) target = $region17
    $region16: #{mnist_avae_forward.1} parent=1 // pred_region
      _
    $region17: #{mnist_avae_forward.1} parent=1 // pred_fallthru
      _
    // Predicated region
    $region18: #{mnist_avae_forward.1} parent=1 // pred_check
      _
    $region19: #{mnist_avae_forward.1} parent=1 // pred_check_branch
      %181 = sbr.rel (0) target = $region21
    $region20: #{mnist_avae_forward.1} parent=1 // pred_region
      %s183 = ssub.s32 64, 64
      %184 = vsyncadd [#allocation5], %s183
      %s186 = sshll.u32 [#allocation4], 4
      %s187 = int_to_ptr.vmem [resolvable:$true] %s186
      %189 = dma.hbm_to_vmem [thread:$0]  %s9, 64, %s187, [#allocation5]
    $region21: #{mnist_avae_forward.1} parent=1 // pred_fallthru
      _
    // Predicated region
    $region22: #{mnist_avae_forward.1} parent=1 // pred_check
      _
    $region23: #{mnist_avae_forward.1} parent=1 // pred_check_branch
      %191 = sbr.rel (0) target = $region25
    $region24: #{mnist_avae_forward.1} parent=1 // pred_region
      _
    $region25: #{mnist_avae_forward.1} parent=1 // pred_fallthru
      _
    // Predicated region
    $region26: #{mnist_avae_forward.1} parent=1 // pred_check
      _
    $region27: #{mnist_avae_forward.1} parent=1 // pred_check_branch
      %193 = sbr.rel (0) target = $region29
    $region28: #{mnist_avae_forward.1} parent=1 // pred_region
      %s195 = ssub.s32 512, 512
      %196 = vsyncadd [#allocation8], %s195
      %s198 = sshll.u32 [#allocation7], 4
      %s199 = int_to_ptr.vmem [resolvable:$true] %s198
      %201 = dma.hbm_to_vmem [thread:$0]  %s13, 512, %s199, [#allocation8]
    $region29: #{mnist_avae_forward.1} parent=1 // pred_fallthru
      _
    // Predicated region
    $region30: #{mnist_avae_forward.1} parent=1 // pred_check
      _
    $region31: #{mnist_avae_forward.1} parent=1 // pred_check_branch
      %203 = sbr.rel (0) target = $region33
    $region32: #{mnist_avae_forward.1} parent=1 // pred_region
      _
    $region33: #{mnist_avae_forward.1} parent=1 // pred_fallthru
      _
    // Predicated region
    $region34: #{mnist_avae_forward.1} parent=1 // pred_check
      _
    $region35: #{mnist_avae_forward.1} parent=1 // pred_check_branch
      %205 = sbr.rel (0) target = $region37
    $region36: #{mnist_avae_forward.1} parent=1 // pred_region
      %s207 = ssub.s32 32, 32
      %208 = vsyncadd [#allocation8], %s207
      %s210 = sshll.u32 [#allocation9], 4
      %s211 = int_to_ptr.vmem [resolvable:$true] %s210
      %213 = dma.hbm_to_vmem [thread:$0]  %s17, 32, %s211, [#allocation8]
    $region37: #{mnist_avae_forward.1} parent=1 // pred_fallthru
      _
    // Predicated region
    $region38: #{mnist_avae_forward.1} parent=1 // pred_check
      _
    $region39: #{mnist_avae_forward.1} parent=1 // pred_check_branch
      %215 = sbr.rel (0) target = $region41
    $region40: #{mnist_avae_forward.1} parent=1 // pred_region
      _
    $region41: #{mnist_avae_forward.1} parent=1 // pred_fallthru
      _
    // Predicated region
    $region42: #{mnist_avae_forward.1} parent=1 // pred_check
      _
    $region43: #{mnist_avae_forward.1} parent=1 // pred_check_branch
      %217 = sbr.rel (0) target = $region45
    $region44: #{mnist_avae_forward.1} parent=1 // pred_region
      %s219 = ssub.s32 512, 512
      %220 = vsyncadd [#allocation11], %s219
      %s221 = sshll.u32 [#allocation10], 4
      %s222 = int_to_ptr.vmem [resolvable:$true] %s221
      %227 = dma.hbm_to_vmem [thread:$0]  %s21, 512, %s222, [#allocation11], 256, 256, 16
    $region45: #{mnist_avae_forward.1} parent=1 // pred_fallthru
      _
    // Predicated region
    $region46: #{mnist_avae_forward.1} parent=1 // pred_check
      _
    $region47: #{mnist_avae_forward.1} parent=1 // pred_check_branch
      %229 = sbr.rel (0) target = $region49
    $region48: #{mnist_avae_forward.1} parent=1 // pred_region
      %s231 = ssub.s32 2048, 2048
      %232 = vsyncadd [#allocation11], %s231
      %s233 = sshll.u32 [#allocation12], 4
      %s234 = int_to_ptr.vmem [resolvable:$true] %s233
      %239 = dma.hbm_to_vmem [thread:$0]  %s23, 2048, %s234, [#allocation11], 64, 64, 4
    $region49: #{mnist_avae_forward.1} parent=1 // pred_fallthru
      _
    // Predicated region
    $region50: #{mnist_avae_forward.1} parent=1 // pred_check
      _
    $region51: #{mnist_avae_forward.1} parent=1 // pred_check_branch
      %241 = sbr.rel (0) target = $region53
    $region52: #{mnist_avae_forward.1} parent=1 // pred_region
      _
    $region53: #{mnist_avae_forward.1} parent=1 // pred_fallthru
      _
    // Predicated region
    $region54: #{mnist_avae_forward.1} parent=1 // pred_check
      _
    $region55: #{mnist_avae_forward.1} parent=1 // pred_check_branch
      %243 = sbr.rel (0) target = $region57
    $region56: #{mnist_avae_forward.1} parent=1 // pred_region
      _
    $region57: #{mnist_avae_forward.1} parent=1 // pred_fallthru
      _
    // Predicated region
    $region58: #{mnist_avae_forward.1} parent=1 // pred_check
      _
    $region59: #{mnist_avae_forward.1} parent=1 // pred_check_branch
      %245 = sbr.rel (0) target = $region61
    $region60: #{mnist_avae_forward.1} parent=1 // pred_region
      %s247 = ssub.s32 512, 512
      %248 = vsyncadd [#allocation14], %s247
      %s249 = sshll.u32 [#allocation13], 4
      %s250 = int_to_ptr.vmem [resolvable:$true] %s249
      %255 = dma.hbm_to_vmem [thread:$0]  %s29, 512, %s250, [#allocation14], 128, 128, 8
    $region61: #{mnist_avae_forward.1} parent=1 // pred_fallthru
      _
    // Predicated region
    $region62: #{mnist_avae_forward.1} parent=1 // pred_check
      _
    $region63: #{mnist_avae_forward.1} parent=1 // pred_check_branch
      %257 = sbr.rel (0) target = $region65
    $region64: #{mnist_avae_forward.1} parent=1 // pred_region
      _
    $region65: #{mnist_avae_forward.1} parent=1 // pred_fallthru
      _
    // Predicated region
    $region66: #{mnist_avae_forward.1} parent=1 // pred_check
      _
    $region67: #{mnist_avae_forward.1} parent=1 // pred_check_branch
      %259 = sbr.rel (0) target = $region69
    $region68: #{mnist_avae_forward.1} parent=1 // pred_region
      %s261 = ssub.s32 16, 16
      %262 = vsyncadd [#allocation14], %s261
      %s264 = sshll.u32 [#allocation15], 4
      %s265 = int_to_ptr.vmem [resolvable:$true] %s264
      %267 = dma.hbm_to_vmem [thread:$0]  %s33, 16, %s265, [#allocation14]
    $region69: #{mnist_avae_forward.1} parent=1 // pred_fallthru
      _
    // Predicated region
    $region70: #{mnist_avae_forward.1} parent=1 // pred_check
      _
    $region71: #{mnist_avae_forward.1} parent=1 // pred_check_branch
      %269 = sbr.rel (0) target = $region73
    $region72: #{mnist_avae_forward.1} parent=1 // pred_region
      _
    $region73: #{mnist_avae_forward.1} parent=1 // pred_fallthru
      _
    // Predicated region
    $region74: #{mnist_avae_forward.1} parent=1 // pred_check
      _
    $region75: #{mnist_avae_forward.1} parent=1 // pred_check_branch
      %271 = sbr.rel (0) target = $region77
    $region76: #{mnist_avae_forward.1} parent=1 // pred_region
      _
    $region77: #{mnist_avae_forward.1} parent=1 // pred_fallthru
      _
    // Predicated region
    $region78: #{mnist_avae_forward.1} parent=1 // pred_check
      _
    $region79: #{mnist_avae_forward.1} parent=1 // pred_check_branch
      %273 = sbr.rel (0) target = $region81
    $region80: #{mnist_avae_forward.1} parent=1 // pred_region
      _
    $region81: #{mnist_avae_forward.1} parent=1 // pred_fallthru
      _
    // Predicated region
    $region82: #{mnist_avae_forward.1} parent=1 // pred_check
      _
    $region83: #{mnist_avae_forward.1} parent=1 // pred_check_branch
      %275 = sbr.rel (0) target = $region85
    $region84: #{mnist_avae_forward.1} parent=1 // pred_region
      %s277 = ssub.s32 16, 16
      %278 = vsyncadd [#allocation17], %s277
      %s280 = sshll.u32 [#allocation16], 4
      %s281 = int_to_ptr.vmem [resolvable:$true] %s280
      %283 = dma.hbm_to_vmem [thread:$0]  %s41, 16, %s281, [#allocation17]
    $region85: #{mnist_avae_forward.1} parent=1 // pred_fallthru
      _
    // Predicated region
    $region86: #{mnist_avae_forward.1} parent=1 // pred_check
      _
    $region87: #{mnist_avae_forward.1} parent=1 // pred_check_branch
      %285 = sbr.rel (0) target = $region89
    $region88: #{mnist_avae_forward.1} parent=1 // pred_region
      _
    $region89: #{mnist_avae_forward.1} parent=1 // pred_fallthru
      _
    // Predicated region
    $region90: #{mnist_avae_forward.1} parent=1 // pred_check
      _
    $region91: #{mnist_avae_forward.1} parent=1 // pred_check_branch
      %287 = sbr.rel (0) target = $region93
    $region92: #{mnist_avae_forward.1} parent=1 // pred_region
      %s289 = ssub.s32 16, 16
      %290 = vsyncadd [#allocation17], %s289
      %s292 = sshll.u32 [#allocation18], 4
      %s293 = int_to_ptr.vmem [resolvable:$true] %s292
      %295 = dma.hbm_to_vmem [thread:$0]  %s45, 16, %s293, [#allocation17]
    $region93: #{mnist_avae_forward.1} parent=1 // pred_fallthru
      _
    // Predicated region
    $region94: #{mnist_avae_forward.1} parent=1 // pred_check
      _
    $region95: #{mnist_avae_forward.1} parent=1 // pred_check_branch
      %297 = sbr.rel (0) target = $region97
    $region96: #{mnist_avae_forward.1} parent=1 // pred_region
      %s299 = ssub.s32 256, 256
      %300 = vsyncadd [#allocation20], %s299
      %s301 = sshll.u32 [#allocation19], 4
      %s302 = int_to_ptr.vmem [resolvable:$true] %s301
      %307 = dma.hbm_to_vmem [thread:$0]  %s47, 256, %s302, [#allocation20], 64, 64, 4
    $region97: #{mnist_avae_forward.1} parent=1 // pred_fallthru
      _
    // Predicated region
    $region98: #{mnist_avae_forward.1} parent=1 // pred_check
      _
    $region99: #{mnist_avae_forward.1} parent=1 // pred_check_branch
      %309 = sbr.rel (0) target = $region101
    $region100: #{mnist_avae_forward.1} parent=1 // pred_region
      %s311 = ssub.s32 16, 16
      %312 = vsyncadd [#allocation20], %s311
      %s314 = sshll.u32 [#allocation21], 4
      %s315 = int_to_ptr.vmem [resolvable:$true] %s314
      %317 = dma.hbm_to_vmem [thread:$0]  %s49, 16, %s315, [#allocation20]
    $region101: #{mnist_avae_forward.1} parent=1 // pred_fallthru
      _
    // Predicated region
    $region102: #{mnist_avae_forward.1} parent=1 // pred_check
      _
    $region103: #{mnist_avae_forward.1} parent=1 // pred_check_branch
      %319 = sbr.rel (0) target = $region105
    $region104: #{mnist_avae_forward.1} parent=1 // pred_region
      %s321 = ssub.s32 1024, 1024
      %322 = vsyncadd [#allocation23], %s321
      %s323 = sshll.u32 [#allocation22], 4
      %s324 = int_to_ptr.vmem [resolvable:$true] %s323
      %329 = dma.hbm_to_vmem [thread:$0]  %s51, 1024, %s324, [#allocation23], 64, 64, 4
    $region105: #{mnist_avae_forward.1} parent=1 // pred_fallthru
      _
    // Predicated region
    $region106: #{mnist_avae_forward.1} parent=1 // pred_check
      _
    $region107: #{mnist_avae_forward.1} parent=1 // pred_check_branch
      %331 = sbr.rel (0) target = $region109
    $region108: #{mnist_avae_forward.1} parent=1 // pred_region
      %s333 = ssub.s32 16, 16
      %334 = vsyncadd [#allocation23], %s333
      %s336 = sshll.u32 [#allocation24], 4
      %s337 = int_to_ptr.vmem [resolvable:$true] %s336
      %339 = dma.hbm_to_vmem [thread:$0]  %s53, 16, %s337, [#allocation23]
    $region109: #{mnist_avae_forward.1} parent=1 // pred_fallthru
      _
    // Predicated region
    $region110: #{mnist_avae_forward.1} parent=1 // pred_check
      _
    $region111: #{mnist_avae_forward.1} parent=1 // pred_check_branch
      %341 = sbr.rel (0) target = $region113
    $region112: #{mnist_avae_forward.1} parent=1 // pred_region
      _
    $region113: #{mnist_avae_forward.1} parent=1 // pred_fallthru
      _
    // Predicated region
    $region114: #{mnist_avae_forward.1} parent=1 // pred_check
      _
    $region115: #{mnist_avae_forward.1} parent=1 // pred_check_branch
      %343 = sbr.rel (0) target = $region117
    $region116: #{mnist_avae_forward.1} parent=1 // pred_region
      %s345 = ssub.s32 16, 16
      %346 = vsyncadd [#allocation26], %s345
      %s348 = sshll.u32 [#allocation25], 4
      %s349 = int_to_ptr.vmem [resolvable:$true] %s348
      %351 = dma.hbm_to_vmem [thread:$0]  %s57, 16, %s349, [#allocation26]
    $region117: #{mnist_avae_forward.1} parent=1 // pred_fallthru
      _
    // Predicated region
    $region118: #{mnist_avae_forward.1} parent=1 // pred_check
      _
    $region119: #{mnist_avae_forward.1} parent=1 // pred_check_branch
      %353 = sbr.rel (0) target = $region121
    $region120: #{mnist_avae_forward.1} parent=1 // pred_region
      %s355 = ssub.s32 32, 32
      %356 = vsyncadd [#allocation26], %s355
      %s358 = sshll.u32 [#allocation27], 4
      %s359 = int_to_ptr.vmem [resolvable:$true] %s358
      %361 = dma.hbm_to_vmem [thread:$0]  %s59, 32, %s359, [#allocation26]
    $region121: #{mnist_avae_forward.1} parent=1 // pred_fallthru
      _
    // Predicated region
    $region122: #{mnist_avae_forward.1} parent=1 // pred_check
      _
    $region123: #{mnist_avae_forward.1} parent=1 // pred_check_branch
      %363 = sbr.rel (0) target = $region125
    $region124: #{mnist_avae_forward.1} parent=1 // pred_region
      _
    $region125: #{mnist_avae_forward.1} parent=1 // pred_fallthru
      _
    // Predicated region
    $region126: #{mnist_avae_forward.1} parent=1 // pred_check
      _
    $region127: #{mnist_avae_forward.1} parent=1 // pred_check_branch
      %365 = sbr.rel (0) target = $region129
    $region128: #{mnist_avae_forward.1} parent=1 // pred_region
      _
    $region129: #{mnist_avae_forward.1} parent=1 // pred_fallthru
      _
    // Predicated region
    $region130: #{mnist_avae_forward.1} parent=1 // pred_check
      _
    $region131: #{mnist_avae_forward.1} parent=1 // pred_check_branch
      %367 = sbr.rel (0) target = $region133
    $region132: #{mnist_avae_forward.1} parent=1 // pred_region
      %s369 = ssub.s32 32, 32
      %370 = vsyncadd [#allocation29], %s369
      %s372 = sshll.u32 [#allocation28], 4
      %s373 = int_to_ptr.vmem [resolvable:$true] %s372
      %375 = dma.hbm_to_vmem [thread:$0]  %s65, 32, %s373, [#allocation29]
    $region133: #{mnist_avae_forward.1} parent=1 // pred_fallthru
      _
    // Predicated region
    $region134: #{mnist_avae_forward.1} parent=1 // pred_check
      _
    $region135: #{mnist_avae_forward.1} parent=1 // pred_check_branch
      %377 = sbr.rel (0) target = $region137
    $region136: #{mnist_avae_forward.1} parent=1 // pred_region
      %s379 = ssub.s32 32, 32
      %380 = vsyncadd [#allocation29], %s379
      %s382 = sshll.u32 [#allocation30], 4
      %s383 = int_to_ptr.vmem [resolvable:$true] %s382
      %385 = dma.hbm_to_vmem [thread:$0]  %s67, 32, %s383, [#allocation29]
    $region137: #{mnist_avae_forward.1} parent=1 // pred_fallthru
      _
    // Predicated region
    $region138: #{mnist_avae_forward.1} parent=1 // pred_check
      _
    $region139: #{mnist_avae_forward.1} parent=1 // pred_check_branch
      %387 = sbr.rel (0) target = $region141
    $region140: #{mnist_avae_forward.1} parent=1 // pred_region
      _
    $region141: #{mnist_avae_forward.1} parent=1 // pred_fallthru
      _
    // Predicated region
    $region142: #{mnist_avae_forward.1} parent=1 // pred_check
      _
    $region143: #{mnist_avae_forward.1} parent=1 // pred_check_branch
      %389 = sbr.rel (0) target = $region145
    $region144: #{mnist_avae_forward.1} parent=1 // pred_region
      %s391 = ssub.s32 64, 64
      %392 = vsyncadd [#allocation32], %s391
      %s394 = sshll.u32 [#allocation31], 4
      %s395 = int_to_ptr.vmem [resolvable:$true] %s394
      %397 = dma.hbm_to_vmem [thread:$0]  %s71, 64, %s395, [#allocation32]
    $region145: #{mnist_avae_forward.1} parent=1 // pred_fallthru
      _
    // Predicated region
    $region146: #{mnist_avae_forward.1} parent=1 // pred_check
      _
    $region147: #{mnist_avae_forward.1} parent=1 // pred_check_branch
      %399 = sbr.rel (0) target = $region149
    $region148: #{mnist_avae_forward.1} parent=1 // pred_region
      %s401 = ssub.s32 4096, 4096
      %402 = vsyncadd [#allocation32], %s401
      %s403 = sshll.u32 [#allocation33], 4
      %s404 = int_to_ptr.vmem [resolvable:$true] %s403
      %409 = dma.hbm_to_vmem [thread:$0]  %s73, 4096, %s404, [#allocation32], 128, 128, 8
    $region149: #{mnist_avae_forward.1} parent=1 // pred_fallthru
      _
    // Predicated region
    $region150: #{mnist_avae_forward.1} parent=1 // pred_check
      _
    $region151: #{mnist_avae_forward.1} parent=1 // pred_check_branch
      %411 = sbr.rel (0) target = $region153
    $region152: #{mnist_avae_forward.1} parent=1 // pred_region
      %s413 = ssub.s32 32, 32
      %414 = vsyncadd [#allocation35], %s413
      %s416 = sshll.u32 [#allocation34], 4
      %s417 = int_to_ptr.vmem [resolvable:$true] %s416
      %419 = dma.hbm_to_vmem [thread:$0]  %s75, 32, %s417, [#allocation35]
    $region153: #{mnist_avae_forward.1} parent=1 // pred_fallthru
      _
    // Predicated region
    $region154: #{mnist_avae_forward.1} parent=1 // pred_check
      _
    $region155: #{mnist_avae_forward.1} parent=1 // pred_check_branch
      %421 = sbr.rel (0) target = $region157
    $region156: #{mnist_avae_forward.1} parent=1 // pred_region
      %s423 = ssub.s32 4096, 4096
      %424 = vsyncadd [#allocation35], %s423
      %s425 = sshll.u32 [#allocation36], 4
      %s426 = int_to_ptr.vmem [resolvable:$true] %s425
      %431 = dma.hbm_to_vmem [thread:$0]  %s77, 4096, %s426, [#allocation35], 128, 128, 8
    $region157: #{mnist_avae_forward.1} parent=1 // pred_fallthru
      _
    // Predicated region
    $region158: #{mnist_avae_forward.1} parent=1 // pred_check
      _
    $region159: #{mnist_avae_forward.1} parent=1 // pred_check_branch
      %433 = sbr.rel (0) target = $region161
    $region160: #{mnist_avae_forward.1} parent=1 // pred_region
      %s435 = ssub.s32 32, 32
      %436 = vsyncadd [#allocation38], %s435
      %s438 = sshll.u32 [#allocation37], 4
      %s439 = int_to_ptr.vmem [resolvable:$true] %s438
      %441 = dma.hbm_to_vmem [thread:$0]  %s79, 32, %s439, [#allocation38]
    $region161: #{mnist_avae_forward.1} parent=1 // pred_fallthru
      _
    // Predicated region
    $region162: #{mnist_avae_forward.1} parent=1 // pred_check
      _
    $region163: #{mnist_avae_forward.1} parent=1 // pred_check_branch
      %443 = sbr.rel (0) target = $region165
    $region164: #{mnist_avae_forward.1} parent=1 // pred_region
      %s445 = ssub.s32 8192, 8192
      %446 = vsyncadd [#allocation38], %s445
      %s447 = sshll.u32 [#allocation39], 4
      %s448 = int_to_ptr.vmem [resolvable:$true] %s447
      %453 = dma.hbm_to_vmem [thread:$0]  %s81, 8192, %s448, [#allocation38], 256, 256, 16
    $region165: #{mnist_avae_forward.1} parent=1 // pred_fallthru
      _
    // Predicated region
    $region166: #{mnist_avae_forward.1} parent=1 // pred_check
      _
    $region167: #{mnist_avae_forward.1} parent=1 // pred_check_branch
      %455 = sbr.rel (0) target = $region169
    $region168: #{mnist_avae_forward.1} parent=1 // pred_region
      _
    $region169: #{mnist_avae_forward.1} parent=1 // pred_fallthru
      _
    // Predicated region
    $region170: #{mnist_avae_forward.1} parent=1 // pred_check
      _
    $region171: #{mnist_avae_forward.1} parent=1 // pred_check_branch
      %457 = sbr.rel (0) target = $region173
    $region172: #{mnist_avae_forward.1} parent=1 // pred_region
      %s459 = ssub.s32 4096, 4096
      %460 = vsyncadd [#allocation41], %s459
      %s461 = sshll.u32 [#allocation40], 4
      %s462 = int_to_ptr.vmem [resolvable:$true] %s461
      %467 = dma.hbm_to_vmem [thread:$0]  %s85, 4096, %s462, [#allocation41], 128, 128, 8
    $region173: #{mnist_avae_forward.1} parent=1 // pred_fallthru
      _
    // Predicated region
    $region174: #{mnist_avae_forward.1} parent=1 // pred_check
      _
    $region175: #{mnist_avae_forward.1} parent=1 // pred_check_branch
      %469 = sbr.rel (0) target = $region177
    $region176: #{mnist_avae_forward.1} parent=1 // pred_region
      %s471 = ssub.s32 32, 32
      %472 = vsyncadd [#allocation41], %s471
      %s474 = sshll.u32 [#allocation42], 4
      %s475 = int_to_ptr.vmem [resolvable:$true] %s474
      %477 = dma.hbm_to_vmem [thread:$0]  %s87, 32, %s475, [#allocation41]
    $region177: #{mnist_avae_forward.1} parent=1 // pred_fallthru
      _
    // Predicated region
    $region178: #{mnist_avae_forward.1} parent=1 // pred_check
      _
    $region179: #{mnist_avae_forward.1} parent=1 // pred_check_branch
      %479 = sbr.rel (0) target = $region181
    $region180: #{mnist_avae_forward.1} parent=1 // pred_region
      %s481 = ssub.s32 4096, 4096
      %482 = vsyncadd [#allocation44], %s481
      %s483 = sshll.u32 [#allocation43], 4
      %s484 = int_to_ptr.vmem [resolvable:$true] %s483
      %489 = dma.hbm_to_vmem [thread:$0]  %s89, 4096, %s484, [#allocation44], 128, 128, 8
    $region181: #{mnist_avae_forward.1} parent=1 // pred_fallthru
      _
    // Predicated region
    $region182: #{mnist_avae_forward.1} parent=1 // pred_check
      _
    $region183: #{mnist_avae_forward.1} parent=1 // pred_check_branch
      %491 = sbr.rel (0) target = $region185
    $region184: #{mnist_avae_forward.1} parent=1 // pred_region
      %s493 = ssub.s32 32, 32
      %494 = vsyncadd [#allocation44], %s493
      %s496 = sshll.u32 [#allocation45], 4
      %s497 = int_to_ptr.vmem [resolvable:$true] %s496
      %499 = dma.hbm_to_vmem [thread:$0]  %s91, 32, %s497, [#allocation44]
    $region185: #{mnist_avae_forward.1} parent=1 // pred_fallthru
      _
    // Predicated region
    $region186: #{mnist_avae_forward.1} parent=1 // pred_check
      _
    $region187: #{mnist_avae_forward.1} parent=1 // pred_check_branch
      %501 = sbr.rel (0) target = $region189
    $region188: #{mnist_avae_forward.1} parent=1 // pred_region
      _
    $region189: #{mnist_avae_forward.1} parent=1 // pred_fallthru
      _
    // Predicated region
    $region190: #{mnist_avae_forward.1} parent=1 // pred_check
      _
    $region191: #{mnist_avae_forward.1} parent=1 // pred_check_branch
      %503 = sbr.rel (0) target = $region193
    $region192: #{mnist_avae_forward.1} parent=1 // pred_region
      _
    $region193: #{mnist_avae_forward.1} parent=1 // pred_fallthru
      _
    // Predicated region
    $region194: #{mnist_avae_forward.1} parent=1 // pred_check
      _
    $region195: #{mnist_avae_forward.1} parent=1 // pred_check_branch
      %505 = sbr.rel (0) target = $region197
    $region196: #{mnist_avae_forward.1} parent=1 // pred_region
      _
    $region197: #{mnist_avae_forward.1} parent=1 // pred_fallthru
      _
    // Predicated region
    $region198: #{mnist_avae_forward.1} parent=1 // pred_check
      _
    $region199: #{mnist_avae_forward.1} parent=1 // pred_check_branch
      %507 = sbr.rel (0) target = $region201
    $region200: #{mnist_avae_forward.1} parent=1 // pred_region
      _
    $region201: #{mnist_avae_forward.1} parent=1 // pred_fallthru
      _
    // Predicated region
    $region202: #{mnist_avae_forward.1} parent=1 // pred_check
      _
    $region203: #{mnist_avae_forward.1} parent=1 // pred_check_branch
      %509 = sbr.rel (0) target = $region205
    $region204: #{mnist_avae_forward.1} parent=1 // pred_region
      %s511 = ssub.s32 4096, 4096
      %512 = vsyncadd [#allocation47], %s511
      %s513 = sshll.u32 [#allocation46], 4
      %s514 = int_to_ptr.vmem [resolvable:$true] %s513
      %519 = dma.hbm_to_vmem [thread:$0]  %s101, 4096, %s514, [#allocation47], 128, 128, 8
    $region205: #{mnist_avae_forward.1} parent=1 // pred_fallthru
      _
    // Predicated region
    $region206: #{mnist_avae_forward.1} parent=1 // pred_check
      _
    $region207: #{mnist_avae_forward.1} parent=1 // pred_check_branch
      %521 = sbr.rel (0) target = $region209
    $region208: #{mnist_avae_forward.1} parent=1 // pred_region
      _
    $region209: #{mnist_avae_forward.1} parent=1 // pred_fallthru
      _
    // Predicated region
    $region210: #{mnist_avae_forward.1} parent=1 // pred_check
      _
    $region211: #{mnist_avae_forward.1} parent=1 // pred_check_branch
      %523 = sbr.rel (0) target = $region213
    $region212: #{mnist_avae_forward.1} parent=1 // pred_region
      %s525 = ssub.s32 4096, 4096
      %526 = vsyncadd [#allocation47], %s525
      %s527 = sshll.u32 [#allocation48], 4
      %s528 = int_to_ptr.vmem [resolvable:$true] %s527
      %533 = dma.hbm_to_vmem [thread:$0]  %s105, 4096, %s528, [#allocation47], 128, 128, 8
    $region213: #{mnist_avae_forward.1} parent=1 // pred_fallthru
      _
    // Predicated region
    $region214: #{mnist_avae_forward.1} parent=1 // pred_check
      _
    $region215: #{mnist_avae_forward.1} parent=1 // pred_check_branch
      %535 = sbr.rel (0) target = $region217
    $region216: #{mnist_avae_forward.1} parent=1 // pred_region
      _
    $region217: #{mnist_avae_forward.1} parent=1 // pred_fallthru
      _
    // Predicated region
    $region218: #{mnist_avae_forward.1} parent=1 // pred_check
      _
    $region219: #{mnist_avae_forward.1} parent=1 // pred_check_branch
      %537 = sbr.rel (0) target = $region221
    $region220: #{mnist_avae_forward.1} parent=1 // pred_region
      %s539 = ssub.s32 8192, 8192
      %540 = vsyncadd [#allocation50], %s539
      %s541 = sshll.u32 [#allocation49], 4
      %s542 = int_to_ptr.vmem [resolvable:$true] %s541
      %547 = dma.hbm_to_vmem [thread:$0]  %s109, 8192, %s542, [#allocation50], 256, 256, 16
    $region221: #{mnist_avae_forward.1} parent=1 // pred_fallthru
      _
    // Predicated region
    $region222: #{mnist_avae_forward.1} parent=1 // pred_check
      _
    $region223: #{mnist_avae_forward.1} parent=1 // pred_check_branch
      %549 = sbr.rel (0) target = $region225
    $region224: #{mnist_avae_forward.1} parent=1 // pred_region
      _
    $region225: #{mnist_avae_forward.1} parent=1 // pred_fallthru
      _
    // Predicated region
    $region226: #{mnist_avae_forward.1} parent=1 // pred_check
      _
    $region227: #{mnist_avae_forward.1} parent=1 // pred_check_branch
      %551 = sbr.rel (0) target = $region229
    $region228: #{mnist_avae_forward.1} parent=1 // pred_region
      %s553 = ssub.s32 4096, 4096
      %554 = vsyncadd [#allocation50], %s553
      %s555 = sshll.u32 [#allocation51], 4
      %s556 = int_to_ptr.vmem [resolvable:$true] %s555
      %561 = dma.hbm_to_vmem [thread:$0]  %s113, 4096, %s556, [#allocation50], 128, 128, 8
    $region229: #{mnist_avae_forward.1} parent=1 // pred_fallthru
      _
    // Predicated region
    $region230: #{mnist_avae_forward.1} parent=1 // pred_check
      _
    $region231: #{mnist_avae_forward.1} parent=1 // pred_check_branch
      %563 = sbr.rel (0) target = $region233
    $region232: #{mnist_avae_forward.1} parent=1 // pred_region
      _
    $region233: #{mnist_avae_forward.1} parent=1 // pred_fallthru
      _
    // Predicated region
    $region234: #{mnist_avae_forward.1} parent=1 // pred_check
      _
    $region235: #{mnist_avae_forward.1} parent=1 // pred_check_branch
      %565 = sbr.rel (0) target = $region237
    $region236: #{mnist_avae_forward.1} parent=1 // pred_region
      %s567 = ssub.s32 4096, 4096
      %568 = vsyncadd [#allocation53], %s567
      %s569 = sshll.u32 [#allocation52], 4
      %s570 = int_to_ptr.vmem [resolvable:$true] %s569
      %575 = dma.hbm_to_vmem [thread:$0]  %s117, 4096, %s570, [#allocation53], 128, 128, 8
    $region237: #{mnist_avae_forward.1} parent=1 // pred_fallthru
      _
    // Predicated region
    $region238: #{mnist_avae_forward.1} parent=1 // pred_check
      _
    $region239: #{mnist_avae_forward.1} parent=1 // pred_check_branch
      %577 = sbr.rel (0) target = $region241
    $region240: #{mnist_avae_forward.1} parent=1 // pred_region
      _
    $region241: #{mnist_avae_forward.1} parent=1 // pred_fallthru
      _
    // Predicated region
    $region242: #{mnist_avae_forward.1} parent=1 // pred_check
      _
    $region243: #{mnist_avae_forward.1} parent=1 // pred_check_branch
      %579 = sbr.rel (0) target = $region245
    $region244: #{mnist_avae_forward.1} parent=1 // pred_region
      _
    $region245: #{mnist_avae_forward.1} parent=1 // pred_fallthru
      _
    // Predicated region
    $region246: #{mnist_avae_forward.1} parent=1 // pred_check
      _
    $region247: #{mnist_avae_forward.1} parent=1 // pred_check_branch
      %581 = sbr.rel (0) target = $region249
    $region248: #{mnist_avae_forward.1} parent=1 // pred_region
      _
    $region249: #{mnist_avae_forward.1} parent=1 // pred_fallthru
      _
    // Predicated region
    $region250: #{mnist_avae_forward.1} parent=1 // pred_check
      _
    $region251: #{mnist_avae_forward.1} parent=1 // pred_check_branch
      %583 = sbr.rel (0) target = $region253
    $region252: #{mnist_avae_forward.1} parent=1 // pred_region
      _
    $region253: #{mnist_avae_forward.1} parent=1 // pred_fallthru
      _
    // Predicated region
    $region254: #{mnist_avae_forward.1} parent=1 // pred_check
      _
    $region255: #{mnist_avae_forward.1} parent=1 // pred_check_branch
      %585 = sbr.rel (0) target = $region257
    $region256: #{mnist_avae_forward.1} parent=1 // pred_region
      _
    $region257: #{mnist_avae_forward.1} parent=1 // pred_fallthru
      _
    // Predicated region
    $region258: #{mnist_avae_forward.1} parent=1 // pred_check
      _
    $region259: #{mnist_avae_forward.1} parent=1 // pred_check_branch
      %587 = sbr.rel (0) target = $region261
    $region260: #{mnist_avae_forward.1} parent=1 // pred_region
      %s589 = ssub.s32 4096, 4096
      %590 = vsyncadd [#allocation53], %s589
      %s591 = sshll.u32 [#allocation54], 4
      %s592 = int_to_ptr.vmem [resolvable:$true] %s591
      %597 = dma.hbm_to_vmem [thread:$0]  %s129, 4096, %s592, [#allocation53], 128, 128, 8
    $region261: #{mnist_avae_forward.1} parent=1 // pred_fallthru
      _
    // Predicated region
    $region262: #{mnist_avae_forward.1} parent=1 // pred_check
      _
    $region263: #{mnist_avae_forward.1} parent=1 // pred_check_branch
      %599 = sbr.rel (0) target = $region265
    $region264: #{mnist_avae_forward.1} parent=1 // pred_region
      _
    $region265: #{mnist_avae_forward.1} parent=1 // pred_fallthru
      _
    // Predicated region
    $region266: #{mnist_avae_forward.1} parent=1 // pred_check
      _
    $region267: #{mnist_avae_forward.1} parent=1 // pred_check_branch
      %601 = sbr.rel (0) target = $region269
    $region268: #{mnist_avae_forward.1} parent=1 // pred_region
      %s603 = ssub.s32 4096, 4096
      %604 = vsyncadd [#allocation56], %s603
      %s605 = sshll.u32 [#allocation55], 4
      %s606 = int_to_ptr.vmem [resolvable:$true] %s605
      %611 = dma.hbm_to_vmem [thread:$0]  %s133, 4096, %s606, [#allocation56], 128, 128, 8
    $region269: #{mnist_avae_forward.1} parent=1 // pred_fallthru
      _
    // Predicated region
    $region270: #{mnist_avae_forward.1} parent=1 // pred_check
      _
    $region271: #{mnist_avae_forward.1} parent=1 // pred_check_branch
      %613 = sbr.rel (0) target = $region273
    $region272: #{mnist_avae_forward.1} parent=1 // pred_region
      _
    $region273: #{mnist_avae_forward.1} parent=1 // pred_fallthru
      _
    // Predicated region
    $region274: #{mnist_avae_forward.1} parent=1 // pred_check
      _
    $region275: #{mnist_avae_forward.1} parent=1 // pred_check_branch
      %615 = sbr.rel (0) target = $region277
    $region276: #{mnist_avae_forward.1} parent=1 // pred_region
      %616 = dma.done [#allocation5], 64
    $region277: #{mnist_avae_forward.1} parent=1 // pred_fallthru
      _
    // Predicated region
    $region278: #{mnist_avae_forward.1} parent=1 // pred_check
      _
    $region279: #{mnist_avae_forward.1} parent=1 // pred_check_branch
      %618 = sbr.rel (0) target = $region281
    $region280: #{mnist_avae_forward.1} parent=1 // pred_region
      %619 = dma.done [#allocation8], 512
    $region281: #{mnist_avae_forward.1} parent=1 // pred_fallthru
      _
    // Predicated region
    $region282: #{mnist_avae_forward.1} parent=1 // pred_check
      _
    $region283: #{mnist_avae_forward.1} parent=1 // pred_check_branch
      %621 = sbr.rel (0) target = $region285
    $region284: #{mnist_avae_forward.1} parent=1 // pred_region
      %622 = dma.done [#allocation8], 32
    $region285: #{mnist_avae_forward.1} parent=1 // pred_fallthru
      _
    // Predicated region
    $region286: #{mnist_avae_forward.1} parent=1 // pred_check
      _
    $region287: #{mnist_avae_forward.1} parent=1 // pred_check_branch
      %624 = sbr.rel (0) target = $region289
    $region288: #{mnist_avae_forward.1} parent=1 // pred_region
      %625 = dma.done [#allocation11], 512
    $region289: #{mnist_avae_forward.1} parent=1 // pred_fallthru
      _
    // Predicated region
    $region290: #{mnist_avae_forward.1} parent=1 // pred_check
      _
    $region291: #{mnist_avae_forward.1} parent=1 // pred_check_branch
      %627 = sbr.rel (0) target = $region293
    $region292: #{mnist_avae_forward.1} parent=1 // pred_region
      %628 = dma.done [#allocation11], 2048
    $region293: #{mnist_avae_forward.1} parent=1 // pred_fallthru
      _
    // Predicated region
    $region294: #{mnist_avae_forward.1} parent=1 // pred_check
      _
    $region295: #{mnist_avae_forward.1} parent=1 // pred_check_branch
      %630 = sbr.rel (0) target = $region297
    $region296: #{mnist_avae_forward.1} parent=1 // pred_region
      %631 = dma.done [#allocation14], 512
    $region297: #{mnist_avae_forward.1} parent=1 // pred_fallthru
      _
    // Predicated region
    $region298: #{mnist_avae_forward.1} parent=1 // pred_check
      _
    $region299: #{mnist_avae_forward.1} parent=1 // pred_check_branch
      %633 = sbr.rel (0) target = $region301
    $region300: #{mnist_avae_forward.1} parent=1 // pred_region
      %634 = dma.done [#allocation14], 16
    $region301: #{mnist_avae_forward.1} parent=1 // pred_fallthru
      _
    // Predicated region
    $region302: #{mnist_avae_forward.1} parent=1 // pred_check
      _
    $region303: #{mnist_avae_forward.1} parent=1 // pred_check_branch
      %636 = sbr.rel (0) target = $region305
    $region304: #{mnist_avae_forward.1} parent=1 // pred_region
      %637 = dma.done [#allocation17], 16
    $region305: #{mnist_avae_forward.1} parent=1 // pred_fallthru
      _
    // Predicated region
    $region306: #{mnist_avae_forward.1} parent=1 // pred_check
      _
    $region307: #{mnist_avae_forward.1} parent=1 // pred_check_branch
      %639 = sbr.rel (0) target = $region309
    $region308: #{mnist_avae_forward.1} parent=1 // pred_region
      %640 = dma.done [#allocation17], 16
    $region309: #{mnist_avae_forward.1} parent=1 // pred_fallthru
      _
    // Predicated region
    $region310: #{mnist_avae_forward.1} parent=1 // pred_check
      _
    $region311: #{mnist_avae_forward.1} parent=1 // pred_check_branch
      %642 = sbr.rel (0) target = $region313
    $region312: #{mnist_avae_forward.1} parent=1 // pred_region
      %643 = dma.done [#allocation20], 256
    $region313: #{mnist_avae_forward.1} parent=1 // pred_fallthru
      _
    // Predicated region
    $region314: #{mnist_avae_forward.1} parent=1 // pred_check
      _
    $region315: #{mnist_avae_forward.1} parent=1 // pred_check_branch
      %645 = sbr.rel (0) target = $region317
    $region316: #{mnist_avae_forward.1} parent=1 // pred_region
      %646 = dma.done [#allocation20], 16
    $region317: #{mnist_avae_forward.1} parent=1 // pred_fallthru
      _
    // Predicated region
    $region318: #{mnist_avae_forward.1} parent=1 // pred_check
      _
    $region319: #{mnist_avae_forward.1} parent=1 // pred_check_branch
      %648 = sbr.rel (0) target = $region321
    $region320: #{mnist_avae_forward.1} parent=1 // pred_region
      %649 = dma.done [#allocation23], 1024
    $region321: #{mnist_avae_forward.1} parent=1 // pred_fallthru
      _
    // Predicated region
    $region322: #{mnist_avae_forward.1} parent=1 // pred_check
      _
    $region323: #{mnist_avae_forward.1} parent=1 // pred_check_branch
      %651 = sbr.rel (0) target = $region325
    $region324: #{mnist_avae_forward.1} parent=1 // pred_region
      %652 = dma.done [#allocation23], 16
    $region325: #{mnist_avae_forward.1} parent=1 // pred_fallthru
      _
    // Predicated region
    $region326: #{mnist_avae_forward.1} parent=1 // pred_check
      _
    $region327: #{mnist_avae_forward.1} parent=1 // pred_check_branch
      %654 = sbr.rel (0) target = $region329
    $region328: #{mnist_avae_forward.1} parent=1 // pred_region
      %655 = dma.done [#allocation26], 16
    $region329: #{mnist_avae_forward.1} parent=1 // pred_fallthru
      _
    // Predicated region
    $region330: #{mnist_avae_forward.1} parent=1 // pred_check
      _
    $region331: #{mnist_avae_forward.1} parent=1 // pred_check_branch
      %657 = sbr.rel (0) target = $region333
    $region332: #{mnist_avae_forward.1} parent=1 // pred_region
      %658 = dma.done [#allocation26], 32
    $region333: #{mnist_avae_forward.1} parent=1 // pred_fallthru
      _
    // Predicated region
    $region334: #{mnist_avae_forward.1} parent=1 // pred_check
      _
    $region335: #{mnist_avae_forward.1} parent=1 // pred_check_branch
      %660 = sbr.rel (0) target = $region337
    $region336: #{mnist_avae_forward.1} parent=1 // pred_region
      %661 = dma.done [#allocation29], 32
    $region337: #{mnist_avae_forward.1} parent=1 // pred_fallthru
      _
    // Predicated region
    $region338: #{mnist_avae_forward.1} parent=1 // pred_check
      _
    $region339: #{mnist_avae_forward.1} parent=1 // pred_check_branch
      %663 = sbr.rel (0) target = $region341
    $region340: #{mnist_avae_forward.1} parent=1 // pred_region
      %664 = dma.done [#allocation29], 32
    $region341: #{mnist_avae_forward.1} parent=1 // pred_fallthru
      _
    // Predicated region
    $region342: #{mnist_avae_forward.1} parent=1 // pred_check
      _
    $region343: #{mnist_avae_forward.1} parent=1 // pred_check_branch
      %666 = sbr.rel (0) target = $region345
    $region344: #{mnist_avae_forward.1} parent=1 // pred_region
      %667 = dma.done [#allocation32], 64
    $region345: #{mnist_avae_forward.1} parent=1 // pred_fallthru
      _
    // Predicated region
    $region346: #{mnist_avae_forward.1} parent=1 // pred_check
      _
    $region347: #{mnist_avae_forward.1} parent=1 // pred_check_branch
      %669 = sbr.rel (0) target = $region349
    $region348: #{mnist_avae_forward.1} parent=1 // pred_region
      %670 = dma.done [#allocation32], 4096
    $region349: #{mnist_avae_forward.1} parent=1 // pred_fallthru
      _
    // Predicated region
    $region350: #{mnist_avae_forward.1} parent=1 // pred_check
      _
    $region351: #{mnist_avae_forward.1} parent=1 // pred_check_branch
      %672 = sbr.rel (0) target = $region353
    $region352: #{mnist_avae_forward.1} parent=1 // pred_region
      %673 = dma.done [#allocation35], 32
    $region353: #{mnist_avae_forward.1} parent=1 // pred_fallthru
      _
    // Predicated region
    $region354: #{mnist_avae_forward.1} parent=1 // pred_check
      _
    $region355: #{mnist_avae_forward.1} parent=1 // pred_check_branch
      %675 = sbr.rel (0) target = $region357
    $region356: #{mnist_avae_forward.1} parent=1 // pred_region
      %676 = dma.done [#allocation35], 4096
    $region357: #{mnist_avae_forward.1} parent=1 // pred_fallthru
      _
    // Predicated region
    $region358: #{mnist_avae_forward.1} parent=1 // pred_check
      _
    $region359: #{mnist_avae_forward.1} parent=1 // pred_check_branch
      %678 = sbr.rel (0) target = $region361
    $region360: #{mnist_avae_forward.1} parent=1 // pred_region
      %679 = dma.done [#allocation38], 32
    $region361: #{mnist_avae_forward.1} parent=1 // pred_fallthru
      _
    // Predicated region
    $region362: #{mnist_avae_forward.1} parent=1 // pred_check
      _
    $region363: #{mnist_avae_forward.1} parent=1 // pred_check_branch
      %681 = sbr.rel (0) target = $region365
    $region364: #{mnist_avae_forward.1} parent=1 // pred_region
      %682 = dma.done [#allocation38], 8192
    $region365: #{mnist_avae_forward.1} parent=1 // pred_fallthru
      _
    // Predicated region
    $region366: #{mnist_avae_forward.1} parent=1 // pred_check
      _
    $region367: #{mnist_avae_forward.1} parent=1 // pred_check_branch
      %684 = sbr.rel (0) target = $region369
    $region368: #{mnist_avae_forward.1} parent=1 // pred_region
      %685 = dma.done [#allocation41], 4096
    $region369: #{mnist_avae_forward.1} parent=1 // pred_fallthru
      _
    // Predicated region
    $region370: #{mnist_avae_forward.1} parent=1 // pred_check
      _
    $region371: #{mnist_avae_forward.1} parent=1 // pred_check_branch
      %687 = sbr.rel (0) target = $region373
    $region372: #{mnist_avae_forward.1} parent=1 // pred_region
      %688 = dma.done [#allocation41], 32
    $region373: #{mnist_avae_forward.1} parent=1 // pred_fallthru
      _
    // Predicated region
    $region374: #{mnist_avae_forward.1} parent=1 // pred_check
      _
    $region375: #{mnist_avae_forward.1} parent=1 // pred_check_branch
      %690 = sbr.rel (0) target = $region377
    $region376: #{mnist_avae_forward.1} parent=1 // pred_region
      %691 = dma.done [#allocation44], 4096
    $region377: #{mnist_avae_forward.1} parent=1 // pred_fallthru
      _
    // Predicated region
    $region378: #{mnist_avae_forward.1} parent=1 // pred_check
      _
    $region379: #{mnist_avae_forward.1} parent=1 // pred_check_branch
      %693 = sbr.rel (0) target = $region381
    $region380: #{mnist_avae_forward.1} parent=1 // pred_region
      %694 = dma.done [#allocation44], 32
    $region381: #{mnist_avae_forward.1} parent=1 // pred_fallthru
      _
    // Predicated region
    $region382: #{mnist_avae_forward.1} parent=1 // pred_check
      _
    $region383: #{mnist_avae_forward.1} parent=1 // pred_check_branch
      %696 = sbr.rel (0) target = $region385
    $region384: #{mnist_avae_forward.1} parent=1 // pred_region
      %697 = dma.done [#allocation47], 4096
    $region385: #{mnist_avae_forward.1} parent=1 // pred_fallthru
      _
    // Predicated region
    $region386: #{mnist_avae_forward.1} parent=1 // pred_check
      _
    $region387: #{mnist_avae_forward.1} parent=1 // pred_check_branch
      %699 = sbr.rel (0) target = $region389
    $region388: #{mnist_avae_forward.1} parent=1 // pred_region
      %700 = dma.done [#allocation47], 4096
    $region389: #{mnist_avae_forward.1} parent=1 // pred_fallthru
      _
    // Predicated region
    $region390: #{mnist_avae_forward.1} parent=1 // pred_check
      _
    $region391: #{mnist_avae_forward.1} parent=1 // pred_check_branch
      %702 = sbr.rel (0) target = $region393
    $region392: #{mnist_avae_forward.1} parent=1 // pred_region
      %703 = dma.done [#allocation50], 8192
    $region393: #{mnist_avae_forward.1} parent=1 // pred_fallthru
      _
    // Predicated region
    $region394: #{mnist_avae_forward.1} parent=1 // pred_check
      _
    $region395: #{mnist_avae_forward.1} parent=1 // pred_check_branch
      %705 = sbr.rel (0) target = $region397
    $region396: #{mnist_avae_forward.1} parent=1 // pred_region
      %706 = dma.done [#allocation50], 4096
    $region397: #{mnist_avae_forward.1} parent=1 // pred_fallthru
      _
    // Predicated region
    $region398: #{mnist_avae_forward.1} parent=1 // pred_check
      _
    $region399: #{mnist_avae_forward.1} parent=1 // pred_check_branch
      %708 = sbr.rel (0) target = $region401
    $region400: #{mnist_avae_forward.1} parent=1 // pred_region
      %709 = dma.done [#allocation53], 4096
    $region401: #{mnist_avae_forward.1} parent=1 // pred_fallthru
      _
    // Predicated region
    $region402: #{mnist_avae_forward.1} parent=1 // pred_check
      _
    $region403: #{mnist_avae_forward.1} parent=1 // pred_check_branch
      %711 = sbr.rel (0) target = $region405
    $region404: #{mnist_avae_forward.1} parent=1 // pred_region
      %712 = dma.done [#allocation53], 4096
    $region405: #{mnist_avae_forward.1} parent=1 // pred_fallthru
      _
    // Predicated region
    $region406: #{mnist_avae_forward.1} parent=1 // pred_check
      _
    $region407: #{mnist_avae_forward.1} parent=1 // pred_check_branch
      %714 = sbr.rel (0) target = $region409
    $region408: #{mnist_avae_forward.1} parent=1 // pred_region
      %715 = dma.done [#allocation56], 4096
    $region409: #{mnist_avae_forward.1} parent=1 // pred_fallthru
      _
    %v717 = vld [vmem:[%s1] sm:$0xf]
    %v718 = vld [vmem:[%s3] sm:$0xff]
    %v719 = vld [vmem:[%s3 + $0x8] sm:$0xff]
    %v720 = vld [vmem:[%s3 + $0x10] sm:$0xff]
    %v721 = vld [vmem:[%s3 + $0x18] sm:$0xff]
    %v722 = vld [vmem:[%s5] sm:$0x3]
    %v725 = vunpack.c.l.s4 1983009808
    %v726 = vunpack.c.0.s8 %v725
    %v727 = vlaneseq
    %v728 = vshrl.u32 %v727, 7
    %v729 = vsub.s32 %v726, %v728
    %v730 = vrot.slane %v717, %v729
    %v731 = vcombine.high %v730, %v730
    %v734 = vpack.c.bf16 %v730, %v730
    %v735 = vpack.c.bf16 %v731, %v731
    %v736 = vld [vmem:[%s7] sm:$0xff]
    %v737 = vld [vmem:[%s7 + $0x8] sm:$0xff]
    %v738 = vld [vmem:[%s7 + $0x10] sm:$0xff]
    %v739 = vld [vmem:[%s7 + $0x18] sm:$0xff]
    %v740 = vld [vmem:[%s7 + $0x20] sm:$0xff]
    %v741 = vld [vmem:[%s7 + $0x28] sm:$0xff]
    %v742 = vld [vmem:[%s7 + $0x30] sm:$0xff]
    %v743 = vld [vmem:[%s7 + $0x38] sm:$0xff]
    %v744 = vld [vmem:[%s7 + $0x40] sm:$0xff]
    %v745 = vld [vmem:[%s7 + $0x48] sm:$0xff]
    %v746 = vld [vmem:[%s7 + $0x50] sm:$0xff]
    %v747 = vld [vmem:[%s7 + $0x58] sm:$0xff]
    %v748 = vld [vmem:[%s7 + $0x60] sm:$0xff]
    %v749 = vld [vmem:[%s7 + $0x68] sm:$0xff]
    %v750 = vld [vmem:[%s7 + $0x70] sm:$0xff]
    %v751 = vld [vmem:[%s7 + $0x78] sm:$0xff]
    %v752 = vld [vmem:[%s7 + $0x80] sm:$0xff]
    %v753 = vld [vmem:[%s7 + $0x88] sm:$0xff]
    %v754 = vld [vmem:[%s7 + $0x90] sm:$0xff]
    %v755 = vld [vmem:[%s7 + $0x98] sm:$0xff]
    %v756 = vld [vmem:[%s7 + $0xa0] sm:$0xff]
    %v757 = vld [vmem:[%s7 + $0xa8] sm:$0xff]
    %v758 = vld [vmem:[%s7 + $0xb0] sm:$0xff]
    %v759 = vld [vmem:[%s7 + $0xb8] sm:$0xff]
    %v760 = vld [vmem:[%s7 + $0xc0] sm:$0xff]
    %v761 = vld [vmem:[%s7 + $0xc8] sm:$0xff]
    %v762 = vld [vmem:[%s7 + $0xd0] sm:$0xff]
    %v763 = vld [vmem:[%s7 + $0xd8] sm:$0xff]
    %v764 = vld [vmem:[%s7 + $0xe0] sm:$0xff]
    %v765 = vld [vmem:[%s7 + $0xe8] sm:$0xff]
    %v766 = vld [vmem:[%s7 + $0xf0] sm:$0xff]
    %v767 = vld [vmem:[%s7 + $0xf8] sm:$0xff]
    %v768 = vld [vmem:[%s7 + $0x100] sm:$0xff]
    %v769 = vld [vmem:[%s7 + $0x108] sm:$0xff]
    %v770 = vld [vmem:[%s7 + $0x110] sm:$0xff]
    %v771 = vld [vmem:[%s7 + $0x118] sm:$0xff]
    %v772 = vld [vmem:[%s7 + $0x120] sm:$0xff]
    %v773 = vld [vmem:[%s7 + $0x128] sm:$0xff]
    %v774 = vld [vmem:[%s7 + $0x130] sm:$0xff]
    %v775 = vld [vmem:[%s7 + $0x138] sm:$0xff]
    %v776 = vld [vmem:[%s7 + $0x140] sm:$0xff]
    %v777 = vld [vmem:[%s7 + $0x148] sm:$0xff]
    %v778 = vld [vmem:[%s7 + $0x150] sm:$0xff]
    %v779 = vld [vmem:[%s7 + $0x158] sm:$0xff]
    %v780 = vld [vmem:[%s7 + $0x160] sm:$0xff]
    %v781 = vld [vmem:[%s7 + $0x168] sm:$0xff]
    %v782 = vld [vmem:[%s7 + $0x170] sm:$0xff]
    %v783 = vld [vmem:[%s7 + $0x178] sm:$0xff]
    %v784 = vld [vmem:[%s7 + $0x180] sm:$0xff]
    %v785 = vld [vmem:[%s7 + $0x188] sm:$0xff]
    %v786 = vld [vmem:[%s7 + $0x190] sm:$0xff]
    %v787 = vld [vmem:[%s7 + $0x198] sm:$0xff]
    %v788 = vld [vmem:[%s7 + $0x1a0] sm:$0xff]
    %v789 = vld [vmem:[%s7 + $0x1a8] sm:$0xff]
    %v790 = vld [vmem:[%s7 + $0x1b0] sm:$0xff]
    %v791 = vld [vmem:[%s7 + $0x1b8] sm:$0xff]
    %v792 = vld [vmem:[%s7 + $0x1c0] sm:$0xff]
    %v793 = vld [vmem:[%s7 + $0x1c8] sm:$0xff]
    %v794 = vld [vmem:[%s7 + $0x1d0] sm:$0xff]
    %v795 = vld [vmem:[%s7 + $0x1d8] sm:$0xff]
    %v796 = vld [vmem:[%s7 + $0x1e0] sm:$0xff]
    %v797 = vld [vmem:[%s7 + $0x1e8] sm:$0xff]
    %v798 = vld [vmem:[%s7 + $0x1f0] sm:$0xff]
    %v799 = vld [vmem:[%s7 + $0x1f8] sm:$0xff]
    %v800 = vld [vmem:[#allocation4] sm:$0xf]
    %v802 = vlaneseq
    %v803 = vshrl.u32 %v802, 7
    %v804 = vsub.s32 0, %v803
    %v805 = vrot.slane %v800, %v804
    %v806 = vlaneseq
    %v807 = vshrl.u32 %v806, 7
    %v808 = vsub.s32 1, %v807
    %v809 = vrot.slane %v800, %v808
    %v810 = vlaneseq
    %v811 = vshrl.u32 %v810, 7
    %v812 = vsub.s32 2, %v811
    %v813 = vrot.slane %v800, %v812
    %v814 = vlaneseq
    %v815 = vshrl.u32 %v814, 7
    %v816 = vsub.s32 3, %v815
    %v817 = vrot.slane %v800, %v816
    %v886 = vunpack.c.l.b16 %v736
    %v887 = vunpack.c.h.b16 %v736
    %v888 = vunpack.c.l.b16 %v737
    %v889 = vunpack.c.h.b16 %v737
    %v890 = vunpack.c.l.b16 %v738
    %v891 = vunpack.c.h.b16 %v738
    %v892 = vunpack.c.l.b16 %v739
    %v893 = vunpack.c.h.b16 %v739
    %v894 = vunpack.c.l.b16 %v740
    %v895 = vunpack.c.h.b16 %v740
    %v896 = vunpack.c.l.b16 %v741
    %v897 = vunpack.c.h.b16 %v741
    %v898 = vunpack.c.l.b16 %v742
    %v899 = vunpack.c.h.b16 %v742
    %v900 = vunpack.c.l.b16 %v743
    %v901 = vunpack.c.h.b16 %v743
    %v902 = vunpack.c.l.b16 %v744
    %v903 = vunpack.c.h.b16 %v744
    %v904 = vunpack.c.l.b16 %v745
    %v905 = vunpack.c.h.b16 %v745
    %v906 = vunpack.c.l.b16 %v746
    %v907 = vunpack.c.h.b16 %v746
    %v908 = vunpack.c.l.b16 %v747
    %v909 = vunpack.c.h.b16 %v747
    %v910 = vunpack.c.l.b16 %v748
    %v911 = vunpack.c.h.b16 %v748
    %v912 = vunpack.c.l.b16 %v749
    %v913 = vunpack.c.h.b16 %v749
    %v914 = vunpack.c.l.b16 %v750
    %v915 = vunpack.c.h.b16 %v750
    %v916 = vunpack.c.l.b16 %v751
    %v917 = vunpack.c.h.b16 %v751
    %v918 = vunpack.c.l.b16 %v752
    %v919 = vunpack.c.h.b16 %v752
    %v920 = vunpack.c.l.b16 %v753
    %v921 = vunpack.c.h.b16 %v753
    %v922 = vunpack.c.l.b16 %v754
    %v923 = vunpack.c.h.b16 %v754
    %v924 = vunpack.c.l.b16 %v755
    %v925 = vunpack.c.h.b16 %v755
    %v926 = vunpack.c.l.b16 %v756
    %v927 = vunpack.c.h.b16 %v756
    %v928 = vunpack.c.l.b16 %v757
    %v929 = vunpack.c.h.b16 %v757
    %v930 = vunpack.c.l.b16 %v758
    %v931 = vunpack.c.h.b16 %v758
    %v932 = vunpack.c.l.b16 %v759
    %v933 = vunpack.c.h.b16 %v759
    %v934 = vunpack.c.l.b16 %v760
    %v935 = vunpack.c.h.b16 %v760
    %v936 = vunpack.c.l.b16 %v761
    %v937 = vunpack.c.h.b16 %v761
    %v938 = vunpack.c.l.b16 %v762
    %v939 = vunpack.c.h.b16 %v762
    %v940 = vunpack.c.l.b16 %v763
    %v941 = vunpack.c.h.b16 %v763
    %v942 = vunpack.c.l.b16 %v764
    %v943 = vunpack.c.h.b16 %v764
    %v944 = vunpack.c.l.b16 %v765
    %v945 = vunpack.c.h.b16 %v765
    %v946 = vunpack.c.l.b16 %v766
    %v947 = vunpack.c.h.b16 %v766
    %v948 = vunpack.c.l.b16 %v767
    %v949 = vunpack.c.h.b16 %v767
    %v950 = vunpack.c.l.b16 %v768
    %v951 = vunpack.c.h.b16 %v768
    %v952 = vunpack.c.l.b16 %v769
    %v953 = vunpack.c.h.b16 %v769
    %v954 = vunpack.c.l.b16 %v770
    %v955 = vunpack.c.h.b16 %v770
    %v956 = vunpack.c.l.b16 %v771
    %v957 = vunpack.c.h.b16 %v771
    %v958 = vunpack.c.l.b16 %v772
    %v959 = vunpack.c.h.b16 %v772
    %v960 = vunpack.c.l.b16 %v773
    %v961 = vunpack.c.h.b16 %v773
    %v962 = vunpack.c.l.b16 %v774
    %v963 = vunpack.c.h.b16 %v774
    %v964 = vunpack.c.l.b16 %v775
    %v965 = vunpack.c.h.b16 %v775
    %v966 = vunpack.c.l.b16 %v776
    %v967 = vunpack.c.h.b16 %v776
    %v968 = vunpack.c.l.b16 %v777
    %v969 = vunpack.c.h.b16 %v777
    %v970 = vunpack.c.l.b16 %v778
    %v971 = vunpack.c.h.b16 %v778
    %v972 = vunpack.c.l.b16 %v779
    %v973 = vunpack.c.h.b16 %v779
    %v974 = vunpack.c.l.b16 %v780
    %v975 = vunpack.c.h.b16 %v780
    %v976 = vunpack.c.l.b16 %v781
    %v977 = vunpack.c.h.b16 %v781
    %v978 = vunpack.c.l.b16 %v782
    %v979 = vunpack.c.h.b16 %v782
    %v980 = vunpack.c.l.b16 %v783
    %v981 = vunpack.c.h.b16 %v783
    %v982 = vunpack.c.l.b16 %v784
    %v983 = vunpack.c.h.b16 %v784
    %v984 = vunpack.c.l.b16 %v785
    %v985 = vunpack.c.h.b16 %v785
    %v986 = vunpack.c.l.b16 %v786
    %v987 = vunpack.c.h.b16 %v786
    %v988 = vunpack.c.l.b16 %v787
    %v989 = vunpack.c.h.b16 %v787
    %v990 = vunpack.c.l.b16 %v788
    %v991 = vunpack.c.h.b16 %v788
    %v992 = vunpack.c.l.b16 %v789
    %v993 = vunpack.c.h.b16 %v789
    %v994 = vunpack.c.l.b16 %v790
    %v995 = vunpack.c.h.b16 %v790
    %v996 = vunpack.c.l.b16 %v791
    %v997 = vunpack.c.h.b16 %v791
    %v998 = vunpack.c.l.b16 %v792
    %v999 = vunpack.c.h.b16 %v792
    %v1000 = vunpack.c.l.b16 %v793
    %v1001 = vunpack.c.h.b16 %v793
    %v1002 = vunpack.c.l.b16 %v794
    %v1003 = vunpack.c.h.b16 %v794
    %v1004 = vunpack.c.l.b16 %v795
    %v1005 = vunpack.c.h.b16 %v795
    %v1006 = vunpack.c.l.b16 %v796
    %v1007 = vunpack.c.h.b16 %v796
    %v1008 = vunpack.c.l.b16 %v797
    %v1009 = vunpack.c.h.b16 %v797
    %v1010 = vunpack.c.l.b16 %v798
    %v1011 = vunpack.c.h.b16 %v798
    %v1012 = vunpack.c.l.b16 %v799
    %v1013 = vunpack.c.h.b16 %v799
    %v1014 = vpack.c.b16 %v890, %v886
    %v1015 = vpack.c.b16 %v891, %v887
    %v1016 = vpack.c.b16 %v892, %v888
    %v1017 = vpack.c.b16 %v893, %v889
    %v1018 = vpack.c.b16 %v898, %v894
    %v1019 = vpack.c.b16 %v899, %v895
    %v1020 = vpack.c.b16 %v900, %v896
    %v1021 = vpack.c.b16 %v901, %v897
    %v1022 = vpack.c.b16 %v906, %v902
    %v1023 = vpack.c.b16 %v907, %v903
    %v1024 = vpack.c.b16 %v908, %v904
    %v1025 = vpack.c.b16 %v909, %v905
    %v1026 = vpack.c.b16 %v914, %v910
    %v1027 = vpack.c.b16 %v915, %v911
    %v1028 = vpack.c.b16 %v916, %v912
    %v1029 = vpack.c.b16 %v917, %v913
    %v1030 = vpack.c.b16 %v922, %v918
    %v1031 = vpack.c.b16 %v923, %v919
    %v1032 = vpack.c.b16 %v924, %v920
    %v1033 = vpack.c.b16 %v925, %v921
    %v1034 = vpack.c.b16 %v930, %v926
    %v1035 = vpack.c.b16 %v931, %v927
    %v1036 = vpack.c.b16 %v932, %v928
    %v1037 = vpack.c.b16 %v933, %v929
    %v1038 = vpack.c.b16 %v938, %v934
    %v1039 = vpack.c.b16 %v939, %v935
    %v1040 = vpack.c.b16 %v940, %v936
    %v1041 = vpack.c.b16 %v941, %v937
    %v1042 = vpack.c.b16 %v946, %v942
    %v1043 = vpack.c.b16 %v947, %v943
    %v1044 = vpack.c.b16 %v948, %v944
    %v1045 = vpack.c.b16 %v949, %v945
    %v1046 = vpack.c.b16 %v954, %v950
    %v1047 = vpack.c.b16 %v955, %v951
    %v1048 = vpack.c.b16 %v956, %v952
    %v1049 = vpack.c.b16 %v957, %v953
    %v1050 = vpack.c.b16 %v962, %v958
    %v1051 = vpack.c.b16 %v963, %v959
    %v1052 = vpack.c.b16 %v964, %v960
    %v1053 = vpack.c.b16 %v965, %v961
    %v1054 = vpack.c.b16 %v970, %v966
    %v1055 = vpack.c.b16 %v971, %v967
    %v1056 = vpack.c.b16 %v972, %v968
    %v1057 = vpack.c.b16 %v973, %v969
    %v1058 = vpack.c.b16 %v978, %v974
    %v1059 = vpack.c.b16 %v979, %v975
    %v1060 = vpack.c.b16 %v980, %v976
    %v1061 = vpack.c.b16 %v981, %v977
    %v1062 = vpack.c.b16 %v986, %v982
    %v1063 = vpack.c.b16 %v987, %v983
    %v1064 = vpack.c.b16 %v988, %v984
    %v1065 = vpack.c.b16 %v989, %v985
    %v1066 = vpack.c.b16 %v994, %v990
    %v1067 = vpack.c.b16 %v995, %v991
    %v1068 = vpack.c.b16 %v996, %v992
    %v1069 = vpack.c.b16 %v997, %v993
    %v1070 = vpack.c.b16 %v1002, %v998
    %v1071 = vpack.c.b16 %v1003, %v999
    %v1072 = vpack.c.b16 %v1004, %v1000
    %v1073 = vpack.c.b16 %v1005, %v1001
    %v1074 = vpack.c.b16 %v1010, %v1006
    %v1075 = vpack.c.b16 %v1011, %v1007
    %v1076 = vpack.c.b16 %v1012, %v1008
    %v1077 = vpack.c.b16 %v1013, %v1009
    %1142 = vmatprep.subr.bf16.mxu0 %v1043
    %1143 = vmatpush1.bf16.msra.mxu0 %v1042
    %1144 = vmatprep.subr.bf16.mxu0 %v1039
    %1145 = vmatpush1.bf16.msra.mxu0 %v1038
    %1146 = vmatprep.subr.bf16.mxu0 %v1035
    %1147 = vmatpush1.bf16.msra.mxu0 %v1034
    %1148 = vmatprep.subr.bf16.mxu0 %v1031
    %1149 = vmatpush1.bf16.msra.mxu0 %v1030
    %1150 = vmatprep.subr.bf16.mxu0 %v1027
    %1151 = vmatpush1.bf16.msra.mxu0 %v1026
    %1152 = vmatprep.subr.bf16.mxu0 %v1023
    %1153 = vmatpush1.bf16.msra.mxu0 %v1022
    %1154 = vmatprep.subr.bf16.mxu0 %v1019
    %1155 = vmatpush1.bf16.msra.mxu0 %v1018
    %1156 = vmatprep.subr.bf16.mxu0 %v1015
    %1157 = vmatpush1.bf16.msra.mxu0 %v1014
    %1158 = vmatprep.subr.bf16.mxu0 %v1075
    %1159 = vmatpush2.bf16.msra.mxu0 %v1074
    %1160 = vmatprep.subr.bf16.mxu0 %v1071
    %1161 = vmatpush2.bf16.msra.mxu0 %v1070
    %1162 = vmatprep.subr.bf16.mxu0 %v1067
    %1163 = vmatpush2.bf16.msra.mxu0 %v1066
    %1164 = vmatprep.subr.bf16.mxu0 %v1063
    %1165 = vmatpush2.bf16.msra.mxu0 %v1062
    %1166 = vmatprep.subr.bf16.mxu0 %v1059
    %1167 = vmatpush2.bf16.msra.mxu0 %v1058
    %1168 = vmatprep.subr.bf16.mxu0 %v1055
    %1169 = vmatpush2.bf16.msra.mxu0 %v1054
    %1170 = vmatprep.subr.bf16.mxu0 %v1051
    %1171 = vmatpush2.bf16.msra.mxu0 %v1050
    %1172 = vmatprep.subr.bf16.mxu0 %v1047
    %1173 = vmatpush2.bf16.msra.mxu0 %v1046
    %1174 = vmatprep.mubr.bf16.mxu0 %v735
    %1175 = vmatmul.mubr.bf16.gmra.mxu0 %v734
    %v1176 = vpop.f32.mrf.mxu0
    %v1177 = vadd.f32 %v805, %v1176
    %v1178 = vpop.f32.mrf.mxu0
    %v1179 = vadd.f32 %v809, %v1178
    %v1180 = vpop.f32.mrf.mxu0
    %v1181 = vpop.f32.mrf.mxu0
    %1182 = vdwg.mxu0
    %1183 = vmatprep.subr.bf16.mxu0 %v1045
    %1184 = vmatpush1.bf16.msra.mxu0 %v1044
    %1185 = vmatprep.subr.bf16.mxu0 %v1041
    %1186 = vmatpush1.bf16.msra.mxu0 %v1040
    %1187 = vmatprep.subr.bf16.mxu0 %v1037
    %1188 = vmatpush1.bf16.msra.mxu0 %v1036
    %1189 = vmatprep.subr.bf16.mxu0 %v1033
    %1190 = vmatpush1.bf16.msra.mxu0 %v1032
    %1191 = vmatprep.subr.bf16.mxu0 %v1029
    %1192 = vmatpush1.bf16.msra.mxu0 %v1028
    %1193 = vmatprep.subr.bf16.mxu0 %v1025
    %1194 = vmatpush1.bf16.msra.mxu0 %v1024
    %1195 = vmatprep.subr.bf16.mxu0 %v1021
    %1196 = vmatpush1.bf16.msra.mxu0 %v1020
    %1197 = vmatprep.subr.bf16.mxu0 %v1017
    %1198 = vmatpush1.bf16.msra.mxu0 %v1016
    %1199 = vmatprep.subr.bf16.mxu0 %v1077
    %1200 = vmatpush2.bf16.msra.mxu0 %v1076
    %1201 = vmatprep.subr.bf16.mxu0 %v1073
    %1202 = vmatpush2.bf16.msra.mxu0 %v1072
    %1203 = vmatprep.subr.bf16.mxu0 %v1069
    %1204 = vmatpush2.bf16.msra.mxu0 %v1068
    %1205 = vmatprep.subr.bf16.mxu0 %v1065
    %1206 = vmatpush2.bf16.msra.mxu0 %v1064
    %1207 = vmatprep.subr.bf16.mxu0 %v1061
    %1208 = vmatpush2.bf16.msra.mxu0 %v1060
    %1209 = vmatprep.subr.bf16.mxu0 %v1057
    %1210 = vmatpush2.bf16.msra.mxu0 %v1056
    %1211 = vmatprep.subr.bf16.mxu0 %v1053
    %1212 = vmatpush2.bf16.msra.mxu0 %v1052
    %1213 = vmatprep.subr.bf16.mxu0 %v1049
    %1214 = vmatpush2.bf16.msra.mxu0 %v1048
    %1215 = vmatprep.mubr.bf16.mxu0 %v735
    %1216 = vmatmul.mubr.bf16.gmra.mxu0 %v734
    %v1217 = vpop.f32.mrf.mxu0
    %v1218 = vadd.f32 %v813, %v1217
    %v1219 = vpop.f32.mrf.mxu0
    %v1220 = vadd.f32 %v817, %v1219
    %v1221 = vpop.f32.mrf.mxu0
    %v1222 = vpop.f32.mrf.mxu0
    %1223 = vdwg.mxu0
    %vm1224 = vcmp.gt.f32.partialorder %v1177, 0.0
    %vm1225 = vcmp.gt.f32.partialorder %v1179, 0.0
    %vm1226 = vcmp.gt.f32.partialorder %v1218, 0.0
    %vm1227 = vcmp.gt.f32.partialorder %v1220, 0.0
    %v1228 = vmul.f32 %v1177, 0.2
    %v1229 = vmul.f32 %v1179, 0.2
    %v1230 = vmul.f32 %v1218, 0.2
    %v1231 = vmul.f32 %v1220, 0.2
    %v1232 = vsel %vm1224, %v1177, %v1228
    %v1233 = vsel %vm1225, %v1179, %v1229
    %v1234 = vsel %vm1226, %v1218, %v1230
    %v1235 = vsel %vm1227, %v1220, %v1231
    %vm1236 = vcmask 1041408
    %v1237 = vsel %vm1236, %v1232, 0.0
    %v1238 = vrot.slane %v1237, 4
    %v1239 = vadd.f32 %v1237, %v1238
    %v1240 = vrot.slane %v1239, 2
    %v1241 = vadd.f32 %v1239, %v1240
    %v1242 = vrot.slane %v1241, 1
    %v1243 = vadd.f32 %v1241, %v1242
    %v1244 = vsel %vm1236, %v1233, 0.0
    %v1245 = vrot.slane %v1244, 4
    %v1246 = vadd.f32 %v1244, %v1245
    %v1247 = vrot.slane %v1246, 2
    %v1248 = vadd.f32 %v1246, %v1247
    %v1249 = vrot.slane %v1248, 1
    %v1250 = vadd.f32 %v1248, %v1249
    %v1251 = vsel %vm1236, %v1234, 0.0
    %v1252 = vrot.slane %v1251, 4
    %v1253 = vadd.f32 %v1251, %v1252
    %v1254 = vrot.slane %v1253, 2
    %v1255 = vadd.f32 %v1253, %v1254
    %v1256 = vrot.slane %v1255, 1
    %v1257 = vadd.f32 %v1255, %v1256
    %v1258 = vsel %vm1236, %v1235, 0.0
    %v1259 = vrot.slane %v1258, 4
    %v1260 = vadd.f32 %v1258, %v1259
    %v1261 = vrot.slane %v1260, 2
    %v1262 = vadd.f32 %v1260, %v1261
    %v1263 = vrot.slane %v1262, 1
    %v1264 = vadd.f32 %v1262, %v1263
    %v1265 = vmul.f32 %v1232, %v1232
    %v1266 = vmul.f32 %v1233, %v1233
    %v1267 = vmul.f32 %v1234, %v1234
    %v1268 = vmul.f32 %v1235, %v1235
    %v1269 = vsel %vm1236, %v1265, 0.0
    %v1270 = vrot.slane %v1269, 4
    %v1271 = vadd.f32 %v1269, %v1270
    %v1272 = vrot.slane %v1271, 2
    %v1273 = vadd.f32 %v1271, %v1272
    %v1274 = vrot.slane %v1273, 1
    %v1275 = vadd.f32 %v1273, %v1274
    %v1276 = vsel %vm1236, %v1266, 0.0
    %v1277 = vrot.slane %v1276, 4
    %v1278 = vadd.f32 %v1276, %v1277
    %v1279 = vrot.slane %v1278, 2
    %v1280 = vadd.f32 %v1278, %v1279
    %v1281 = vrot.slane %v1280, 1
    %v1282 = vadd.f32 %v1280, %v1281
    %v1283 = vsel %vm1236, %v1267, 0.0
    %v1284 = vrot.slane %v1283, 4
    %v1285 = vadd.f32 %v1283, %v1284
    %v1286 = vrot.slane %v1285, 2
    %v1287 = vadd.f32 %v1285, %v1286
    %v1288 = vrot.slane %v1287, 1
    %v1289 = vadd.f32 %v1287, %v1288
    %v1290 = vsel %vm1236, %v1268, 0.0
    %v1291 = vrot.slane %v1290, 4
    %v1292 = vadd.f32 %v1290, %v1291
    %v1293 = vrot.slane %v1292, 2
    %v1294 = vadd.f32 %v1292, %v1293
    %v1295 = vrot.slane %v1294, 1
    %v1296 = vadd.f32 %v1294, %v1295
    %v1297 = vld [vmem:[%s11] sm:$0xff]
    %v1298 = vld [vmem:[%s11 + $0x8] sm:$0xff]
    %v1299 = vld [vmem:[%s11 + $0x10] sm:$0xff]
    %v1300 = vld [vmem:[%s11 + $0x18] sm:$0xff]
    %v1301 = vld [vmem:[%s11 + $0x20] sm:$0xff]
    %v1302 = vld [vmem:[%s11 + $0x28] sm:$0xff]
    %v1303 = vld [vmem:[%s11 + $0x30] sm:$0xff]
    %v1304 = vld [vmem:[%s11 + $0x38] sm:$0xff]
    %v1305 = vld [vmem:[%s11 + $0x40] sm:$0xff]
    %v1306 = vld [vmem:[%s11 + $0x48] sm:$0xff]
    %v1307 = vld [vmem:[%s11 + $0x50] sm:$0xff]
    %v1308 = vld [vmem:[%s11 + $0x58] sm:$0xff]
    %v1309 = vld [vmem:[%s11 + $0x60] sm:$0xff]
    %v1310 = vld [vmem:[%s11 + $0x68] sm:$0xff]
    %v1311 = vld [vmem:[%s11 + $0x70] sm:$0xff]
    %v1312 = vld [vmem:[%s11 + $0x78] sm:$0xff]
    %v1313 = vld [vmem:[%s11 + $0x80] sm:$0xff]
    %v1314 = vld [vmem:[%s11 + $0x88] sm:$0xff]
    %v1315 = vld [vmem:[%s11 + $0x90] sm:$0xff]
    %v1316 = vld [vmem:[%s11 + $0x98] sm:$0xff]
    %v1317 = vld [vmem:[%s11 + $0xa0] sm:$0xff]
    %v1318 = vld [vmem:[%s11 + $0xa8] sm:$0xff]
    %v1319 = vld [vmem:[%s11 + $0xb0] sm:$0xff]
    %v1320 = vld [vmem:[%s11 + $0xb8] sm:$0xff]
    %v1321 = vld [vmem:[%s11 + $0xc0] sm:$0xff]
    %v1322 = vld [vmem:[%s11 + $0xc8] sm:$0xff]
    %v1323 = vld [vmem:[%s11 + $0xd0] sm:$0xff]
    %v1324 = vld [vmem:[%s11 + $0xd8] sm:$0xff]
    %v1325 = vld [vmem:[%s11 + $0xe0] sm:$0xff]
    %v1326 = vld [vmem:[%s11 + $0xe8] sm:$0xff]
    %v1327 = vld [vmem:[%s11 + $0xf0] sm:$0xff]
    %v1328 = vld [vmem:[%s11 + $0xf8] sm:$0xff]
    %v1329 = vld [vmem:[%s11 + $0x100] sm:$0xff]
    %v1330 = vld [vmem:[%s11 + $0x108] sm:$0xff]
    %v1331 = vld [vmem:[%s11 + $0x110] sm:$0xff]
    %v1332 = vld [vmem:[%s11 + $0x118] sm:$0xff]
    %v1333 = vld [vmem:[%s11 + $0x120] sm:$0xff]
    %v1334 = vld [vmem:[%s11 + $0x128] sm:$0xff]
    %v1335 = vld [vmem:[%s11 + $0x130] sm:$0xff]
    %v1336 = vld [vmem:[%s11 + $0x138] sm:$0xff]
    %v1337 = vld [vmem:[%s11 + $0x140] sm:$0xff]
    %v1338 = vld [vmem:[%s11 + $0x148] sm:$0xff]
    %v1339 = vld [vmem:[%s11 + $0x150] sm:$0xff]
    %v1340 = vld [vmem:[%s11 + $0x158] sm:$0xff]
    %v1341 = vld [vmem:[%s11 + $0x160] sm:$0xff]
    %v1342 = vld [vmem:[%s11 + $0x168] sm:$0xff]
    %v1343 = vld [vmem:[%s11 + $0x170] sm:$0xff]
    %v1344 = vld [vmem:[%s11 + $0x178] sm:$0xff]
    %v1345 = vld [vmem:[%s11 + $0x180] sm:$0xff]
    %v1346 = vld [vmem:[%s11 + $0x188] sm:$0xff]
    %v1347 = vld [vmem:[%s11 + $0x190] sm:$0xff]
    %v1348 = vld [vmem:[%s11 + $0x198] sm:$0xff]
    %v1349 = vld [vmem:[%s11 + $0x1a0] sm:$0xff]
    %v1350 = vld [vmem:[%s11 + $0x1a8] sm:$0xff]
    %v1351 = vld [vmem:[%s11 + $0x1b0] sm:$0xff]
    %v1352 = vld [vmem:[%s11 + $0x1b8] sm:$0xff]
    %v1353 = vld [vmem:[%s11 + $0x1c0] sm:$0xff]
    %v1354 = vld [vmem:[%s11 + $0x1c8] sm:$0xff]
    %v1355 = vld [vmem:[%s11 + $0x1d0] sm:$0xff]
    %v1356 = vld [vmem:[%s11 + $0x1d8] sm:$0xff]
    %v1357 = vld [vmem:[%s11 + $0x1e0] sm:$0xff]
    %v1358 = vld [vmem:[%s11 + $0x1e8] sm:$0xff]
    %v1359 = vld [vmem:[%s11 + $0x1f0] sm:$0xff]
    %v1360 = vld [vmem:[%s11 + $0x1f8] sm:$0xff]
    %1361 = vmatprep.subr.mxu0 0.0
    %1362 = vmatpush1.msra.mxu0 %v1312
    %1363 = vmatprep.subr.mxu0 0.0
    %1364 = vmatpush1.msra.mxu0 %v1311
    %1365 = vmatprep.subr.mxu0 0.0
    %1366 = vmatpush1.msra.mxu0 %v1310
    %1367 = vmatprep.subr.mxu0 0.0
    %1368 = vmatpush1.msra.mxu0 %v1309
    %1369 = vmatprep.subr.mxu0 0.0
    %1370 = vmatpush1.msra.mxu0 %v1308
    %1371 = vmatprep.subr.mxu0 0.0
    %1372 = vmatpush1.msra.mxu0 %v1307
    %1373 = vmatprep.subr.mxu0 0.0
    %1374 = vmatpush1.msra.mxu0 %v1306
    %1375 = vmatprep.subr.mxu0 0.0
    %1376 = vmatpush1.msra.mxu0 %v1305
    %1377 = vmatprep.subr.mxu0 0.0
    %1378 = vmatpush1.msra.mxu0 %v1304
    %1379 = vmatprep.subr.mxu0 0.0
    %1380 = vmatpush1.msra.mxu0 %v1303
    %1381 = vmatprep.subr.mxu0 0.0
    %1382 = vmatpush1.msra.mxu0 %v1302
    %1383 = vmatprep.subr.mxu0 0.0
    %1384 = vmatpush1.msra.mxu0 %v1301
    %1385 = vmatprep.subr.mxu0 0.0
    %1386 = vmatpush1.msra.mxu0 %v1300
    %1387 = vmatprep.subr.mxu0 0.0
    %1388 = vmatpush1.msra.mxu0 %v1299
    %1389 = vmatprep.subr.mxu0 0.0
    %1390 = vmatpush1.msra.mxu0 %v1298
    %1391 = vmatprep.subr.mxu0 0.0
    %1392 = vmatpush1.msra.mxu0 %v1297
    %1393 = vmatprep.subr.mxu0 0.0
    %1394 = vmatpush2.msra.mxu0 %v1328
    %1395 = vmatprep.subr.mxu0 0.0
    %1396 = vmatpush2.msra.mxu0 %v1327
    %1397 = vmatprep.subr.mxu0 0.0
    %1398 = vmatpush2.msra.mxu0 %v1326
    %1399 = vmatprep.subr.mxu0 0.0
    %1400 = vmatpush2.msra.mxu0 %v1325
    %1401 = vmatprep.subr.mxu0 0.0
    %1402 = vmatpush2.msra.mxu0 %v1324
    %1403 = vmatprep.subr.mxu0 0.0
    %1404 = vmatpush2.msra.mxu0 %v1323
    %1405 = vmatprep.subr.mxu0 0.0
    %1406 = vmatpush2.msra.mxu0 %v1322
    %1407 = vmatprep.subr.mxu0 0.0
    %1408 = vmatpush2.msra.mxu0 %v1321
    %1409 = vmatprep.subr.mxu0 0.0
    %1410 = vmatpush2.msra.mxu0 %v1320
    %1411 = vmatprep.subr.mxu0 0.0
    %1412 = vmatpush2.msra.mxu0 %v1319
    %1413 = vmatprep.subr.mxu0 0.0
    %1414 = vmatpush2.msra.mxu0 %v1318
    %1415 = vmatprep.subr.mxu0 0.0
    %1416 = vmatpush2.msra.mxu0 %v1317
    %1417 = vmatprep.subr.mxu0 0.0
    %1418 = vmatpush2.msra.mxu0 %v1316
    %1419 = vmatprep.subr.mxu0 0.0
    %1420 = vmatpush2.msra.mxu0 %v1315
    %1421 = vmatprep.subr.mxu0 0.0
    %1422 = vmatpush2.msra.mxu0 %v1314
    %1423 = vmatprep.subr.mxu0 0.0
    %1424 = vmatpush2.msra.mxu0 %v1313
    %1425 = vmatprep.mubr.f32.mxu0 %v1250
    %1426 = vmatmul.mubr.f32.gmra.mxu0 %v1243
    %v1427 = vpop.f32.mrf.mxu0
    %v1428 = vadd.f32 0.0, %v1427
    %v1429 = vpop.f32.mrf.mxu0
    %1430 = vdwg.mxu0
    %1431 = vmatprep.subr.mxu0 0.0
    %1432 = vmatpush1.msra.mxu0 %v1344
    %1433 = vmatprep.subr.mxu0 0.0
    %1434 = vmatpush1.msra.mxu0 %v1343
    %1435 = vmatprep.subr.mxu0 0.0
    %1436 = vmatpush1.msra.mxu0 %v1342
    %1437 = vmatprep.subr.mxu0 0.0
    %1438 = vmatpush1.msra.mxu0 %v1341
    %1439 = vmatprep.subr.mxu0 0.0
    %1440 = vmatpush1.msra.mxu0 %v1340
    %1441 = vmatprep.subr.mxu0 0.0
    %1442 = vmatpush1.msra.mxu0 %v1339
    %1443 = vmatprep.subr.mxu0 0.0
    %1444 = vmatpush1.msra.mxu0 %v1338
    %1445 = vmatprep.subr.mxu0 0.0
    %1446 = vmatpush1.msra.mxu0 %v1337
    %1447 = vmatprep.subr.mxu0 0.0
    %1448 = vmatpush1.msra.mxu0 %v1336
    %1449 = vmatprep.subr.mxu0 0.0
    %1450 = vmatpush1.msra.mxu0 %v1335
    %1451 = vmatprep.subr.mxu0 0.0
    %1452 = vmatpush1.msra.mxu0 %v1334
    %1453 = vmatprep.subr.mxu0 0.0
    %1454 = vmatpush1.msra.mxu0 %v1333
    %1455 = vmatprep.subr.mxu0 0.0
    %1456 = vmatpush1.msra.mxu0 %v1332
    %1457 = vmatprep.subr.mxu0 0.0
    %1458 = vmatpush1.msra.mxu0 %v1331
    %1459 = vmatprep.subr.mxu0 0.0
    %1460 = vmatpush1.msra.mxu0 %v1330
    %1461 = vmatprep.subr.mxu0 0.0
    %1462 = vmatpush1.msra.mxu0 %v1329
    %1463 = vmatprep.subr.mxu0 0.0
    %1464 = vmatpush2.msra.mxu0 %v1360
    %1465 = vmatprep.subr.mxu0 0.0
    %1466 = vmatpush2.msra.mxu0 %v1359
    %1467 = vmatprep.subr.mxu0 0.0
    %1468 = vmatpush2.msra.mxu0 %v1358
    %1469 = vmatprep.subr.mxu0 0.0
    %1470 = vmatpush2.msra.mxu0 %v1357
    %1471 = vmatprep.subr.mxu0 0.0
    %1472 = vmatpush2.msra.mxu0 %v1356
    %1473 = vmatprep.subr.mxu0 0.0
    %1474 = vmatpush2.msra.mxu0 %v1355
    %1475 = vmatprep.subr.mxu0 0.0
    %1476 = vmatpush2.msra.mxu0 %v1354
    %1477 = vmatprep.subr.mxu0 0.0
    %1478 = vmatpush2.msra.mxu0 %v1353
    %1479 = vmatprep.subr.mxu0 0.0
    %1480 = vmatpush2.msra.mxu0 %v1352
    %1481 = vmatprep.subr.mxu0 0.0
    %1482 = vmatpush2.msra.mxu0 %v1351
    %1483 = vmatprep.subr.mxu0 0.0
    %1484 = vmatpush2.msra.mxu0 %v1350
    %1485 = vmatprep.subr.mxu0 0.0
    %1486 = vmatpush2.msra.mxu0 %v1349
    %1487 = vmatprep.subr.mxu0 0.0
    %1488 = vmatpush2.msra.mxu0 %v1348
    %1489 = vmatprep.subr.mxu0 0.0
    %1490 = vmatpush2.msra.mxu0 %v1347
    %1491 = vmatprep.subr.mxu0 0.0
    %1492 = vmatpush2.msra.mxu0 %v1346
    %1493 = vmatprep.subr.mxu0 0.0
    %1494 = vmatpush2.msra.mxu0 %v1345
    %1495 = vmatprep.mubr.f32.mxu0 %v1264
    %1496 = vmatmul.mubr.f32.gmra.mxu0 %v1257
    %v1497 = vpop.f32.mrf.mxu0
    %v1498 = vadd.f32 %v1428, %v1497
    %v1499 = vpop.f32.mrf.mxu0
    %1500 = vdwg.mxu0
    %v1501 = vrcp.pop 128.0
    %v1502 = vmul.f32 %v1498, %v1501
    %1503 = vmatprep.subr.mxu0 0.0
    %1504 = vmatpush1.msra.mxu0 %v1312
    %1505 = vmatprep.subr.mxu0 0.0
    %1506 = vmatpush1.msra.mxu0 %v1311
    %1507 = vmatprep.subr.mxu0 0.0
    %1508 = vmatpush1.msra.mxu0 %v1310
    %1509 = vmatprep.subr.mxu0 0.0
    %1510 = vmatpush1.msra.mxu0 %v1309
    %1511 = vmatprep.subr.mxu0 0.0
    %1512 = vmatpush1.msra.mxu0 %v1308
    %1513 = vmatprep.subr.mxu0 0.0
    %1514 = vmatpush1.msra.mxu0 %v1307
    %1515 = vmatprep.subr.mxu0 0.0
    %1516 = vmatpush1.msra.mxu0 %v1306
    %1517 = vmatprep.subr.mxu0 0.0
    %1518 = vmatpush1.msra.mxu0 %v1305
    %1519 = vmatprep.subr.mxu0 0.0
    %1520 = vmatpush1.msra.mxu0 %v1304
    %1521 = vmatprep.subr.mxu0 0.0
    %1522 = vmatpush1.msra.mxu0 %v1303
    %1523 = vmatprep.subr.mxu0 0.0
    %1524 = vmatpush1.msra.mxu0 %v1302
    %1525 = vmatprep.subr.mxu0 0.0
    %1526 = vmatpush1.msra.mxu0 %v1301
    %1527 = vmatprep.subr.mxu0 0.0
    %1528 = vmatpush1.msra.mxu0 %v1300
    %1529 = vmatprep.subr.mxu0 0.0
    %1530 = vmatpush1.msra.mxu0 %v1299
    %1531 = vmatprep.subr.mxu0 0.0
    %1532 = vmatpush1.msra.mxu0 %v1298
    %1533 = vmatprep.subr.mxu0 0.0
    %1534 = vmatpush1.msra.mxu0 %v1297
    %1535 = vmatprep.subr.mxu0 0.0
    %1536 = vmatpush2.msra.mxu0 %v1328
    %1537 = vmatprep.subr.mxu0 0.0
    %1538 = vmatpush2.msra.mxu0 %v1327
    %1539 = vmatprep.subr.mxu0 0.0
    %1540 = vmatpush2.msra.mxu0 %v1326
    %1541 = vmatprep.subr.mxu0 0.0
    %1542 = vmatpush2.msra.mxu0 %v1325
    %1543 = vmatprep.subr.mxu0 0.0
    %1544 = vmatpush2.msra.mxu0 %v1324
    %1545 = vmatprep.subr.mxu0 0.0
    %1546 = vmatpush2.msra.mxu0 %v1323
    %1547 = vmatprep.subr.mxu0 0.0
    %1548 = vmatpush2.msra.mxu0 %v1322
    %1549 = vmatprep.subr.mxu0 0.0
    %1550 = vmatpush2.msra.mxu0 %v1321
    %1551 = vmatprep.subr.mxu0 0.0
    %1552 = vmatpush2.msra.mxu0 %v1320
    %1553 = vmatprep.subr.mxu0 0.0
    %1554 = vmatpush2.msra.mxu0 %v1319
    %1555 = vmatprep.subr.mxu0 0.0
    %1556 = vmatpush2.msra.mxu0 %v1318
    %1557 = vmatprep.subr.mxu0 0.0
    %1558 = vmatpush2.msra.mxu0 %v1317
    %1559 = vmatprep.subr.mxu0 0.0
    %1560 = vmatpush2.msra.mxu0 %v1316
    %1561 = vmatprep.subr.mxu0 0.0
    %1562 = vmatpush2.msra.mxu0 %v1315
    %1563 = vmatprep.subr.mxu0 0.0
    %1564 = vmatpush2.msra.mxu0 %v1314
    %1565 = vmatprep.subr.mxu0 0.0
    %1566 = vmatpush2.msra.mxu0 %v1313
    %1567 = vmatprep.mubr.f32.mxu0 %v1282
    %1568 = vmatmul.mubr.f32.gmra.mxu0 %v1275
    %v1569 = vpop.f32.mrf.mxu0
    %v1570 = vadd.f32 0.0, %v1569
    %v1571 = vpop.f32.mrf.mxu0
    %1572 = vdwg.mxu0
    %1573 = vmatprep.subr.mxu0 0.0
    %1574 = vmatpush1.msra.mxu0 %v1344
    %1575 = vmatprep.subr.mxu0 0.0
    %1576 = vmatpush1.msra.mxu0 %v1343
    %1577 = vmatprep.subr.mxu0 0.0
    %1578 = vmatpush1.msra.mxu0 %v1342
    %1579 = vmatprep.subr.mxu0 0.0
    %1580 = vmatpush1.msra.mxu0 %v1341
    %1581 = vmatprep.subr.mxu0 0.0
    %1582 = vmatpush1.msra.mxu0 %v1340
    %1583 = vmatprep.subr.mxu0 0.0
    %1584 = vmatpush1.msra.mxu0 %v1339
    %1585 = vmatprep.subr.mxu0 0.0
    %1586 = vmatpush1.msra.mxu0 %v1338
    %1587 = vmatprep.subr.mxu0 0.0
    %1588 = vmatpush1.msra.mxu0 %v1337
    %1589 = vmatprep.subr.mxu0 0.0
    %1590 = vmatpush1.msra.mxu0 %v1336
    %1591 = vmatprep.subr.mxu0 0.0
    %1592 = vmatpush1.msra.mxu0 %v1335
    %1593 = vmatprep.subr.mxu0 0.0
    %1594 = vmatpush1.msra.mxu0 %v1334
    %1595 = vmatprep.subr.mxu0 0.0
    %1596 = vmatpush1.msra.mxu0 %v1333
    %1597 = vmatprep.subr.mxu0 0.0
    %1598 = vmatpush1.msra.mxu0 %v1332
    %1599 = vmatprep.subr.mxu0 0.0
    %1600 = vmatpush1.msra.mxu0 %v1331
    %1601 = vmatprep.subr.mxu0 0.0
    %1602 = vmatpush1.msra.mxu0 %v1330
    %1603 = vmatprep.subr.mxu0 0.0
    %1604 = vmatpush1.msra.mxu0 %v1329
    %1605 = vmatprep.subr.mxu0 0.0
    %1606 = vmatpush2.msra.mxu0 %v1360
    %1607 = vmatprep.subr.mxu0 0.0
    %1608 = vmatpush2.msra.mxu0 %v1359
    %1609 = vmatprep.subr.mxu0 0.0
    %1610 = vmatpush2.msra.mxu0 %v1358
    %1611 = vmatprep.subr.mxu0 0.0
    %1612 = vmatpush2.msra.mxu0 %v1357
    %1613 = vmatprep.subr.mxu0 0.0
    %1614 = vmatpush2.msra.mxu0 %v1356
    %1615 = vmatprep.subr.mxu0 0.0
    %1616 = vmatpush2.msra.mxu0 %v1355
    %1617 = vmatprep.subr.mxu0 0.0
    %1618 = vmatpush2.msra.mxu0 %v1354
    %1619 = vmatprep.subr.mxu0 0.0
    %1620 = vmatpush2.msra.mxu0 %v1353
    %1621 = vmatprep.subr.mxu0 0.0
    %1622 = vmatpush2.msra.mxu0 %v1352
    %1623 = vmatprep.subr.mxu0 0.0
    %1624 = vmatpush2.msra.mxu0 %v1351
    %1625 = vmatprep.subr.mxu0 0.0
    %1626 = vmatpush2.msra.mxu0 %v1350
    %1627 = vmatprep.subr.mxu0 0.0
    %1628 = vmatpush2.msra.mxu0 %v1349
    %1629 = vmatprep.subr.mxu0 0.0
    %1630 = vmatpush2.msra.mxu0 %v1348
    %1631 = vmatprep.subr.mxu0 0.0
    %1632 = vmatpush2.msra.mxu0 %v1347
    %1633 = vmatprep.subr.mxu0 0.0
    %1634 = vmatpush2.msra.mxu0 %v1346
    %1635 = vmatprep.subr.mxu0 0.0
    %1636 = vmatpush2.msra.mxu0 %v1345
    %1637 = vmatprep.mubr.f32.mxu0 %v1296
    %1638 = vmatmul.mubr.f32.gmra.mxu0 %v1289
    %v1639 = vpop.f32.mrf.mxu0
    %v1640 = vadd.f32 %v1570, %v1639
    %v1641 = vpop.f32.mrf.mxu0
    %1642 = vdwg.mxu0
    %v1643 = vmul.f32 %v1640, %v1501
    %v1644 = vmul.f32 %v1502, %v1502
    %v1645 = vsub.f32 %v1643, %v1644
    %v1646 = vmax.f32 %v1645, 0.0
    %v1647 = vadd.f32 %v1646, 1e-05
    %v1648 = vrsqrt.pop %v1647
    %v1649 = vld [vmem:[#allocation7] sm:$0xff]
    %v1650 = vld [vmem:[#allocation7 + $0x8] sm:$0xff]
    %v1651 = vld [vmem:[#allocation7 + $0x10] sm:$0xff]
    %v1652 = vld [vmem:[#allocation7 + $0x18] sm:$0xff]
    %vm1653 = vcmask 64512
    %v1655 = vsel %vm1653, %v1502, 0
    %1657 = vmatprep.subr.mxu0 0.0
    %1658 = vmatpush1.msra.mxu0 0.0
    %1659 = vmatprep.subr.mxu0 0.0
    %1660 = vmatpush1.msra.mxu0 0.0
    %1661 = vmatprep.subr.mxu0 0.0
    %1662 = vmatpush1.msra.mxu0 0.0
    %1663 = vmatprep.subr.mxu0 0.0
    %1664 = vmatpush1.msra.mxu0 0.0
    %1665 = vmatprep.subr.mxu0 0.0
    %1666 = vmatpush1.msra.mxu0 0.0
    %1667 = vmatprep.subr.mxu0 0.0
    %1668 = vmatpush1.msra.mxu0 0.0
    %1669 = vmatprep.subr.mxu0 0.0
    %1670 = vmatpush1.msra.mxu0 0.0
    %1671 = vmatprep.subr.mxu0 0.0
    %1672 = vmatpush1.msra.mxu0 0.0
    %1673 = vmatprep.subr.mxu0 0.0
    %1674 = vmatpush1.msra.mxu0 0.0
    %1675 = vmatprep.subr.mxu0 0.0
    %1676 = vmatpush1.msra.mxu0 0.0
    %1677 = vmatprep.subr.mxu0 0.0
    %1678 = vmatpush1.msra.mxu0 0.0
    %1679 = vmatprep.subr.mxu0 0.0
    %1680 = vmatpush1.msra.mxu0 0.0
    %1681 = vmatprep.subr.mxu0 0.0
    %1682 = vmatpush1.msra.mxu0 0.0
    %1683 = vmatprep.subr.mxu0 0.0
    %1684 = vmatpush1.msra.mxu0 0.0
    %1685 = vmatprep.subr.mxu0 0.0
    %1686 = vmatpush1.msra.mxu0 0.0
    %1687 = vmatprep.subr.mxu0 %v1650
    %1688 = vmatpush1.msra.mxu0 %v1649
    %1689 = vmatprep.subr.mxu0 0.0
    %1690 = vmatpush2.msra.mxu0 0.0
    %1691 = vmatprep.subr.mxu0 0.0
    %1692 = vmatpush2.msra.mxu0 0.0
    %1693 = vmatprep.subr.mxu0 0.0
    %1694 = vmatpush2.msra.mxu0 0.0
    %1695 = vmatprep.subr.mxu0 0.0
    %1696 = vmatpush2.msra.mxu0 0.0
    %1697 = vmatprep.subr.mxu0 0.0
    %1698 = vmatpush2.msra.mxu0 0.0
    %1699 = vmatprep.subr.mxu0 0.0
    %1700 = vmatpush2.msra.mxu0 0.0
    %1701 = vmatprep.subr.mxu0 0.0
    %1702 = vmatpush2.msra.mxu0 0.0
    %1703 = vmatprep.subr.mxu0 0.0
    %1704 = vmatpush2.msra.mxu0 0.0
    %1705 = vmatprep.subr.mxu0 0.0
    %1706 = vmatpush2.msra.mxu0 0.0
    %1707 = vmatprep.subr.mxu0 0.0
    %1708 = vmatpush2.msra.mxu0 0.0
    %1709 = vmatprep.subr.mxu0 0.0
    %1710 = vmatpush2.msra.mxu0 0.0
    %1711 = vmatprep.subr.mxu0 0.0
    %1712 = vmatpush2.msra.mxu0 0.0
    %1713 = vmatprep.subr.mxu0 0.0
    %1714 = vmatpush2.msra.mxu0 0.0
    %1715 = vmatprep.subr.mxu0 0.0
    %1716 = vmatpush2.msra.mxu0 0.0
    %1717 = vmatprep.subr.mxu0 0.0
    %1718 = vmatpush2.msra.mxu0 0.0
    %1719 = vmatprep.subr.mxu0 0.0
    %1720 = vmatpush2.msra.mxu0 0.0
    %1721 = vmatprep.mubr.f32.mxu0 0.0
    %1722 = vmatmul.mubr.f32.gmra.mxu0 %v1655
    %v1723 = vpop.f32.mrf.mxu0
    %v1724 = vadd.f32 0.0, %v1723
    %v1725 = vpop.f32.mrf.mxu0
    %v1726 = vadd.f32 0.0, %v1725
    %1727 = vdwg.mxu0
    %1728 = vmatprep.subr.mxu0 0.0
    %1729 = vmatpush1.msra.mxu0 0.0
    %1730 = vmatprep.subr.mxu0 0.0
    %1731 = vmatpush1.msra.mxu0 0.0
    %1732 = vmatprep.subr.mxu0 0.0
    %1733 = vmatpush1.msra.mxu0 0.0
    %1734 = vmatprep.subr.mxu0 0.0
    %1735 = vmatpush1.msra.mxu0 0.0
    %1736 = vmatprep.subr.mxu0 0.0
    %1737 = vmatpush1.msra.mxu0 0.0
    %1738 = vmatprep.subr.mxu0 0.0
    %1739 = vmatpush1.msra.mxu0 0.0
    %1740 = vmatprep.subr.mxu0 0.0
    %1741 = vmatpush1.msra.mxu0 0.0
    %1742 = vmatprep.subr.mxu0 0.0
    %1743 = vmatpush1.msra.mxu0 0.0
    %1744 = vmatprep.subr.mxu0 0.0
    %1745 = vmatpush1.msra.mxu0 0.0
    %1746 = vmatprep.subr.mxu0 0.0
    %1747 = vmatpush1.msra.mxu0 0.0
    %1748 = vmatprep.subr.mxu0 0.0
    %1749 = vmatpush1.msra.mxu0 0.0
    %1750 = vmatprep.subr.mxu0 0.0
    %1751 = vmatpush1.msra.mxu0 0.0
    %1752 = vmatprep.subr.mxu0 0.0
    %1753 = vmatpush1.msra.mxu0 0.0
    %1754 = vmatprep.subr.mxu0 0.0
    %1755 = vmatpush1.msra.mxu0 0.0
    %1756 = vmatprep.subr.mxu0 0.0
    %1757 = vmatpush1.msra.mxu0 0.0
    %1758 = vmatprep.subr.mxu0 %v1652
    %1759 = vmatpush1.msra.mxu0 %v1651
    %1760 = vmatprep.subr.mxu0 0.0
    %1761 = vmatpush2.msra.mxu0 0.0
    %1762 = vmatprep.subr.mxu0 0.0
    %1763 = vmatpush2.msra.mxu0 0.0
    %1764 = vmatprep.subr.mxu0 0.0
    %1765 = vmatpush2.msra.mxu0 0.0
    %1766 = vmatprep.subr.mxu0 0.0
    %1767 = vmatpush2.msra.mxu0 0.0
    %1768 = vmatprep.subr.mxu0 0.0
    %1769 = vmatpush2.msra.mxu0 0.0
    %1770 = vmatprep.subr.mxu0 0.0
    %1771 = vmatpush2.msra.mxu0 0.0
    %1772 = vmatprep.subr.mxu0 0.0
    %1773 = vmatpush2.msra.mxu0 0.0
    %1774 = vmatprep.subr.mxu0 0.0
    %1775 = vmatpush2.msra.mxu0 0.0
    %1776 = vmatprep.subr.mxu0 0.0
    %1777 = vmatpush2.msra.mxu0 0.0
    %1778 = vmatprep.subr.mxu0 0.0
    %1779 = vmatpush2.msra.mxu0 0.0
    %1780 = vmatprep.subr.mxu0 0.0
    %1781 = vmatpush2.msra.mxu0 0.0
    %1782 = vmatprep.subr.mxu0 0.0
    %1783 = vmatpush2.msra.mxu0 0.0
    %1784 = vmatprep.subr.mxu0 0.0
    %1785 = vmatpush2.msra.mxu0 0.0
    %1786 = vmatprep.subr.mxu0 0.0
    %1787 = vmatpush2.msra.mxu0 0.0
    %1788 = vmatprep.subr.mxu0 0.0
    %1789 = vmatpush2.msra.mxu0 0.0
    %1790 = vmatprep.subr.mxu0 0.0
    %1791 = vmatpush2.msra.mxu0 0.0
    %1792 = vmatprep.mubr.f32.mxu0 0.0
    %1793 = vmatmul.mubr.f32.gmra.mxu0 %v1655
    %v1794 = vpop.f32.mrf.mxu0
    %v1795 = vadd.f32 0.0, %v1794
    %v1796 = vpop.f32.mrf.mxu0
    %v1797 = vadd.f32 0.0, %v1796
    %1798 = vdwg.mxu0
    %v1799 = vlaneseq
    %v1800 = vshrl.u32 %v1799, 7
    %v1801 = vsub.s32 0, %v1800
    %v1802 = vrot.slane %v1724, %v1801
    %v1803 = vlaneseq
    %v1804 = vshrl.u32 %v1803, 7
    %v1805 = vsub.s32 0, %v1804
    %v1806 = vrot.slane %v1726, %v1805
    %v1807 = vlaneseq
    %v1808 = vshrl.u32 %v1807, 7
    %v1809 = vsub.s32 0, %v1808
    %v1810 = vrot.slane %v1795, %v1809
    %v1811 = vlaneseq
    %v1812 = vshrl.u32 %v1811, 7
    %v1813 = vsub.s32 0, %v1812
    %v1814 = vrot.slane %v1797, %v1813
    %v1815 = vsub.f32 %v1232, %v1802
    %v1816 = vsub.f32 %v1233, %v1806
    %v1817 = vsub.f32 %v1234, %v1810
    %v1818 = vsub.f32 %v1235, %v1814
    %v1820 = vsel %vm1653, %v1648, 0
    %1822 = vmatprep.subr.mxu0 0.0
    %1823 = vmatpush1.msra.mxu0 0.0
    %1824 = vmatprep.subr.mxu0 0.0
    %1825 = vmatpush1.msra.mxu0 0.0
    %1826 = vmatprep.subr.mxu0 0.0
    %1827 = vmatpush1.msra.mxu0 0.0
    %1828 = vmatprep.subr.mxu0 0.0
    %1829 = vmatpush1.msra.mxu0 0.0
    %1830 = vmatprep.subr.mxu0 0.0
    %1831 = vmatpush1.msra.mxu0 0.0
    %1832 = vmatprep.subr.mxu0 0.0
    %1833 = vmatpush1.msra.mxu0 0.0
    %1834 = vmatprep.subr.mxu0 0.0
    %1835 = vmatpush1.msra.mxu0 0.0
    %1836 = vmatprep.subr.mxu0 0.0
    %1837 = vmatpush1.msra.mxu0 0.0
    %1838 = vmatprep.subr.mxu0 0.0
    %1839 = vmatpush1.msra.mxu0 0.0
    %1840 = vmatprep.subr.mxu0 0.0
    %1841 = vmatpush1.msra.mxu0 0.0
    %1842 = vmatprep.subr.mxu0 0.0
    %1843 = vmatpush1.msra.mxu0 0.0
    %1844 = vmatprep.subr.mxu0 0.0
    %1845 = vmatpush1.msra.mxu0 0.0
    %1846 = vmatprep.subr.mxu0 0.0
    %1847 = vmatpush1.msra.mxu0 0.0
    %1848 = vmatprep.subr.mxu0 0.0
    %1849 = vmatpush1.msra.mxu0 0.0
    %1850 = vmatprep.subr.mxu0 0.0
    %1851 = vmatpush1.msra.mxu0 0.0
    %1852 = vmatprep.subr.mxu0 %v1650
    %1853 = vmatpush1.msra.mxu0 %v1649
    %1854 = vmatprep.subr.mxu0 0.0
    %1855 = vmatpush2.msra.mxu0 0.0
    %1856 = vmatprep.subr.mxu0 0.0
    %1857 = vmatpush2.msra.mxu0 0.0
    %1858 = vmatprep.subr.mxu0 0.0
    %1859 = vmatpush2.msra.mxu0 0.0
    %1860 = vmatprep.subr.mxu0 0.0
    %1861 = vmatpush2.msra.mxu0 0.0
    %1862 = vmatprep.subr.mxu0 0.0
    %1863 = vmatpush2.msra.mxu0 0.0
    %1864 = vmatprep.subr.mxu0 0.0
    %1865 = vmatpush2.msra.mxu0 0.0
    %1866 = vmatprep.subr.mxu0 0.0
    %1867 = vmatpush2.msra.mxu0 0.0
    %1868 = vmatprep.subr.mxu0 0.0
    %1869 = vmatpush2.msra.mxu0 0.0
    %1870 = vmatprep.subr.mxu0 0.0
    %1871 = vmatpush2.msra.mxu0 0.0
    %1872 = vmatprep.subr.mxu0 0.0
    %1873 = vmatpush2.msra.mxu0 0.0
    %1874 = vmatprep.subr.mxu0 0.0
    %1875 = vmatpush2.msra.mxu0 0.0
    %1876 = vmatprep.subr.mxu0 0.0
    %1877 = vmatpush2.msra.mxu0 0.0
    %1878 = vmatprep.subr.mxu0 0.0
    %1879 = vmatpush2.msra.mxu0 0.0
    %1880 = vmatprep.subr.mxu0 0.0
    %1881 = vmatpush2.msra.mxu0 0.0
    %1882 = vmatprep.subr.mxu0 0.0
    %1883 = vmatpush2.msra.mxu0 0.0
    %1884 = vmatprep.subr.mxu0 0.0
    %1885 = vmatpush2.msra.mxu0 0.0
    %1886 = vmatprep.mubr.f32.mxu0 0.0
    %1887 = vmatmul.mubr.f32.gmra.mxu0 %v1820
    %v1888 = vpop.f32.mrf.mxu0
    %v1889 = vadd.f32 0.0, %v1888
    %v1890 = vpop.f32.mrf.mxu0
    %v1891 = vadd.f32 0.0, %v1890
    %1892 = vdwg.mxu0
    %1893 = vmatprep.subr.mxu0 0.0
    %1894 = vmatpush1.msra.mxu0 0.0
    %1895 = vmatprep.subr.mxu0 0.0
    %1896 = vmatpush1.msra.mxu0 0.0
    %1897 = vmatprep.subr.mxu0 0.0
    %1898 = vmatpush1.msra.mxu0 0.0
    %1899 = vmatprep.subr.mxu0 0.0
    %1900 = vmatpush1.msra.mxu0 0.0
    %1901 = vmatprep.subr.mxu0 0.0
    %1902 = vmatpush1.msra.mxu0 0.0
    %1903 = vmatprep.subr.mxu0 0.0
    %1904 = vmatpush1.msra.mxu0 0.0
    %1905 = vmatprep.subr.mxu0 0.0
    %1906 = vmatpush1.msra.mxu0 0.0
    %1907 = vmatprep.subr.mxu0 0.0
    %1908 = vmatpush1.msra.mxu0 0.0
    %1909 = vmatprep.subr.mxu0 0.0
    %1910 = vmatpush1.msra.mxu0 0.0
    %1911 = vmatprep.subr.mxu0 0.0
    %1912 = vmatpush1.msra.mxu0 0.0
    %1913 = vmatprep.subr.mxu0 0.0
    %1914 = vmatpush1.msra.mxu0 0.0
    %1915 = vmatprep.subr.mxu0 0.0
    %1916 = vmatpush1.msra.mxu0 0.0
    %1917 = vmatprep.subr.mxu0 0.0
    %1918 = vmatpush1.msra.mxu0 0.0
    %1919 = vmatprep.subr.mxu0 0.0
    %1920 = vmatpush1.msra.mxu0 0.0
    %1921 = vmatprep.subr.mxu0 0.0
    %1922 = vmatpush1.msra.mxu0 0.0
    %1923 = vmatprep.subr.mxu0 %v1652
    %1924 = vmatpush1.msra.mxu0 %v1651
    %1925 = vmatprep.subr.mxu0 0.0
    %1926 = vmatpush2.msra.mxu0 0.0
    %1927 = vmatprep.subr.mxu0 0.0
    %1928 = vmatpush2.msra.mxu0 0.0
    %1929 = vmatprep.subr.mxu0 0.0
    %1930 = vmatpush2.msra.mxu0 0.0
    %1931 = vmatprep.subr.mxu0 0.0
    %1932 = vmatpush2.msra.mxu0 0.0
    %1933 = vmatprep.subr.mxu0 0.0
    %1934 = vmatpush2.msra.mxu0 0.0
    %1935 = vmatprep.subr.mxu0 0.0
    %1936 = vmatpush2.msra.mxu0 0.0
    %1937 = vmatprep.subr.mxu0 0.0
    %1938 = vmatpush2.msra.mxu0 0.0
    %1939 = vmatprep.subr.mxu0 0.0
    %1940 = vmatpush2.msra.mxu0 0.0
    %1941 = vmatprep.subr.mxu0 0.0
    %1942 = vmatpush2.msra.mxu0 0.0
    %1943 = vmatprep.subr.mxu0 0.0
    %1944 = vmatpush2.msra.mxu0 0.0
    %1945 = vmatprep.subr.mxu0 0.0
    %1946 = vmatpush2.msra.mxu0 0.0
    %1947 = vmatprep.subr.mxu0 0.0
    %1948 = vmatpush2.msra.mxu0 0.0
    %1949 = vmatprep.subr.mxu0 0.0
    %1950 = vmatpush2.msra.mxu0 0.0
    %1951 = vmatprep.subr.mxu0 0.0
    %1952 = vmatpush2.msra.mxu0 0.0
    %1953 = vmatprep.subr.mxu0 0.0
    %1954 = vmatpush2.msra.mxu0 0.0
    %1955 = vmatprep.subr.mxu0 0.0
    %1956 = vmatpush2.msra.mxu0 0.0
    %1957 = vmatprep.mubr.f32.mxu0 0.0
    %1958 = vmatmul.mubr.f32.gmra.mxu0 %v1820
    %v1959 = vpop.f32.mrf.mxu0
    %v1960 = vadd.f32 0.0, %v1959
    %v1961 = vpop.f32.mrf.mxu0
    %v1962 = vadd.f32 0.0, %v1961
    %1963 = vdwg.mxu0
    %v1964 = vlaneseq
    %v1965 = vshrl.u32 %v1964, 7
    %v1966 = vsub.s32 0, %v1965
    %v1967 = vrot.slane %v1889, %v1966
    %v1968 = vlaneseq
    %v1969 = vshrl.u32 %v1968, 7
    %v1970 = vsub.s32 0, %v1969
    %v1971 = vrot.slane %v1891, %v1970
    %v1972 = vlaneseq
    %v1973 = vshrl.u32 %v1972, 7
    %v1974 = vsub.s32 0, %v1973
    %v1975 = vrot.slane %v1960, %v1974
    %v1976 = vlaneseq
    %v1977 = vshrl.u32 %v1976, 7
    %v1978 = vsub.s32 0, %v1977
    %v1979 = vrot.slane %v1962, %v1978
    %v1980 = vmul.f32 %v1815, %v1967
    %v1981 = vmul.f32 %v1816, %v1971
    %v1982 = vmul.f32 %v1817, %v1975
    %v1983 = vmul.f32 %v1818, %v1979
    %v1984 = vpack.c.bf16 %v1980, %v1980
    %v1985 = vpack.c.bf16 %v1981, %v1981
    %v1986 = vpack.c.bf16 %v1982, %v1982
    %v1987 = vpack.c.bf16 %v1983, %v1983
    %v1988 = vld [vmem:[%s15] sm:$0xff]
    %v1989 = vld [vmem:[%s15 + $0x8] sm:$0xff]
    %v1990 = vld [vmem:[%s15 + $0x10] sm:$0xff]
    %v1991 = vld [vmem:[%s15 + $0x18] sm:$0xff]
    %v1992 = vld [vmem:[%s15 + $0x20] sm:$0xff]
    %v1993 = vld [vmem:[%s15 + $0x28] sm:$0xff]
    %v1994 = vld [vmem:[%s15 + $0x30] sm:$0xff]
    %v1995 = vld [vmem:[%s15 + $0x38] sm:$0xff]
    %v1996 = vld [vmem:[%s15 + $0x40] sm:$0xff]
    %v1997 = vld [vmem:[%s15 + $0x48] sm:$0xff]
    %v1998 = vld [vmem:[%s15 + $0x50] sm:$0xff]
    %v1999 = vld [vmem:[%s15 + $0x58] sm:$0xff]
    %v2000 = vld [vmem:[%s15 + $0x60] sm:$0xff]
    %v2001 = vld [vmem:[%s15 + $0x68] sm:$0xff]
    %v2002 = vld [vmem:[%s15 + $0x70] sm:$0xff]
    %v2003 = vld [vmem:[%s15 + $0x78] sm:$0xff]
    %v2004 = vld [vmem:[%s15 + $0x80] sm:$0xff]
    %v2005 = vld [vmem:[%s15 + $0x88] sm:$0xff]
    %v2006 = vld [vmem:[%s15 + $0x90] sm:$0xff]
    %v2007 = vld [vmem:[%s15 + $0x98] sm:$0xff]
    %v2008 = vld [vmem:[%s15 + $0xa0] sm:$0xff]
    %v2009 = vld [vmem:[%s15 + $0xa8] sm:$0xff]
    %v2010 = vld [vmem:[%s15 + $0xb0] sm:$0xff]
    %v2011 = vld [vmem:[%s15 + $0xb8] sm:$0xff]
    %v2012 = vld [vmem:[%s15 + $0xc0] sm:$0xff]
    %v2013 = vld [vmem:[%s15 + $0xc8] sm:$0xff]
    %v2014 = vld [vmem:[%s15 + $0xd0] sm:$0xff]
    %v2015 = vld [vmem:[%s15 + $0xd8] sm:$0xff]
    %v2016 = vld [vmem:[%s15 + $0xe0] sm:$0xff]
    %v2017 = vld [vmem:[%s15 + $0xe8] sm:$0xff]
    %v2018 = vld [vmem:[%s15 + $0xf0] sm:$0xff]
    %v2019 = vld [vmem:[%s15 + $0xf8] sm:$0xff]
    %v2020 = vld [vmem:[%s15 + $0x100] sm:$0xff]
    %v2021 = vld [vmem:[%s15 + $0x108] sm:$0xff]
    %v2022 = vld [vmem:[%s15 + $0x110] sm:$0xff]
    %v2023 = vld [vmem:[%s15 + $0x118] sm:$0xff]
    %v2024 = vld [vmem:[%s15 + $0x120] sm:$0xff]
    %v2025 = vld [vmem:[%s15 + $0x128] sm:$0xff]
    %v2026 = vld [vmem:[%s15 + $0x130] sm:$0xff]
    %v2027 = vld [vmem:[%s15 + $0x138] sm:$0xff]
    %v2028 = vld [vmem:[%s15 + $0x140] sm:$0xff]
    %v2029 = vld [vmem:[%s15 + $0x148] sm:$0xff]
    %v2030 = vld [vmem:[%s15 + $0x150] sm:$0xff]
    %v2031 = vld [vmem:[%s15 + $0x158] sm:$0xff]
    %v2032 = vld [vmem:[%s15 + $0x160] sm:$0xff]
    %v2033 = vld [vmem:[%s15 + $0x168] sm:$0xff]
    %v2034 = vld [vmem:[%s15 + $0x170] sm:$0xff]
    %v2035 = vld [vmem:[%s15 + $0x178] sm:$0xff]
    %v2036 = vld [vmem:[%s15 + $0x180] sm:$0xff]
    %v2037 = vld [vmem:[%s15 + $0x188] sm:$0xff]
    %v2038 = vld [vmem:[%s15 + $0x190] sm:$0xff]
    %v2039 = vld [vmem:[%s15 + $0x198] sm:$0xff]
    %v2040 = vld [vmem:[%s15 + $0x1a0] sm:$0xff]
    %v2041 = vld [vmem:[%s15 + $0x1a8] sm:$0xff]
    %v2042 = vld [vmem:[%s15 + $0x1b0] sm:$0xff]
    %v2043 = vld [vmem:[%s15 + $0x1b8] sm:$0xff]
    %v2044 = vld [vmem:[%s15 + $0x1c0] sm:$0xff]
    %v2045 = vld [vmem:[%s15 + $0x1c8] sm:$0xff]
    %v2046 = vld [vmem:[%s15 + $0x1d0] sm:$0xff]
    %v2047 = vld [vmem:[%s15 + $0x1d8] sm:$0xff]
    %v2048 = vld [vmem:[%s15 + $0x1e0] sm:$0xff]
    %v2049 = vld [vmem:[%s15 + $0x1e8] sm:$0xff]
    %v2050 = vld [vmem:[%s15 + $0x1f0] sm:$0xff]
    %v2051 = vld [vmem:[%s15 + $0x1f8] sm:$0xff]
    %v2052 = vld [vmem:[#allocation9] sm:$0x3]
    %v2054 = vlaneseq
    %v2055 = vshrl.u32 %v2054, 7
    %v2056 = vsub.s32 0, %v2055
    %v2057 = vrot.slane %v2052, %v2056
    %v2058 = vlaneseq
    %v2059 = vshrl.u32 %v2058, 7
    %v2060 = vsub.s32 1, %v2059
    %v2061 = vrot.slane %v2052, %v2060
    %v2128 = vunpack.c.l.b16 %v1988
    %v2129 = vunpack.c.h.b16 %v1988
    %v2130 = vunpack.c.l.b16 %v1989
    %v2131 = vunpack.c.h.b16 %v1989
    %v2132 = vunpack.c.l.b16 %v1990
    %v2133 = vunpack.c.h.b16 %v1990
    %v2134 = vunpack.c.l.b16 %v1991
    %v2135 = vunpack.c.h.b16 %v1991
    %v2136 = vunpack.c.l.b16 %v1992
    %v2137 = vunpack.c.h.b16 %v1992
    %v2138 = vunpack.c.l.b16 %v1993
    %v2139 = vunpack.c.h.b16 %v1993
    %v2140 = vunpack.c.l.b16 %v1994
    %v2141 = vunpack.c.h.b16 %v1994
    %v2142 = vunpack.c.l.b16 %v1995
    %v2143 = vunpack.c.h.b16 %v1995
    %v2144 = vunpack.c.l.b16 %v1996
    %v2145 = vunpack.c.h.b16 %v1996
    %v2146 = vunpack.c.l.b16 %v1997
    %v2147 = vunpack.c.h.b16 %v1997
    %v2148 = vunpack.c.l.b16 %v1998
    %v2149 = vunpack.c.h.b16 %v1998
    %v2150 = vunpack.c.l.b16 %v1999
    %v2151 = vunpack.c.h.b16 %v1999
    %v2152 = vunpack.c.l.b16 %v2000
    %v2153 = vunpack.c.h.b16 %v2000
    %v2154 = vunpack.c.l.b16 %v2001
    %v2155 = vunpack.c.h.b16 %v2001
    %v2156 = vunpack.c.l.b16 %v2002
    %v2157 = vunpack.c.h.b16 %v2002
    %v2158 = vunpack.c.l.b16 %v2003
    %v2159 = vunpack.c.h.b16 %v2003
    %v2160 = vunpack.c.l.b16 %v2004
    %v2161 = vunpack.c.h.b16 %v2004
    %v2162 = vunpack.c.l.b16 %v2005
    %v2163 = vunpack.c.h.b16 %v2005
    %v2164 = vunpack.c.l.b16 %v2006
    %v2165 = vunpack.c.h.b16 %v2006
    %v2166 = vunpack.c.l.b16 %v2007
    %v2167 = vunpack.c.h.b16 %v2007
    %v2168 = vunpack.c.l.b16 %v2008
    %v2169 = vunpack.c.h.b16 %v2008
    %v2170 = vunpack.c.l.b16 %v2009
    %v2171 = vunpack.c.h.b16 %v2009
    %v2172 = vunpack.c.l.b16 %v2010
    %v2173 = vunpack.c.h.b16 %v2010
    %v2174 = vunpack.c.l.b16 %v2011
    %v2175 = vunpack.c.h.b16 %v2011
    %v2176 = vunpack.c.l.b16 %v2012
    %v2177 = vunpack.c.h.b16 %v2012
    %v2178 = vunpack.c.l.b16 %v2013
    %v2179 = vunpack.c.h.b16 %v2013
    %v2180 = vunpack.c.l.b16 %v2014
    %v2181 = vunpack.c.h.b16 %v2014
    %v2182 = vunpack.c.l.b16 %v2015
    %v2183 = vunpack.c.h.b16 %v2015
    %v2184 = vunpack.c.l.b16 %v2016
    %v2185 = vunpack.c.h.b16 %v2016
    %v2186 = vunpack.c.l.b16 %v2017
    %v2187 = vunpack.c.h.b16 %v2017
    %v2188 = vunpack.c.l.b16 %v2018
    %v2189 = vunpack.c.h.b16 %v2018
    %v2190 = vunpack.c.l.b16 %v2019
    %v2191 = vunpack.c.h.b16 %v2019
    %v2192 = vunpack.c.l.b16 %v2020
    %v2193 = vunpack.c.h.b16 %v2020
    %v2194 = vunpack.c.l.b16 %v2021
    %v2195 = vunpack.c.h.b16 %v2021
    %v2196 = vunpack.c.l.b16 %v2022
    %v2197 = vunpack.c.h.b16 %v2022
    %v2198 = vunpack.c.l.b16 %v2023
    %v2199 = vunpack.c.h.b16 %v2023
    %v2200 = vunpack.c.l.b16 %v2024
    %v2201 = vunpack.c.h.b16 %v2024
    %v2202 = vunpack.c.l.b16 %v2025
    %v2203 = vunpack.c.h.b16 %v2025
    %v2204 = vunpack.c.l.b16 %v2026
    %v2205 = vunpack.c.h.b16 %v2026
    %v2206 = vunpack.c.l.b16 %v2027
    %v2207 = vunpack.c.h.b16 %v2027
    %v2208 = vunpack.c.l.b16 %v2028
    %v2209 = vunpack.c.h.b16 %v2028
    %v2210 = vunpack.c.l.b16 %v2029
    %v2211 = vunpack.c.h.b16 %v2029
    %v2212 = vunpack.c.l.b16 %v2030
    %v2213 = vunpack.c.h.b16 %v2030
    %v2214 = vunpack.c.l.b16 %v2031
    %v2215 = vunpack.c.h.b16 %v2031
    %v2216 = vunpack.c.l.b16 %v2032
    %v2217 = vunpack.c.h.b16 %v2032
    %v2218 = vunpack.c.l.b16 %v2033
    %v2219 = vunpack.c.h.b16 %v2033
    %v2220 = vunpack.c.l.b16 %v2034
    %v2221 = vunpack.c.h.b16 %v2034
    %v2222 = vunpack.c.l.b16 %v2035
    %v2223 = vunpack.c.h.b16 %v2035
    %v2224 = vunpack.c.l.b16 %v2036
    %v2225 = vunpack.c.h.b16 %v2036
    %v2226 = vunpack.c.l.b16 %v2037
    %v2227 = vunpack.c.h.b16 %v2037
    %v2228 = vunpack.c.l.b16 %v2038
    %v2229 = vunpack.c.h.b16 %v2038
    %v2230 = vunpack.c.l.b16 %v2039
    %v2231 = vunpack.c.h.b16 %v2039
    %v2232 = vunpack.c.l.b16 %v2040
    %v2233 = vunpack.c.h.b16 %v2040
    %v2234 = vunpack.c.l.b16 %v2041
    %v2235 = vunpack.c.h.b16 %v2041
    %v2236 = vunpack.c.l.b16 %v2042
    %v2237 = vunpack.c.h.b16 %v2042
    %v2238 = vunpack.c.l.b16 %v2043
    %v2239 = vunpack.c.h.b16 %v2043
    %v2240 = vunpack.c.l.b16 %v2044
    %v2241 = vunpack.c.h.b16 %v2044
    %v2242 = vunpack.c.l.b16 %v2045
    %v2243 = vunpack.c.h.b16 %v2045
    %v2244 = vunpack.c.l.b16 %v2046
    %v2245 = vunpack.c.h.b16 %v2046
    %v2246 = vunpack.c.l.b16 %v2047
    %v2247 = vunpack.c.h.b16 %v2047
    %v2248 = vunpack.c.l.b16 %v2048
    %v2249 = vunpack.c.h.b16 %v2048
    %v2250 = vunpack.c.l.b16 %v2049
    %v2251 = vunpack.c.h.b16 %v2049
    %v2252 = vunpack.c.l.b16 %v2050
    %v2253 = vunpack.c.h.b16 %v2050
    %v2254 = vunpack.c.l.b16 %v2051
    %v2255 = vunpack.c.h.b16 %v2051
    %v2256 = vpack.c.b16 %v2130, %v2128
    %v2257 = vpack.c.b16 %v2131, %v2129
    %v2258 = vpack.c.b16 %v2134, %v2132
    %v2259 = vpack.c.b16 %v2135, %v2133
    %v2260 = vpack.c.b16 %v2138, %v2136
    %v2261 = vpack.c.b16 %v2139, %v2137
    %v2262 = vpack.c.b16 %v2142, %v2140
    %v2263 = vpack.c.b16 %v2143, %v2141
    %v2264 = vpack.c.b16 %v2146, %v2144
    %v2265 = vpack.c.b16 %v2147, %v2145
    %v2266 = vpack.c.b16 %v2150, %v2148
    %v2267 = vpack.c.b16 %v2151, %v2149
    %v2268 = vpack.c.b16 %v2154, %v2152
    %v2269 = vpack.c.b16 %v2155, %v2153
    %v2270 = vpack.c.b16 %v2158, %v2156
    %v2271 = vpack.c.b16 %v2159, %v2157
    %v2272 = vpack.c.b16 %v2162, %v2160
    %v2273 = vpack.c.b16 %v2163, %v2161
    %v2274 = vpack.c.b16 %v2166, %v2164
    %v2275 = vpack.c.b16 %v2167, %v2165
    %v2276 = vpack.c.b16 %v2170, %v2168
    %v2277 = vpack.c.b16 %v2171, %v2169
    %v2278 = vpack.c.b16 %v2174, %v2172
    %v2279 = vpack.c.b16 %v2175, %v2173
    %v2280 = vpack.c.b16 %v2178, %v2176
    %v2281 = vpack.c.b16 %v2179, %v2177
    %v2282 = vpack.c.b16 %v2182, %v2180
    %v2283 = vpack.c.b16 %v2183, %v2181
    %v2284 = vpack.c.b16 %v2186, %v2184
    %v2285 = vpack.c.b16 %v2187, %v2185
    %v2286 = vpack.c.b16 %v2190, %v2188
    %v2287 = vpack.c.b16 %v2191, %v2189
    %v2288 = vpack.c.b16 %v2194, %v2192
    %v2289 = vpack.c.b16 %v2195, %v2193
    %v2290 = vpack.c.b16 %v2198, %v2196
    %v2291 = vpack.c.b16 %v2199, %v2197
    %v2292 = vpack.c.b16 %v2202, %v2200
    %v2293 = vpack.c.b16 %v2203, %v2201
    %v2294 = vpack.c.b16 %v2206, %v2204
    %v2295 = vpack.c.b16 %v2207, %v2205
    %v2296 = vpack.c.b16 %v2210, %v2208
    %v2297 = vpack.c.b16 %v2211, %v2209
    %v2298 = vpack.c.b16 %v2214, %v2212
    %v2299 = vpack.c.b16 %v2215, %v2213
    %v2300 = vpack.c.b16 %v2218, %v2216
    %v2301 = vpack.c.b16 %v2219, %v2217
    %v2302 = vpack.c.b16 %v2222, %v2220
    %v2303 = vpack.c.b16 %v2223, %v2221
    %v2304 = vpack.c.b16 %v2226, %v2224
    %v2305 = vpack.c.b16 %v2227, %v2225
    %v2306 = vpack.c.b16 %v2230, %v2228
    %v2307 = vpack.c.b16 %v2231, %v2229
    %v2308 = vpack.c.b16 %v2234, %v2232
    %v2309 = vpack.c.b16 %v2235, %v2233
    %v2310 = vpack.c.b16 %v2238, %v2236
    %v2311 = vpack.c.b16 %v2239, %v2237
    %v2312 = vpack.c.b16 %v2242, %v2240
    %v2313 = vpack.c.b16 %v2243, %v2241
    %v2314 = vpack.c.b16 %v2246, %v2244
    %v2315 = vpack.c.b16 %v2247, %v2245
    %v2316 = vpack.c.b16 %v2250, %v2248
    %v2317 = vpack.c.b16 %v2251, %v2249
    %v2318 = vpack.c.b16 %v2254, %v2252
    %v2319 = vpack.c.b16 %v2255, %v2253
    %2384 = vmatprep.subr.bf16.mxu0 %v2271
    %2385 = vmatpush1.bf16.msra.mxu0 %v2270
    %2386 = vmatprep.subr.bf16.mxu0 %v2269
    %2387 = vmatpush1.bf16.msra.mxu0 %v2268
    %2388 = vmatprep.subr.bf16.mxu0 %v2267
    %2389 = vmatpush1.bf16.msra.mxu0 %v2266
    %2390 = vmatprep.subr.bf16.mxu0 %v2265
    %2391 = vmatpush1.bf16.msra.mxu0 %v2264
    %2392 = vmatprep.subr.bf16.mxu0 %v2263
    %2393 = vmatpush1.bf16.msra.mxu0 %v2262
    %2394 = vmatprep.subr.bf16.mxu0 %v2261
    %2395 = vmatpush1.bf16.msra.mxu0 %v2260
    %2396 = vmatprep.subr.bf16.mxu0 %v2259
    %2397 = vmatpush1.bf16.msra.mxu0 %v2258
    %2398 = vmatprep.subr.bf16.mxu0 %v2257
    %2399 = vmatpush1.bf16.msra.mxu0 %v2256
    %2400 = vmatprep.subr.bf16.mxu0 %v2287
    %2401 = vmatpush2.bf16.msra.mxu0 %v2286
    %2402 = vmatprep.subr.bf16.mxu0 %v2285
    %2403 = vmatpush2.bf16.msra.mxu0 %v2284
    %2404 = vmatprep.subr.bf16.mxu0 %v2283
    %2405 = vmatpush2.bf16.msra.mxu0 %v2282
    %2406 = vmatprep.subr.bf16.mxu0 %v2281
    %2407 = vmatpush2.bf16.msra.mxu0 %v2280
    %2408 = vmatprep.subr.bf16.mxu0 %v2279
    %2409 = vmatpush2.bf16.msra.mxu0 %v2278
    %2410 = vmatprep.subr.bf16.mxu0 %v2277
    %2411 = vmatpush2.bf16.msra.mxu0 %v2276
    %2412 = vmatprep.subr.bf16.mxu0 %v2275
    %2413 = vmatpush2.bf16.msra.mxu0 %v2274
    %2414 = vmatprep.subr.bf16.mxu0 %v2273
    %2415 = vmatpush2.bf16.msra.mxu0 %v2272
    %2416 = vmatprep.mubr.bf16.mxu0 %v1985
    %2417 = vmatmul.mubr.bf16.gmra.mxu0 %v1984
    %v2418 = vpop.f32.mrf.mxu0
    %v2419 = vadd.f32 %v2057, %v2418
    %v2420 = vpop.f32.mrf.mxu0
    %v2421 = vadd.f32 %v2061, %v2420
    %v2422 = vpop.f32.mrf.mxu0
    %v2423 = vpop.f32.mrf.mxu0
    %2424 = vdwg.mxu0
    %2425 = vmatprep.subr.bf16.mxu0 %v2303
    %2426 = vmatpush1.bf16.msra.mxu0 %v2302
    %2427 = vmatprep.subr.bf16.mxu0 %v2301
    %2428 = vmatpush1.bf16.msra.mxu0 %v2300
    %2429 = vmatprep.subr.bf16.mxu0 %v2299
    %2430 = vmatpush1.bf16.msra.mxu0 %v2298
    %2431 = vmatprep.subr.bf16.mxu0 %v2297
    %2432 = vmatpush1.bf16.msra.mxu0 %v2296
    %2433 = vmatprep.subr.bf16.mxu0 %v2295
    %2434 = vmatpush1.bf16.msra.mxu0 %v2294
    %2435 = vmatprep.subr.bf16.mxu0 %v2293
    %2436 = vmatpush1.bf16.msra.mxu0 %v2292
    %2437 = vmatprep.subr.bf16.mxu0 %v2291
    %2438 = vmatpush1.bf16.msra.mxu0 %v2290
    %2439 = vmatprep.subr.bf16.mxu0 %v2289
    %2440 = vmatpush1.bf16.msra.mxu0 %v2288
    %2441 = vmatprep.subr.bf16.mxu0 %v2319
    %2442 = vmatpush2.bf16.msra.mxu0 %v2318
    %2443 = vmatprep.subr.bf16.mxu0 %v2317
    %2444 = vmatpush2.bf16.msra.mxu0 %v2316
    %2445 = vmatprep.subr.bf16.mxu0 %v2315
    %2446 = vmatpush2.bf16.msra.mxu0 %v2314
    %2447 = vmatprep.subr.bf16.mxu0 %v2313
    %2448 = vmatpush2.bf16.msra.mxu0 %v2312
    %2449 = vmatprep.subr.bf16.mxu0 %v2311
    %2450 = vmatpush2.bf16.msra.mxu0 %v2310
    %2451 = vmatprep.subr.bf16.mxu0 %v2309
    %2452 = vmatpush2.bf16.msra.mxu0 %v2308
    %2453 = vmatprep.subr.bf16.mxu0 %v2307
    %2454 = vmatpush2.bf16.msra.mxu0 %v2306
    %2455 = vmatprep.subr.bf16.mxu0 %v2305
    %2456 = vmatpush2.bf16.msra.mxu0 %v2304
    %2457 = vmatprep.mubr.bf16.mxu0 %v1987
    %2458 = vmatmul.mubr.bf16.gmra.mxu0 %v1986
    %v2459 = vpop.f32.mrf.mxu0
    %v2460 = vadd.f32 %v2419, %v2459
    %v2461 = vpop.f32.mrf.mxu0
    %v2462 = vadd.f32 %v2421, %v2461
    %v2463 = vpop.f32.mrf.mxu0
    %v2464 = vpop.f32.mrf.mxu0
    %2465 = vdwg.mxu0
    %vm2466 = vcmp.gt.f32.partialorder %v2460, 0.0
    %vm2467 = vcmp.gt.f32.partialorder %v2462, 0.0
    %v2468 = vmul.f32 %v2460, 0.2
    %v2469 = vmul.f32 %v2462, 0.2
    %v2470 = vsel %vm2466, %v2460, %v2468
    %v2471 = vsel %vm2467, %v2462, %v2469
    %v2472 = vsel %vm1236, %v2470, 0.0
    %v2473 = vrot.slane %v2472, 4
    %v2474 = vadd.f32 %v2472, %v2473
    %v2475 = vrot.slane %v2474, 2
    %v2476 = vadd.f32 %v2474, %v2475
    %v2477 = vrot.slane %v2476, 1
    %v2478 = vadd.f32 %v2476, %v2477
    %v2479 = vsel %vm1236, %v2471, 0.0
    %v2480 = vrot.slane %v2479, 4
    %v2481 = vadd.f32 %v2479, %v2480
    %v2482 = vrot.slane %v2481, 2
    %v2483 = vadd.f32 %v2481, %v2482
    %v2484 = vrot.slane %v2483, 1
    %v2485 = vadd.f32 %v2483, %v2484
    %v2486 = vmul.f32 %v2470, %v2470
    %v2487 = vmul.f32 %v2471, %v2471
    %v2488 = vsel %vm1236, %v2486, 0.0
    %v2489 = vrot.slane %v2488, 4
    %v2490 = vadd.f32 %v2488, %v2489
    %v2491 = vrot.slane %v2490, 2
    %v2492 = vadd.f32 %v2490, %v2491
    %v2493 = vrot.slane %v2492, 1
    %v2494 = vadd.f32 %v2492, %v2493
    %v2495 = vsel %vm1236, %v2487, 0.0
    %v2496 = vrot.slane %v2495, 4
    %v2497 = vadd.f32 %v2495, %v2496
    %v2498 = vrot.slane %v2497, 2
    %v2499 = vadd.f32 %v2497, %v2498
    %v2500 = vrot.slane %v2499, 1
    %v2501 = vadd.f32 %v2499, %v2500
    %v2502 = vld [vmem:[%s19] sm:$0xff]
    %v2503 = vld [vmem:[%s19 + $0x8] sm:$0xff]
    %v2504 = vld [vmem:[%s19 + $0x10] sm:$0xff]
    %v2505 = vld [vmem:[%s19 + $0x18] sm:$0xff]
    %v2506 = vld [vmem:[%s19 + $0x20] sm:$0xff]
    %v2507 = vld [vmem:[%s19 + $0x28] sm:$0xff]
    %v2508 = vld [vmem:[%s19 + $0x30] sm:$0xff]
    %v2509 = vld [vmem:[%s19 + $0x38] sm:$0xff]
    %v2510 = vld [vmem:[%s19 + $0x40] sm:$0xff]
    %v2511 = vld [vmem:[%s19 + $0x48] sm:$0xff]
    %v2512 = vld [vmem:[%s19 + $0x50] sm:$0xff]
    %v2513 = vld [vmem:[%s19 + $0x58] sm:$0xff]
    %v2514 = vld [vmem:[%s19 + $0x60] sm:$0xff]
    %v2515 = vld [vmem:[%s19 + $0x68] sm:$0xff]
    %v2516 = vld [vmem:[%s19 + $0x70] sm:$0xff]
    %v2517 = vld [vmem:[%s19 + $0x78] sm:$0xff]
    %v2518 = vld [vmem:[%s19 + $0x80] sm:$0xff]
    %v2519 = vld [vmem:[%s19 + $0x88] sm:$0xff]
    %v2520 = vld [vmem:[%s19 + $0x90] sm:$0xff]
    %v2521 = vld [vmem:[%s19 + $0x98] sm:$0xff]
    %v2522 = vld [vmem:[%s19 + $0xa0] sm:$0xff]
    %v2523 = vld [vmem:[%s19 + $0xa8] sm:$0xff]
    %v2524 = vld [vmem:[%s19 + $0xb0] sm:$0xff]
    %v2525 = vld [vmem:[%s19 + $0xb8] sm:$0xff]
    %v2526 = vld [vmem:[%s19 + $0xc0] sm:$0xff]
    %v2527 = vld [vmem:[%s19 + $0xc8] sm:$0xff]
    %v2528 = vld [vmem:[%s19 + $0xd0] sm:$0xff]
    %v2529 = vld [vmem:[%s19 + $0xd8] sm:$0xff]
    %v2530 = vld [vmem:[%s19 + $0xe0] sm:$0xff]
    %v2531 = vld [vmem:[%s19 + $0xe8] sm:$0xff]
    %v2532 = vld [vmem:[%s19 + $0xf0] sm:$0xff]
    %v2533 = vld [vmem:[%s19 + $0xf8] sm:$0xff]
    %2534 = vmatprep.subr.mxu0 0.0
    %2535 = vmatpush1.msra.mxu0 %v2517
    %2536 = vmatprep.subr.mxu0 0.0
    %2537 = vmatpush1.msra.mxu0 %v2516
    %2538 = vmatprep.subr.mxu0 0.0
    %2539 = vmatpush1.msra.mxu0 %v2515
    %2540 = vmatprep.subr.mxu0 0.0
    %2541 = vmatpush1.msra.mxu0 %v2514
    %2542 = vmatprep.subr.mxu0 0.0
    %2543 = vmatpush1.msra.mxu0 %v2513
    %2544 = vmatprep.subr.mxu0 0.0
    %2545 = vmatpush1.msra.mxu0 %v2512
    %2546 = vmatprep.subr.mxu0 0.0
    %2547 = vmatpush1.msra.mxu0 %v2511
    %2548 = vmatprep.subr.mxu0 0.0
    %2549 = vmatpush1.msra.mxu0 %v2510
    %2550 = vmatprep.subr.mxu0 0.0
    %2551 = vmatpush1.msra.mxu0 %v2509
    %2552 = vmatprep.subr.mxu0 0.0
    %2553 = vmatpush1.msra.mxu0 %v2508
    %2554 = vmatprep.subr.mxu0 0.0
    %2555 = vmatpush1.msra.mxu0 %v2507
    %2556 = vmatprep.subr.mxu0 0.0
    %2557 = vmatpush1.msra.mxu0 %v2506
    %2558 = vmatprep.subr.mxu0 0.0
    %2559 = vmatpush1.msra.mxu0 %v2505
    %2560 = vmatprep.subr.mxu0 0.0
    %2561 = vmatpush1.msra.mxu0 %v2504
    %2562 = vmatprep.subr.mxu0 0.0
    %2563 = vmatpush1.msra.mxu0 %v2503
    %2564 = vmatprep.subr.mxu0 0.0
    %2565 = vmatpush1.msra.mxu0 %v2502
    %2566 = vmatprep.subr.mxu0 0.0
    %2567 = vmatpush2.msra.mxu0 %v2533
    %2568 = vmatprep.subr.mxu0 0.0
    %2569 = vmatpush2.msra.mxu0 %v2532
    %2570 = vmatprep.subr.mxu0 0.0
    %2571 = vmatpush2.msra.mxu0 %v2531
    %2572 = vmatprep.subr.mxu0 0.0
    %2573 = vmatpush2.msra.mxu0 %v2530
    %2574 = vmatprep.subr.mxu0 0.0
    %2575 = vmatpush2.msra.mxu0 %v2529
    %2576 = vmatprep.subr.mxu0 0.0
    %2577 = vmatpush2.msra.mxu0 %v2528
    %2578 = vmatprep.subr.mxu0 0.0
    %2579 = vmatpush2.msra.mxu0 %v2527
    %2580 = vmatprep.subr.mxu0 0.0
    %2581 = vmatpush2.msra.mxu0 %v2526
    %2582 = vmatprep.subr.mxu0 0.0
    %2583 = vmatpush2.msra.mxu0 %v2525
    %2584 = vmatprep.subr.mxu0 0.0
    %2585 = vmatpush2.msra.mxu0 %v2524
    %2586 = vmatprep.subr.mxu0 0.0
    %2587 = vmatpush2.msra.mxu0 %v2523
    %2588 = vmatprep.subr.mxu0 0.0
    %2589 = vmatpush2.msra.mxu0 %v2522
    %2590 = vmatprep.subr.mxu0 0.0
    %2591 = vmatpush2.msra.mxu0 %v2521
    %2592 = vmatprep.subr.mxu0 0.0
    %2593 = vmatpush2.msra.mxu0 %v2520
    %2594 = vmatprep.subr.mxu0 0.0
    %2595 = vmatpush2.msra.mxu0 %v2519
    %2596 = vmatprep.subr.mxu0 0.0
    %2597 = vmatpush2.msra.mxu0 %v2518
    %2598 = vmatprep.mubr.f32.mxu0 %v2485
    %2599 = vmatmul.mubr.f32.gmra.mxu0 %v2478
    %v2600 = vpop.f32.mrf.mxu0
    %v2601 = vadd.f32 0.0, %v2600
    %v2602 = vpop.f32.mrf.mxu0
    %2603 = vdwg.mxu0
    %v2604 = vrcp.pop 32.0
    %v2605 = vmul.f32 %v2601, %v2604
    %2606 = vmatprep.subr.mxu0 0.0
    %2607 = vmatpush1.msra.mxu0 %v2517
    %2608 = vmatprep.subr.mxu0 0.0
    %2609 = vmatpush1.msra.mxu0 %v2516
    %2610 = vmatprep.subr.mxu0 0.0
    %2611 = vmatpush1.msra.mxu0 %v2515
    %2612 = vmatprep.subr.mxu0 0.0
    %2613 = vmatpush1.msra.mxu0 %v2514
    %2614 = vmatprep.subr.mxu0 0.0
    %2615 = vmatpush1.msra.mxu0 %v2513
    %2616 = vmatprep.subr.mxu0 0.0
    %2617 = vmatpush1.msra.mxu0 %v2512
    %2618 = vmatprep.subr.mxu0 0.0
    %2619 = vmatpush1.msra.mxu0 %v2511
    %2620 = vmatprep.subr.mxu0 0.0
    %2621 = vmatpush1.msra.mxu0 %v2510
    %2622 = vmatprep.subr.mxu0 0.0
    %2623 = vmatpush1.msra.mxu0 %v2509
    %2624 = vmatprep.subr.mxu0 0.0
    %2625 = vmatpush1.msra.mxu0 %v2508
    %2626 = vmatprep.subr.mxu0 0.0
    %2627 = vmatpush1.msra.mxu0 %v2507
    %2628 = vmatprep.subr.mxu0 0.0
    %2629 = vmatpush1.msra.mxu0 %v2506
    %2630 = vmatprep.subr.mxu0 0.0
    %2631 = vmatpush1.msra.mxu0 %v2505
    %2632 = vmatprep.subr.mxu0 0.0
    %2633 = vmatpush1.msra.mxu0 %v2504
    %2634 = vmatprep.subr.mxu0 0.0
    %2635 = vmatpush1.msra.mxu0 %v2503
    %2636 = vmatprep.subr.mxu0 0.0
    %2637 = vmatpush1.msra.mxu0 %v2502
    %2638 = vmatprep.subr.mxu0 0.0
    %2639 = vmatpush2.msra.mxu0 %v2533
    %2640 = vmatprep.subr.mxu0 0.0
    %2641 = vmatpush2.msra.mxu0 %v2532
    %2642 = vmatprep.subr.mxu0 0.0
    %2643 = vmatpush2.msra.mxu0 %v2531
    %2644 = vmatprep.subr.mxu0 0.0
    %2645 = vmatpush2.msra.mxu0 %v2530
    %2646 = vmatprep.subr.mxu0 0.0
    %2647 = vmatpush2.msra.mxu0 %v2529
    %2648 = vmatprep.subr.mxu0 0.0
    %2649 = vmatpush2.msra.mxu0 %v2528
    %2650 = vmatprep.subr.mxu0 0.0
    %2651 = vmatpush2.msra.mxu0 %v2527
    %2652 = vmatprep.subr.mxu0 0.0
    %2653 = vmatpush2.msra.mxu0 %v2526
    %2654 = vmatprep.subr.mxu0 0.0
    %2655 = vmatpush2.msra.mxu0 %v2525
    %2656 = vmatprep.subr.mxu0 0.0
    %2657 = vmatpush2.msra.mxu0 %v2524
    %2658 = vmatprep.subr.mxu0 0.0
    %2659 = vmatpush2.msra.mxu0 %v2523
    %2660 = vmatprep.subr.mxu0 0.0
    %2661 = vmatpush2.msra.mxu0 %v2522
    %2662 = vmatprep.subr.mxu0 0.0
    %2663 = vmatpush2.msra.mxu0 %v2521
    %2664 = vmatprep.subr.mxu0 0.0
    %2665 = vmatpush2.msra.mxu0 %v2520
    %2666 = vmatprep.subr.mxu0 0.0
    %2667 = vmatpush2.msra.mxu0 %v2519
    %2668 = vmatprep.subr.mxu0 0.0
    %2669 = vmatpush2.msra.mxu0 %v2518
    %2670 = vmatprep.mubr.f32.mxu0 %v2501
    %2671 = vmatmul.mubr.f32.gmra.mxu0 %v2494
    %v2672 = vpop.f32.mrf.mxu0
    %v2673 = vadd.f32 0.0, %v2672
    %v2674 = vpop.f32.mrf.mxu0
    %2675 = vdwg.mxu0
    %v2676 = vmul.f32 %v2673, %v2604
    %v2677 = vmul.f32 %v2605, %v2605
    %v2678 = vsub.f32 %v2676, %v2677
    %v2679 = vmax.f32 %v2678, 0.0
    %v2680 = vadd.f32 %v2679, 1e-05
    %v2681 = vrsqrt.pop %v2680
    %v2682 = vld [vmem:[#allocation10] sm:$0xff]
    %v2683 = vld [vmem:[#allocation10 + $0x8] sm:$0xff]
    %v2684 = vld [vmem:[#allocation10 + $0x10] sm:$0xff]
    %v2685 = vld [vmem:[#allocation10 + $0x18] sm:$0xff]
    %vm2686 = vcmask 130048
    %v2688 = vsel %vm2686, %v2605, 0
    %2690 = vmatprep.subr.mxu0 0.0
    %2691 = vmatpush1.msra.mxu0 0.0
    %2692 = vmatprep.subr.mxu0 0.0
    %2693 = vmatpush1.msra.mxu0 0.0
    %2694 = vmatprep.subr.mxu0 0.0
    %2695 = vmatpush1.msra.mxu0 0.0
    %2696 = vmatprep.subr.mxu0 0.0
    %2697 = vmatpush1.msra.mxu0 0.0
    %2698 = vmatprep.subr.mxu0 0.0
    %2699 = vmatpush1.msra.mxu0 0.0
    %2700 = vmatprep.subr.mxu0 0.0
    %2701 = vmatpush1.msra.mxu0 0.0
    %2702 = vmatprep.subr.mxu0 0.0
    %2703 = vmatpush1.msra.mxu0 0.0
    %2704 = vmatprep.subr.mxu0 0.0
    %2705 = vmatpush1.msra.mxu0 0.0
    %2706 = vmatprep.subr.mxu0 0.0
    %2707 = vmatpush1.msra.mxu0 0.0
    %2708 = vmatprep.subr.mxu0 0.0
    %2709 = vmatpush1.msra.mxu0 0.0
    %2710 = vmatprep.subr.mxu0 0.0
    %2711 = vmatpush1.msra.mxu0 0.0
    %2712 = vmatprep.subr.mxu0 0.0
    %2713 = vmatpush1.msra.mxu0 0.0
    %2714 = vmatprep.subr.mxu0 0.0
    %2715 = vmatpush1.msra.mxu0 0.0
    %2716 = vmatprep.subr.mxu0 0.0
    %2717 = vmatpush1.msra.mxu0 0.0
    %2718 = vmatprep.subr.mxu0 %v2685
    %2719 = vmatpush1.msra.mxu0 %v2684
    %2720 = vmatprep.subr.mxu0 %v2683
    %2721 = vmatpush1.msra.mxu0 %v2682
    %2722 = vmatprep.subr.mxu0 0.0
    %2723 = vmatpush2.msra.mxu0 0.0
    %2724 = vmatprep.subr.mxu0 0.0
    %2725 = vmatpush2.msra.mxu0 0.0
    %2726 = vmatprep.subr.mxu0 0.0
    %2727 = vmatpush2.msra.mxu0 0.0
    %2728 = vmatprep.subr.mxu0 0.0
    %2729 = vmatpush2.msra.mxu0 0.0
    %2730 = vmatprep.subr.mxu0 0.0
    %2731 = vmatpush2.msra.mxu0 0.0
    %2732 = vmatprep.subr.mxu0 0.0
    %2733 = vmatpush2.msra.mxu0 0.0
    %2734 = vmatprep.subr.mxu0 0.0
    %2735 = vmatpush2.msra.mxu0 0.0
    %2736 = vmatprep.subr.mxu0 0.0
    %2737 = vmatpush2.msra.mxu0 0.0
    %2738 = vmatprep.subr.mxu0 0.0
    %2739 = vmatpush2.msra.mxu0 0.0
    %2740 = vmatprep.subr.mxu0 0.0
    %2741 = vmatpush2.msra.mxu0 0.0
    %2742 = vmatprep.subr.mxu0 0.0
    %2743 = vmatpush2.msra.mxu0 0.0
    %2744 = vmatprep.subr.mxu0 0.0
    %2745 = vmatpush2.msra.mxu0 0.0
    %2746 = vmatprep.subr.mxu0 0.0
    %2747 = vmatpush2.msra.mxu0 0.0
    %2748 = vmatprep.subr.mxu0 0.0
    %2749 = vmatpush2.msra.mxu0 0.0
    %2750 = vmatprep.subr.mxu0 0.0
    %2751 = vmatpush2.msra.mxu0 0.0
    %2752 = vmatprep.subr.mxu0 0.0
    %2753 = vmatpush2.msra.mxu0 0.0
    %2754 = vmatprep.mubr.f32.mxu0 0.0
    %2755 = vmatmul.mubr.f32.gmra.mxu0 %v2688
    %v2756 = vpop.f32.mrf.mxu0
    %v2757 = vadd.f32 0.0, %v2756
    %v2758 = vpop.f32.mrf.mxu0
    %v2759 = vadd.f32 0.0, %v2758
    %2760 = vdwg.mxu0
    %v2761 = vlaneseq
    %v2762 = vshrl.u32 %v2761, 7
    %v2763 = vsub.s32 0, %v2762
    %v2764 = vrot.slane %v2757, %v2763
    %v2765 = vlaneseq
    %v2766 = vshrl.u32 %v2765, 7
    %v2767 = vsub.s32 0, %v2766
    %v2768 = vrot.slane %v2759, %v2767
    %v2769 = vsub.f32 %v2470, %v2764
    %v2770 = vsub.f32 %v2471, %v2768
    %v2772 = vsel %vm2686, %v2681, 0
    %2774 = vmatprep.subr.mxu0 0.0
    %2775 = vmatpush1.msra.mxu0 0.0
    %2776 = vmatprep.subr.mxu0 0.0
    %2777 = vmatpush1.msra.mxu0 0.0
    %2778 = vmatprep.subr.mxu0 0.0
    %2779 = vmatpush1.msra.mxu0 0.0
    %2780 = vmatprep.subr.mxu0 0.0
    %2781 = vmatpush1.msra.mxu0 0.0
    %2782 = vmatprep.subr.mxu0 0.0
    %2783 = vmatpush1.msra.mxu0 0.0
    %2784 = vmatprep.subr.mxu0 0.0
    %2785 = vmatpush1.msra.mxu0 0.0
    %2786 = vmatprep.subr.mxu0 0.0
    %2787 = vmatpush1.msra.mxu0 0.0
    %2788 = vmatprep.subr.mxu0 0.0
    %2789 = vmatpush1.msra.mxu0 0.0
    %2790 = vmatprep.subr.mxu0 0.0
    %2791 = vmatpush1.msra.mxu0 0.0
    %2792 = vmatprep.subr.mxu0 0.0
    %2793 = vmatpush1.msra.mxu0 0.0
    %2794 = vmatprep.subr.mxu0 0.0
    %2795 = vmatpush1.msra.mxu0 0.0
    %2796 = vmatprep.subr.mxu0 0.0
    %2797 = vmatpush1.msra.mxu0 0.0
    %2798 = vmatprep.subr.mxu0 0.0
    %2799 = vmatpush1.msra.mxu0 0.0
    %2800 = vmatprep.subr.mxu0 0.0
    %2801 = vmatpush1.msra.mxu0 0.0
    %2802 = vmatprep.subr.mxu0 %v2685
    %2803 = vmatpush1.msra.mxu0 %v2684
    %2804 = vmatprep.subr.mxu0 %v2683
    %2805 = vmatpush1.msra.mxu0 %v2682
    %2806 = vmatprep.subr.mxu0 0.0
    %2807 = vmatpush2.msra.mxu0 0.0
    %2808 = vmatprep.subr.mxu0 0.0
    %2809 = vmatpush2.msra.mxu0 0.0
    %2810 = vmatprep.subr.mxu0 0.0
    %2811 = vmatpush2.msra.mxu0 0.0
    %2812 = vmatprep.subr.mxu0 0.0
    %2813 = vmatpush2.msra.mxu0 0.0
    %2814 = vmatprep.subr.mxu0 0.0
    %2815 = vmatpush2.msra.mxu0 0.0
    %2816 = vmatprep.subr.mxu0 0.0
    %2817 = vmatpush2.msra.mxu0 0.0
    %2818 = vmatprep.subr.mxu0 0.0
    %2819 = vmatpush2.msra.mxu0 0.0
    %2820 = vmatprep.subr.mxu0 0.0
    %2821 = vmatpush2.msra.mxu0 0.0
    %2822 = vmatprep.subr.mxu0 0.0
    %2823 = vmatpush2.msra.mxu0 0.0
    %2824 = vmatprep.subr.mxu0 0.0
    %2825 = vmatpush2.msra.mxu0 0.0
    %2826 = vmatprep.subr.mxu0 0.0
    %2827 = vmatpush2.msra.mxu0 0.0
    %2828 = vmatprep.subr.mxu0 0.0
    %2829 = vmatpush2.msra.mxu0 0.0
    %2830 = vmatprep.subr.mxu0 0.0
    %2831 = vmatpush2.msra.mxu0 0.0
    %2832 = vmatprep.subr.mxu0 0.0
    %2833 = vmatpush2.msra.mxu0 0.0
    %2834 = vmatprep.subr.mxu0 0.0
    %2835 = vmatpush2.msra.mxu0 0.0
    %2836 = vmatprep.subr.mxu0 0.0
    %2837 = vmatpush2.msra.mxu0 0.0
    %2838 = vmatprep.mubr.f32.mxu0 0.0
    %2839 = vmatmul.mubr.f32.gmra.mxu0 %v2772
    %v2840 = vpop.f32.mrf.mxu0
    %v2841 = vadd.f32 0.0, %v2840
    %v2842 = vpop.f32.mrf.mxu0
    %v2843 = vadd.f32 0.0, %v2842
    %2844 = vdwg.mxu0
    %v2845 = vlaneseq
    %v2846 = vshrl.u32 %v2845, 7
    %v2847 = vsub.s32 0, %v2846
    %v2848 = vrot.slane %v2841, %v2847
    %v2849 = vlaneseq
    %v2850 = vshrl.u32 %v2849, 7
    %v2851 = vsub.s32 0, %v2850
    %v2852 = vrot.slane %v2843, %v2851
    %v2853 = vmul.f32 %v2769, %v2848
    %v2854 = vmul.f32 %v2770, %v2852
    %v2855 = vpack.c.bf16 %v2853, %v2853
    %v2856 = vpack.c.bf16 %v2854, %v2854
    %v2857 = vld [vmem:[#allocation12] sm:$0xf]
    %v2858 = vld [vmem:[#allocation12 + $0x4] sm:$0xf]
    %v2859 = vld [vmem:[#allocation12 + $0x8] sm:$0xf]
    %v2860 = vld [vmem:[#allocation12 + $0xc] sm:$0xf]
    %v2861 = vld [vmem:[#allocation12 + $0x10] sm:$0xf]
    %v2862 = vld [vmem:[#allocation12 + $0x14] sm:$0xf]
    %v2863 = vld [vmem:[#allocation12 + $0x18] sm:$0xf]
    %v2864 = vld [vmem:[#allocation12 + $0x1c] sm:$0xf]
    %v2865 = vld [vmem:[#allocation12 + $0x20] sm:$0xf]
    %v2866 = vld [vmem:[#allocation12 + $0x24] sm:$0xf]
    %v2867 = vld [vmem:[#allocation12 + $0x28] sm:$0xf]
    %v2868 = vld [vmem:[#allocation12 + $0x2c] sm:$0xf]
    %v2869 = vld [vmem:[#allocation12 + $0x30] sm:$0xf]
    %v2870 = vld [vmem:[#allocation12 + $0x34] sm:$0xf]
    %v2871 = vld [vmem:[#allocation12 + $0x38] sm:$0xf]
    %v2872 = vld [vmem:[#allocation12 + $0x3c] sm:$0xf]
    %v2873 = vld [vmem:[#allocation12 + $0x40] sm:$0xf]
    %v2874 = vld [vmem:[#allocation12 + $0x44] sm:$0xf]
    %v2875 = vld [vmem:[#allocation12 + $0x48] sm:$0xf]
    %v2876 = vld [vmem:[#allocation12 + $0x4c] sm:$0xf]
    %v2877 = vld [vmem:[#allocation12 + $0x50] sm:$0xf]
    %v2878 = vld [vmem:[#allocation12 + $0x54] sm:$0xf]
    %v2879 = vld [vmem:[#allocation12 + $0x58] sm:$0xf]
    %v2880 = vld [vmem:[#allocation12 + $0x5c] sm:$0xf]
    %v2881 = vld [vmem:[#allocation12 + $0x60] sm:$0xf]
    %v2882 = vld [vmem:[#allocation12 + $0x64] sm:$0xf]
    %v2883 = vld [vmem:[#allocation12 + $0x68] sm:$0xf]
    %v2884 = vld [vmem:[#allocation12 + $0x6c] sm:$0xf]
    %v2885 = vld [vmem:[#allocation12 + $0x70] sm:$0xf]
    %v2886 = vld [vmem:[#allocation12 + $0x74] sm:$0xf]
    %v2887 = vld [vmem:[#allocation12 + $0x78] sm:$0xf]
    %v2888 = vld [vmem:[#allocation12 + $0x7c] sm:$0xf]
    %v2889 = vld [vmem:[%s25] sm:$0x1]
    %v2891 = vlaneseq
    %v2892 = vshrl.u32 %v2891, 7
    %v2893 = vsub.s32 0, %v2892
    %v2894 = vrot.slane %v2889, %v2893
    %v2928 = vunpack.c.l.b16 %v2857
    %v2929 = vunpack.c.l.b16 %v2858
    %v2930 = vunpack.c.l.b16 %v2859
    %v2931 = vunpack.c.l.b16 %v2860
    %v2932 = vunpack.c.l.b16 %v2861
    %v2933 = vunpack.c.l.b16 %v2862
    %v2934 = vunpack.c.l.b16 %v2863
    %v2935 = vunpack.c.l.b16 %v2864
    %v2936 = vunpack.c.l.b16 %v2865
    %v2937 = vunpack.c.l.b16 %v2866
    %v2938 = vunpack.c.l.b16 %v2867
    %v2939 = vunpack.c.l.b16 %v2868
    %v2940 = vunpack.c.l.b16 %v2869
    %v2941 = vunpack.c.l.b16 %v2870
    %v2942 = vunpack.c.l.b16 %v2871
    %v2943 = vunpack.c.l.b16 %v2872
    %v2944 = vunpack.c.l.b16 %v2873
    %v2945 = vunpack.c.l.b16 %v2874
    %v2946 = vunpack.c.l.b16 %v2875
    %v2947 = vunpack.c.l.b16 %v2876
    %v2948 = vunpack.c.l.b16 %v2877
    %v2949 = vunpack.c.l.b16 %v2878
    %v2950 = vunpack.c.l.b16 %v2879
    %v2951 = vunpack.c.l.b16 %v2880
    %v2952 = vunpack.c.l.b16 %v2881
    %v2953 = vunpack.c.l.b16 %v2882
    %v2954 = vunpack.c.l.b16 %v2883
    %v2955 = vunpack.c.l.b16 %v2884
    %v2956 = vunpack.c.l.b16 %v2885
    %v2957 = vunpack.c.l.b16 %v2886
    %v2958 = vunpack.c.l.b16 %v2887
    %v2959 = vunpack.c.l.b16 %v2888
    %v2960 = vpack.c.b16 %v2929, %v2928
    %v2961 = vpack.c.b16 %v2931, %v2930
    %v2962 = vpack.c.b16 %v2933, %v2932
    %v2963 = vpack.c.b16 %v2935, %v2934
    %v2964 = vpack.c.b16 %v2937, %v2936
    %v2965 = vpack.c.b16 %v2939, %v2938
    %v2966 = vpack.c.b16 %v2941, %v2940
    %v2967 = vpack.c.b16 %v2943, %v2942
    %v2968 = vpack.c.b16 %v2945, %v2944
    %v2969 = vpack.c.b16 %v2947, %v2946
    %v2970 = vpack.c.b16 %v2949, %v2948
    %v2971 = vpack.c.b16 %v2951, %v2950
    %v2972 = vpack.c.b16 %v2953, %v2952
    %v2973 = vpack.c.b16 %v2955, %v2954
    %v2974 = vpack.c.b16 %v2957, %v2956
    %v2975 = vpack.c.b16 %v2959, %v2958
    %2992 = vmatprep.subr.bf16.mxu0 0
    %2993 = vmatpush1.bf16.msra.mxu0 %v2967
    %2994 = vmatprep.subr.bf16.mxu0 0
    %2995 = vmatpush1.bf16.msra.mxu0 %v2966
    %2996 = vmatprep.subr.bf16.mxu0 0
    %2997 = vmatpush1.bf16.msra.mxu0 %v2965
    %2998 = vmatprep.subr.bf16.mxu0 0
    %2999 = vmatpush1.bf16.msra.mxu0 %v2964
    %3000 = vmatprep.subr.bf16.mxu0 0
    %3001 = vmatpush1.bf16.msra.mxu0 %v2963
    %3002 = vmatprep.subr.bf16.mxu0 0
    %3003 = vmatpush1.bf16.msra.mxu0 %v2962
    %3004 = vmatprep.subr.bf16.mxu0 0
    %3005 = vmatpush1.bf16.msra.mxu0 %v2961
    %3006 = vmatprep.subr.bf16.mxu0 0
    %3007 = vmatpush1.bf16.msra.mxu0 %v2960
    %3008 = vmatprep.subr.bf16.mxu0 0
    %3009 = vmatpush2.bf16.msra.mxu0 %v2975
    %3010 = vmatprep.subr.bf16.mxu0 0
    %3011 = vmatpush2.bf16.msra.mxu0 %v2974
    %3012 = vmatprep.subr.bf16.mxu0 0
    %3013 = vmatpush2.bf16.msra.mxu0 %v2973
    %3014 = vmatprep.subr.bf16.mxu0 0
    %3015 = vmatpush2.bf16.msra.mxu0 %v2972
    %3016 = vmatprep.subr.bf16.mxu0 0
    %3017 = vmatpush2.bf16.msra.mxu0 %v2971
    %3018 = vmatprep.subr.bf16.mxu0 0
    %3019 = vmatpush2.bf16.msra.mxu0 %v2970
    %3020 = vmatprep.subr.bf16.mxu0 0
    %3021 = vmatpush2.bf16.msra.mxu0 %v2969
    %3022 = vmatprep.subr.bf16.mxu0 0
    %3023 = vmatpush2.bf16.msra.mxu0 %v2968
    %3024 = vmatprep.mubr.bf16.mxu0 %v2856
    %3025 = vmatmul.mubr.bf16.gmra.mxu0 %v2855
    %v3026 = vpop.f32.mrf.mxu0
    %v3027 = vadd.f32 %v2894, %v3026
    %v3028 = vpop.f32.mrf.mxu0
    %v3029 = vpop.f32.mrf.mxu0
    %v3030 = vpop.f32.mrf.mxu0
    %3031 = vdwg.mxu0
    %vm3032 = vcmp.gt.f32.partialorder %v3027, 0.0
    %v3033 = vmul.f32 %v3027, 0.2
    %v3034 = vsel %vm3032, %v3027, %v3033
    %v3035 = vsel %vm1236, %v3034, 0.0
    %v3036 = vrot.slane %v3035, 4
    %v3037 = vadd.f32 %v3035, %v3036
    %v3038 = vrot.slane %v3037, 2
    %v3039 = vadd.f32 %v3037, %v3038
    %v3040 = vrot.slane %v3039, 1
    %v3041 = vadd.f32 %v3039, %v3040
    %v3042 = vmul.f32 %v3034, %v3034
    %v3043 = vsel %vm1236, %v3042, 0.0
    %v3044 = vrot.slane %v3043, 4
    %v3045 = vadd.f32 %v3043, %v3044
    %v3046 = vrot.slane %v3045, 2
    %v3047 = vadd.f32 %v3045, %v3046
    %v3048 = vrot.slane %v3047, 1
    %v3049 = vadd.f32 %v3047, %v3048
    %v3050 = vld [vmem:[%s27] sm:$0xff]
    %v3051 = vld [vmem:[%s27 + $0x8] sm:$0xff]
    %v3052 = vld [vmem:[%s27 + $0x10] sm:$0xff]
    %v3053 = vld [vmem:[%s27 + $0x18] sm:$0xff]
    %v3054 = vld [vmem:[%s27 + $0x20] sm:$0xff]
    %v3055 = vld [vmem:[%s27 + $0x28] sm:$0xff]
    %v3056 = vld [vmem:[%s27 + $0x30] sm:$0xff]
    %v3057 = vld [vmem:[%s27 + $0x38] sm:$0xff]
    %v3058 = vld [vmem:[%s27 + $0x40] sm:$0xff]
    %v3059 = vld [vmem:[%s27 + $0x48] sm:$0xff]
    %v3060 = vld [vmem:[%s27 + $0x50] sm:$0xff]
    %v3061 = vld [vmem:[%s27 + $0x58] sm:$0xff]
    %v3062 = vld [vmem:[%s27 + $0x60] sm:$0xff]
    %v3063 = vld [vmem:[%s27 + $0x68] sm:$0xff]
    %v3064 = vld [vmem:[%s27 + $0x70] sm:$0xff]
    %v3065 = vld [vmem:[%s27 + $0x78] sm:$0xff]
    %3066 = vmatprep.subr.mxu0 0.0
    %3067 = vmatpush1.msra.mxu0 %v3065
    %3068 = vmatprep.subr.mxu0 0.0
    %3069 = vmatpush1.msra.mxu0 %v3064
    %3070 = vmatprep.subr.mxu0 0.0
    %3071 = vmatpush1.msra.mxu0 %v3063
    %3072 = vmatprep.subr.mxu0 0.0
    %3073 = vmatpush1.msra.mxu0 %v3062
    %3074 = vmatprep.subr.mxu0 0.0
    %3075 = vmatpush1.msra.mxu0 %v3061
    %3076 = vmatprep.subr.mxu0 0.0
    %3077 = vmatpush1.msra.mxu0 %v3060
    %3078 = vmatprep.subr.mxu0 0.0
    %3079 = vmatpush1.msra.mxu0 %v3059
    %3080 = vmatprep.subr.mxu0 0.0
    %3081 = vmatpush1.msra.mxu0 %v3058
    %3082 = vmatprep.subr.mxu0 0.0
    %3083 = vmatpush1.msra.mxu0 %v3057
    %3084 = vmatprep.subr.mxu0 0.0
    %3085 = vmatpush1.msra.mxu0 %v3056
    %3086 = vmatprep.subr.mxu0 0.0
    %3087 = vmatpush1.msra.mxu0 %v3055
    %3088 = vmatprep.subr.mxu0 0.0
    %3089 = vmatpush1.msra.mxu0 %v3054
    %3090 = vmatprep.subr.mxu0 0.0
    %3091 = vmatpush1.msra.mxu0 %v3053
    %3092 = vmatprep.subr.mxu0 0.0
    %3093 = vmatpush1.msra.mxu0 %v3052
    %3094 = vmatprep.subr.mxu0 0.0
    %3095 = vmatpush1.msra.mxu0 %v3051
    %3096 = vmatprep.subr.mxu0 0.0
    %3097 = vmatpush1.msra.mxu0 %v3050
    %3098 = vmatprep.subr.mxu0 0.0
    %3099 = vmatpush2.msra.mxu0 0.0
    %3100 = vmatprep.subr.mxu0 0.0
    %3101 = vmatpush2.msra.mxu0 0.0
    %3102 = vmatprep.subr.mxu0 0.0
    %3103 = vmatpush2.msra.mxu0 0.0
    %3104 = vmatprep.subr.mxu0 0.0
    %3105 = vmatpush2.msra.mxu0 0.0
    %3106 = vmatprep.subr.mxu0 0.0
    %3107 = vmatpush2.msra.mxu0 0.0
    %3108 = vmatprep.subr.mxu0 0.0
    %3109 = vmatpush2.msra.mxu0 0.0
    %3110 = vmatprep.subr.mxu0 0.0
    %3111 = vmatpush2.msra.mxu0 0.0
    %3112 = vmatprep.subr.mxu0 0.0
    %3113 = vmatpush2.msra.mxu0 0.0
    %3114 = vmatprep.subr.mxu0 0.0
    %3115 = vmatpush2.msra.mxu0 0.0
    %3116 = vmatprep.subr.mxu0 0.0
    %3117 = vmatpush2.msra.mxu0 0.0
    %3118 = vmatprep.subr.mxu0 0.0
    %3119 = vmatpush2.msra.mxu0 0.0
    %3120 = vmatprep.subr.mxu0 0.0
    %3121 = vmatpush2.msra.mxu0 0.0
    %3122 = vmatprep.subr.mxu0 0.0
    %3123 = vmatpush2.msra.mxu0 0.0
    %3124 = vmatprep.subr.mxu0 0.0
    %3125 = vmatpush2.msra.mxu0 0.0
    %3126 = vmatprep.subr.mxu0 0.0
    %3127 = vmatpush2.msra.mxu0 0.0
    %3128 = vmatprep.subr.mxu0 0.0
    %3129 = vmatpush2.msra.mxu0 0.0
    %3130 = vmatprep.mubr.f32.mxu0 0.0
    %3131 = vmatmul.mubr.f32.gmra.mxu0 %v3041
    %v3132 = vpop.f32.mrf.mxu0
    %v3133 = vadd.f32 0.0, %v3132
    %v3134 = vpop.f32.mrf.mxu0
    %3135 = vdwg.mxu0
    %v3136 = vrcp.pop 8.0
    %v3137 = vmul.f32 %v3133, %v3136
    %3138 = vmatprep.subr.mxu0 0.0
    %3139 = vmatpush1.msra.mxu0 %v3065
    %3140 = vmatprep.subr.mxu0 0.0
    %3141 = vmatpush1.msra.mxu0 %v3064
    %3142 = vmatprep.subr.mxu0 0.0
    %3143 = vmatpush1.msra.mxu0 %v3063
    %3144 = vmatprep.subr.mxu0 0.0
    %3145 = vmatpush1.msra.mxu0 %v3062
    %3146 = vmatprep.subr.mxu0 0.0
    %3147 = vmatpush1.msra.mxu0 %v3061
    %3148 = vmatprep.subr.mxu0 0.0
    %3149 = vmatpush1.msra.mxu0 %v3060
    %3150 = vmatprep.subr.mxu0 0.0
    %3151 = vmatpush1.msra.mxu0 %v3059
    %3152 = vmatprep.subr.mxu0 0.0
    %3153 = vmatpush1.msra.mxu0 %v3058
    %3154 = vmatprep.subr.mxu0 0.0
    %3155 = vmatpush1.msra.mxu0 %v3057
    %3156 = vmatprep.subr.mxu0 0.0
    %3157 = vmatpush1.msra.mxu0 %v3056
    %3158 = vmatprep.subr.mxu0 0.0
    %3159 = vmatpush1.msra.mxu0 %v3055
    %3160 = vmatprep.subr.mxu0 0.0
    %3161 = vmatpush1.msra.mxu0 %v3054
    %3162 = vmatprep.subr.mxu0 0.0
    %3163 = vmatpush1.msra.mxu0 %v3053
    %3164 = vmatprep.subr.mxu0 0.0
    %3165 = vmatpush1.msra.mxu0 %v3052
    %3166 = vmatprep.subr.mxu0 0.0
    %3167 = vmatpush1.msra.mxu0 %v3051
    %3168 = vmatprep.subr.mxu0 0.0
    %3169 = vmatpush1.msra.mxu0 %v3050
    %3170 = vmatprep.subr.mxu0 0.0
    %3171 = vmatpush2.msra.mxu0 0.0
    %3172 = vmatprep.subr.mxu0 0.0
    %3173 = vmatpush2.msra.mxu0 0.0
    %3174 = vmatprep.subr.mxu0 0.0
    %3175 = vmatpush2.msra.mxu0 0.0
    %3176 = vmatprep.subr.mxu0 0.0
    %3177 = vmatpush2.msra.mxu0 0.0
    %3178 = vmatprep.subr.mxu0 0.0
    %3179 = vmatpush2.msra.mxu0 0.0
    %3180 = vmatprep.subr.mxu0 0.0
    %3181 = vmatpush2.msra.mxu0 0.0
    %3182 = vmatprep.subr.mxu0 0.0
    %3183 = vmatpush2.msra.mxu0 0.0
    %3184 = vmatprep.subr.mxu0 0.0
    %3185 = vmatpush2.msra.mxu0 0.0
    %3186 = vmatprep.subr.mxu0 0.0
    %3187 = vmatpush2.msra.mxu0 0.0
    %3188 = vmatprep.subr.mxu0 0.0
    %3189 = vmatpush2.msra.mxu0 0.0
    %3190 = vmatprep.subr.mxu0 0.0
    %3191 = vmatpush2.msra.mxu0 0.0
    %3192 = vmatprep.subr.mxu0 0.0
    %3193 = vmatpush2.msra.mxu0 0.0
    %3194 = vmatprep.subr.mxu0 0.0
    %3195 = vmatpush2.msra.mxu0 0.0
    %3196 = vmatprep.subr.mxu0 0.0
    %3197 = vmatpush2.msra.mxu0 0.0
    %3198 = vmatprep.subr.mxu0 0.0
    %3199 = vmatpush2.msra.mxu0 0.0
    %3200 = vmatprep.subr.mxu0 0.0
    %3201 = vmatpush2.msra.mxu0 0.0
    %3202 = vmatprep.mubr.f32.mxu0 0.0
    %3203 = vmatmul.mubr.f32.gmra.mxu0 %v3049
    %v3204 = vpop.f32.mrf.mxu0
    %v3205 = vadd.f32 0.0, %v3204
    %v3206 = vpop.f32.mrf.mxu0
    %3207 = vdwg.mxu0
    %v3208 = vmul.f32 %v3205, %v3136
    %v3209 = vmul.f32 %v3137, %v3137
    %v3210 = vsub.f32 %v3208, %v3209
    %v3211 = vmax.f32 %v3210, 0.0
    %v3212 = vadd.f32 %v3211, 1e-05
    %v3213 = vrsqrt.pop %v3212
    %v3214 = vld [vmem:[#allocation13] sm:$0xff]
    %v3215 = vld [vmem:[#allocation13 + $0x8] sm:$0xff]
    %v3216 = vld [vmem:[#allocation13 + $0x10] sm:$0xff]
    %v3217 = vld [vmem:[#allocation13 + $0x18] sm:$0xff]
    %vm3218 = vcmask 261120
    %v3220 = vsel %vm3218, %v3137, 0
    %3222 = vmatprep.subr.mxu0 0.0
    %3223 = vmatpush1.msra.mxu0 0.0
    %3224 = vmatprep.subr.mxu0 0.0
    %3225 = vmatpush1.msra.mxu0 0.0
    %3226 = vmatprep.subr.mxu0 0.0
    %3227 = vmatpush1.msra.mxu0 0.0
    %3228 = vmatprep.subr.mxu0 0.0
    %3229 = vmatpush1.msra.mxu0 0.0
    %3230 = vmatprep.subr.mxu0 0.0
    %3231 = vmatpush1.msra.mxu0 0.0
    %3232 = vmatprep.subr.mxu0 0.0
    %3233 = vmatpush1.msra.mxu0 0.0
    %3234 = vmatprep.subr.mxu0 0.0
    %3235 = vmatpush1.msra.mxu0 0.0
    %3236 = vmatprep.subr.mxu0 0.0
    %3237 = vmatpush1.msra.mxu0 0.0
    %3238 = vmatprep.subr.mxu0 0.0
    %3239 = vmatpush1.msra.mxu0 0.0
    %3240 = vmatprep.subr.mxu0 0.0
    %3241 = vmatpush1.msra.mxu0 0.0
    %3242 = vmatprep.subr.mxu0 0.0
    %3243 = vmatpush1.msra.mxu0 0.0
    %3244 = vmatprep.subr.mxu0 0.0
    %3245 = vmatpush1.msra.mxu0 0.0
    %3246 = vmatprep.subr.mxu0 0.0
    %3247 = vmatpush1.msra.mxu0 %v3217
    %3248 = vmatprep.subr.mxu0 0.0
    %3249 = vmatpush1.msra.mxu0 %v3216
    %3250 = vmatprep.subr.mxu0 0.0
    %3251 = vmatpush1.msra.mxu0 %v3215
    %3252 = vmatprep.subr.mxu0 0.0
    %3253 = vmatpush1.msra.mxu0 %v3214
    %3254 = vmatprep.subr.mxu0 0.0
    %3255 = vmatpush2.msra.mxu0 0.0
    %3256 = vmatprep.subr.mxu0 0.0
    %3257 = vmatpush2.msra.mxu0 0.0
    %3258 = vmatprep.subr.mxu0 0.0
    %3259 = vmatpush2.msra.mxu0 0.0
    %3260 = vmatprep.subr.mxu0 0.0
    %3261 = vmatpush2.msra.mxu0 0.0
    %3262 = vmatprep.subr.mxu0 0.0
    %3263 = vmatpush2.msra.mxu0 0.0
    %3264 = vmatprep.subr.mxu0 0.0
    %3265 = vmatpush2.msra.mxu0 0.0
    %3266 = vmatprep.subr.mxu0 0.0
    %3267 = vmatpush2.msra.mxu0 0.0
    %3268 = vmatprep.subr.mxu0 0.0
    %3269 = vmatpush2.msra.mxu0 0.0
    %3270 = vmatprep.subr.mxu0 0.0
    %3271 = vmatpush2.msra.mxu0 0.0
    %3272 = vmatprep.subr.mxu0 0.0
    %3273 = vmatpush2.msra.mxu0 0.0
    %3274 = vmatprep.subr.mxu0 0.0
    %3275 = vmatpush2.msra.mxu0 0.0
    %3276 = vmatprep.subr.mxu0 0.0
    %3277 = vmatpush2.msra.mxu0 0.0
    %3278 = vmatprep.subr.mxu0 0.0
    %3279 = vmatpush2.msra.mxu0 0.0
    %3280 = vmatprep.subr.mxu0 0.0
    %3281 = vmatpush2.msra.mxu0 0.0
    %3282 = vmatprep.subr.mxu0 0.0
    %3283 = vmatpush2.msra.mxu0 0.0
    %3284 = vmatprep.subr.mxu0 0.0
    %3285 = vmatpush2.msra.mxu0 0.0
    %3286 = vmatprep.mubr.f32.mxu0 0.0
    %3287 = vmatmul.mubr.f32.gmra.mxu0 %v3220
    %v3288 = vpop.f32.mrf.mxu0
    %v3289 = vadd.f32 0.0, %v3288
    %v3290 = vpop.f32.mrf.mxu0
    %3291 = vdwg.mxu0
    %v3292 = vlaneseq
    %v3293 = vshrl.u32 %v3292, 7
    %v3294 = vsub.s32 0, %v3293
    %v3295 = vrot.slane %v3289, %v3294
    %v3296 = vsub.f32 %v3034, %v3295
    %v3298 = vsel %vm3218, %v3213, 0
    %3300 = vmatprep.subr.mxu0 0.0
    %3301 = vmatpush1.msra.mxu0 0.0
    %3302 = vmatprep.subr.mxu0 0.0
    %3303 = vmatpush1.msra.mxu0 0.0
    %3304 = vmatprep.subr.mxu0 0.0
    %3305 = vmatpush1.msra.mxu0 0.0
    %3306 = vmatprep.subr.mxu0 0.0
    %3307 = vmatpush1.msra.mxu0 0.0
    %3308 = vmatprep.subr.mxu0 0.0
    %3309 = vmatpush1.msra.mxu0 0.0
    %3310 = vmatprep.subr.mxu0 0.0
    %3311 = vmatpush1.msra.mxu0 0.0
    %3312 = vmatprep.subr.mxu0 0.0
    %3313 = vmatpush1.msra.mxu0 0.0
    %3314 = vmatprep.subr.mxu0 0.0
    %3315 = vmatpush1.msra.mxu0 0.0
    %3316 = vmatprep.subr.mxu0 0.0
    %3317 = vmatpush1.msra.mxu0 0.0
    %3318 = vmatprep.subr.mxu0 0.0
    %3319 = vmatpush1.msra.mxu0 0.0
    %3320 = vmatprep.subr.mxu0 0.0
    %3321 = vmatpush1.msra.mxu0 0.0
    %3322 = vmatprep.subr.mxu0 0.0
    %3323 = vmatpush1.msra.mxu0 0.0
    %3324 = vmatprep.subr.mxu0 0.0
    %3325 = vmatpush1.msra.mxu0 %v3217
    %3326 = vmatprep.subr.mxu0 0.0
    %3327 = vmatpush1.msra.mxu0 %v3216
    %3328 = vmatprep.subr.mxu0 0.0
    %3329 = vmatpush1.msra.mxu0 %v3215
    %3330 = vmatprep.subr.mxu0 0.0
    %3331 = vmatpush1.msra.mxu0 %v3214
    %3332 = vmatprep.subr.mxu0 0.0
    %3333 = vmatpush2.msra.mxu0 0.0
    %3334 = vmatprep.subr.mxu0 0.0
    %3335 = vmatpush2.msra.mxu0 0.0
    %3336 = vmatprep.subr.mxu0 0.0
    %3337 = vmatpush2.msra.mxu0 0.0
    %3338 = vmatprep.subr.mxu0 0.0
    %3339 = vmatpush2.msra.mxu0 0.0
    %3340 = vmatprep.subr.mxu0 0.0
    %3341 = vmatpush2.msra.mxu0 0.0
    %3342 = vmatprep.subr.mxu0 0.0
    %3343 = vmatpush2.msra.mxu0 0.0
    %3344 = vmatprep.subr.mxu0 0.0
    %3345 = vmatpush2.msra.mxu0 0.0
    %3346 = vmatprep.subr.mxu0 0.0
    %3347 = vmatpush2.msra.mxu0 0.0
    %3348 = vmatprep.subr.mxu0 0.0
    %3349 = vmatpush2.msra.mxu0 0.0
    %3350 = vmatprep.subr.mxu0 0.0
    %3351 = vmatpush2.msra.mxu0 0.0
    %3352 = vmatprep.subr.mxu0 0.0
    %3353 = vmatpush2.msra.mxu0 0.0
    %3354 = vmatprep.subr.mxu0 0.0
    %3355 = vmatpush2.msra.mxu0 0.0
    %3356 = vmatprep.subr.mxu0 0.0
    %3357 = vmatpush2.msra.mxu0 0.0
    %3358 = vmatprep.subr.mxu0 0.0
    %3359 = vmatpush2.msra.mxu0 0.0
    %3360 = vmatprep.subr.mxu0 0.0
    %3361 = vmatpush2.msra.mxu0 0.0
    %3362 = vmatprep.subr.mxu0 0.0
    %3363 = vmatpush2.msra.mxu0 0.0
    %3364 = vmatprep.mubr.f32.mxu0 0.0
    %3365 = vmatmul.mubr.f32.gmra.mxu0 %v3298
    %v3366 = vpop.f32.mrf.mxu0
    %v3367 = vadd.f32 0.0, %v3366
    %v3368 = vpop.f32.mrf.mxu0
    %3369 = vdwg.mxu0
    %v3370 = vlaneseq
    %v3371 = vshrl.u32 %v3370, 7
    %v3372 = vsub.s32 0, %v3371
    %v3373 = vrot.slane %v3367, %v3372
    %v3374 = vmul.f32 %v3296, %v3373
    %v3375 = vpack.c.bf16 %v3374, %v3374
    %v3376 = vld [vmem:[%s31] sm:$0xf]
    %v3377 = vld [vmem:[%s31 + $0x4] sm:$0xf]
    %v3378 = vld [vmem:[%s31 + $0x8] sm:$0xf]
    %v3379 = vld [vmem:[%s31 + $0xc] sm:$0xf]
    %v3380 = vld [vmem:[%s31 + $0x10] sm:$0xf]
    %v3381 = vld [vmem:[%s31 + $0x14] sm:$0xf]
    %v3382 = vld [vmem:[%s31 + $0x18] sm:$0xf]
    %v3383 = vld [vmem:[%s31 + $0x1c] sm:$0xf]
    %v3384 = vld [vmem:[%s31 + $0x20] sm:$0xf]
    %v3385 = vld [vmem:[%s31 + $0x24] sm:$0xf]
    %v3386 = vld [vmem:[%s31 + $0x28] sm:$0xf]
    %v3387 = vld [vmem:[%s31 + $0x2c] sm:$0xf]
    %v3388 = vld [vmem:[%s31 + $0x30] sm:$0xf]
    %v3389 = vld [vmem:[%s31 + $0x34] sm:$0xf]
    %v3390 = vld [vmem:[%s31 + $0x38] sm:$0xf]
    %v3391 = vld [vmem:[%s31 + $0x3c] sm:$0xf]
    %v3392 = vld [vmem:[#allocation15] sm:$0x1]
    %v3394 = vlaneseq
    %v3395 = vshrl.u32 %v3394, 7
    %v3396 = vsub.s32 0, %v3395
    %v3397 = vrot.slane %v3392, %v3396
    %v3415 = vunpack.c.l.b16 %v3376
    %v3416 = vunpack.c.l.b16 %v3377
    %v3417 = vunpack.c.l.b16 %v3378
    %v3418 = vunpack.c.l.b16 %v3379
    %v3419 = vunpack.c.l.b16 %v3380
    %v3420 = vunpack.c.l.b16 %v3381
    %v3421 = vunpack.c.l.b16 %v3382
    %v3422 = vunpack.c.l.b16 %v3383
    %v3423 = vunpack.c.l.b16 %v3384
    %v3424 = vunpack.c.l.b16 %v3385
    %v3425 = vunpack.c.l.b16 %v3386
    %v3426 = vunpack.c.l.b16 %v3387
    %v3427 = vunpack.c.l.b16 %v3388
    %v3428 = vunpack.c.l.b16 %v3389
    %v3429 = vunpack.c.l.b16 %v3390
    %v3430 = vunpack.c.l.b16 %v3391
    %v3431 = vpack.c.b16 %v3416, %v3415
    %v3432 = vpack.c.b16 %v3418, %v3417
    %v3433 = vpack.c.b16 %v3420, %v3419
    %v3434 = vpack.c.b16 %v3422, %v3421
    %v3435 = vpack.c.b16 %v3424, %v3423
    %v3436 = vpack.c.b16 %v3426, %v3425
    %v3437 = vpack.c.b16 %v3428, %v3427
    %v3438 = vpack.c.b16 %v3430, %v3429
    %3447 = vmatprep.subr.bf16.mxu0 0
    %3448 = vmatpush1.bf16.msra.mxu0 %v3438
    %3449 = vmatprep.subr.bf16.mxu0 0
    %3450 = vmatpush1.bf16.msra.mxu0 %v3437
    %3451 = vmatprep.subr.bf16.mxu0 0
    %3452 = vmatpush1.bf16.msra.mxu0 %v3436
    %3453 = vmatprep.subr.bf16.mxu0 0
    %3454 = vmatpush1.bf16.msra.mxu0 %v3435
    %3455 = vmatprep.subr.bf16.mxu0 0
    %3456 = vmatpush1.bf16.msra.mxu0 %v3434
    %3457 = vmatprep.subr.bf16.mxu0 0
    %3458 = vmatpush1.bf16.msra.mxu0 %v3433
    %3459 = vmatprep.subr.bf16.mxu0 0
    %3460 = vmatpush1.bf16.msra.mxu0 %v3432
    %3461 = vmatprep.subr.bf16.mxu0 0
    %3462 = vmatpush1.bf16.msra.mxu0 %v3431
    %3463 = vmatprep.subr.bf16.mxu0 0
    %3464 = vmatpush2.bf16.msra.mxu0 0
    %3465 = vmatprep.subr.bf16.mxu0 0
    %3466 = vmatpush2.bf16.msra.mxu0 0
    %3467 = vmatprep.subr.bf16.mxu0 0
    %3468 = vmatpush2.bf16.msra.mxu0 0
    %3469 = vmatprep.subr.bf16.mxu0 0
    %3470 = vmatpush2.bf16.msra.mxu0 0
    %3471 = vmatprep.subr.bf16.mxu0 0
    %3472 = vmatpush2.bf16.msra.mxu0 0
    %3473 = vmatprep.subr.bf16.mxu0 0
    %3474 = vmatpush2.bf16.msra.mxu0 0
    %3475 = vmatprep.subr.bf16.mxu0 0
    %3476 = vmatpush2.bf16.msra.mxu0 0
    %3477 = vmatprep.subr.bf16.mxu0 0
    %3478 = vmatpush2.bf16.msra.mxu0 0
    %3479 = vmatprep.mubr.bf16.mxu0 0
    %3480 = vmatmul.mubr.bf16.gmra.mxu0 %v3375
    %v3481 = vpop.f32.mrf.mxu0
    %v3482 = vadd.f32 %v3397, %v3481
    %v3483 = vpop.f32.mrf.mxu0
    %v3484 = vpop.f32.mrf.mxu0
    %v3485 = vpop.f32.mrf.mxu0
    %3486 = vdwg.mxu0
    %vm3487 = vcmp.gt.f32.partialorder %v3482, 0.0
    %v3488 = vmul.f32 %v3482, 0.2
    %v3489 = vsel %vm3487, %v3482, %v3488
    %vm3490 = vcmask 517120
    %v3491 = vsel %vm3490, %v3489, 0.0
    %v3492 = vrot.slane %v3491, 4
    %v3493 = vadd.f32 %v3491, %v3492
    %v3494 = vrot.slane %v3493, 2
    %v3495 = vadd.f32 %v3493, %v3494
    %v3496 = vrot.slane %v3495, 1
    %v3497 = vadd.f32 %v3495, %v3496
    %v3498 = vmul.f32 %v3489, %v3489
    %v3499 = vsel %vm3490, %v3498, 0.0
    %v3500 = vrot.slane %v3499, 4
    %v3501 = vadd.f32 %v3499, %v3500
    %v3502 = vrot.slane %v3501, 2
    %v3503 = vadd.f32 %v3501, %v3502
    %v3504 = vrot.slane %v3503, 1
    %v3505 = vadd.f32 %v3503, %v3504
    %v3506 = vld [vmem:[%s35] sm:$0xff]
    %v3507 = vld [vmem:[%s35 + $0x8] sm:$0xff]
    %v3508 = vld [vmem:[%s35 + $0x10] sm:$0xff]
    %v3509 = vld [vmem:[%s35 + $0x18] sm:$0xff]
    %v3510 = vld [vmem:[%s35 + $0x20] sm:$0xff]
    %v3511 = vld [vmem:[%s35 + $0x28] sm:$0xff]
    %v3512 = vld [vmem:[%s35 + $0x30] sm:$0xff]
    %v3513 = vld [vmem:[%s35 + $0x38] sm:$0xff]
    %vm3514 = vcmask 523264
    %v3516 = vsel %vm3514, %v3497, 0
    %3518 = vmatprep.subr.mxu0 0.0
    %3519 = vmatpush1.msra.mxu0 0.0
    %3520 = vmatprep.subr.mxu0 0.0
    %3521 = vmatpush1.msra.mxu0 0.0
    %3522 = vmatprep.subr.mxu0 0.0
    %3523 = vmatpush1.msra.mxu0 0.0
    %3524 = vmatprep.subr.mxu0 0.0
    %3525 = vmatpush1.msra.mxu0 0.0
    %3526 = vmatprep.subr.mxu0 0.0
    %3527 = vmatpush1.msra.mxu0 0.0
    %3528 = vmatprep.subr.mxu0 0.0
    %3529 = vmatpush1.msra.mxu0 0.0
    %3530 = vmatprep.subr.mxu0 0.0
    %3531 = vmatpush1.msra.mxu0 0.0
    %3532 = vmatprep.subr.mxu0 0.0
    %3533 = vmatpush1.msra.mxu0 0.0
    %3534 = vmatprep.subr.mxu0 0.0
    %3535 = vmatpush1.msra.mxu0 %v3513
    %3536 = vmatprep.subr.mxu0 0.0
    %3537 = vmatpush1.msra.mxu0 %v3512
    %3538 = vmatprep.subr.mxu0 0.0
    %3539 = vmatpush1.msra.mxu0 %v3511
    %3540 = vmatprep.subr.mxu0 0.0
    %3541 = vmatpush1.msra.mxu0 %v3510
    %3542 = vmatprep.subr.mxu0 0.0
    %3543 = vmatpush1.msra.mxu0 %v3509
    %3544 = vmatprep.subr.mxu0 0.0
    %3545 = vmatpush1.msra.mxu0 %v3508
    %3546 = vmatprep.subr.mxu0 0.0
    %3547 = vmatpush1.msra.mxu0 %v3507
    %3548 = vmatprep.subr.mxu0 0.0
    %3549 = vmatpush1.msra.mxu0 %v3506
    %3550 = vmatprep.subr.mxu0 0.0
    %3551 = vmatpush2.msra.mxu0 0.0
    %3552 = vmatprep.subr.mxu0 0.0
    %3553 = vmatpush2.msra.mxu0 0.0
    %3554 = vmatprep.subr.mxu0 0.0
    %3555 = vmatpush2.msra.mxu0 0.0
    %3556 = vmatprep.subr.mxu0 0.0
    %3557 = vmatpush2.msra.mxu0 0.0
    %3558 = vmatprep.subr.mxu0 0.0
    %3559 = vmatpush2.msra.mxu0 0.0
    %3560 = vmatprep.subr.mxu0 0.0
    %3561 = vmatpush2.msra.mxu0 0.0
    %3562 = vmatprep.subr.mxu0 0.0
    %3563 = vmatpush2.msra.mxu0 0.0
    %3564 = vmatprep.subr.mxu0 0.0
    %3565 = vmatpush2.msra.mxu0 0.0
    %3566 = vmatprep.subr.mxu0 0.0
    %3567 = vmatpush2.msra.mxu0 0.0
    %3568 = vmatprep.subr.mxu0 0.0
    %3569 = vmatpush2.msra.mxu0 0.0
    %3570 = vmatprep.subr.mxu0 0.0
    %3571 = vmatpush2.msra.mxu0 0.0
    %3572 = vmatprep.subr.mxu0 0.0
    %3573 = vmatpush2.msra.mxu0 0.0
    %3574 = vmatprep.subr.mxu0 0.0
    %3575 = vmatpush2.msra.mxu0 0.0
    %3576 = vmatprep.subr.mxu0 0.0
    %3577 = vmatpush2.msra.mxu0 0.0
    %3578 = vmatprep.subr.mxu0 0.0
    %3579 = vmatpush2.msra.mxu0 0.0
    %3580 = vmatprep.subr.mxu0 0.0
    %3581 = vmatpush2.msra.mxu0 0.0
    %3582 = vmatprep.mubr.f32.mxu0 0.0
    %3583 = vmatmul.mubr.f32.gmra.mxu0 %v3516
    %v3584 = vpop.f32.mrf.mxu0
    %v3585 = vadd.f32 0.0, %v3584
    %v3586 = vpop.f32.mrf.mxu0
    %3587 = vdwg.mxu0
    %v3588 = vrcp.pop 2.0
    %v3589 = vmul.f32 %v3585, %v3588
    %v3591 = vsel %vm3514, %v3505, 0
    %3593 = vmatprep.subr.mxu0 0.0
    %3594 = vmatpush1.msra.mxu0 0.0
    %3595 = vmatprep.subr.mxu0 0.0
    %3596 = vmatpush1.msra.mxu0 0.0
    %3597 = vmatprep.subr.mxu0 0.0
    %3598 = vmatpush1.msra.mxu0 0.0
    %3599 = vmatprep.subr.mxu0 0.0
    %3600 = vmatpush1.msra.mxu0 0.0
    %3601 = vmatprep.subr.mxu0 0.0
    %3602 = vmatpush1.msra.mxu0 0.0
    %3603 = vmatprep.subr.mxu0 0.0
    %3604 = vmatpush1.msra.mxu0 0.0
    %3605 = vmatprep.subr.mxu0 0.0
    %3606 = vmatpush1.msra.mxu0 0.0
    %3607 = vmatprep.subr.mxu0 0.0
    %3608 = vmatpush1.msra.mxu0 0.0
    %3609 = vmatprep.subr.mxu0 0.0
    %3610 = vmatpush1.msra.mxu0 %v3513
    %3611 = vmatprep.subr.mxu0 0.0
    %3612 = vmatpush1.msra.mxu0 %v3512
    %3613 = vmatprep.subr.mxu0 0.0
    %3614 = vmatpush1.msra.mxu0 %v3511
    %3615 = vmatprep.subr.mxu0 0.0
    %3616 = vmatpush1.msra.mxu0 %v3510
    %3617 = vmatprep.subr.mxu0 0.0
    %3618 = vmatpush1.msra.mxu0 %v3509
    %3619 = vmatprep.subr.mxu0 0.0
    %3620 = vmatpush1.msra.mxu0 %v3508
    %3621 = vmatprep.subr.mxu0 0.0
    %3622 = vmatpush1.msra.mxu0 %v3507
    %3623 = vmatprep.subr.mxu0 0.0
    %3624 = vmatpush1.msra.mxu0 %v3506
    %3625 = vmatprep.subr.mxu0 0.0
    %3626 = vmatpush2.msra.mxu0 0.0
    %3627 = vmatprep.subr.mxu0 0.0
    %3628 = vmatpush2.msra.mxu0 0.0
    %3629 = vmatprep.subr.mxu0 0.0
    %3630 = vmatpush2.msra.mxu0 0.0
    %3631 = vmatprep.subr.mxu0 0.0
    %3632 = vmatpush2.msra.mxu0 0.0
    %3633 = vmatprep.subr.mxu0 0.0
    %3634 = vmatpush2.msra.mxu0 0.0
    %3635 = vmatprep.subr.mxu0 0.0
    %3636 = vmatpush2.msra.mxu0 0.0
    %3637 = vmatprep.subr.mxu0 0.0
    %3638 = vmatpush2.msra.mxu0 0.0
    %3639 = vmatprep.subr.mxu0 0.0
    %3640 = vmatpush2.msra.mxu0 0.0
    %3641 = vmatprep.subr.mxu0 0.0
    %3642 = vmatpush2.msra.mxu0 0.0
    %3643 = vmatprep.subr.mxu0 0.0
    %3644 = vmatpush2.msra.mxu0 0.0
    %3645 = vmatprep.subr.mxu0 0.0
    %3646 = vmatpush2.msra.mxu0 0.0
    %3647 = vmatprep.subr.mxu0 0.0
    %3648 = vmatpush2.msra.mxu0 0.0
    %3649 = vmatprep.subr.mxu0 0.0
    %3650 = vmatpush2.msra.mxu0 0.0
    %3651 = vmatprep.subr.mxu0 0.0
    %3652 = vmatpush2.msra.mxu0 0.0
    %3653 = vmatprep.subr.mxu0 0.0
    %3654 = vmatpush2.msra.mxu0 0.0
    %3655 = vmatprep.subr.mxu0 0.0
    %3656 = vmatpush2.msra.mxu0 0.0
    %3657 = vmatprep.mubr.f32.mxu0 0.0
    %3658 = vmatmul.mubr.f32.gmra.mxu0 %v3591
    %v3659 = vpop.f32.mrf.mxu0
    %v3660 = vadd.f32 0.0, %v3659
    %v3661 = vpop.f32.mrf.mxu0
    %3662 = vdwg.mxu0
    %v3663 = vmul.f32 %v3660, %v3588
    %v3664 = vmul.f32 %v3589, %v3589
    %v3665 = vsub.f32 %v3663, %v3664
    %v3666 = vmax.f32 %v3665, 0.0
    %v3667 = vadd.f32 %v3666, 1e-05
    %v3668 = vrsqrt.pop %v3667
    %v3669 = vld [vmem:[%s37] sm:$0xff]
    %v3670 = vld [vmem:[%s37 + $0x8] sm:$0xff]
    %v3671 = vld [vmem:[%s37 + $0x10] sm:$0xff]
    %v3672 = vld [vmem:[%s37 + $0x18] sm:$0xff]
    %v3673 = vld [vmem:[%s37 + $0x20] sm:$0xff]
    %v3674 = vld [vmem:[%s37 + $0x28] sm:$0xff]
    %v3675 = vld [vmem:[%s37 + $0x30] sm:$0xff]
    %v3676 = vld [vmem:[%s37 + $0x38] sm:$0xff]
    %v3678 = vsel %vm3514, %v3589, 0
    %3680 = vmatprep.subr.mxu0 0.0
    %3681 = vmatpush1.msra.mxu0 0.0
    %3682 = vmatprep.subr.mxu0 0.0
    %3683 = vmatpush1.msra.mxu0 0.0
    %3684 = vmatprep.subr.mxu0 0.0
    %3685 = vmatpush1.msra.mxu0 0.0
    %3686 = vmatprep.subr.mxu0 0.0
    %3687 = vmatpush1.msra.mxu0 0.0
    %3688 = vmatprep.subr.mxu0 0.0
    %3689 = vmatpush1.msra.mxu0 0.0
    %3690 = vmatprep.subr.mxu0 0.0
    %3691 = vmatpush1.msra.mxu0 0.0
    %3692 = vmatprep.subr.mxu0 0.0
    %3693 = vmatpush1.msra.mxu0 0.0
    %3694 = vmatprep.subr.mxu0 0.0
    %3695 = vmatpush1.msra.mxu0 0.0
    %3696 = vmatprep.subr.mxu0 0.0
    %3697 = vmatpush1.msra.mxu0 %v3676
    %3698 = vmatprep.subr.mxu0 0.0
    %3699 = vmatpush1.msra.mxu0 %v3675
    %3700 = vmatprep.subr.mxu0 0.0
    %3701 = vmatpush1.msra.mxu0 %v3674
    %3702 = vmatprep.subr.mxu0 0.0
    %3703 = vmatpush1.msra.mxu0 %v3673
    %3704 = vmatprep.subr.mxu0 0.0
    %3705 = vmatpush1.msra.mxu0 %v3672
    %3706 = vmatprep.subr.mxu0 0.0
    %3707 = vmatpush1.msra.mxu0 %v3671
    %3708 = vmatprep.subr.mxu0 0.0
    %3709 = vmatpush1.msra.mxu0 %v3670
    %3710 = vmatprep.subr.mxu0 0.0
    %3711 = vmatpush1.msra.mxu0 %v3669
    %3712 = vmatprep.subr.mxu0 0.0
    %3713 = vmatpush2.msra.mxu0 0.0
    %3714 = vmatprep.subr.mxu0 0.0
    %3715 = vmatpush2.msra.mxu0 0.0
    %3716 = vmatprep.subr.mxu0 0.0
    %3717 = vmatpush2.msra.mxu0 0.0
    %3718 = vmatprep.subr.mxu0 0.0
    %3719 = vmatpush2.msra.mxu0 0.0
    %3720 = vmatprep.subr.mxu0 0.0
    %3721 = vmatpush2.msra.mxu0 0.0
    %3722 = vmatprep.subr.mxu0 0.0
    %3723 = vmatpush2.msra.mxu0 0.0
    %3724 = vmatprep.subr.mxu0 0.0
    %3725 = vmatpush2.msra.mxu0 0.0
    %3726 = vmatprep.subr.mxu0 0.0
    %3727 = vmatpush2.msra.mxu0 0.0
    %3728 = vmatprep.subr.mxu0 0.0
    %3729 = vmatpush2.msra.mxu0 0.0
    %3730 = vmatprep.subr.mxu0 0.0
    %3731 = vmatpush2.msra.mxu0 0.0
    %3732 = vmatprep.subr.mxu0 0.0
    %3733 = vmatpush2.msra.mxu0 0.0
    %3734 = vmatprep.subr.mxu0 0.0
    %3735 = vmatpush2.msra.mxu0 0.0
    %3736 = vmatprep.subr.mxu0 0.0
    %3737 = vmatpush2.msra.mxu0 0.0
    %3738 = vmatprep.subr.mxu0 0.0
    %3739 = vmatpush2.msra.mxu0 0.0
    %3740 = vmatprep.subr.mxu0 0.0
    %3741 = vmatpush2.msra.mxu0 0.0
    %3742 = vmatprep.subr.mxu0 0.0
    %3743 = vmatpush2.msra.mxu0 0.0
    %3744 = vmatprep.mubr.f32.mxu0 0.0
    %3745 = vmatmul.mubr.f32.gmra.mxu0 %v3678
    %v3746 = vpop.f32.mrf.mxu0
    %v3747 = vadd.f32 0.0, %v3746
    %v3748 = vpop.f32.mrf.mxu0
    %3749 = vdwg.mxu0
    %v3750 = vlaneseq
    %v3751 = vshrl.u32 %v3750, 7
    %v3752 = vsub.s32 0, %v3751
    %v3753 = vrot.slane %v3747, %v3752
    %v3754 = vsub.f32 %v3489, %v3753
    %v3756 = vsel %vm3514, %v3668, 0
    %3758 = vmatprep.subr.mxu0 0.0
    %3759 = vmatpush1.msra.mxu0 0.0
    %3760 = vmatprep.subr.mxu0 0.0
    %3761 = vmatpush1.msra.mxu0 0.0
    %3762 = vmatprep.subr.mxu0 0.0
    %3763 = vmatpush1.msra.mxu0 0.0
    %3764 = vmatprep.subr.mxu0 0.0
    %3765 = vmatpush1.msra.mxu0 0.0
    %3766 = vmatprep.subr.mxu0 0.0
    %3767 = vmatpush1.msra.mxu0 0.0
    %3768 = vmatprep.subr.mxu0 0.0
    %3769 = vmatpush1.msra.mxu0 0.0
    %3770 = vmatprep.subr.mxu0 0.0
    %3771 = vmatpush1.msra.mxu0 0.0
    %3772 = vmatprep.subr.mxu0 0.0
    %3773 = vmatpush1.msra.mxu0 0.0
    %3774 = vmatprep.subr.mxu0 0.0
    %3775 = vmatpush1.msra.mxu0 %v3676
    %3776 = vmatprep.subr.mxu0 0.0
    %3777 = vmatpush1.msra.mxu0 %v3675
    %3778 = vmatprep.subr.mxu0 0.0
    %3779 = vmatpush1.msra.mxu0 %v3674
    %3780 = vmatprep.subr.mxu0 0.0
    %3781 = vmatpush1.msra.mxu0 %v3673
    %3782 = vmatprep.subr.mxu0 0.0
    %3783 = vmatpush1.msra.mxu0 %v3672
    %3784 = vmatprep.subr.mxu0 0.0
    %3785 = vmatpush1.msra.mxu0 %v3671
    %3786 = vmatprep.subr.mxu0 0.0
    %3787 = vmatpush1.msra.mxu0 %v3670
    %3788 = vmatprep.subr.mxu0 0.0
    %3789 = vmatpush1.msra.mxu0 %v3669
    %3790 = vmatprep.subr.mxu0 0.0
    %3791 = vmatpush2.msra.mxu0 0.0
    %3792 = vmatprep.subr.mxu0 0.0
    %3793 = vmatpush2.msra.mxu0 0.0
    %3794 = vmatprep.subr.mxu0 0.0
    %3795 = vmatpush2.msra.mxu0 0.0
    %3796 = vmatprep.subr.mxu0 0.0
    %3797 = vmatpush2.msra.mxu0 0.0
    %3798 = vmatprep.subr.mxu0 0.0
    %3799 = vmatpush2.msra.mxu0 0.0
    %3800 = vmatprep.subr.mxu0 0.0
    %3801 = vmatpush2.msra.mxu0 0.0
    %3802 = vmatprep.subr.mxu0 0.0
    %3803 = vmatpush2.msra.mxu0 0.0
    %3804 = vmatprep.subr.mxu0 0.0
    %3805 = vmatpush2.msra.mxu0 0.0
    %3806 = vmatprep.subr.mxu0 0.0
    %3807 = vmatpush2.msra.mxu0 0.0
    %3808 = vmatprep.subr.mxu0 0.0
    %3809 = vmatpush2.msra.mxu0 0.0
    %3810 = vmatprep.subr.mxu0 0.0
    %3811 = vmatpush2.msra.mxu0 0.0
    %3812 = vmatprep.subr.mxu0 0.0
    %3813 = vmatpush2.msra.mxu0 0.0
    %3814 = vmatprep.subr.mxu0 0.0
    %3815 = vmatpush2.msra.mxu0 0.0
    %3816 = vmatprep.subr.mxu0 0.0
    %3817 = vmatpush2.msra.mxu0 0.0
    %3818 = vmatprep.subr.mxu0 0.0
    %3819 = vmatpush2.msra.mxu0 0.0
    %3820 = vmatprep.subr.mxu0 0.0
    %3821 = vmatpush2.msra.mxu0 0.0
    %3822 = vmatprep.mubr.f32.mxu0 0.0
    %3823 = vmatmul.mubr.f32.gmra.mxu0 %v3756
    %v3824 = vpop.f32.mrf.mxu0
    %v3825 = vadd.f32 0.0, %v3824
    %v3826 = vpop.f32.mrf.mxu0
    %3827 = vdwg.mxu0
    %v3828 = vlaneseq
    %v3829 = vshrl.u32 %v3828, 7
    %v3830 = vsub.s32 0, %v3829
    %v3831 = vrot.slane %v3825, %v3830
    %v3832 = vmul.f32 %v3754, %v3831
    %v3833 = vpack.c.bf16 %v3832, %v3832
    %v3834 = vld [vmem:[%s39] sm:$0xf]
    %v3835 = vld [vmem:[%s39 + $0x4] sm:$0xf]
    %v3836 = vld [vmem:[%s39 + $0x8] sm:$0xf]
    %v3837 = vld [vmem:[%s39 + $0xc] sm:$0xf]
    %v3838 = vld [vmem:[%s39 + $0x10] sm:$0xf]
    %v3839 = vld [vmem:[%s39 + $0x14] sm:$0xf]
    %v3840 = vld [vmem:[%s39 + $0x18] sm:$0xf]
    %v3841 = vld [vmem:[%s39 + $0x1c] sm:$0xf]
    %v3842 = vld [vmem:[#allocation16] sm:$0x1]
    %v3844 = vlaneseq
    %v3845 = vshrl.u32 %v3844, 7
    %v3846 = vsub.s32 0, %v3845
    %v3847 = vrot.slane %v3842, %v3846
    %v3857 = vunpack.c.l.b16 %v3834
    %v3858 = vunpack.c.l.b16 %v3835
    %v3859 = vunpack.c.l.b16 %v3836
    %v3860 = vunpack.c.l.b16 %v3837
    %v3861 = vunpack.c.l.b16 %v3838
    %v3862 = vunpack.c.l.b16 %v3839
    %v3863 = vunpack.c.l.b16 %v3840
    %v3864 = vunpack.c.l.b16 %v3841
    %v3865 = vpack.c.b16 %v3858, %v3857
    %v3866 = vpack.c.b16 %v3860, %v3859
    %v3867 = vpack.c.b16 %v3862, %v3861
    %v3868 = vpack.c.b16 %v3864, %v3863
    %v3874 = vsel %vm3514, %v3833, 0
    %3876 = vmatprep.subr.bf16.mxu0 0
    %3877 = vmatpush1.bf16.msra.mxu0 0
    %3878 = vmatprep.subr.bf16.mxu0 0
    %3879 = vmatpush1.bf16.msra.mxu0 0
    %3880 = vmatprep.subr.bf16.mxu0 0
    %3881 = vmatpush1.bf16.msra.mxu0 0
    %3882 = vmatprep.subr.bf16.mxu0 0
    %3883 = vmatpush1.bf16.msra.mxu0 0
    %3884 = vmatprep.subr.bf16.mxu0 0
    %3885 = vmatpush1.bf16.msra.mxu0 %v3868
    %3886 = vmatprep.subr.bf16.mxu0 0
    %3887 = vmatpush1.bf16.msra.mxu0 %v3867
    %3888 = vmatprep.subr.bf16.mxu0 0
    %3889 = vmatpush1.bf16.msra.mxu0 %v3866
    %3890 = vmatprep.subr.bf16.mxu0 0
    %3891 = vmatpush1.bf16.msra.mxu0 %v3865
    %3892 = vmatprep.subr.bf16.mxu0 0
    %3893 = vmatpush2.bf16.msra.mxu0 0
    %3894 = vmatprep.subr.bf16.mxu0 0
    %3895 = vmatpush2.bf16.msra.mxu0 0
    %3896 = vmatprep.subr.bf16.mxu0 0
    %3897 = vmatpush2.bf16.msra.mxu0 0
    %3898 = vmatprep.subr.bf16.mxu0 0
    %3899 = vmatpush2.bf16.msra.mxu0 0
    %3900 = vmatprep.subr.bf16.mxu0 0
    %3901 = vmatpush2.bf16.msra.mxu0 0
    %3902 = vmatprep.subr.bf16.mxu0 0
    %3903 = vmatpush2.bf16.msra.mxu0 0
    %3904 = vmatprep.subr.bf16.mxu0 0
    %3905 = vmatpush2.bf16.msra.mxu0 0
    %3906 = vmatprep.subr.bf16.mxu0 0
    %3907 = vmatpush2.bf16.msra.mxu0 0
    %3908 = vmatprep.mubr.bf16.mxu0 0
    %3909 = vmatmul.mubr.bf16.gmra.mxu0 %v3874
    %v3910 = vpop.f32.mrf.mxu0
    %v3911 = vadd.f32 %v3847, %v3910
    %v3912 = vpop.f32.mrf.mxu0
    %v3913 = vpop.f32.mrf.mxu0
    %v3914 = vpop.f32.mrf.mxu0
    %3915 = vdwg.mxu0
    %vm3916 = vcmp.gt.f32.partialorder %v3911, 0.0
    %v3917 = vmul.f32 %v3911, 0.2
    %v3918 = vsel %vm3916, %v3911, %v3917
    %v3919 = vld [vmem:[%s43] sm:$0xf]
    %v3920 = vld [vmem:[%s43 + $0x4] sm:$0xf]
    %v3921 = vld [vmem:[%s43 + $0x8] sm:$0xf]
    %v3922 = vld [vmem:[%s43 + $0xc] sm:$0xf]
    %v3923 = vld [vmem:[%s43 + $0x10] sm:$0xf]
    %v3924 = vld [vmem:[%s43 + $0x14] sm:$0xf]
    %v3925 = vld [vmem:[%s43 + $0x18] sm:$0xf]
    %v3926 = vld [vmem:[%s43 + $0x1c] sm:$0xf]
    %v3927 = vld [vmem:[#allocation18] sm:$0x1]
    %v3929 = vlaneseq
    %v3930 = vshrl.u32 %v3929, 7
    %v3931 = vsub.s32 0, %v3930
    %v3932 = vrot.slane %v3927, %v3931
    %v3942 = vunpack.c.l.b16 %v3919
    %v3943 = vunpack.c.l.b16 %v3920
    %v3944 = vunpack.c.l.b16 %v3921
    %v3945 = vunpack.c.l.b16 %v3922
    %v3946 = vunpack.c.l.b16 %v3923
    %v3947 = vunpack.c.l.b16 %v3924
    %v3948 = vunpack.c.l.b16 %v3925
    %v3949 = vunpack.c.l.b16 %v3926
    %v3950 = vpack.c.b16 %v3943, %v3942
    %v3951 = vpack.c.b16 %v3945, %v3944
    %v3952 = vpack.c.b16 %v3947, %v3946
    %v3953 = vpack.c.b16 %v3949, %v3948
    %3958 = vmatprep.subr.bf16.mxu0 0
    %3959 = vmatpush1.bf16.msra.mxu0 0
    %3960 = vmatprep.subr.bf16.mxu0 0
    %3961 = vmatpush1.bf16.msra.mxu0 0
    %3962 = vmatprep.subr.bf16.mxu0 0
    %3963 = vmatpush1.bf16.msra.mxu0 0
    %3964 = vmatprep.subr.bf16.mxu0 0
    %3965 = vmatpush1.bf16.msra.mxu0 0
    %3966 = vmatprep.subr.bf16.mxu0 0
    %3967 = vmatpush1.bf16.msra.mxu0 %v3953
    %3968 = vmatprep.subr.bf16.mxu0 0
    %3969 = vmatpush1.bf16.msra.mxu0 %v3952
    %3970 = vmatprep.subr.bf16.mxu0 0
    %3971 = vmatpush1.bf16.msra.mxu0 %v3951
    %3972 = vmatprep.subr.bf16.mxu0 0
    %3973 = vmatpush1.bf16.msra.mxu0 %v3950
    %3974 = vmatprep.subr.bf16.mxu0 0
    %3975 = vmatpush2.bf16.msra.mxu0 0
    %3976 = vmatprep.subr.bf16.mxu0 0
    %3977 = vmatpush2.bf16.msra.mxu0 0
    %3978 = vmatprep.subr.bf16.mxu0 0
    %3979 = vmatpush2.bf16.msra.mxu0 0
    %3980 = vmatprep.subr.bf16.mxu0 0
    %3981 = vmatpush2.bf16.msra.mxu0 0
    %3982 = vmatprep.subr.bf16.mxu0 0
    %3983 = vmatpush2.bf16.msra.mxu0 0
    %3984 = vmatprep.subr.bf16.mxu0 0
    %3985 = vmatpush2.bf16.msra.mxu0 0
    %3986 = vmatprep.subr.bf16.mxu0 0
    %3987 = vmatpush2.bf16.msra.mxu0 0
    %3988 = vmatprep.subr.bf16.mxu0 0
    %3989 = vmatpush2.bf16.msra.mxu0 0
    %3990 = vmatprep.mubr.bf16.mxu0 0
    %3991 = vmatmul.mubr.bf16.gmra.mxu0 %v3874
    %v3992 = vpop.f32.mrf.mxu0
    %v3993 = vadd.f32 %v3932, %v3992
    %v3994 = vpop.f32.mrf.mxu0
    %v3995 = vpop.f32.mrf.mxu0
    %v3996 = vpop.f32.mrf.mxu0
    %3997 = vdwg.mxu0
    %vm3998 = vcmp.gt.f32.partialorder %v3993, 0.0
    %v3999 = vmul.f32 %v3993, 0.2
    %v4000 = vsel %vm3998, %v3993, %v3999
    %v4001 = vpack.c.bf16 %v719, %v718
    %v4002 = vpack.c.bf16 %v721, %v720
    %v4003 = vld [vmem:[#allocation19] sm:$0xf]
    %v4004 = vld [vmem:[#allocation19 + $0x4] sm:$0xf]
    %v4005 = vld [vmem:[#allocation19 + $0x8] sm:$0xf]
    %v4006 = vld [vmem:[#allocation19 + $0xc] sm:$0xf]
    %v4007 = vld [vmem:[#allocation21] sm:$0x1]
    %v4009 = vlaneseq
    %v4010 = vshrl.u32 %v4009, 7
    %v4011 = vsub.s32 0, %v4010
    %v4012 = vrot.slane %v4007, %v4011
    %v4018 = vunpack.c.l.b16 %v4003
    %v4019 = vunpack.c.l.b16 %v4004
    %v4020 = vunpack.c.l.b16 %v4005
    %v4021 = vunpack.c.l.b16 %v4006
    %v4022 = vpack.c.b16 %v4019, %v4018
    %v4023 = vpack.c.b16 %v4021, %v4020
    %v4027 = vsel %vm3218, %v4001, 0
    %v4030 = vsel %vm3218, %v4002, 0
    %4032 = vmatprep.subr.bf16.mxu0 0
    %4033 = vmatpush1.bf16.msra.mxu0 0
    %4034 = vmatprep.subr.bf16.mxu0 0
    %4035 = vmatpush1.bf16.msra.mxu0 0
    %4036 = vmatprep.subr.bf16.mxu0 0
    %4037 = vmatpush1.bf16.msra.mxu0 0
    %4038 = vmatprep.subr.bf16.mxu0 0
    %4039 = vmatpush1.bf16.msra.mxu0 0
    %4040 = vmatprep.subr.bf16.mxu0 0
    %4041 = vmatpush1.bf16.msra.mxu0 0
    %4042 = vmatprep.subr.bf16.mxu0 0
    %4043 = vmatpush1.bf16.msra.mxu0 0
    %4044 = vmatprep.subr.bf16.mxu0 0
    %4045 = vmatpush1.bf16.msra.mxu0 %v4023
    %4046 = vmatprep.subr.bf16.mxu0 0
    %4047 = vmatpush1.bf16.msra.mxu0 %v4022
    %4048 = vmatprep.subr.bf16.mxu0 0
    %4049 = vmatpush2.bf16.msra.mxu0 0
    %4050 = vmatprep.subr.bf16.mxu0 0
    %4051 = vmatpush2.bf16.msra.mxu0 0
    %4052 = vmatprep.subr.bf16.mxu0 0
    %4053 = vmatpush2.bf16.msra.mxu0 0
    %4054 = vmatprep.subr.bf16.mxu0 0
    %4055 = vmatpush2.bf16.msra.mxu0 0
    %4056 = vmatprep.subr.bf16.mxu0 0
    %4057 = vmatpush2.bf16.msra.mxu0 0
    %4058 = vmatprep.subr.bf16.mxu0 0
    %4059 = vmatpush2.bf16.msra.mxu0 0
    %4060 = vmatprep.subr.bf16.mxu0 0
    %4061 = vmatpush2.bf16.msra.mxu0 0
    %4062 = vmatprep.subr.bf16.mxu0 0
    %4063 = vmatpush2.bf16.msra.mxu0 0
    %4064 = vmatprep.mubr.bf16.mxu0 0
    %4065 = vmatmul.mubr.bf16.gmra.mxu0 %v4027
    %v4066 = vpop.f32.mrf.mxu0
    %v4067 = vadd.f32 %v4012, %v4066
    %v4068 = vpop.f32.mrf.mxu0
    %v4069 = vpop.f32.mrf.mxu0
    %v4070 = vadd.f32 %v4012, %v4069
    %v4071 = vpop.f32.mrf.mxu0
    %4072 = vmatprep.mubr.bf16.mxu0 0
    %4073 = vmatmul.mubr.bf16.gmra.mxu0 %v4030
    %v4074 = vpop.f32.mrf.mxu0
    %v4075 = vadd.f32 %v4012, %v4074
    %v4076 = vpop.f32.mrf.mxu0
    %v4077 = vpop.f32.mrf.mxu0
    %v4078 = vadd.f32 %v4012, %v4077
    %v4079 = vpop.f32.mrf.mxu0
    %4080 = vdwg.mxu0
    %vm4081 = vcmp.gt.f32.partialorder %v4067, 0.0
    %vm4082 = vcmp.gt.f32.partialorder %v4070, 0.0
    %vm4083 = vcmp.gt.f32.partialorder %v4075, 0.0
    %vm4084 = vcmp.gt.f32.partialorder %v4078, 0.0
    %v4085 = vmul.f32 %v4067, 0.2
    %v4086 = vmul.f32 %v4070, 0.2
    %v4087 = vmul.f32 %v4075, 0.2
    %v4088 = vmul.f32 %v4078, 0.2
    %v4089 = vsel %vm4081, %v4067, %v4085
    %v4090 = vsel %vm4082, %v4070, %v4086
    %v4091 = vsel %vm4083, %v4075, %v4087
    %v4092 = vsel %vm4084, %v4078, %v4088
    %v4093 = vpack.c.bf16 %v4090, %v4089
    %v4094 = vpack.c.bf16 %v4092, %v4091
    %v4095 = vld [vmem:[#allocation22] sm:$0xf]
    %v4096 = vld [vmem:[#allocation22 + $0x4] sm:$0xf]
    %v4097 = vld [vmem:[#allocation22 + $0x8] sm:$0xf]
    %v4098 = vld [vmem:[#allocation22 + $0xc] sm:$0xf]
    %v4099 = vld [vmem:[#allocation22 + $0x10] sm:$0xf]
    %v4100 = vld [vmem:[#allocation22 + $0x14] sm:$0xf]
    %v4101 = vld [vmem:[#allocation22 + $0x18] sm:$0xf]
    %v4102 = vld [vmem:[#allocation22 + $0x1c] sm:$0xf]
    %v4103 = vld [vmem:[#allocation22 + $0x20] sm:$0xf]
    %v4104 = vld [vmem:[#allocation22 + $0x24] sm:$0xf]
    %v4105 = vld [vmem:[#allocation22 + $0x28] sm:$0xf]
    %v4106 = vld [vmem:[#allocation22 + $0x2c] sm:$0xf]
    %v4107 = vld [vmem:[#allocation22 + $0x30] sm:$0xf]
    %v4108 = vld [vmem:[#allocation22 + $0x34] sm:$0xf]
    %v4109 = vld [vmem:[#allocation22 + $0x38] sm:$0xf]
    %v4110 = vld [vmem:[#allocation22 + $0x3c] sm:$0xf]
    %v4111 = vld [vmem:[#allocation24] sm:$0x1]
    %v4113 = vlaneseq
    %v4114 = vshrl.u32 %v4113, 7
    %v4115 = vsub.s32 0, %v4114
    %v4116 = vrot.slane %v4111, %v4115
    %v4134 = vunpack.c.l.b16 %v4095
    %v4135 = vunpack.c.l.b16 %v4096
    %v4136 = vunpack.c.l.b16 %v4097
    %v4137 = vunpack.c.l.b16 %v4098
    %v4138 = vunpack.c.l.b16 %v4099
    %v4139 = vunpack.c.l.b16 %v4100
    %v4140 = vunpack.c.l.b16 %v4101
    %v4141 = vunpack.c.l.b16 %v4102
    %v4142 = vunpack.c.l.b16 %v4103
    %v4143 = vunpack.c.l.b16 %v4104
    %v4144 = vunpack.c.l.b16 %v4105
    %v4145 = vunpack.c.l.b16 %v4106
    %v4146 = vunpack.c.l.b16 %v4107
    %v4147 = vunpack.c.l.b16 %v4108
    %v4148 = vunpack.c.l.b16 %v4109
    %v4149 = vunpack.c.l.b16 %v4110
    %v4150 = vpack.c.b16 %v4135, %v4134
    %v4151 = vpack.c.b16 %v4137, %v4136
    %v4152 = vpack.c.b16 %v4139, %v4138
    %v4153 = vpack.c.b16 %v4141, %v4140
    %v4154 = vpack.c.b16 %v4143, %v4142
    %v4155 = vpack.c.b16 %v4145, %v4144
    %v4156 = vpack.c.b16 %v4147, %v4146
    %v4157 = vpack.c.b16 %v4149, %v4148
    %4166 = vmatprep.subr.bf16.mxu0 0
    %4167 = vmatpush1.bf16.msra.mxu0 %v4157
    %4168 = vmatprep.subr.bf16.mxu0 0
    %4169 = vmatpush1.bf16.msra.mxu0 %v4156
    %4170 = vmatprep.subr.bf16.mxu0 0
    %4171 = vmatpush1.bf16.msra.mxu0 %v4155
    %4172 = vmatprep.subr.bf16.mxu0 0
    %4173 = vmatpush1.bf16.msra.mxu0 %v4154
    %4174 = vmatprep.subr.bf16.mxu0 0
    %4175 = vmatpush1.bf16.msra.mxu0 %v4153
    %4176 = vmatprep.subr.bf16.mxu0 0
    %4177 = vmatpush1.bf16.msra.mxu0 %v4152
    %4178 = vmatprep.subr.bf16.mxu0 0
    %4179 = vmatpush1.bf16.msra.mxu0 %v4151
    %4180 = vmatprep.subr.bf16.mxu0 0
    %4181 = vmatpush1.bf16.msra.mxu0 %v4150
    %4182 = vmatprep.subr.bf16.mxu0 0
    %4183 = vmatpush2.bf16.msra.mxu0 0
    %4184 = vmatprep.subr.bf16.mxu0 0
    %4185 = vmatpush2.bf16.msra.mxu0 0
    %4186 = vmatprep.subr.bf16.mxu0 0
    %4187 = vmatpush2.bf16.msra.mxu0 0
    %4188 = vmatprep.subr.bf16.mxu0 0
    %4189 = vmatpush2.bf16.msra.mxu0 0
    %4190 = vmatprep.subr.bf16.mxu0 0
    %4191 = vmatpush2.bf16.msra.mxu0 0
    %4192 = vmatprep.subr.bf16.mxu0 0
    %4193 = vmatpush2.bf16.msra.mxu0 0
    %4194 = vmatprep.subr.bf16.mxu0 0
    %4195 = vmatpush2.bf16.msra.mxu0 0
    %4196 = vmatprep.subr.bf16.mxu0 0
    %4197 = vmatpush2.bf16.msra.mxu0 0
    %4198 = vmatprep.mubr.bf16.mxu0 0
    %4199 = vmatmul.mubr.bf16.gmra.mxu0 %v4093
    %v4200 = vpop.f32.mrf.mxu0
    %v4201 = vadd.f32 %v4116, %v4200
    %v4202 = vpop.f32.mrf.mxu0
    %v4203 = vpop.f32.mrf.mxu0
    %v4204 = vadd.f32 %v4116, %v4203
    %v4205 = vpop.f32.mrf.mxu0
    %4206 = vmatprep.mubr.bf16.mxu0 0
    %4207 = vmatmul.mubr.bf16.gmra.mxu0 %v4094
    %v4208 = vpop.f32.mrf.mxu0
    %v4209 = vadd.f32 %v4116, %v4208
    %v4210 = vpop.f32.mrf.mxu0
    %v4211 = vpop.f32.mrf.mxu0
    %v4212 = vadd.f32 %v4116, %v4211
    %v4213 = vpop.f32.mrf.mxu0
    %4214 = vdwg.mxu0
    %vm4215 = vcmp.gt.f32.partialorder %v4201, 0.0
    %vm4216 = vcmp.gt.f32.partialorder %v4204, 0.0
    %vm4217 = vcmp.gt.f32.partialorder %v4209, 0.0
    %vm4218 = vcmp.gt.f32.partialorder %v4212, 0.0
    %v4219 = vmul.f32 %v4201, 0.2
    %v4220 = vmul.f32 %v4204, 0.2
    %v4221 = vmul.f32 %v4209, 0.2
    %v4222 = vmul.f32 %v4212, 0.2
    %v4223 = vsel %vm4215, %v4201, %v4219
    %v4224 = vsel %vm4216, %v4204, %v4220
    %v4225 = vsel %vm4217, %v4209, %v4221
    %v4226 = vsel %vm4218, %v4212, %v4222
    %v4227 = vpack.c.bf16 %v4224, %v4223
    %v4228 = vpack.c.bf16 %v4226, %v4225
    %v4229 = vld [vmem:[%s55] sm:$0xf]
    %v4230 = vld [vmem:[%s55 + $0x4] sm:$0xf]
    %v4231 = vld [vmem:[%s55 + $0x8] sm:$0xf]
    %v4232 = vld [vmem:[%s55 + $0xc] sm:$0xf]
    %v4233 = vld [vmem:[%s55 + $0x10] sm:$0xf]
    %v4234 = vld [vmem:[%s55 + $0x14] sm:$0xf]
    %v4235 = vld [vmem:[%s55 + $0x18] sm:$0xf]
    %v4236 = vld [vmem:[%s55 + $0x1c] sm:$0xf]
    %v4237 = vld [vmem:[%s55 + $0x20] sm:$0xf]
    %v4238 = vld [vmem:[%s55 + $0x24] sm:$0xf]
    %v4239 = vld [vmem:[%s55 + $0x28] sm:$0xf]
    %v4240 = vld [vmem:[%s55 + $0x2c] sm:$0xf]
    %v4241 = vld [vmem:[%s55 + $0x30] sm:$0xf]
    %v4242 = vld [vmem:[%s55 + $0x34] sm:$0xf]
    %v4243 = vld [vmem:[%s55 + $0x38] sm:$0xf]
    %v4244 = vld [vmem:[%s55 + $0x3c] sm:$0xf]
    %v4245 = vld [vmem:[#allocation25] sm:$0x1]
    %v4247 = vlaneseq
    %v4248 = vshrl.u32 %v4247, 7
    %v4249 = vsub.s32 0, %v4248
    %v4250 = vrot.slane %v4245, %v4249
    %v4268 = vunpack.c.l.b16 %v4229
    %v4269 = vunpack.c.l.b16 %v4230
    %v4270 = vunpack.c.l.b16 %v4231
    %v4271 = vunpack.c.l.b16 %v4232
    %v4272 = vunpack.c.l.b16 %v4233
    %v4273 = vunpack.c.l.b16 %v4234
    %v4274 = vunpack.c.l.b16 %v4235
    %v4275 = vunpack.c.l.b16 %v4236
    %v4276 = vunpack.c.l.b16 %v4237
    %v4277 = vunpack.c.l.b16 %v4238
    %v4278 = vunpack.c.l.b16 %v4239
    %v4279 = vunpack.c.l.b16 %v4240
    %v4280 = vunpack.c.l.b16 %v4241
    %v4281 = vunpack.c.l.b16 %v4242
    %v4282 = vunpack.c.l.b16 %v4243
    %v4283 = vunpack.c.l.b16 %v4244
    %v4284 = vpack.c.b16 %v4269, %v4268
    %v4285 = vpack.c.b16 %v4271, %v4270
    %v4286 = vpack.c.b16 %v4273, %v4272
    %v4287 = vpack.c.b16 %v4275, %v4274
    %v4288 = vpack.c.b16 %v4277, %v4276
    %v4289 = vpack.c.b16 %v4279, %v4278
    %v4290 = vpack.c.b16 %v4281, %v4280
    %v4291 = vpack.c.b16 %v4283, %v4282
    %4300 = vmatprep.subr.bf16.mxu0 0
    %4301 = vmatpush1.bf16.msra.mxu0 %v4291
    %4302 = vmatprep.subr.bf16.mxu0 0
    %4303 = vmatpush1.bf16.msra.mxu0 %v4290
    %4304 = vmatprep.subr.bf16.mxu0 0
    %4305 = vmatpush1.bf16.msra.mxu0 %v4289
    %4306 = vmatprep.subr.bf16.mxu0 0
    %4307 = vmatpush1.bf16.msra.mxu0 %v4288
    %4308 = vmatprep.subr.bf16.mxu0 0
    %4309 = vmatpush1.bf16.msra.mxu0 %v4287
    %4310 = vmatprep.subr.bf16.mxu0 0
    %4311 = vmatpush1.bf16.msra.mxu0 %v4286
    %4312 = vmatprep.subr.bf16.mxu0 0
    %4313 = vmatpush1.bf16.msra.mxu0 %v4285
    %4314 = vmatprep.subr.bf16.mxu0 0
    %4315 = vmatpush1.bf16.msra.mxu0 %v4284
    %4316 = vmatprep.subr.bf16.mxu0 0
    %4317 = vmatpush2.bf16.msra.mxu0 0
    %4318 = vmatprep.subr.bf16.mxu0 0
    %4319 = vmatpush2.bf16.msra.mxu0 0
    %4320 = vmatprep.subr.bf16.mxu0 0
    %4321 = vmatpush2.bf16.msra.mxu0 0
    %4322 = vmatprep.subr.bf16.mxu0 0
    %4323 = vmatpush2.bf16.msra.mxu0 0
    %4324 = vmatprep.subr.bf16.mxu0 0
    %4325 = vmatpush2.bf16.msra.mxu0 0
    %4326 = vmatprep.subr.bf16.mxu0 0
    %4327 = vmatpush2.bf16.msra.mxu0 0
    %4328 = vmatprep.subr.bf16.mxu0 0
    %4329 = vmatpush2.bf16.msra.mxu0 0
    %4330 = vmatprep.subr.bf16.mxu0 0
    %4331 = vmatpush2.bf16.msra.mxu0 0
    %4332 = vmatprep.mubr.bf16.mxu0 0
    %4333 = vmatmul.mubr.bf16.gmra.mxu0 %v4227
    %v4334 = vpop.f32.mrf.mxu0
    %v4335 = vadd.f32 %v4250, %v4334
    %v4336 = vpop.f32.mrf.mxu0
    %v4337 = vpop.f32.mrf.mxu0
    %v4338 = vadd.f32 %v4250, %v4337
    %v4339 = vpop.f32.mrf.mxu0
    %4340 = vmatprep.mubr.bf16.mxu0 0
    %4341 = vmatmul.mubr.bf16.gmra.mxu0 %v4228
    %v4342 = vpop.f32.mrf.mxu0
    %v4343 = vadd.f32 %v4250, %v4342
    %v4344 = vpop.f32.mrf.mxu0
    %v4345 = vpop.f32.mrf.mxu0
    %v4346 = vadd.f32 %v4250, %v4345
    %v4347 = vpop.f32.mrf.mxu0
    %4348 = vdwg.mxu0
    %vm4349 = vcmp.gt.f32.partialorder %v4335, 0.0
    %vm4350 = vcmp.gt.f32.partialorder %v4338, 0.0
    %vm4351 = vcmp.gt.f32.partialorder %v4343, 0.0
    %vm4352 = vcmp.gt.f32.partialorder %v4346, 0.0
    %v4353 = vmul.f32 %v4335, 0.2
    %v4354 = vmul.f32 %v4338, 0.2
    %v4355 = vmul.f32 %v4343, 0.2
    %v4356 = vmul.f32 %v4346, 0.2
    %v4357 = vsel %vm4349, %v4335, %v4353
    %v4358 = vsel %vm4350, %v4338, %v4354
    %v4359 = vsel %vm4351, %v4343, %v4355
    %v4360 = vsel %vm4352, %v4346, %v4356
    %v4361 = vld [vmem:[#allocation27] sm:$0x3]
    %v4363 = vsel %vm3218, %v4361, 0
    %4365 = vmatprep.subr.mxu0 0.0
    %4366 = vmatpush1.msra.mxu0 0.0
    %4367 = vmatprep.subr.mxu0 0.0
    %4368 = vmatpush1.msra.mxu0 0.0
    %4369 = vmatprep.subr.mxu0 0.0
    %4370 = vmatpush1.msra.mxu0 0.0
    %4371 = vmatprep.subr.mxu0 0.0
    %4372 = vmatpush1.msra.mxu0 0.0
    %4373 = vmatprep.subr.mxu0 0.0
    %4374 = vmatpush1.msra.mxu0 0.0
    %4375 = vmatprep.subr.mxu0 0.0
    %4376 = vmatpush1.msra.mxu0 0.0
    %4377 = vmatprep.subr.mxu0 0.0
    %4378 = vmatpush1.msra.mxu0 0.0
    %4379 = vmatprep.subr.mxu0 0.0
    %4380 = vmatpush1.msra.mxu0 0.0
    %4381 = vmatprep.subr.mxu0 0.0
    %4382 = vmatpush1.msra.mxu0 0.0
    %4383 = vmatprep.subr.mxu0 0.0
    %4384 = vmatpush1.msra.mxu0 0.0
    %4385 = vmatprep.subr.mxu0 0.0
    %4386 = vmatpush1.msra.mxu0 0.0
    %4387 = vmatprep.subr.mxu0 0.0
    %4388 = vmatpush1.msra.mxu0 0.0
    %4389 = vmatprep.subr.mxu0 0.0
    %4390 = vmatpush1.msra.mxu0 %v4360
    %4391 = vmatprep.subr.mxu0 0.0
    %4392 = vmatpush1.msra.mxu0 %v4359
    %4393 = vmatprep.subr.mxu0 0.0
    %4394 = vmatpush1.msra.mxu0 %v4358
    %4395 = vmatprep.subr.mxu0 0.0
    %4396 = vmatpush1.msra.mxu0 %v4357
    %4397 = vmatprep.subr.mxu0 0.0
    %4398 = vmatpush2.msra.mxu0 0.0
    %4399 = vmatprep.subr.mxu0 0.0
    %4400 = vmatpush2.msra.mxu0 0.0
    %4401 = vmatprep.subr.mxu0 0.0
    %4402 = vmatpush2.msra.mxu0 0.0
    %4403 = vmatprep.subr.mxu0 0.0
    %4404 = vmatpush2.msra.mxu0 0.0
    %4405 = vmatprep.subr.mxu0 0.0
    %4406 = vmatpush2.msra.mxu0 0.0
    %4407 = vmatprep.subr.mxu0 0.0
    %4408 = vmatpush2.msra.mxu0 0.0
    %4409 = vmatprep.subr.mxu0 0.0
    %4410 = vmatpush2.msra.mxu0 0.0
    %4411 = vmatprep.subr.mxu0 0.0
    %4412 = vmatpush2.msra.mxu0 0.0
    %4413 = vmatprep.subr.mxu0 0.0
    %4414 = vmatpush2.msra.mxu0 0.0
    %4415 = vmatprep.subr.mxu0 0.0
    %4416 = vmatpush2.msra.mxu0 0.0
    %4417 = vmatprep.subr.mxu0 0.0
    %4418 = vmatpush2.msra.mxu0 0.0
    %4419 = vmatprep.subr.mxu0 0.0
    %4420 = vmatpush2.msra.mxu0 0.0
    %4421 = vmatprep.subr.mxu0 0.0
    %4422 = vmatpush2.msra.mxu0 0.0
    %4423 = vmatprep.subr.mxu0 0.0
    %4424 = vmatpush2.msra.mxu0 0.0
    %4425 = vmatprep.subr.mxu0 0.0
    %4426 = vmatpush2.msra.mxu0 0.0
    %4427 = vmatprep.subr.mxu0 0.0
    %4428 = vmatpush2.msra.mxu0 0.0
    %4429 = vmatprep.mubr.f32.mxu0 0.0
    %4430 = vmatmul.mubr.f32.gmra.mxu0 %v4363
    %v4431 = vpop.f32.mrf.mxu0
    %v4432 = vadd.f32 0.0, %v4431
    %v4433 = vpop.f32.mrf.mxu0
    %4434 = vdwg.mxu0
    %v4435 = vmul.f32 %v4357, %v4357
    %v4436 = vmul.f32 %v4358, %v4358
    %v4437 = vmul.f32 %v4359, %v4359
    %v4438 = vmul.f32 %v4360, %v4360
    %4439 = vmatprep.subr.mxu0 0.0
    %4440 = vmatpush1.msra.mxu0 0.0
    %4441 = vmatprep.subr.mxu0 0.0
    %4442 = vmatpush1.msra.mxu0 0.0
    %4443 = vmatprep.subr.mxu0 0.0
    %4444 = vmatpush1.msra.mxu0 0.0
    %4445 = vmatprep.subr.mxu0 0.0
    %4446 = vmatpush1.msra.mxu0 0.0
    %4447 = vmatprep.subr.mxu0 0.0
    %4448 = vmatpush1.msra.mxu0 0.0
    %4449 = vmatprep.subr.mxu0 0.0
    %4450 = vmatpush1.msra.mxu0 0.0
    %4451 = vmatprep.subr.mxu0 0.0
    %4452 = vmatpush1.msra.mxu0 0.0
    %4453 = vmatprep.subr.mxu0 0.0
    %4454 = vmatpush1.msra.mxu0 0.0
    %4455 = vmatprep.subr.mxu0 0.0
    %4456 = vmatpush1.msra.mxu0 0.0
    %4457 = vmatprep.subr.mxu0 0.0
    %4458 = vmatpush1.msra.mxu0 0.0
    %4459 = vmatprep.subr.mxu0 0.0
    %4460 = vmatpush1.msra.mxu0 0.0
    %4461 = vmatprep.subr.mxu0 0.0
    %4462 = vmatpush1.msra.mxu0 0.0
    %4463 = vmatprep.subr.mxu0 0.0
    %4464 = vmatpush1.msra.mxu0 %v4438
    %4465 = vmatprep.subr.mxu0 0.0
    %4466 = vmatpush1.msra.mxu0 %v4437
    %4467 = vmatprep.subr.mxu0 0.0
    %4468 = vmatpush1.msra.mxu0 %v4436
    %4469 = vmatprep.subr.mxu0 0.0
    %4470 = vmatpush1.msra.mxu0 %v4435
    %4471 = vmatprep.subr.mxu0 0.0
    %4472 = vmatpush2.msra.mxu0 0.0
    %4473 = vmatprep.subr.mxu0 0.0
    %4474 = vmatpush2.msra.mxu0 0.0
    %4475 = vmatprep.subr.mxu0 0.0
    %4476 = vmatpush2.msra.mxu0 0.0
    %4477 = vmatprep.subr.mxu0 0.0
    %4478 = vmatpush2.msra.mxu0 0.0
    %4479 = vmatprep.subr.mxu0 0.0
    %4480 = vmatpush2.msra.mxu0 0.0
    %4481 = vmatprep.subr.mxu0 0.0
    %4482 = vmatpush2.msra.mxu0 0.0
    %4483 = vmatprep.subr.mxu0 0.0
    %4484 = vmatpush2.msra.mxu0 0.0
    %4485 = vmatprep.subr.mxu0 0.0
    %4486 = vmatpush2.msra.mxu0 0.0
    %4487 = vmatprep.subr.mxu0 0.0
    %4488 = vmatpush2.msra.mxu0 0.0
    %4489 = vmatprep.subr.mxu0 0.0
    %4490 = vmatpush2.msra.mxu0 0.0
    %4491 = vmatprep.subr.mxu0 0.0
    %4492 = vmatpush2.msra.mxu0 0.0
    %4493 = vmatprep.subr.mxu0 0.0
    %4494 = vmatpush2.msra.mxu0 0.0
    %4495 = vmatprep.subr.mxu0 0.0
    %4496 = vmatpush2.msra.mxu0 0.0
    %4497 = vmatprep.subr.mxu0 0.0
    %4498 = vmatpush2.msra.mxu0 0.0
    %4499 = vmatprep.subr.mxu0 0.0
    %4500 = vmatpush2.msra.mxu0 0.0
    %4501 = vmatprep.subr.mxu0 0.0
    %4502 = vmatpush2.msra.mxu0 0.0
    %4503 = vmatprep.mubr.f32.mxu0 0.0
    %4504 = vmatmul.mubr.f32.gmra.mxu0 %v4363
    %v4505 = vpop.f32.mrf.mxu0
    %v4506 = vadd.f32 0.0, %v4505
    %v4507 = vpop.f32.mrf.mxu0
    %4508 = vdwg.mxu0
    %v4509 = vrcp.pop 16.0
    %v4510 = vmul.f32 %v4432, %v4509
    %v4511 = vmul.f32 %v4510, 16.0
    %v4512 = vmul.f32 %v4511, %v4510
    %v4513 = vsub.f32 %v4506, %v4512
    %v4514 = vrcp.pop 15.0
    %v4515 = vmul.f32 %v4513, %v4514
    %v4516 = vadd.f32 %v3918, %v4432
    %v4517 = vmul.f32 %v4000, %v4510
    %v4518 = vadd.f32 %v3918, %v4517
    %v4519 = vmul.f32 %v4000, %v4000
    %v4520 = vmul.f32 %v4519, %v4515
    %v4521 = vld [vmem:[%s61] sm:$0xf]
    %v4522 = vld [vmem:[%s63] sm:$0xf]
    %v4523 = vld [vmem:[#allocation28] sm:$0x3]
    %v4524 = vld [vmem:[#allocation30] sm:$0x3]
    %v4525 = vadd.f32 %v4521, %v4522
    %v4526 = vld [vmem:[%s69] sm:$0xff]
    %v4527 = vld [vmem:[%s69 + $0x8] sm:$0xff]
    %v4528 = vld [vmem:[%s69 + $0x10] sm:$0xff]
    %v4529 = vld [vmem:[%s69 + $0x18] sm:$0xff]
    %v4530 = vld [vmem:[%s69 + $0x20] sm:$0xff]
    %v4531 = vld [vmem:[%s69 + $0x28] sm:$0xff]
    %v4532 = vld [vmem:[%s69 + $0x30] sm:$0xff]
    %v4533 = vld [vmem:[%s69 + $0x38] sm:$0xff]
    %v4534 = vld [vmem:[%s69 + $0x40] sm:$0xff]
    %v4535 = vld [vmem:[%s69 + $0x48] sm:$0xff]
    %v4536 = vld [vmem:[%s69 + $0x50] sm:$0xff]
    %v4537 = vld [vmem:[%s69 + $0x58] sm:$0xff]
    %v4538 = vld [vmem:[%s69 + $0x60] sm:$0xff]
    %v4539 = vld [vmem:[%s69 + $0x68] sm:$0xff]
    %v4540 = vld [vmem:[%s69 + $0x70] sm:$0xff]
    %v4541 = vld [vmem:[%s69 + $0x78] sm:$0xff]
    %v4542 = vld [vmem:[%s69 + $0x80] sm:$0xff]
    %v4543 = vld [vmem:[%s69 + $0x88] sm:$0xff]
    %v4544 = vld [vmem:[%s69 + $0x90] sm:$0xff]
    %v4545 = vld [vmem:[%s69 + $0x98] sm:$0xff]
    %v4546 = vld [vmem:[%s69 + $0xa0] sm:$0xff]
    %v4547 = vld [vmem:[%s69 + $0xa8] sm:$0xff]
    %v4548 = vld [vmem:[%s69 + $0xb0] sm:$0xff]
    %v4549 = vld [vmem:[%s69 + $0xb8] sm:$0xff]
    %v4550 = vld [vmem:[%s69 + $0xc0] sm:$0xff]
    %v4551 = vld [vmem:[%s69 + $0xc8] sm:$0xff]
    %v4552 = vld [vmem:[%s69 + $0xd0] sm:$0xff]
    %v4553 = vld [vmem:[%s69 + $0xd8] sm:$0xff]
    %v4554 = vld [vmem:[%s69 + $0xe0] sm:$0xff]
    %v4555 = vld [vmem:[%s69 + $0xe8] sm:$0xff]
    %v4556 = vld [vmem:[%s69 + $0xf0] sm:$0xff]
    %v4557 = vld [vmem:[%s69 + $0xf8] sm:$0xff]
    %v4558 = vld [vmem:[%s69 + $0x100] sm:$0xff]
    %v4559 = vld [vmem:[%s69 + $0x108] sm:$0xff]
    %v4560 = vld [vmem:[%s69 + $0x110] sm:$0xff]
    %v4561 = vld [vmem:[%s69 + $0x118] sm:$0xff]
    %v4562 = vld [vmem:[%s69 + $0x120] sm:$0xff]
    %v4563 = vld [vmem:[%s69 + $0x128] sm:$0xff]
    %v4564 = vld [vmem:[%s69 + $0x130] sm:$0xff]
    %v4565 = vld [vmem:[%s69 + $0x138] sm:$0xff]
    %v4566 = vld [vmem:[%s69 + $0x140] sm:$0xff]
    %v4567 = vld [vmem:[%s69 + $0x148] sm:$0xff]
    %v4568 = vld [vmem:[%s69 + $0x150] sm:$0xff]
    %v4569 = vld [vmem:[%s69 + $0x158] sm:$0xff]
    %v4570 = vld [vmem:[%s69 + $0x160] sm:$0xff]
    %v4571 = vld [vmem:[%s69 + $0x168] sm:$0xff]
    %v4572 = vld [vmem:[%s69 + $0x170] sm:$0xff]
    %v4573 = vld [vmem:[%s69 + $0x178] sm:$0xff]
    %v4574 = vld [vmem:[%s69 + $0x180] sm:$0xff]
    %v4575 = vld [vmem:[%s69 + $0x188] sm:$0xff]
    %v4576 = vld [vmem:[%s69 + $0x190] sm:$0xff]
    %v4577 = vld [vmem:[%s69 + $0x198] sm:$0xff]
    %v4578 = vld [vmem:[%s69 + $0x1a0] sm:$0xff]
    %v4579 = vld [vmem:[%s69 + $0x1a8] sm:$0xff]
    %v4580 = vld [vmem:[%s69 + $0x1b0] sm:$0xff]
    %v4581 = vld [vmem:[%s69 + $0x1b8] sm:$0xff]
    %v4582 = vld [vmem:[%s69 + $0x1c0] sm:$0xff]
    %v4583 = vld [vmem:[%s69 + $0x1c8] sm:$0xff]
    %v4584 = vld [vmem:[%s69 + $0x1d0] sm:$0xff]
    %v4585 = vld [vmem:[%s69 + $0x1d8] sm:$0xff]
    %v4586 = vld [vmem:[%s69 + $0x1e0] sm:$0xff]
    %v4587 = vld [vmem:[%s69 + $0x1e8] sm:$0xff]
    %v4588 = vld [vmem:[%s69 + $0x1f0] sm:$0xff]
    %v4589 = vld [vmem:[%s69 + $0x1f8] sm:$0xff]
    %v4590 = vld [vmem:[#allocation31] sm:$0xf]
    %v4592 = vlaneseq
    %v4593 = vshrl.u32 %v4592, 7
    %v4594 = vsub.s32 0, %v4593
    %v4595 = vrot.slane %v4590, %v4594
    %v4596 = vlaneseq
    %v4597 = vshrl.u32 %v4596, 7
    %v4598 = vsub.s32 1, %v4597
    %v4599 = vrot.slane %v4590, %v4598
    %v4600 = vlaneseq
    %v4601 = vshrl.u32 %v4600, 7
    %v4602 = vsub.s32 2, %v4601
    %v4603 = vrot.slane %v4590, %v4602
    %v4604 = vlaneseq
    %v4605 = vshrl.u32 %v4604, 7
    %v4606 = vsub.s32 3, %v4605
    %v4607 = vrot.slane %v4590, %v4606
    %v4676 = vunpack.c.l.b16 %v4526
    %v4677 = vunpack.c.h.b16 %v4526
    %v4678 = vunpack.c.l.b16 %v4527
    %v4679 = vunpack.c.h.b16 %v4527
    %v4680 = vunpack.c.l.b16 %v4528
    %v4681 = vunpack.c.h.b16 %v4528
    %v4682 = vunpack.c.l.b16 %v4529
    %v4683 = vunpack.c.h.b16 %v4529
    %v4684 = vunpack.c.l.b16 %v4530
    %v4685 = vunpack.c.h.b16 %v4530
    %v4686 = vunpack.c.l.b16 %v4531
    %v4687 = vunpack.c.h.b16 %v4531
    %v4688 = vunpack.c.l.b16 %v4532
    %v4689 = vunpack.c.h.b16 %v4532
    %v4690 = vunpack.c.l.b16 %v4533
    %v4691 = vunpack.c.h.b16 %v4533
    %v4692 = vunpack.c.l.b16 %v4534
    %v4693 = vunpack.c.h.b16 %v4534
    %v4694 = vunpack.c.l.b16 %v4535
    %v4695 = vunpack.c.h.b16 %v4535
    %v4696 = vunpack.c.l.b16 %v4536
    %v4697 = vunpack.c.h.b16 %v4536
    %v4698 = vunpack.c.l.b16 %v4537
    %v4699 = vunpack.c.h.b16 %v4537
    %v4700 = vunpack.c.l.b16 %v4538
    %v4701 = vunpack.c.h.b16 %v4538
    %v4702 = vunpack.c.l.b16 %v4539
    %v4703 = vunpack.c.h.b16 %v4539
    %v4704 = vunpack.c.l.b16 %v4540
    %v4705 = vunpack.c.h.b16 %v4540
    %v4706 = vunpack.c.l.b16 %v4541
    %v4707 = vunpack.c.h.b16 %v4541
    %v4708 = vunpack.c.l.b16 %v4542
    %v4709 = vunpack.c.h.b16 %v4542
    %v4710 = vunpack.c.l.b16 %v4543
    %v4711 = vunpack.c.h.b16 %v4543
    %v4712 = vunpack.c.l.b16 %v4544
    %v4713 = vunpack.c.h.b16 %v4544
    %v4714 = vunpack.c.l.b16 %v4545
    %v4715 = vunpack.c.h.b16 %v4545
    %v4716 = vunpack.c.l.b16 %v4546
    %v4717 = vunpack.c.h.b16 %v4546
    %v4718 = vunpack.c.l.b16 %v4547
    %v4719 = vunpack.c.h.b16 %v4547
    %v4720 = vunpack.c.l.b16 %v4548
    %v4721 = vunpack.c.h.b16 %v4548
    %v4722 = vunpack.c.l.b16 %v4549
    %v4723 = vunpack.c.h.b16 %v4549
    %v4724 = vunpack.c.l.b16 %v4550
    %v4725 = vunpack.c.h.b16 %v4550
    %v4726 = vunpack.c.l.b16 %v4551
    %v4727 = vunpack.c.h.b16 %v4551
    %v4728 = vunpack.c.l.b16 %v4552
    %v4729 = vunpack.c.h.b16 %v4552
    %v4730 = vunpack.c.l.b16 %v4553
    %v4731 = vunpack.c.h.b16 %v4553
    %v4732 = vunpack.c.l.b16 %v4554
    %v4733 = vunpack.c.h.b16 %v4554
    %v4734 = vunpack.c.l.b16 %v4555
    %v4735 = vunpack.c.h.b16 %v4555
    %v4736 = vunpack.c.l.b16 %v4556
    %v4737 = vunpack.c.h.b16 %v4556
    %v4738 = vunpack.c.l.b16 %v4557
    %v4739 = vunpack.c.h.b16 %v4557
    %v4740 = vunpack.c.l.b16 %v4558
    %v4741 = vunpack.c.h.b16 %v4558
    %v4742 = vunpack.c.l.b16 %v4559
    %v4743 = vunpack.c.h.b16 %v4559
    %v4744 = vunpack.c.l.b16 %v4560
    %v4745 = vunpack.c.h.b16 %v4560
    %v4746 = vunpack.c.l.b16 %v4561
    %v4747 = vunpack.c.h.b16 %v4561
    %v4748 = vunpack.c.l.b16 %v4562
    %v4749 = vunpack.c.h.b16 %v4562
    %v4750 = vunpack.c.l.b16 %v4563
    %v4751 = vunpack.c.h.b16 %v4563
    %v4752 = vunpack.c.l.b16 %v4564
    %v4753 = vunpack.c.h.b16 %v4564
    %v4754 = vunpack.c.l.b16 %v4565
    %v4755 = vunpack.c.h.b16 %v4565
    %v4756 = vunpack.c.l.b16 %v4566
    %v4757 = vunpack.c.h.b16 %v4566
    %v4758 = vunpack.c.l.b16 %v4567
    %v4759 = vunpack.c.h.b16 %v4567
    %v4760 = vunpack.c.l.b16 %v4568
    %v4761 = vunpack.c.h.b16 %v4568
    %v4762 = vunpack.c.l.b16 %v4569
    %v4763 = vunpack.c.h.b16 %v4569
    %v4764 = vunpack.c.l.b16 %v4570
    %v4765 = vunpack.c.h.b16 %v4570
    %v4766 = vunpack.c.l.b16 %v4571
    %v4767 = vunpack.c.h.b16 %v4571
    %v4768 = vunpack.c.l.b16 %v4572
    %v4769 = vunpack.c.h.b16 %v4572
    %v4770 = vunpack.c.l.b16 %v4573
    %v4771 = vunpack.c.h.b16 %v4573
    %v4772 = vunpack.c.l.b16 %v4574
    %v4773 = vunpack.c.h.b16 %v4574
    %v4774 = vunpack.c.l.b16 %v4575
    %v4775 = vunpack.c.h.b16 %v4575
    %v4776 = vunpack.c.l.b16 %v4576
    %v4777 = vunpack.c.h.b16 %v4576
    %v4778 = vunpack.c.l.b16 %v4577
    %v4779 = vunpack.c.h.b16 %v4577
    %v4780 = vunpack.c.l.b16 %v4578
    %v4781 = vunpack.c.h.b16 %v4578
    %v4782 = vunpack.c.l.b16 %v4579
    %v4783 = vunpack.c.h.b16 %v4579
    %v4784 = vunpack.c.l.b16 %v4580
    %v4785 = vunpack.c.h.b16 %v4580
    %v4786 = vunpack.c.l.b16 %v4581
    %v4787 = vunpack.c.h.b16 %v4581
    %v4788 = vunpack.c.l.b16 %v4582
    %v4789 = vunpack.c.h.b16 %v4582
    %v4790 = vunpack.c.l.b16 %v4583
    %v4791 = vunpack.c.h.b16 %v4583
    %v4792 = vunpack.c.l.b16 %v4584
    %v4793 = vunpack.c.h.b16 %v4584
    %v4794 = vunpack.c.l.b16 %v4585
    %v4795 = vunpack.c.h.b16 %v4585
    %v4796 = vunpack.c.l.b16 %v4586
    %v4797 = vunpack.c.h.b16 %v4586
    %v4798 = vunpack.c.l.b16 %v4587
    %v4799 = vunpack.c.h.b16 %v4587
    %v4800 = vunpack.c.l.b16 %v4588
    %v4801 = vunpack.c.h.b16 %v4588
    %v4802 = vunpack.c.l.b16 %v4589
    %v4803 = vunpack.c.h.b16 %v4589
    %v4804 = vpack.c.b16 %v4680, %v4676
    %v4805 = vpack.c.b16 %v4681, %v4677
    %v4806 = vpack.c.b16 %v4682, %v4678
    %v4807 = vpack.c.b16 %v4683, %v4679
    %v4808 = vpack.c.b16 %v4688, %v4684
    %v4809 = vpack.c.b16 %v4689, %v4685
    %v4810 = vpack.c.b16 %v4690, %v4686
    %v4811 = vpack.c.b16 %v4691, %v4687
    %v4812 = vpack.c.b16 %v4696, %v4692
    %v4813 = vpack.c.b16 %v4697, %v4693
    %v4814 = vpack.c.b16 %v4698, %v4694
    %v4815 = vpack.c.b16 %v4699, %v4695
    %v4816 = vpack.c.b16 %v4704, %v4700
    %v4817 = vpack.c.b16 %v4705, %v4701
    %v4818 = vpack.c.b16 %v4706, %v4702
    %v4819 = vpack.c.b16 %v4707, %v4703
    %v4820 = vpack.c.b16 %v4712, %v4708
    %v4821 = vpack.c.b16 %v4713, %v4709
    %v4822 = vpack.c.b16 %v4714, %v4710
    %v4823 = vpack.c.b16 %v4715, %v4711
    %v4824 = vpack.c.b16 %v4720, %v4716
    %v4825 = vpack.c.b16 %v4721, %v4717
    %v4826 = vpack.c.b16 %v4722, %v4718
    %v4827 = vpack.c.b16 %v4723, %v4719
    %v4828 = vpack.c.b16 %v4728, %v4724
    %v4829 = vpack.c.b16 %v4729, %v4725
    %v4830 = vpack.c.b16 %v4730, %v4726
    %v4831 = vpack.c.b16 %v4731, %v4727
    %v4832 = vpack.c.b16 %v4736, %v4732
    %v4833 = vpack.c.b16 %v4737, %v4733
    %v4834 = vpack.c.b16 %v4738, %v4734
    %v4835 = vpack.c.b16 %v4739, %v4735
    %v4836 = vpack.c.b16 %v4744, %v4740
    %v4837 = vpack.c.b16 %v4745, %v4741
    %v4838 = vpack.c.b16 %v4746, %v4742
    %v4839 = vpack.c.b16 %v4747, %v4743
    %v4840 = vpack.c.b16 %v4752, %v4748
    %v4841 = vpack.c.b16 %v4753, %v4749
    %v4842 = vpack.c.b16 %v4754, %v4750
    %v4843 = vpack.c.b16 %v4755, %v4751
    %v4844 = vpack.c.b16 %v4760, %v4756
    %v4845 = vpack.c.b16 %v4761, %v4757
    %v4846 = vpack.c.b16 %v4762, %v4758
    %v4847 = vpack.c.b16 %v4763, %v4759
    %v4848 = vpack.c.b16 %v4768, %v4764
    %v4849 = vpack.c.b16 %v4769, %v4765
    %v4850 = vpack.c.b16 %v4770, %v4766
    %v4851 = vpack.c.b16 %v4771, %v4767
    %v4852 = vpack.c.b16 %v4776, %v4772
    %v4853 = vpack.c.b16 %v4777, %v4773
    %v4854 = vpack.c.b16 %v4778, %v4774
    %v4855 = vpack.c.b16 %v4779, %v4775
    %v4856 = vpack.c.b16 %v4784, %v4780
    %v4857 = vpack.c.b16 %v4785, %v4781
    %v4858 = vpack.c.b16 %v4786, %v4782
    %v4859 = vpack.c.b16 %v4787, %v4783
    %v4860 = vpack.c.b16 %v4792, %v4788
    %v4861 = vpack.c.b16 %v4793, %v4789
    %v4862 = vpack.c.b16 %v4794, %v4790
    %v4863 = vpack.c.b16 %v4795, %v4791
    %v4864 = vpack.c.b16 %v4800, %v4796
    %v4865 = vpack.c.b16 %v4801, %v4797
    %v4866 = vpack.c.b16 %v4802, %v4798
    %v4867 = vpack.c.b16 %v4803, %v4799
    %4932 = vmatprep.subr.bf16.mxu0 %v4833
    %4933 = vmatpush1.bf16.msra.mxu0 %v4832
    %4934 = vmatprep.subr.bf16.mxu0 %v4829
    %4935 = vmatpush1.bf16.msra.mxu0 %v4828
    %4936 = vmatprep.subr.bf16.mxu0 %v4825
    %4937 = vmatpush1.bf16.msra.mxu0 %v4824
    %4938 = vmatprep.subr.bf16.mxu0 %v4821
    %4939 = vmatpush1.bf16.msra.mxu0 %v4820
    %4940 = vmatprep.subr.bf16.mxu0 %v4817
    %4941 = vmatpush1.bf16.msra.mxu0 %v4816
    %4942 = vmatprep.subr.bf16.mxu0 %v4813
    %4943 = vmatpush1.bf16.msra.mxu0 %v4812
    %4944 = vmatprep.subr.bf16.mxu0 %v4809
    %4945 = vmatpush1.bf16.msra.mxu0 %v4808
    %4946 = vmatprep.subr.bf16.mxu0 %v4805
    %4947 = vmatpush1.bf16.msra.mxu0 %v4804
    %4948 = vmatprep.subr.bf16.mxu0 %v4865
    %4949 = vmatpush2.bf16.msra.mxu0 %v4864
    %4950 = vmatprep.subr.bf16.mxu0 %v4861
    %4951 = vmatpush2.bf16.msra.mxu0 %v4860
    %4952 = vmatprep.subr.bf16.mxu0 %v4857
    %4953 = vmatpush2.bf16.msra.mxu0 %v4856
    %4954 = vmatprep.subr.bf16.mxu0 %v4853
    %4955 = vmatpush2.bf16.msra.mxu0 %v4852
    %4956 = vmatprep.subr.bf16.mxu0 %v4849
    %4957 = vmatpush2.bf16.msra.mxu0 %v4848
    %4958 = vmatprep.subr.bf16.mxu0 %v4845
    %4959 = vmatpush2.bf16.msra.mxu0 %v4844
    %4960 = vmatprep.subr.bf16.mxu0 %v4841
    %4961 = vmatpush2.bf16.msra.mxu0 %v4840
    %4962 = vmatprep.subr.bf16.mxu0 %v4837
    %4963 = vmatpush2.bf16.msra.mxu0 %v4836
    %4964 = vmatprep.mubr.bf16.mxu0 %v735
    %4965 = vmatmul.mubr.bf16.gmra.mxu0 %v734
    %v4966 = vpop.f32.mrf.mxu0
    %v4967 = vadd.f32 %v4595, %v4966
    %v4968 = vpop.f32.mrf.mxu0
    %v4969 = vadd.f32 %v4599, %v4968
    %v4970 = vpop.f32.mrf.mxu0
    %v4971 = vpop.f32.mrf.mxu0
    %4972 = vdwg.mxu0
    %4973 = vmatprep.subr.bf16.mxu0 %v4835
    %4974 = vmatpush1.bf16.msra.mxu0 %v4834
    %4975 = vmatprep.subr.bf16.mxu0 %v4831
    %4976 = vmatpush1.bf16.msra.mxu0 %v4830
    %4977 = vmatprep.subr.bf16.mxu0 %v4827
    %4978 = vmatpush1.bf16.msra.mxu0 %v4826
    %4979 = vmatprep.subr.bf16.mxu0 %v4823
    %4980 = vmatpush1.bf16.msra.mxu0 %v4822
    %4981 = vmatprep.subr.bf16.mxu0 %v4819
    %4982 = vmatpush1.bf16.msra.mxu0 %v4818
    %4983 = vmatprep.subr.bf16.mxu0 %v4815
    %4984 = vmatpush1.bf16.msra.mxu0 %v4814
    %4985 = vmatprep.subr.bf16.mxu0 %v4811
    %4986 = vmatpush1.bf16.msra.mxu0 %v4810
    %4987 = vmatprep.subr.bf16.mxu0 %v4807
    %4988 = vmatpush1.bf16.msra.mxu0 %v4806
    %4989 = vmatprep.subr.bf16.mxu0 %v4867
    %4990 = vmatpush2.bf16.msra.mxu0 %v4866
    %4991 = vmatprep.subr.bf16.mxu0 %v4863
    %4992 = vmatpush2.bf16.msra.mxu0 %v4862
    %4993 = vmatprep.subr.bf16.mxu0 %v4859
    %4994 = vmatpush2.bf16.msra.mxu0 %v4858
    %4995 = vmatprep.subr.bf16.mxu0 %v4855
    %4996 = vmatpush2.bf16.msra.mxu0 %v4854
    %4997 = vmatprep.subr.bf16.mxu0 %v4851
    %4998 = vmatpush2.bf16.msra.mxu0 %v4850
    %4999 = vmatprep.subr.bf16.mxu0 %v4847
    %5000 = vmatpush2.bf16.msra.mxu0 %v4846
    %5001 = vmatprep.subr.bf16.mxu0 %v4843
    %5002 = vmatpush2.bf16.msra.mxu0 %v4842
    %5003 = vmatprep.subr.bf16.mxu0 %v4839
    %5004 = vmatpush2.bf16.msra.mxu0 %v4838
    %5005 = vmatprep.mubr.bf16.mxu0 %v735
    %5006 = vmatmul.mubr.bf16.gmra.mxu0 %v734
    %v5007 = vpop.f32.mrf.mxu0
    %v5008 = vadd.f32 %v4603, %v5007
    %v5009 = vpop.f32.mrf.mxu0
    %v5010 = vadd.f32 %v4607, %v5009
    %v5011 = vpop.f32.mrf.mxu0
    %v5012 = vpop.f32.mrf.mxu0
    %5013 = vdwg.mxu0
    %vm5014 = vcmp.gt.f32.partialorder %v4967, 0.0
    %vm5015 = vcmp.gt.f32.partialorder %v4969, 0.0
    %vm5016 = vcmp.gt.f32.partialorder %v5008, 0.0
    %vm5017 = vcmp.gt.f32.partialorder %v5010, 0.0
    %v5018 = vmul.f32 %v4967, 0.2
    %v5019 = vmul.f32 %v4969, 0.2
    %v5020 = vmul.f32 %v5008, 0.2
    %v5021 = vmul.f32 %v5010, 0.2
    %v5022 = vsel %vm5014, %v4967, %v5018
    %v5023 = vsel %vm5015, %v4969, %v5019
    %v5024 = vsel %vm5016, %v5008, %v5020
    %v5025 = vsel %vm5017, %v5010, %v5021
    %v5026 = vpack.c.bf16 %v5022, %v5022
    %v5027 = vpack.c.bf16 %v5023, %v5023
    %v5028 = vld [vmem:[#allocation33] sm:$0xff]
    %v5029 = vld [vmem:[#allocation33 + $0x8] sm:$0xff]
    %v5030 = vld [vmem:[#allocation33 + $0x10] sm:$0xff]
    %v5031 = vld [vmem:[#allocation33 + $0x18] sm:$0xff]
    %v5032 = vld [vmem:[#allocation33 + $0x20] sm:$0xff]
    %v5033 = vld [vmem:[#allocation33 + $0x28] sm:$0xff]
    %v5034 = vld [vmem:[#allocation33 + $0x30] sm:$0xff]
    %v5035 = vld [vmem:[#allocation33 + $0x38] sm:$0xff]
    %v5036 = vld [vmem:[#allocation33 + $0x40] sm:$0xff]
    %v5037 = vld [vmem:[#allocation33 + $0x48] sm:$0xff]
    %v5038 = vld [vmem:[#allocation33 + $0x50] sm:$0xff]
    %v5039 = vld [vmem:[#allocation33 + $0x58] sm:$0xff]
    %v5040 = vld [vmem:[#allocation33 + $0x60] sm:$0xff]
    %v5041 = vld [vmem:[#allocation33 + $0x68] sm:$0xff]
    %v5042 = vld [vmem:[#allocation33 + $0x70] sm:$0xff]
    %v5043 = vld [vmem:[#allocation33 + $0x78] sm:$0xff]
    %v5044 = vld [vmem:[#allocation33 + $0x80] sm:$0xff]
    %v5045 = vld [vmem:[#allocation33 + $0x88] sm:$0xff]
    %v5046 = vld [vmem:[#allocation33 + $0x90] sm:$0xff]
    %v5047 = vld [vmem:[#allocation33 + $0x98] sm:$0xff]
    %v5048 = vld [vmem:[#allocation33 + $0xa0] sm:$0xff]
    %v5049 = vld [vmem:[#allocation33 + $0xa8] sm:$0xff]
    %v5050 = vld [vmem:[#allocation33 + $0xb0] sm:$0xff]
    %v5051 = vld [vmem:[#allocation33 + $0xb8] sm:$0xff]
    %v5052 = vld [vmem:[#allocation33 + $0xc0] sm:$0xff]
    %v5053 = vld [vmem:[#allocation33 + $0xc8] sm:$0xff]
    %v5054 = vld [vmem:[#allocation33 + $0xd0] sm:$0xff]
    %v5055 = vld [vmem:[#allocation33 + $0xd8] sm:$0xff]
    %v5056 = vld [vmem:[#allocation33 + $0xe0] sm:$0xff]
    %v5057 = vld [vmem:[#allocation33 + $0xe8] sm:$0xff]
    %v5058 = vld [vmem:[#allocation33 + $0xf0] sm:$0xff]
    %v5059 = vld [vmem:[#allocation33 + $0xf8] sm:$0xff]
    %v5060 = vld [vmem:[#allocation34] sm:$0x3]
    %v5062 = vlaneseq
    %v5063 = vshrl.u32 %v5062, 7
    %v5064 = vsub.s32 0, %v5063
    %v5065 = vrot.slane %v5060, %v5064
    %v5066 = vlaneseq
    %v5067 = vshrl.u32 %v5066, 7
    %v5068 = vsub.s32 1, %v5067
    %v5069 = vrot.slane %v5060, %v5068
    %v5104 = vunpack.c.l.b16 %v5028
    %v5105 = vunpack.c.h.b16 %v5028
    %v5106 = vunpack.c.l.b16 %v5029
    %v5107 = vunpack.c.h.b16 %v5029
    %v5108 = vunpack.c.l.b16 %v5030
    %v5109 = vunpack.c.h.b16 %v5030
    %v5110 = vunpack.c.l.b16 %v5031
    %v5111 = vunpack.c.h.b16 %v5031
    %v5112 = vunpack.c.l.b16 %v5032
    %v5113 = vunpack.c.h.b16 %v5032
    %v5114 = vunpack.c.l.b16 %v5033
    %v5115 = vunpack.c.h.b16 %v5033
    %v5116 = vunpack.c.l.b16 %v5034
    %v5117 = vunpack.c.h.b16 %v5034
    %v5118 = vunpack.c.l.b16 %v5035
    %v5119 = vunpack.c.h.b16 %v5035
    %v5120 = vunpack.c.l.b16 %v5036
    %v5121 = vunpack.c.h.b16 %v5036
    %v5122 = vunpack.c.l.b16 %v5037
    %v5123 = vunpack.c.h.b16 %v5037
    %v5124 = vunpack.c.l.b16 %v5038
    %v5125 = vunpack.c.h.b16 %v5038
    %v5126 = vunpack.c.l.b16 %v5039
    %v5127 = vunpack.c.h.b16 %v5039
    %v5128 = vunpack.c.l.b16 %v5040
    %v5129 = vunpack.c.h.b16 %v5040
    %v5130 = vunpack.c.l.b16 %v5041
    %v5131 = vunpack.c.h.b16 %v5041
    %v5132 = vunpack.c.l.b16 %v5042
    %v5133 = vunpack.c.h.b16 %v5042
    %v5134 = vunpack.c.l.b16 %v5043
    %v5135 = vunpack.c.h.b16 %v5043
    %v5136 = vunpack.c.l.b16 %v5044
    %v5137 = vunpack.c.h.b16 %v5044
    %v5138 = vunpack.c.l.b16 %v5045
    %v5139 = vunpack.c.h.b16 %v5045
    %v5140 = vunpack.c.l.b16 %v5046
    %v5141 = vunpack.c.h.b16 %v5046
    %v5142 = vunpack.c.l.b16 %v5047
    %v5143 = vunpack.c.h.b16 %v5047
    %v5144 = vunpack.c.l.b16 %v5048
    %v5145 = vunpack.c.h.b16 %v5048
    %v5146 = vunpack.c.l.b16 %v5049
    %v5147 = vunpack.c.h.b16 %v5049
    %v5148 = vunpack.c.l.b16 %v5050
    %v5149 = vunpack.c.h.b16 %v5050
    %v5150 = vunpack.c.l.b16 %v5051
    %v5151 = vunpack.c.h.b16 %v5051
    %v5152 = vunpack.c.l.b16 %v5052
    %v5153 = vunpack.c.h.b16 %v5052
    %v5154 = vunpack.c.l.b16 %v5053
    %v5155 = vunpack.c.h.b16 %v5053
    %v5156 = vunpack.c.l.b16 %v5054
    %v5157 = vunpack.c.h.b16 %v5054
    %v5158 = vunpack.c.l.b16 %v5055
    %v5159 = vunpack.c.h.b16 %v5055
    %v5160 = vunpack.c.l.b16 %v5056
    %v5161 = vunpack.c.h.b16 %v5056
    %v5162 = vunpack.c.l.b16 %v5057
    %v5163 = vunpack.c.h.b16 %v5057
    %v5164 = vunpack.c.l.b16 %v5058
    %v5165 = vunpack.c.h.b16 %v5058
    %v5166 = vunpack.c.l.b16 %v5059
    %v5167 = vunpack.c.h.b16 %v5059
    %v5168 = vpack.c.b16 %v5106, %v5104
    %v5169 = vpack.c.b16 %v5107, %v5105
    %v5170 = vpack.c.b16 %v5110, %v5108
    %v5171 = vpack.c.b16 %v5111, %v5109
    %v5172 = vpack.c.b16 %v5114, %v5112
    %v5173 = vpack.c.b16 %v5115, %v5113
    %v5174 = vpack.c.b16 %v5118, %v5116
    %v5175 = vpack.c.b16 %v5119, %v5117
    %v5176 = vpack.c.b16 %v5122, %v5120
    %v5177 = vpack.c.b16 %v5123, %v5121
    %v5178 = vpack.c.b16 %v5126, %v5124
    %v5179 = vpack.c.b16 %v5127, %v5125
    %v5180 = vpack.c.b16 %v5130, %v5128
    %v5181 = vpack.c.b16 %v5131, %v5129
    %v5182 = vpack.c.b16 %v5134, %v5132
    %v5183 = vpack.c.b16 %v5135, %v5133
    %v5184 = vpack.c.b16 %v5138, %v5136
    %v5185 = vpack.c.b16 %v5139, %v5137
    %v5186 = vpack.c.b16 %v5142, %v5140
    %v5187 = vpack.c.b16 %v5143, %v5141
    %v5188 = vpack.c.b16 %v5146, %v5144
    %v5189 = vpack.c.b16 %v5147, %v5145
    %v5190 = vpack.c.b16 %v5150, %v5148
    %v5191 = vpack.c.b16 %v5151, %v5149
    %v5192 = vpack.c.b16 %v5154, %v5152
    %v5193 = vpack.c.b16 %v5155, %v5153
    %v5194 = vpack.c.b16 %v5158, %v5156
    %v5195 = vpack.c.b16 %v5159, %v5157
    %v5196 = vpack.c.b16 %v5162, %v5160
    %v5197 = vpack.c.b16 %v5163, %v5161
    %v5198 = vpack.c.b16 %v5166, %v5164
    %v5199 = vpack.c.b16 %v5167, %v5165
    %5232 = vmatprep.subr.bf16.mxu0 %v5183
    %5233 = vmatpush1.bf16.msra.mxu0 %v5182
    %5234 = vmatprep.subr.bf16.mxu0 %v5181
    %5235 = vmatpush1.bf16.msra.mxu0 %v5180
    %5236 = vmatprep.subr.bf16.mxu0 %v5179
    %5237 = vmatpush1.bf16.msra.mxu0 %v5178
    %5238 = vmatprep.subr.bf16.mxu0 %v5177
    %5239 = vmatpush1.bf16.msra.mxu0 %v5176
    %5240 = vmatprep.subr.bf16.mxu0 %v5175
    %5241 = vmatpush1.bf16.msra.mxu0 %v5174
    %5242 = vmatprep.subr.bf16.mxu0 %v5173
    %5243 = vmatpush1.bf16.msra.mxu0 %v5172
    %5244 = vmatprep.subr.bf16.mxu0 %v5171
    %5245 = vmatpush1.bf16.msra.mxu0 %v5170
    %5246 = vmatprep.subr.bf16.mxu0 %v5169
    %5247 = vmatpush1.bf16.msra.mxu0 %v5168
    %5248 = vmatprep.subr.bf16.mxu0 %v5199
    %5249 = vmatpush2.bf16.msra.mxu0 %v5198
    %5250 = vmatprep.subr.bf16.mxu0 %v5197
    %5251 = vmatpush2.bf16.msra.mxu0 %v5196
    %5252 = vmatprep.subr.bf16.mxu0 %v5195
    %5253 = vmatpush2.bf16.msra.mxu0 %v5194
    %5254 = vmatprep.subr.bf16.mxu0 %v5193
    %5255 = vmatpush2.bf16.msra.mxu0 %v5192
    %5256 = vmatprep.subr.bf16.mxu0 %v5191
    %5257 = vmatpush2.bf16.msra.mxu0 %v5190
    %5258 = vmatprep.subr.bf16.mxu0 %v5189
    %5259 = vmatpush2.bf16.msra.mxu0 %v5188
    %5260 = vmatprep.subr.bf16.mxu0 %v5187
    %5261 = vmatpush2.bf16.msra.mxu0 %v5186
    %5262 = vmatprep.subr.bf16.mxu0 %v5185
    %5263 = vmatpush2.bf16.msra.mxu0 %v5184
    %5264 = vmatprep.mubr.bf16.mxu0 %v5027
    %5265 = vmatmul.mubr.bf16.gmra.mxu0 %v5026
    %v5266 = vpop.f32.mrf.mxu0
    %v5267 = vadd.f32 %v5065, %v5266
    %v5268 = vpop.f32.mrf.mxu0
    %v5269 = vadd.f32 %v5069, %v5268
    %v5270 = vpop.f32.mrf.mxu0
    %v5271 = vpop.f32.mrf.mxu0
    %5272 = vdwg.mxu0
    %vm5273 = vcmp.gt.f32.partialorder %v5267, 0.0
    %vm5274 = vcmp.gt.f32.partialorder %v5269, 0.0
    %v5275 = vmul.f32 %v5267, 0.2
    %v5276 = vmul.f32 %v5269, 0.2
    %v5277 = vsel %vm5273, %v5267, %v5275
    %v5278 = vsel %vm5274, %v5269, %v5276
    %v5279 = vpack.c.bf16 %v5277, %v5277
    %v5280 = vpack.c.bf16 %v5278, %v5278
    %v5281 = vld [vmem:[#allocation36] sm:$0xff]
    %v5282 = vld [vmem:[#allocation36 + $0x8] sm:$0xff]
    %v5283 = vld [vmem:[#allocation36 + $0x10] sm:$0xff]
    %v5284 = vld [vmem:[#allocation36 + $0x18] sm:$0xff]
    %v5285 = vld [vmem:[#allocation36 + $0x20] sm:$0xff]
    %v5286 = vld [vmem:[#allocation36 + $0x28] sm:$0xff]
    %v5287 = vld [vmem:[#allocation36 + $0x30] sm:$0xff]
    %v5288 = vld [vmem:[#allocation36 + $0x38] sm:$0xff]
    %v5289 = vld [vmem:[#allocation36 + $0x40] sm:$0xff]
    %v5290 = vld [vmem:[#allocation36 + $0x48] sm:$0xff]
    %v5291 = vld [vmem:[#allocation36 + $0x50] sm:$0xff]
    %v5292 = vld [vmem:[#allocation36 + $0x58] sm:$0xff]
    %v5293 = vld [vmem:[#allocation36 + $0x60] sm:$0xff]
    %v5294 = vld [vmem:[#allocation36 + $0x68] sm:$0xff]
    %v5295 = vld [vmem:[#allocation36 + $0x70] sm:$0xff]
    %v5296 = vld [vmem:[#allocation36 + $0x78] sm:$0xff]
    %v5297 = vld [vmem:[#allocation36 + $0x80] sm:$0xff]
    %v5298 = vld [vmem:[#allocation36 + $0x88] sm:$0xff]
    %v5299 = vld [vmem:[#allocation36 + $0x90] sm:$0xff]
    %v5300 = vld [vmem:[#allocation36 + $0x98] sm:$0xff]
    %v5301 = vld [vmem:[#allocation36 + $0xa0] sm:$0xff]
    %v5302 = vld [vmem:[#allocation36 + $0xa8] sm:$0xff]
    %v5303 = vld [vmem:[#allocation36 + $0xb0] sm:$0xff]
    %v5304 = vld [vmem:[#allocation36 + $0xb8] sm:$0xff]
    %v5305 = vld [vmem:[#allocation36 + $0xc0] sm:$0xff]
    %v5306 = vld [vmem:[#allocation36 + $0xc8] sm:$0xff]
    %v5307 = vld [vmem:[#allocation36 + $0xd0] sm:$0xff]
    %v5308 = vld [vmem:[#allocation36 + $0xd8] sm:$0xff]
    %v5309 = vld [vmem:[#allocation36 + $0xe0] sm:$0xff]
    %v5310 = vld [vmem:[#allocation36 + $0xe8] sm:$0xff]
    %v5311 = vld [vmem:[#allocation36 + $0xf0] sm:$0xff]
    %v5312 = vld [vmem:[#allocation36 + $0xf8] sm:$0xff]
    %v5313 = vld [vmem:[#allocation37] sm:$0x3]
    %v5315 = vlaneseq
    %v5316 = vshrl.u32 %v5315, 7
    %v5317 = vsub.s32 0, %v5316
    %v5318 = vrot.slane %v5313, %v5317
    %v5319 = vlaneseq
    %v5320 = vshrl.u32 %v5319, 7
    %v5321 = vsub.s32 1, %v5320
    %v5322 = vrot.slane %v5313, %v5321
    %v5357 = vunpack.c.l.b16 %v5281
    %v5358 = vunpack.c.h.b16 %v5281
    %v5359 = vunpack.c.l.b16 %v5282
    %v5360 = vunpack.c.h.b16 %v5282
    %v5361 = vunpack.c.l.b16 %v5283
    %v5362 = vunpack.c.h.b16 %v5283
    %v5363 = vunpack.c.l.b16 %v5284
    %v5364 = vunpack.c.h.b16 %v5284
    %v5365 = vunpack.c.l.b16 %v5285
    %v5366 = vunpack.c.h.b16 %v5285
    %v5367 = vunpack.c.l.b16 %v5286
    %v5368 = vunpack.c.h.b16 %v5286
    %v5369 = vunpack.c.l.b16 %v5287
    %v5370 = vunpack.c.h.b16 %v5287
    %v5371 = vunpack.c.l.b16 %v5288
    %v5372 = vunpack.c.h.b16 %v5288
    %v5373 = vunpack.c.l.b16 %v5289
    %v5374 = vunpack.c.h.b16 %v5289
    %v5375 = vunpack.c.l.b16 %v5290
    %v5376 = vunpack.c.h.b16 %v5290
    %v5377 = vunpack.c.l.b16 %v5291
    %v5378 = vunpack.c.h.b16 %v5291
    %v5379 = vunpack.c.l.b16 %v5292
    %v5380 = vunpack.c.h.b16 %v5292
    %v5381 = vunpack.c.l.b16 %v5293
    %v5382 = vunpack.c.h.b16 %v5293
    %v5383 = vunpack.c.l.b16 %v5294
    %v5384 = vunpack.c.h.b16 %v5294
    %v5385 = vunpack.c.l.b16 %v5295
    %v5386 = vunpack.c.h.b16 %v5295
    %v5387 = vunpack.c.l.b16 %v5296
    %v5388 = vunpack.c.h.b16 %v5296
    %v5389 = vunpack.c.l.b16 %v5297
    %v5390 = vunpack.c.h.b16 %v5297
    %v5391 = vunpack.c.l.b16 %v5298
    %v5392 = vunpack.c.h.b16 %v5298
    %v5393 = vunpack.c.l.b16 %v5299
    %v5394 = vunpack.c.h.b16 %v5299
    %v5395 = vunpack.c.l.b16 %v5300
    %v5396 = vunpack.c.h.b16 %v5300
    %v5397 = vunpack.c.l.b16 %v5301
    %v5398 = vunpack.c.h.b16 %v5301
    %v5399 = vunpack.c.l.b16 %v5302
    %v5400 = vunpack.c.h.b16 %v5302
    %v5401 = vunpack.c.l.b16 %v5303
    %v5402 = vunpack.c.h.b16 %v5303
    %v5403 = vunpack.c.l.b16 %v5304
    %v5404 = vunpack.c.h.b16 %v5304
    %v5405 = vunpack.c.l.b16 %v5305
    %v5406 = vunpack.c.h.b16 %v5305
    %v5407 = vunpack.c.l.b16 %v5306
    %v5408 = vunpack.c.h.b16 %v5306
    %v5409 = vunpack.c.l.b16 %v5307
    %v5410 = vunpack.c.h.b16 %v5307
    %v5411 = vunpack.c.l.b16 %v5308
    %v5412 = vunpack.c.h.b16 %v5308
    %v5413 = vunpack.c.l.b16 %v5309
    %v5414 = vunpack.c.h.b16 %v5309
    %v5415 = vunpack.c.l.b16 %v5310
    %v5416 = vunpack.c.h.b16 %v5310
    %v5417 = vunpack.c.l.b16 %v5311
    %v5418 = vunpack.c.h.b16 %v5311
    %v5419 = vunpack.c.l.b16 %v5312
    %v5420 = vunpack.c.h.b16 %v5312
    %v5421 = vpack.c.b16 %v5359, %v5357
    %v5422 = vpack.c.b16 %v5360, %v5358
    %v5423 = vpack.c.b16 %v5363, %v5361
    %v5424 = vpack.c.b16 %v5364, %v5362
    %v5425 = vpack.c.b16 %v5367, %v5365
    %v5426 = vpack.c.b16 %v5368, %v5366
    %v5427 = vpack.c.b16 %v5371, %v5369
    %v5428 = vpack.c.b16 %v5372, %v5370
    %v5429 = vpack.c.b16 %v5375, %v5373
    %v5430 = vpack.c.b16 %v5376, %v5374
    %v5431 = vpack.c.b16 %v5379, %v5377
    %v5432 = vpack.c.b16 %v5380, %v5378
    %v5433 = vpack.c.b16 %v5383, %v5381
    %v5434 = vpack.c.b16 %v5384, %v5382
    %v5435 = vpack.c.b16 %v5387, %v5385
    %v5436 = vpack.c.b16 %v5388, %v5386
    %v5437 = vpack.c.b16 %v5391, %v5389
    %v5438 = vpack.c.b16 %v5392, %v5390
    %v5439 = vpack.c.b16 %v5395, %v5393
    %v5440 = vpack.c.b16 %v5396, %v5394
    %v5441 = vpack.c.b16 %v5399, %v5397
    %v5442 = vpack.c.b16 %v5400, %v5398
    %v5443 = vpack.c.b16 %v5403, %v5401
    %v5444 = vpack.c.b16 %v5404, %v5402
    %v5445 = vpack.c.b16 %v5407, %v5405
    %v5446 = vpack.c.b16 %v5408, %v5406
    %v5447 = vpack.c.b16 %v5411, %v5409
    %v5448 = vpack.c.b16 %v5412, %v5410
    %v5449 = vpack.c.b16 %v5415, %v5413
    %v5450 = vpack.c.b16 %v5416, %v5414
    %v5451 = vpack.c.b16 %v5419, %v5417
    %v5452 = vpack.c.b16 %v5420, %v5418
    %5485 = vmatprep.subr.bf16.mxu0 %v5436
    %5486 = vmatpush1.bf16.msra.mxu0 %v5435
    %5487 = vmatprep.subr.bf16.mxu0 %v5434
    %5488 = vmatpush1.bf16.msra.mxu0 %v5433
    %5489 = vmatprep.subr.bf16.mxu0 %v5432
    %5490 = vmatpush1.bf16.msra.mxu0 %v5431
    %5491 = vmatprep.subr.bf16.mxu0 %v5430
    %5492 = vmatpush1.bf16.msra.mxu0 %v5429
    %5493 = vmatprep.subr.bf16.mxu0 %v5428
    %5494 = vmatpush1.bf16.msra.mxu0 %v5427
    %5495 = vmatprep.subr.bf16.mxu0 %v5426
    %5496 = vmatpush1.bf16.msra.mxu0 %v5425
    %5497 = vmatprep.subr.bf16.mxu0 %v5424
    %5498 = vmatpush1.bf16.msra.mxu0 %v5423
    %5499 = vmatprep.subr.bf16.mxu0 %v5422
    %5500 = vmatpush1.bf16.msra.mxu0 %v5421
    %5501 = vmatprep.subr.bf16.mxu0 %v5452
    %5502 = vmatpush2.bf16.msra.mxu0 %v5451
    %5503 = vmatprep.subr.bf16.mxu0 %v5450
    %5504 = vmatpush2.bf16.msra.mxu0 %v5449
    %5505 = vmatprep.subr.bf16.mxu0 %v5448
    %5506 = vmatpush2.bf16.msra.mxu0 %v5447
    %5507 = vmatprep.subr.bf16.mxu0 %v5446
    %5508 = vmatpush2.bf16.msra.mxu0 %v5445
    %5509 = vmatprep.subr.bf16.mxu0 %v5444
    %5510 = vmatpush2.bf16.msra.mxu0 %v5443
    %5511 = vmatprep.subr.bf16.mxu0 %v5442
    %5512 = vmatpush2.bf16.msra.mxu0 %v5441
    %5513 = vmatprep.subr.bf16.mxu0 %v5440
    %5514 = vmatpush2.bf16.msra.mxu0 %v5439
    %5515 = vmatprep.subr.bf16.mxu0 %v5438
    %5516 = vmatpush2.bf16.msra.mxu0 %v5437
    %5517 = vmatprep.mubr.bf16.mxu0 %v5280
    %5518 = vmatmul.mubr.bf16.gmra.mxu0 %v5279
    %v5519 = vpop.f32.mrf.mxu0
    %v5520 = vadd.f32 %v5318, %v5519
    %v5521 = vpop.f32.mrf.mxu0
    %v5522 = vadd.f32 %v5322, %v5521
    %v5523 = vpop.f32.mrf.mxu0
    %v5524 = vpop.f32.mrf.mxu0
    %5525 = vdwg.mxu0
    %vm5526 = vcmp.gt.f32.partialorder %v5520, 0.0
    %vm5527 = vcmp.gt.f32.partialorder %v5522, 0.0
    %v5528 = vmul.f32 %v5520, 0.2
    %v5529 = vmul.f32 %v5522, 0.2
    %v5530 = vsel %vm5526, %v5520, %v5528
    %v5531 = vsel %vm5527, %v5522, %v5529
    %v5532 = vpack.c.bf16 %v5530, %v5530
    %v5533 = vpack.c.bf16 %v5531, %v5531
    %v5534 = vld [vmem:[#allocation39] sm:$0xff]
    %v5535 = vld [vmem:[#allocation39 + $0x8] sm:$0xff]
    %v5536 = vld [vmem:[#allocation39 + $0x10] sm:$0xff]
    %v5537 = vld [vmem:[#allocation39 + $0x18] sm:$0xff]
    %v5538 = vld [vmem:[#allocation39 + $0x20] sm:$0xff]
    %v5539 = vld [vmem:[#allocation39 + $0x28] sm:$0xff]
    %v5540 = vld [vmem:[#allocation39 + $0x30] sm:$0xff]
    %v5541 = vld [vmem:[#allocation39 + $0x38] sm:$0xff]
    %v5542 = vld [vmem:[#allocation39 + $0x40] sm:$0xff]
    %v5543 = vld [vmem:[#allocation39 + $0x48] sm:$0xff]
    %v5544 = vld [vmem:[#allocation39 + $0x50] sm:$0xff]
    %v5545 = vld [vmem:[#allocation39 + $0x58] sm:$0xff]
    %v5546 = vld [vmem:[#allocation39 + $0x60] sm:$0xff]
    %v5547 = vld [vmem:[#allocation39 + $0x68] sm:$0xff]
    %v5548 = vld [vmem:[#allocation39 + $0x70] sm:$0xff]
    %v5549 = vld [vmem:[#allocation39 + $0x78] sm:$0xff]
    %v5550 = vld [vmem:[#allocation39 + $0x80] sm:$0xff]
    %v5551 = vld [vmem:[#allocation39 + $0x88] sm:$0xff]
    %v5552 = vld [vmem:[#allocation39 + $0x90] sm:$0xff]
    %v5553 = vld [vmem:[#allocation39 + $0x98] sm:$0xff]
    %v5554 = vld [vmem:[#allocation39 + $0xa0] sm:$0xff]
    %v5555 = vld [vmem:[#allocation39 + $0xa8] sm:$0xff]
    %v5556 = vld [vmem:[#allocation39 + $0xb0] sm:$0xff]
    %v5557 = vld [vmem:[#allocation39 + $0xb8] sm:$0xff]
    %v5558 = vld [vmem:[#allocation39 + $0xc0] sm:$0xff]
    %v5559 = vld [vmem:[#allocation39 + $0xc8] sm:$0xff]
    %v5560 = vld [vmem:[#allocation39 + $0xd0] sm:$0xff]
    %v5561 = vld [vmem:[#allocation39 + $0xd8] sm:$0xff]
    %v5562 = vld [vmem:[#allocation39 + $0xe0] sm:$0xff]
    %v5563 = vld [vmem:[#allocation39 + $0xe8] sm:$0xff]
    %v5564 = vld [vmem:[#allocation39 + $0xf0] sm:$0xff]
    %v5565 = vld [vmem:[#allocation39 + $0xf8] sm:$0xff]
    %v5566 = vld [vmem:[#allocation39 + $0x100] sm:$0xff]
    %v5567 = vld [vmem:[#allocation39 + $0x108] sm:$0xff]
    %v5568 = vld [vmem:[#allocation39 + $0x110] sm:$0xff]
    %v5569 = vld [vmem:[#allocation39 + $0x118] sm:$0xff]
    %v5570 = vld [vmem:[#allocation39 + $0x120] sm:$0xff]
    %v5571 = vld [vmem:[#allocation39 + $0x128] sm:$0xff]
    %v5572 = vld [vmem:[#allocation39 + $0x130] sm:$0xff]
    %v5573 = vld [vmem:[#allocation39 + $0x138] sm:$0xff]
    %v5574 = vld [vmem:[#allocation39 + $0x140] sm:$0xff]
    %v5575 = vld [vmem:[#allocation39 + $0x148] sm:$0xff]
    %v5576 = vld [vmem:[#allocation39 + $0x150] sm:$0xff]
    %v5577 = vld [vmem:[#allocation39 + $0x158] sm:$0xff]
    %v5578 = vld [vmem:[#allocation39 + $0x160] sm:$0xff]
    %v5579 = vld [vmem:[#allocation39 + $0x168] sm:$0xff]
    %v5580 = vld [vmem:[#allocation39 + $0x170] sm:$0xff]
    %v5581 = vld [vmem:[#allocation39 + $0x178] sm:$0xff]
    %v5582 = vld [vmem:[#allocation39 + $0x180] sm:$0xff]
    %v5583 = vld [vmem:[#allocation39 + $0x188] sm:$0xff]
    %v5584 = vld [vmem:[#allocation39 + $0x190] sm:$0xff]
    %v5585 = vld [vmem:[#allocation39 + $0x198] sm:$0xff]
    %v5586 = vld [vmem:[#allocation39 + $0x1a0] sm:$0xff]
    %v5587 = vld [vmem:[#allocation39 + $0x1a8] sm:$0xff]
    %v5588 = vld [vmem:[#allocation39 + $0x1b0] sm:$0xff]
    %v5589 = vld [vmem:[#allocation39 + $0x1b8] sm:$0xff]
    %v5590 = vld [vmem:[#allocation39 + $0x1c0] sm:$0xff]
    %v5591 = vld [vmem:[#allocation39 + $0x1c8] sm:$0xff]
    %v5592 = vld [vmem:[#allocation39 + $0x1d0] sm:$0xff]
    %v5593 = vld [vmem:[#allocation39 + $0x1d8] sm:$0xff]
    %v5594 = vld [vmem:[#allocation39 + $0x1e0] sm:$0xff]
    %v5595 = vld [vmem:[#allocation39 + $0x1e8] sm:$0xff]
    %v5596 = vld [vmem:[#allocation39 + $0x1f0] sm:$0xff]
    %v5597 = vld [vmem:[#allocation39 + $0x1f8] sm:$0xff]
    %v5598 = vld [vmem:[%s83] sm:$0xf]
    %v5600 = vlaneseq
    %v5601 = vshrl.u32 %v5600, 7
    %v5602 = vsub.s32 0, %v5601
    %v5603 = vrot.slane %v5598, %v5602
    %v5604 = vlaneseq
    %v5605 = vshrl.u32 %v5604, 7
    %v5606 = vsub.s32 1, %v5605
    %v5607 = vrot.slane %v5598, %v5606
    %v5608 = vlaneseq
    %v5609 = vshrl.u32 %v5608, 7
    %v5610 = vsub.s32 2, %v5609
    %v5611 = vrot.slane %v5598, %v5610
    %v5612 = vlaneseq
    %v5613 = vshrl.u32 %v5612, 7
    %v5614 = vsub.s32 3, %v5613
    %v5615 = vrot.slane %v5598, %v5614
    %v5684 = vunpack.c.l.b16 %v5534
    %v5685 = vunpack.c.h.b16 %v5534
    %v5686 = vunpack.c.l.b16 %v5535
    %v5687 = vunpack.c.h.b16 %v5535
    %v5688 = vunpack.c.l.b16 %v5536
    %v5689 = vunpack.c.h.b16 %v5536
    %v5690 = vunpack.c.l.b16 %v5537
    %v5691 = vunpack.c.h.b16 %v5537
    %v5692 = vunpack.c.l.b16 %v5538
    %v5693 = vunpack.c.h.b16 %v5538
    %v5694 = vunpack.c.l.b16 %v5539
    %v5695 = vunpack.c.h.b16 %v5539
    %v5696 = vunpack.c.l.b16 %v5540
    %v5697 = vunpack.c.h.b16 %v5540
    %v5698 = vunpack.c.l.b16 %v5541
    %v5699 = vunpack.c.h.b16 %v5541
    %v5700 = vunpack.c.l.b16 %v5542
    %v5701 = vunpack.c.h.b16 %v5542
    %v5702 = vunpack.c.l.b16 %v5543
    %v5703 = vunpack.c.h.b16 %v5543
    %v5704 = vunpack.c.l.b16 %v5544
    %v5705 = vunpack.c.h.b16 %v5544
    %v5706 = vunpack.c.l.b16 %v5545
    %v5707 = vunpack.c.h.b16 %v5545
    %v5708 = vunpack.c.l.b16 %v5546
    %v5709 = vunpack.c.h.b16 %v5546
    %v5710 = vunpack.c.l.b16 %v5547
    %v5711 = vunpack.c.h.b16 %v5547
    %v5712 = vunpack.c.l.b16 %v5548
    %v5713 = vunpack.c.h.b16 %v5548
    %v5714 = vunpack.c.l.b16 %v5549
    %v5715 = vunpack.c.h.b16 %v5549
    %v5716 = vunpack.c.l.b16 %v5550
    %v5717 = vunpack.c.h.b16 %v5550
    %v5718 = vunpack.c.l.b16 %v5551
    %v5719 = vunpack.c.h.b16 %v5551
    %v5720 = vunpack.c.l.b16 %v5552
    %v5721 = vunpack.c.h.b16 %v5552
    %v5722 = vunpack.c.l.b16 %v5553
    %v5723 = vunpack.c.h.b16 %v5553
    %v5724 = vunpack.c.l.b16 %v5554
    %v5725 = vunpack.c.h.b16 %v5554
    %v5726 = vunpack.c.l.b16 %v5555
    %v5727 = vunpack.c.h.b16 %v5555
    %v5728 = vunpack.c.l.b16 %v5556
    %v5729 = vunpack.c.h.b16 %v5556
    %v5730 = vunpack.c.l.b16 %v5557
    %v5731 = vunpack.c.h.b16 %v5557
    %v5732 = vunpack.c.l.b16 %v5558
    %v5733 = vunpack.c.h.b16 %v5558
    %v5734 = vunpack.c.l.b16 %v5559
    %v5735 = vunpack.c.h.b16 %v5559
    %v5736 = vunpack.c.l.b16 %v5560
    %v5737 = vunpack.c.h.b16 %v5560
    %v5738 = vunpack.c.l.b16 %v5561
    %v5739 = vunpack.c.h.b16 %v5561
    %v5740 = vunpack.c.l.b16 %v5562
    %v5741 = vunpack.c.h.b16 %v5562
    %v5742 = vunpack.c.l.b16 %v5563
    %v5743 = vunpack.c.h.b16 %v5563
    %v5744 = vunpack.c.l.b16 %v5564
    %v5745 = vunpack.c.h.b16 %v5564
    %v5746 = vunpack.c.l.b16 %v5565
    %v5747 = vunpack.c.h.b16 %v5565
    %v5748 = vunpack.c.l.b16 %v5566
    %v5749 = vunpack.c.h.b16 %v5566
    %v5750 = vunpack.c.l.b16 %v5567
    %v5751 = vunpack.c.h.b16 %v5567
    %v5752 = vunpack.c.l.b16 %v5568
    %v5753 = vunpack.c.h.b16 %v5568
    %v5754 = vunpack.c.l.b16 %v5569
    %v5755 = vunpack.c.h.b16 %v5569
    %v5756 = vunpack.c.l.b16 %v5570
    %v5757 = vunpack.c.h.b16 %v5570
    %v5758 = vunpack.c.l.b16 %v5571
    %v5759 = vunpack.c.h.b16 %v5571
    %v5760 = vunpack.c.l.b16 %v5572
    %v5761 = vunpack.c.h.b16 %v5572
    %v5762 = vunpack.c.l.b16 %v5573
    %v5763 = vunpack.c.h.b16 %v5573
    %v5764 = vunpack.c.l.b16 %v5574
    %v5765 = vunpack.c.h.b16 %v5574
    %v5766 = vunpack.c.l.b16 %v5575
    %v5767 = vunpack.c.h.b16 %v5575
    %v5768 = vunpack.c.l.b16 %v5576
    %v5769 = vunpack.c.h.b16 %v5576
    %v5770 = vunpack.c.l.b16 %v5577
    %v5771 = vunpack.c.h.b16 %v5577
    %v5772 = vunpack.c.l.b16 %v5578
    %v5773 = vunpack.c.h.b16 %v5578
    %v5774 = vunpack.c.l.b16 %v5579
    %v5775 = vunpack.c.h.b16 %v5579
    %v5776 = vunpack.c.l.b16 %v5580
    %v5777 = vunpack.c.h.b16 %v5580
    %v5778 = vunpack.c.l.b16 %v5581
    %v5779 = vunpack.c.h.b16 %v5581
    %v5780 = vunpack.c.l.b16 %v5582
    %v5781 = vunpack.c.h.b16 %v5582
    %v5782 = vunpack.c.l.b16 %v5583
    %v5783 = vunpack.c.h.b16 %v5583
    %v5784 = vunpack.c.l.b16 %v5584
    %v5785 = vunpack.c.h.b16 %v5584
    %v5786 = vunpack.c.l.b16 %v5585
    %v5787 = vunpack.c.h.b16 %v5585
    %v5788 = vunpack.c.l.b16 %v5586
    %v5789 = vunpack.c.h.b16 %v5586
    %v5790 = vunpack.c.l.b16 %v5587
    %v5791 = vunpack.c.h.b16 %v5587
    %v5792 = vunpack.c.l.b16 %v5588
    %v5793 = vunpack.c.h.b16 %v5588
    %v5794 = vunpack.c.l.b16 %v5589
    %v5795 = vunpack.c.h.b16 %v5589
    %v5796 = vunpack.c.l.b16 %v5590
    %v5797 = vunpack.c.h.b16 %v5590
    %v5798 = vunpack.c.l.b16 %v5591
    %v5799 = vunpack.c.h.b16 %v5591
    %v5800 = vunpack.c.l.b16 %v5592
    %v5801 = vunpack.c.h.b16 %v5592
    %v5802 = vunpack.c.l.b16 %v5593
    %v5803 = vunpack.c.h.b16 %v5593
    %v5804 = vunpack.c.l.b16 %v5594
    %v5805 = vunpack.c.h.b16 %v5594
    %v5806 = vunpack.c.l.b16 %v5595
    %v5807 = vunpack.c.h.b16 %v5595
    %v5808 = vunpack.c.l.b16 %v5596
    %v5809 = vunpack.c.h.b16 %v5596
    %v5810 = vunpack.c.l.b16 %v5597
    %v5811 = vunpack.c.h.b16 %v5597
    %v5812 = vpack.c.b16 %v5688, %v5684
    %v5813 = vpack.c.b16 %v5689, %v5685
    %v5814 = vpack.c.b16 %v5690, %v5686
    %v5815 = vpack.c.b16 %v5691, %v5687
    %v5816 = vpack.c.b16 %v5696, %v5692
    %v5817 = vpack.c.b16 %v5697, %v5693
    %v5818 = vpack.c.b16 %v5698, %v5694
    %v5819 = vpack.c.b16 %v5699, %v5695
    %v5820 = vpack.c.b16 %v5704, %v5700
    %v5821 = vpack.c.b16 %v5705, %v5701
    %v5822 = vpack.c.b16 %v5706, %v5702
    %v5823 = vpack.c.b16 %v5707, %v5703
    %v5824 = vpack.c.b16 %v5712, %v5708
    %v5825 = vpack.c.b16 %v5713, %v5709
    %v5826 = vpack.c.b16 %v5714, %v5710
    %v5827 = vpack.c.b16 %v5715, %v5711
    %v5828 = vpack.c.b16 %v5720, %v5716
    %v5829 = vpack.c.b16 %v5721, %v5717
    %v5830 = vpack.c.b16 %v5722, %v5718
    %v5831 = vpack.c.b16 %v5723, %v5719
    %v5832 = vpack.c.b16 %v5728, %v5724
    %v5833 = vpack.c.b16 %v5729, %v5725
    %v5834 = vpack.c.b16 %v5730, %v5726
    %v5835 = vpack.c.b16 %v5731, %v5727
    %v5836 = vpack.c.b16 %v5736, %v5732
    %v5837 = vpack.c.b16 %v5737, %v5733
    %v5838 = vpack.c.b16 %v5738, %v5734
    %v5839 = vpack.c.b16 %v5739, %v5735
    %v5840 = vpack.c.b16 %v5744, %v5740
    %v5841 = vpack.c.b16 %v5745, %v5741
    %v5842 = vpack.c.b16 %v5746, %v5742
    %v5843 = vpack.c.b16 %v5747, %v5743
    %v5844 = vpack.c.b16 %v5752, %v5748
    %v5845 = vpack.c.b16 %v5753, %v5749
    %v5846 = vpack.c.b16 %v5754, %v5750
    %v5847 = vpack.c.b16 %v5755, %v5751
    %v5848 = vpack.c.b16 %v5760, %v5756
    %v5849 = vpack.c.b16 %v5761, %v5757
    %v5850 = vpack.c.b16 %v5762, %v5758
    %v5851 = vpack.c.b16 %v5763, %v5759
    %v5852 = vpack.c.b16 %v5768, %v5764
    %v5853 = vpack.c.b16 %v5769, %v5765
    %v5854 = vpack.c.b16 %v5770, %v5766
    %v5855 = vpack.c.b16 %v5771, %v5767
    %v5856 = vpack.c.b16 %v5776, %v5772
    %v5857 = vpack.c.b16 %v5777, %v5773
    %v5858 = vpack.c.b16 %v5778, %v5774
    %v5859 = vpack.c.b16 %v5779, %v5775
    %v5860 = vpack.c.b16 %v5784, %v5780
    %v5861 = vpack.c.b16 %v5785, %v5781
    %v5862 = vpack.c.b16 %v5786, %v5782
    %v5863 = vpack.c.b16 %v5787, %v5783
    %v5864 = vpack.c.b16 %v5792, %v5788
    %v5865 = vpack.c.b16 %v5793, %v5789
    %v5866 = vpack.c.b16 %v5794, %v5790
    %v5867 = vpack.c.b16 %v5795, %v5791
    %v5868 = vpack.c.b16 %v5800, %v5796
    %v5869 = vpack.c.b16 %v5801, %v5797
    %v5870 = vpack.c.b16 %v5802, %v5798
    %v5871 = vpack.c.b16 %v5803, %v5799
    %v5872 = vpack.c.b16 %v5808, %v5804
    %v5873 = vpack.c.b16 %v5809, %v5805
    %v5874 = vpack.c.b16 %v5810, %v5806
    %v5875 = vpack.c.b16 %v5811, %v5807
    %5940 = vmatprep.subr.bf16.mxu0 %v5841
    %5941 = vmatpush1.bf16.msra.mxu0 %v5840
    %5942 = vmatprep.subr.bf16.mxu0 %v5837
    %5943 = vmatpush1.bf16.msra.mxu0 %v5836
    %5944 = vmatprep.subr.bf16.mxu0 %v5833
    %5945 = vmatpush1.bf16.msra.mxu0 %v5832
    %5946 = vmatprep.subr.bf16.mxu0 %v5829
    %5947 = vmatpush1.bf16.msra.mxu0 %v5828
    %5948 = vmatprep.subr.bf16.mxu0 %v5825
    %5949 = vmatpush1.bf16.msra.mxu0 %v5824
    %5950 = vmatprep.subr.bf16.mxu0 %v5821
    %5951 = vmatpush1.bf16.msra.mxu0 %v5820
    %5952 = vmatprep.subr.bf16.mxu0 %v5817
    %5953 = vmatpush1.bf16.msra.mxu0 %v5816
    %5954 = vmatprep.subr.bf16.mxu0 %v5813
    %5955 = vmatpush1.bf16.msra.mxu0 %v5812
    %5956 = vmatprep.subr.bf16.mxu0 %v5873
    %5957 = vmatpush2.bf16.msra.mxu0 %v5872
    %5958 = vmatprep.subr.bf16.mxu0 %v5869
    %5959 = vmatpush2.bf16.msra.mxu0 %v5868
    %5960 = vmatprep.subr.bf16.mxu0 %v5865
    %5961 = vmatpush2.bf16.msra.mxu0 %v5864
    %5962 = vmatprep.subr.bf16.mxu0 %v5861
    %5963 = vmatpush2.bf16.msra.mxu0 %v5860
    %5964 = vmatprep.subr.bf16.mxu0 %v5857
    %5965 = vmatpush2.bf16.msra.mxu0 %v5856
    %5966 = vmatprep.subr.bf16.mxu0 %v5853
    %5967 = vmatpush2.bf16.msra.mxu0 %v5852
    %5968 = vmatprep.subr.bf16.mxu0 %v5849
    %5969 = vmatpush2.bf16.msra.mxu0 %v5848
    %5970 = vmatprep.subr.bf16.mxu0 %v5845
    %5971 = vmatpush2.bf16.msra.mxu0 %v5844
    %5972 = vmatprep.mubr.bf16.mxu0 %v5533
    %5973 = vmatmul.mubr.bf16.gmra.mxu0 %v5532
    %v5974 = vpop.f32.mrf.mxu0
    %v5975 = vadd.f32 %v5603, %v5974
    %v5976 = vpop.f32.mrf.mxu0
    %v5977 = vadd.f32 %v5607, %v5976
    %v5978 = vpop.f32.mrf.mxu0
    %v5979 = vpop.f32.mrf.mxu0
    %5980 = vdwg.mxu0
    %5981 = vmatprep.subr.bf16.mxu0 %v5843
    %5982 = vmatpush1.bf16.msra.mxu0 %v5842
    %5983 = vmatprep.subr.bf16.mxu0 %v5839
    %5984 = vmatpush1.bf16.msra.mxu0 %v5838
    %5985 = vmatprep.subr.bf16.mxu0 %v5835
    %5986 = vmatpush1.bf16.msra.mxu0 %v5834
    %5987 = vmatprep.subr.bf16.mxu0 %v5831
    %5988 = vmatpush1.bf16.msra.mxu0 %v5830
    %5989 = vmatprep.subr.bf16.mxu0 %v5827
    %5990 = vmatpush1.bf16.msra.mxu0 %v5826
    %5991 = vmatprep.subr.bf16.mxu0 %v5823
    %5992 = vmatpush1.bf16.msra.mxu0 %v5822
    %5993 = vmatprep.subr.bf16.mxu0 %v5819
    %5994 = vmatpush1.bf16.msra.mxu0 %v5818
    %5995 = vmatprep.subr.bf16.mxu0 %v5815
    %5996 = vmatpush1.bf16.msra.mxu0 %v5814
    %5997 = vmatprep.subr.bf16.mxu0 %v5875
    %5998 = vmatpush2.bf16.msra.mxu0 %v5874
    %5999 = vmatprep.subr.bf16.mxu0 %v5871
    %6000 = vmatpush2.bf16.msra.mxu0 %v5870
    %6001 = vmatprep.subr.bf16.mxu0 %v5867
    %6002 = vmatpush2.bf16.msra.mxu0 %v5866
    %6003 = vmatprep.subr.bf16.mxu0 %v5863
    %6004 = vmatpush2.bf16.msra.mxu0 %v5862
    %6005 = vmatprep.subr.bf16.mxu0 %v5859
    %6006 = vmatpush2.bf16.msra.mxu0 %v5858
    %6007 = vmatprep.subr.bf16.mxu0 %v5855
    %6008 = vmatpush2.bf16.msra.mxu0 %v5854
    %6009 = vmatprep.subr.bf16.mxu0 %v5851
    %6010 = vmatpush2.bf16.msra.mxu0 %v5850
    %6011 = vmatprep.subr.bf16.mxu0 %v5847
    %6012 = vmatpush2.bf16.msra.mxu0 %v5846
    %6013 = vmatprep.mubr.bf16.mxu0 %v5533
    %6014 = vmatmul.mubr.bf16.gmra.mxu0 %v5532
    %v6015 = vpop.f32.mrf.mxu0
    %v6016 = vadd.f32 %v5611, %v6015
    %v6017 = vpop.f32.mrf.mxu0
    %v6018 = vadd.f32 %v5615, %v6017
    %v6019 = vpop.f32.mrf.mxu0
    %v6020 = vpop.f32.mrf.mxu0
    %6021 = vdwg.mxu0
    %v6022 = vpack.c.bf16 %v5024, %v5024
    %v6023 = vpack.c.bf16 %v5025, %v5025
    %v6024 = vld [vmem:[#allocation40] sm:$0xff]
    %v6025 = vld [vmem:[#allocation40 + $0x8] sm:$0xff]
    %v6026 = vld [vmem:[#allocation40 + $0x10] sm:$0xff]
    %v6027 = vld [vmem:[#allocation40 + $0x18] sm:$0xff]
    %v6028 = vld [vmem:[#allocation40 + $0x20] sm:$0xff]
    %v6029 = vld [vmem:[#allocation40 + $0x28] sm:$0xff]
    %v6030 = vld [vmem:[#allocation40 + $0x30] sm:$0xff]
    %v6031 = vld [vmem:[#allocation40 + $0x38] sm:$0xff]
    %v6032 = vld [vmem:[#allocation40 + $0x40] sm:$0xff]
    %v6033 = vld [vmem:[#allocation40 + $0x48] sm:$0xff]
    %v6034 = vld [vmem:[#allocation40 + $0x50] sm:$0xff]
    %v6035 = vld [vmem:[#allocation40 + $0x58] sm:$0xff]
    %v6036 = vld [vmem:[#allocation40 + $0x60] sm:$0xff]
    %v6037 = vld [vmem:[#allocation40 + $0x68] sm:$0xff]
    %v6038 = vld [vmem:[#allocation40 + $0x70] sm:$0xff]
    %v6039 = vld [vmem:[#allocation40 + $0x78] sm:$0xff]
    %v6040 = vld [vmem:[#allocation40 + $0x80] sm:$0xff]
    %v6041 = vld [vmem:[#allocation40 + $0x88] sm:$0xff]
    %v6042 = vld [vmem:[#allocation40 + $0x90] sm:$0xff]
    %v6043 = vld [vmem:[#allocation40 + $0x98] sm:$0xff]
    %v6044 = vld [vmem:[#allocation40 + $0xa0] sm:$0xff]
    %v6045 = vld [vmem:[#allocation40 + $0xa8] sm:$0xff]
    %v6046 = vld [vmem:[#allocation40 + $0xb0] sm:$0xff]
    %v6047 = vld [vmem:[#allocation40 + $0xb8] sm:$0xff]
    %v6048 = vld [vmem:[#allocation40 + $0xc0] sm:$0xff]
    %v6049 = vld [vmem:[#allocation40 + $0xc8] sm:$0xff]
    %v6050 = vld [vmem:[#allocation40 + $0xd0] sm:$0xff]
    %v6051 = vld [vmem:[#allocation40 + $0xd8] sm:$0xff]
    %v6052 = vld [vmem:[#allocation40 + $0xe0] sm:$0xff]
    %v6053 = vld [vmem:[#allocation40 + $0xe8] sm:$0xff]
    %v6054 = vld [vmem:[#allocation40 + $0xf0] sm:$0xff]
    %v6055 = vld [vmem:[#allocation40 + $0xf8] sm:$0xff]
    %v6056 = vld [vmem:[#allocation42] sm:$0x3]
    %v6058 = vlaneseq
    %v6059 = vshrl.u32 %v6058, 7
    %v6060 = vsub.s32 0, %v6059
    %v6061 = vrot.slane %v6056, %v6060
    %v6062 = vlaneseq
    %v6063 = vshrl.u32 %v6062, 7
    %v6064 = vsub.s32 1, %v6063
    %v6065 = vrot.slane %v6056, %v6064
    %v6100 = vunpack.c.l.b16 %v6024
    %v6101 = vunpack.c.h.b16 %v6024
    %v6102 = vunpack.c.l.b16 %v6025
    %v6103 = vunpack.c.h.b16 %v6025
    %v6104 = vunpack.c.l.b16 %v6026
    %v6105 = vunpack.c.h.b16 %v6026
    %v6106 = vunpack.c.l.b16 %v6027
    %v6107 = vunpack.c.h.b16 %v6027
    %v6108 = vunpack.c.l.b16 %v6028
    %v6109 = vunpack.c.h.b16 %v6028
    %v6110 = vunpack.c.l.b16 %v6029
    %v6111 = vunpack.c.h.b16 %v6029
    %v6112 = vunpack.c.l.b16 %v6030
    %v6113 = vunpack.c.h.b16 %v6030
    %v6114 = vunpack.c.l.b16 %v6031
    %v6115 = vunpack.c.h.b16 %v6031
    %v6116 = vunpack.c.l.b16 %v6032
    %v6117 = vunpack.c.h.b16 %v6032
    %v6118 = vunpack.c.l.b16 %v6033
    %v6119 = vunpack.c.h.b16 %v6033
    %v6120 = vunpack.c.l.b16 %v6034
    %v6121 = vunpack.c.h.b16 %v6034
    %v6122 = vunpack.c.l.b16 %v6035
    %v6123 = vunpack.c.h.b16 %v6035
    %v6124 = vunpack.c.l.b16 %v6036
    %v6125 = vunpack.c.h.b16 %v6036
    %v6126 = vunpack.c.l.b16 %v6037
    %v6127 = vunpack.c.h.b16 %v6037
    %v6128 = vunpack.c.l.b16 %v6038
    %v6129 = vunpack.c.h.b16 %v6038
    %v6130 = vunpack.c.l.b16 %v6039
    %v6131 = vunpack.c.h.b16 %v6039
    %v6132 = vunpack.c.l.b16 %v6040
    %v6133 = vunpack.c.h.b16 %v6040
    %v6134 = vunpack.c.l.b16 %v6041
    %v6135 = vunpack.c.h.b16 %v6041
    %v6136 = vunpack.c.l.b16 %v6042
    %v6137 = vunpack.c.h.b16 %v6042
    %v6138 = vunpack.c.l.b16 %v6043
    %v6139 = vunpack.c.h.b16 %v6043
    %v6140 = vunpack.c.l.b16 %v6044
    %v6141 = vunpack.c.h.b16 %v6044
    %v6142 = vunpack.c.l.b16 %v6045
    %v6143 = vunpack.c.h.b16 %v6045
    %v6144 = vunpack.c.l.b16 %v6046
    %v6145 = vunpack.c.h.b16 %v6046
    %v6146 = vunpack.c.l.b16 %v6047
    %v6147 = vunpack.c.h.b16 %v6047
    %v6148 = vunpack.c.l.b16 %v6048
    %v6149 = vunpack.c.h.b16 %v6048
    %v6150 = vunpack.c.l.b16 %v6049
    %v6151 = vunpack.c.h.b16 %v6049
    %v6152 = vunpack.c.l.b16 %v6050
    %v6153 = vunpack.c.h.b16 %v6050
    %v6154 = vunpack.c.l.b16 %v6051
    %v6155 = vunpack.c.h.b16 %v6051
    %v6156 = vunpack.c.l.b16 %v6052
    %v6157 = vunpack.c.h.b16 %v6052
    %v6158 = vunpack.c.l.b16 %v6053
    %v6159 = vunpack.c.h.b16 %v6053
    %v6160 = vunpack.c.l.b16 %v6054
    %v6161 = vunpack.c.h.b16 %v6054
    %v6162 = vunpack.c.l.b16 %v6055
    %v6163 = vunpack.c.h.b16 %v6055
    %v6164 = vpack.c.b16 %v6102, %v6100
    %v6165 = vpack.c.b16 %v6103, %v6101
    %v6166 = vpack.c.b16 %v6106, %v6104
    %v6167 = vpack.c.b16 %v6107, %v6105
    %v6168 = vpack.c.b16 %v6110, %v6108
    %v6169 = vpack.c.b16 %v6111, %v6109
    %v6170 = vpack.c.b16 %v6114, %v6112
    %v6171 = vpack.c.b16 %v6115, %v6113
    %v6172 = vpack.c.b16 %v6118, %v6116
    %v6173 = vpack.c.b16 %v6119, %v6117
    %v6174 = vpack.c.b16 %v6122, %v6120
    %v6175 = vpack.c.b16 %v6123, %v6121
    %v6176 = vpack.c.b16 %v6126, %v6124
    %v6177 = vpack.c.b16 %v6127, %v6125
    %v6178 = vpack.c.b16 %v6130, %v6128
    %v6179 = vpack.c.b16 %v6131, %v6129
    %v6180 = vpack.c.b16 %v6134, %v6132
    %v6181 = vpack.c.b16 %v6135, %v6133
    %v6182 = vpack.c.b16 %v6138, %v6136
    %v6183 = vpack.c.b16 %v6139, %v6137
    %v6184 = vpack.c.b16 %v6142, %v6140
    %v6185 = vpack.c.b16 %v6143, %v6141
    %v6186 = vpack.c.b16 %v6146, %v6144
    %v6187 = vpack.c.b16 %v6147, %v6145
    %v6188 = vpack.c.b16 %v6150, %v6148
    %v6189 = vpack.c.b16 %v6151, %v6149
    %v6190 = vpack.c.b16 %v6154, %v6152
    %v6191 = vpack.c.b16 %v6155, %v6153
    %v6192 = vpack.c.b16 %v6158, %v6156
    %v6193 = vpack.c.b16 %v6159, %v6157
    %v6194 = vpack.c.b16 %v6162, %v6160
    %v6195 = vpack.c.b16 %v6163, %v6161
    %6228 = vmatprep.subr.bf16.mxu0 %v6179
    %6229 = vmatpush1.bf16.msra.mxu0 %v6178
    %6230 = vmatprep.subr.bf16.mxu0 %v6177
    %6231 = vmatpush1.bf16.msra.mxu0 %v6176
    %6232 = vmatprep.subr.bf16.mxu0 %v6175
    %6233 = vmatpush1.bf16.msra.mxu0 %v6174
    %6234 = vmatprep.subr.bf16.mxu0 %v6173
    %6235 = vmatpush1.bf16.msra.mxu0 %v6172
    %6236 = vmatprep.subr.bf16.mxu0 %v6171
    %6237 = vmatpush1.bf16.msra.mxu0 %v6170
    %6238 = vmatprep.subr.bf16.mxu0 %v6169
    %6239 = vmatpush1.bf16.msra.mxu0 %v6168
    %6240 = vmatprep.subr.bf16.mxu0 %v6167
    %6241 = vmatpush1.bf16.msra.mxu0 %v6166
    %6242 = vmatprep.subr.bf16.mxu0 %v6165
    %6243 = vmatpush1.bf16.msra.mxu0 %v6164
    %6244 = vmatprep.subr.bf16.mxu0 %v6195
    %6245 = vmatpush2.bf16.msra.mxu0 %v6194
    %6246 = vmatprep.subr.bf16.mxu0 %v6193
    %6247 = vmatpush2.bf16.msra.mxu0 %v6192
    %6248 = vmatprep.subr.bf16.mxu0 %v6191
    %6249 = vmatpush2.bf16.msra.mxu0 %v6190
    %6250 = vmatprep.subr.bf16.mxu0 %v6189
    %6251 = vmatpush2.bf16.msra.mxu0 %v6188
    %6252 = vmatprep.subr.bf16.mxu0 %v6187
    %6253 = vmatpush2.bf16.msra.mxu0 %v6186
    %6254 = vmatprep.subr.bf16.mxu0 %v6185
    %6255 = vmatpush2.bf16.msra.mxu0 %v6184
    %6256 = vmatprep.subr.bf16.mxu0 %v6183
    %6257 = vmatpush2.bf16.msra.mxu0 %v6182
    %6258 = vmatprep.subr.bf16.mxu0 %v6181
    %6259 = vmatpush2.bf16.msra.mxu0 %v6180
    %6260 = vmatprep.mubr.bf16.mxu0 %v6023
    %6261 = vmatmul.mubr.bf16.gmra.mxu0 %v6022
    %v6262 = vpop.f32.mrf.mxu0
    %v6263 = vadd.f32 %v6061, %v6262
    %v6264 = vpop.f32.mrf.mxu0
    %v6265 = vadd.f32 %v6065, %v6264
    %v6266 = vpop.f32.mrf.mxu0
    %v6267 = vpop.f32.mrf.mxu0
    %6268 = vdwg.mxu0
    %vm6269 = vcmp.gt.f32.partialorder %v6263, 0.0
    %vm6270 = vcmp.gt.f32.partialorder %v6265, 0.0
    %v6271 = vmul.f32 %v6263, 0.2
    %v6272 = vmul.f32 %v6265, 0.2
    %v6273 = vsel %vm6269, %v6263, %v6271
    %v6274 = vsel %vm6270, %v6265, %v6272
    %v6275 = vpack.c.bf16 %v6273, %v6273
    %v6276 = vpack.c.bf16 %v6274, %v6274
    %v6277 = vld [vmem:[#allocation43] sm:$0xff]
    %v6278 = vld [vmem:[#allocation43 + $0x8] sm:$0xff]
    %v6279 = vld [vmem:[#allocation43 + $0x10] sm:$0xff]
    %v6280 = vld [vmem:[#allocation43 + $0x18] sm:$0xff]
    %v6281 = vld [vmem:[#allocation43 + $0x20] sm:$0xff]
    %v6282 = vld [vmem:[#allocation43 + $0x28] sm:$0xff]
    %v6283 = vld [vmem:[#allocation43 + $0x30] sm:$0xff]
    %v6284 = vld [vmem:[#allocation43 + $0x38] sm:$0xff]
    %v6285 = vld [vmem:[#allocation43 + $0x40] sm:$0xff]
    %v6286 = vld [vmem:[#allocation43 + $0x48] sm:$0xff]
    %v6287 = vld [vmem:[#allocation43 + $0x50] sm:$0xff]
    %v6288 = vld [vmem:[#allocation43 + $0x58] sm:$0xff]
    %v6289 = vld [vmem:[#allocation43 + $0x60] sm:$0xff]
    %v6290 = vld [vmem:[#allocation43 + $0x68] sm:$0xff]
    %v6291 = vld [vmem:[#allocation43 + $0x70] sm:$0xff]
    %v6292 = vld [vmem:[#allocation43 + $0x78] sm:$0xff]
    %v6293 = vld [vmem:[#allocation43 + $0x80] sm:$0xff]
    %v6294 = vld [vmem:[#allocation43 + $0x88] sm:$0xff]
    %v6295 = vld [vmem:[#allocation43 + $0x90] sm:$0xff]
    %v6296 = vld [vmem:[#allocation43 + $0x98] sm:$0xff]
    %v6297 = vld [vmem:[#allocation43 + $0xa0] sm:$0xff]
    %v6298 = vld [vmem:[#allocation43 + $0xa8] sm:$0xff]
    %v6299 = vld [vmem:[#allocation43 + $0xb0] sm:$0xff]
    %v6300 = vld [vmem:[#allocation43 + $0xb8] sm:$0xff]
    %v6301 = vld [vmem:[#allocation43 + $0xc0] sm:$0xff]
    %v6302 = vld [vmem:[#allocation43 + $0xc8] sm:$0xff]
    %v6303 = vld [vmem:[#allocation43 + $0xd0] sm:$0xff]
    %v6304 = vld [vmem:[#allocation43 + $0xd8] sm:$0xff]
    %v6305 = vld [vmem:[#allocation43 + $0xe0] sm:$0xff]
    %v6306 = vld [vmem:[#allocation43 + $0xe8] sm:$0xff]
    %v6307 = vld [vmem:[#allocation43 + $0xf0] sm:$0xff]
    %v6308 = vld [vmem:[#allocation43 + $0xf8] sm:$0xff]
    %v6309 = vld [vmem:[#allocation45] sm:$0x3]
    %v6311 = vlaneseq
    %v6312 = vshrl.u32 %v6311, 7
    %v6313 = vsub.s32 0, %v6312
    %v6314 = vrot.slane %v6309, %v6313
    %v6315 = vlaneseq
    %v6316 = vshrl.u32 %v6315, 7
    %v6317 = vsub.s32 1, %v6316
    %v6318 = vrot.slane %v6309, %v6317
    %v6353 = vunpack.c.l.b16 %v6277
    %v6354 = vunpack.c.h.b16 %v6277
    %v6355 = vunpack.c.l.b16 %v6278
    %v6356 = vunpack.c.h.b16 %v6278
    %v6357 = vunpack.c.l.b16 %v6279
    %v6358 = vunpack.c.h.b16 %v6279
    %v6359 = vunpack.c.l.b16 %v6280
    %v6360 = vunpack.c.h.b16 %v6280
    %v6361 = vunpack.c.l.b16 %v6281
    %v6362 = vunpack.c.h.b16 %v6281
    %v6363 = vunpack.c.l.b16 %v6282
    %v6364 = vunpack.c.h.b16 %v6282
    %v6365 = vunpack.c.l.b16 %v6283
    %v6366 = vunpack.c.h.b16 %v6283
    %v6367 = vunpack.c.l.b16 %v6284
    %v6368 = vunpack.c.h.b16 %v6284
    %v6369 = vunpack.c.l.b16 %v6285
    %v6370 = vunpack.c.h.b16 %v6285
    %v6371 = vunpack.c.l.b16 %v6286
    %v6372 = vunpack.c.h.b16 %v6286
    %v6373 = vunpack.c.l.b16 %v6287
    %v6374 = vunpack.c.h.b16 %v6287
    %v6375 = vunpack.c.l.b16 %v6288
    %v6376 = vunpack.c.h.b16 %v6288
    %v6377 = vunpack.c.l.b16 %v6289
    %v6378 = vunpack.c.h.b16 %v6289
    %v6379 = vunpack.c.l.b16 %v6290
    %v6380 = vunpack.c.h.b16 %v6290
    %v6381 = vunpack.c.l.b16 %v6291
    %v6382 = vunpack.c.h.b16 %v6291
    %v6383 = vunpack.c.l.b16 %v6292
    %v6384 = vunpack.c.h.b16 %v6292
    %v6385 = vunpack.c.l.b16 %v6293
    %v6386 = vunpack.c.h.b16 %v6293
    %v6387 = vunpack.c.l.b16 %v6294
    %v6388 = vunpack.c.h.b16 %v6294
    %v6389 = vunpack.c.l.b16 %v6295
    %v6390 = vunpack.c.h.b16 %v6295
    %v6391 = vunpack.c.l.b16 %v6296
    %v6392 = vunpack.c.h.b16 %v6296
    %v6393 = vunpack.c.l.b16 %v6297
    %v6394 = vunpack.c.h.b16 %v6297
    %v6395 = vunpack.c.l.b16 %v6298
    %v6396 = vunpack.c.h.b16 %v6298
    %v6397 = vunpack.c.l.b16 %v6299
    %v6398 = vunpack.c.h.b16 %v6299
    %v6399 = vunpack.c.l.b16 %v6300
    %v6400 = vunpack.c.h.b16 %v6300
    %v6401 = vunpack.c.l.b16 %v6301
    %v6402 = vunpack.c.h.b16 %v6301
    %v6403 = vunpack.c.l.b16 %v6302
    %v6404 = vunpack.c.h.b16 %v6302
    %v6405 = vunpack.c.l.b16 %v6303
    %v6406 = vunpack.c.h.b16 %v6303
    %v6407 = vunpack.c.l.b16 %v6304
    %v6408 = vunpack.c.h.b16 %v6304
    %v6409 = vunpack.c.l.b16 %v6305
    %v6410 = vunpack.c.h.b16 %v6305
    %v6411 = vunpack.c.l.b16 %v6306
    %v6412 = vunpack.c.h.b16 %v6306
    %v6413 = vunpack.c.l.b16 %v6307
    %v6414 = vunpack.c.h.b16 %v6307
    %v6415 = vunpack.c.l.b16 %v6308
    %v6416 = vunpack.c.h.b16 %v6308
    %v6417 = vpack.c.b16 %v6355, %v6353
    %v6418 = vpack.c.b16 %v6356, %v6354
    %v6419 = vpack.c.b16 %v6359, %v6357
    %v6420 = vpack.c.b16 %v6360, %v6358
    %v6421 = vpack.c.b16 %v6363, %v6361
    %v6422 = vpack.c.b16 %v6364, %v6362
    %v6423 = vpack.c.b16 %v6367, %v6365
    %v6424 = vpack.c.b16 %v6368, %v6366
    %v6425 = vpack.c.b16 %v6371, %v6369
    %v6426 = vpack.c.b16 %v6372, %v6370
    %v6427 = vpack.c.b16 %v6375, %v6373
    %v6428 = vpack.c.b16 %v6376, %v6374
    %v6429 = vpack.c.b16 %v6379, %v6377
    %v6430 = vpack.c.b16 %v6380, %v6378
    %v6431 = vpack.c.b16 %v6383, %v6381
    %v6432 = vpack.c.b16 %v6384, %v6382
    %v6433 = vpack.c.b16 %v6387, %v6385
    %v6434 = vpack.c.b16 %v6388, %v6386
    %v6435 = vpack.c.b16 %v6391, %v6389
    %v6436 = vpack.c.b16 %v6392, %v6390
    %v6437 = vpack.c.b16 %v6395, %v6393
    %v6438 = vpack.c.b16 %v6396, %v6394
    %v6439 = vpack.c.b16 %v6399, %v6397
    %v6440 = vpack.c.b16 %v6400, %v6398
    %v6441 = vpack.c.b16 %v6403, %v6401
    %v6442 = vpack.c.b16 %v6404, %v6402
    %v6443 = vpack.c.b16 %v6407, %v6405
    %v6444 = vpack.c.b16 %v6408, %v6406
    %v6445 = vpack.c.b16 %v6411, %v6409
    %v6446 = vpack.c.b16 %v6412, %v6410
    %v6447 = vpack.c.b16 %v6415, %v6413
    %v6448 = vpack.c.b16 %v6416, %v6414
    %6481 = vmatprep.subr.bf16.mxu0 %v6432
    %6482 = vmatpush1.bf16.msra.mxu0 %v6431
    %6483 = vmatprep.subr.bf16.mxu0 %v6430
    %6484 = vmatpush1.bf16.msra.mxu0 %v6429
    %6485 = vmatprep.subr.bf16.mxu0 %v6428
    %6486 = vmatpush1.bf16.msra.mxu0 %v6427
    %6487 = vmatprep.subr.bf16.mxu0 %v6426
    %6488 = vmatpush1.bf16.msra.mxu0 %v6425
    %6489 = vmatprep.subr.bf16.mxu0 %v6424
    %6490 = vmatpush1.bf16.msra.mxu0 %v6423
    %6491 = vmatprep.subr.bf16.mxu0 %v6422
    %6492 = vmatpush1.bf16.msra.mxu0 %v6421
    %6493 = vmatprep.subr.bf16.mxu0 %v6420
    %6494 = vmatpush1.bf16.msra.mxu0 %v6419
    %6495 = vmatprep.subr.bf16.mxu0 %v6418
    %6496 = vmatpush1.bf16.msra.mxu0 %v6417
    %6497 = vmatprep.subr.bf16.mxu0 %v6448
    %6498 = vmatpush2.bf16.msra.mxu0 %v6447
    %6499 = vmatprep.subr.bf16.mxu0 %v6446
    %6500 = vmatpush2.bf16.msra.mxu0 %v6445
    %6501 = vmatprep.subr.bf16.mxu0 %v6444
    %6502 = vmatpush2.bf16.msra.mxu0 %v6443
    %6503 = vmatprep.subr.bf16.mxu0 %v6442
    %6504 = vmatpush2.bf16.msra.mxu0 %v6441
    %6505 = vmatprep.subr.bf16.mxu0 %v6440
    %6506 = vmatpush2.bf16.msra.mxu0 %v6439
    %6507 = vmatprep.subr.bf16.mxu0 %v6438
    %6508 = vmatpush2.bf16.msra.mxu0 %v6437
    %6509 = vmatprep.subr.bf16.mxu0 %v6436
    %6510 = vmatpush2.bf16.msra.mxu0 %v6435
    %6511 = vmatprep.subr.bf16.mxu0 %v6434
    %6512 = vmatpush2.bf16.msra.mxu0 %v6433
    %6513 = vmatprep.mubr.bf16.mxu0 %v6276
    %6514 = vmatmul.mubr.bf16.gmra.mxu0 %v6275
    %v6515 = vpop.f32.mrf.mxu0
    %v6516 = vadd.f32 %v6314, %v6515
    %v6517 = vpop.f32.mrf.mxu0
    %v6518 = vadd.f32 %v6318, %v6517
    %v6519 = vpop.f32.mrf.mxu0
    %v6520 = vpop.f32.mrf.mxu0
    %6521 = vdwg.mxu0
    %vm6522 = vcmp.gt.f32.partialorder %v6516, 0.0
    %vm6523 = vcmp.gt.f32.partialorder %v6518, 0.0
    %v6524 = vmul.f32 %v6516, 0.2
    %v6525 = vmul.f32 %v6518, 0.2
    %v6526 = vsel %vm6522, %v6516, %v6524
    %v6527 = vsel %vm6523, %v6518, %v6525
    %v6528 = vpack.c.bf16 %v6526, %v6526
    %v6529 = vpack.c.bf16 %v6527, %v6527
    %v6530 = vld [vmem:[%s93] sm:$0xf]
    %v6531 = vld [vmem:[%s93 + $0x4] sm:$0xf]
    %v6532 = vld [vmem:[%s93 + $0x8] sm:$0xf]
    %v6533 = vld [vmem:[%s93 + $0xc] sm:$0xf]
    %v6534 = vld [vmem:[%s93 + $0x10] sm:$0xf]
    %v6535 = vld [vmem:[%s93 + $0x14] sm:$0xf]
    %v6536 = vld [vmem:[%s93 + $0x18] sm:$0xf]
    %v6537 = vld [vmem:[%s93 + $0x1c] sm:$0xf]
    %v6538 = vld [vmem:[%s93 + $0x20] sm:$0xf]
    %v6539 = vld [vmem:[%s93 + $0x24] sm:$0xf]
    %v6540 = vld [vmem:[%s93 + $0x28] sm:$0xf]
    %v6541 = vld [vmem:[%s93 + $0x2c] sm:$0xf]
    %v6542 = vld [vmem:[%s93 + $0x30] sm:$0xf]
    %v6543 = vld [vmem:[%s93 + $0x34] sm:$0xf]
    %v6544 = vld [vmem:[%s93 + $0x38] sm:$0xf]
    %v6545 = vld [vmem:[%s93 + $0x3c] sm:$0xf]
    %v6546 = vld [vmem:[%s93 + $0x40] sm:$0xf]
    %v6547 = vld [vmem:[%s93 + $0x44] sm:$0xf]
    %v6548 = vld [vmem:[%s93 + $0x48] sm:$0xf]
    %v6549 = vld [vmem:[%s93 + $0x4c] sm:$0xf]
    %v6550 = vld [vmem:[%s93 + $0x50] sm:$0xf]
    %v6551 = vld [vmem:[%s93 + $0x54] sm:$0xf]
    %v6552 = vld [vmem:[%s93 + $0x58] sm:$0xf]
    %v6553 = vld [vmem:[%s93 + $0x5c] sm:$0xf]
    %v6554 = vld [vmem:[%s93 + $0x60] sm:$0xf]
    %v6555 = vld [vmem:[%s93 + $0x64] sm:$0xf]
    %v6556 = vld [vmem:[%s93 + $0x68] sm:$0xf]
    %v6557 = vld [vmem:[%s93 + $0x6c] sm:$0xf]
    %v6558 = vld [vmem:[%s93 + $0x70] sm:$0xf]
    %v6559 = vld [vmem:[%s93 + $0x74] sm:$0xf]
    %v6560 = vld [vmem:[%s93 + $0x78] sm:$0xf]
    %v6561 = vld [vmem:[%s93 + $0x7c] sm:$0xf]
    %v6562 = vld [vmem:[#allocation2] sm:$0x1]
    %v6564 = vlaneseq
    %v6565 = vshrl.u32 %v6564, 7
    %v6566 = vsub.s32 0, %v6565
    %v6567 = vrot.slane %v6562, %v6566
    %v6601 = vunpack.c.l.b16 %v6530
    %v6602 = vunpack.c.l.b16 %v6531
    %v6603 = vunpack.c.l.b16 %v6532
    %v6604 = vunpack.c.l.b16 %v6533
    %v6605 = vunpack.c.l.b16 %v6534
    %v6606 = vunpack.c.l.b16 %v6535
    %v6607 = vunpack.c.l.b16 %v6536
    %v6608 = vunpack.c.l.b16 %v6537
    %v6609 = vunpack.c.l.b16 %v6538
    %v6610 = vunpack.c.l.b16 %v6539
    %v6611 = vunpack.c.l.b16 %v6540
    %v6612 = vunpack.c.l.b16 %v6541
    %v6613 = vunpack.c.l.b16 %v6542
    %v6614 = vunpack.c.l.b16 %v6543
    %v6615 = vunpack.c.l.b16 %v6544
    %v6616 = vunpack.c.l.b16 %v6545
    %v6617 = vunpack.c.l.b16 %v6546
    %v6618 = vunpack.c.l.b16 %v6547
    %v6619 = vunpack.c.l.b16 %v6548
    %v6620 = vunpack.c.l.b16 %v6549
    %v6621 = vunpack.c.l.b16 %v6550
    %v6622 = vunpack.c.l.b16 %v6551
    %v6623 = vunpack.c.l.b16 %v6552
    %v6624 = vunpack.c.l.b16 %v6553
    %v6625 = vunpack.c.l.b16 %v6554
    %v6626 = vunpack.c.l.b16 %v6555
    %v6627 = vunpack.c.l.b16 %v6556
    %v6628 = vunpack.c.l.b16 %v6557
    %v6629 = vunpack.c.l.b16 %v6558
    %v6630 = vunpack.c.l.b16 %v6559
    %v6631 = vunpack.c.l.b16 %v6560
    %v6632 = vunpack.c.l.b16 %v6561
    %v6633 = vpack.c.b16 %v6602, %v6601
    %v6634 = vpack.c.b16 %v6604, %v6603
    %v6635 = vpack.c.b16 %v6606, %v6605
    %v6636 = vpack.c.b16 %v6608, %v6607
    %v6637 = vpack.c.b16 %v6610, %v6609
    %v6638 = vpack.c.b16 %v6612, %v6611
    %v6639 = vpack.c.b16 %v6614, %v6613
    %v6640 = vpack.c.b16 %v6616, %v6615
    %v6641 = vpack.c.b16 %v6618, %v6617
    %v6642 = vpack.c.b16 %v6620, %v6619
    %v6643 = vpack.c.b16 %v6622, %v6621
    %v6644 = vpack.c.b16 %v6624, %v6623
    %v6645 = vpack.c.b16 %v6626, %v6625
    %v6646 = vpack.c.b16 %v6628, %v6627
    %v6647 = vpack.c.b16 %v6630, %v6629
    %v6648 = vpack.c.b16 %v6632, %v6631
    %6665 = vmatprep.subr.bf16.mxu0 0
    %6666 = vmatpush1.bf16.msra.mxu0 %v6640
    %6667 = vmatprep.subr.bf16.mxu0 0
    %6668 = vmatpush1.bf16.msra.mxu0 %v6639
    %6669 = vmatprep.subr.bf16.mxu0 0
    %6670 = vmatpush1.bf16.msra.mxu0 %v6638
    %6671 = vmatprep.subr.bf16.mxu0 0
    %6672 = vmatpush1.bf16.msra.mxu0 %v6637
    %6673 = vmatprep.subr.bf16.mxu0 0
    %6674 = vmatpush1.bf16.msra.mxu0 %v6636
    %6675 = vmatprep.subr.bf16.mxu0 0
    %6676 = vmatpush1.bf16.msra.mxu0 %v6635
    %6677 = vmatprep.subr.bf16.mxu0 0
    %6678 = vmatpush1.bf16.msra.mxu0 %v6634
    %6679 = vmatprep.subr.bf16.mxu0 0
    %6680 = vmatpush1.bf16.msra.mxu0 %v6633
    %6681 = vmatprep.subr.bf16.mxu0 0
    %6682 = vmatpush2.bf16.msra.mxu0 %v6648
    %6683 = vmatprep.subr.bf16.mxu0 0
    %6684 = vmatpush2.bf16.msra.mxu0 %v6647
    %6685 = vmatprep.subr.bf16.mxu0 0
    %6686 = vmatpush2.bf16.msra.mxu0 %v6646
    %6687 = vmatprep.subr.bf16.mxu0 0
    %6688 = vmatpush2.bf16.msra.mxu0 %v6645
    %6689 = vmatprep.subr.bf16.mxu0 0
    %6690 = vmatpush2.bf16.msra.mxu0 %v6644
    %6691 = vmatprep.subr.bf16.mxu0 0
    %6692 = vmatpush2.bf16.msra.mxu0 %v6643
    %6693 = vmatprep.subr.bf16.mxu0 0
    %6694 = vmatpush2.bf16.msra.mxu0 %v6642
    %6695 = vmatprep.subr.bf16.mxu0 0
    %6696 = vmatpush2.bf16.msra.mxu0 %v6641
    %6697 = vmatprep.mubr.bf16.mxu0 %v6529
    %6698 = vmatmul.mubr.bf16.gmra.mxu0 %v6528
    %v6699 = vpop.f32.mrf.mxu0
    %v6700 = vadd.f32 %v6567, %v6699
    %v6701 = vpop.f32.mrf.mxu0
    %v6702 = vpop.f32.mrf.mxu0
    %v6703 = vpop.f32.mrf.mxu0
    %6704 = vdwg.mxu0
    %vm6705 = vcmask 15360
    %v6707 = vsel %vm6705, %v4522, 0
    %v6710 = vsel %vm1236, %v722, 0
    %6712 = vmatprep.subr.mxu0 0.0
    %6713 = vmatpush1.msra.mxu0 0.0
    %6714 = vmatprep.subr.mxu0 0.0
    %6715 = vmatpush1.msra.mxu0 0.0
    %6716 = vmatprep.subr.mxu0 0.0
    %6717 = vmatpush1.msra.mxu0 0.0
    %6718 = vmatprep.subr.mxu0 0.0
    %6719 = vmatpush1.msra.mxu0 0.0
    %6720 = vmatprep.subr.mxu0 0.0
    %6721 = vmatpush1.msra.mxu0 0.0
    %6722 = vmatprep.subr.mxu0 0.0
    %6723 = vmatpush1.msra.mxu0 0.0
    %6724 = vmatprep.subr.mxu0 0.0
    %6725 = vmatpush1.msra.mxu0 0.0
    %6726 = vmatprep.subr.mxu0 0.0
    %6727 = vmatpush1.msra.mxu0 0.0
    %6728 = vmatprep.subr.mxu0 0.0
    %6729 = vmatpush1.msra.mxu0 0.0
    %6730 = vmatprep.subr.mxu0 0.0
    %6731 = vmatpush1.msra.mxu0 0.0
    %6732 = vmatprep.subr.mxu0 0.0
    %6733 = vmatpush1.msra.mxu0 0.0
    %6734 = vmatprep.subr.mxu0 0.0
    %6735 = vmatpush1.msra.mxu0 0.0
    %6736 = vmatprep.subr.mxu0 0.0
    %6737 = vmatpush1.msra.mxu0 0.0
    %6738 = vmatprep.subr.mxu0 0.0
    %6739 = vmatpush1.msra.mxu0 0.0
    %6740 = vmatprep.subr.mxu0 0.0
    %6741 = vmatpush1.msra.mxu0 0.0
    %6742 = vmatprep.subr.mxu0 0.0
    %6743 = vmatpush1.msra.mxu0 %v6710
    %6744 = vmatprep.subr.mxu0 0.0
    %6745 = vmatpush2.msra.mxu0 0.0
    %6746 = vmatprep.subr.mxu0 0.0
    %6747 = vmatpush2.msra.mxu0 0.0
    %6748 = vmatprep.subr.mxu0 0.0
    %6749 = vmatpush2.msra.mxu0 0.0
    %6750 = vmatprep.subr.mxu0 0.0
    %6751 = vmatpush2.msra.mxu0 0.0
    %6752 = vmatprep.subr.mxu0 0.0
    %6753 = vmatpush2.msra.mxu0 0.0
    %6754 = vmatprep.subr.mxu0 0.0
    %6755 = vmatpush2.msra.mxu0 0.0
    %6756 = vmatprep.subr.mxu0 0.0
    %6757 = vmatpush2.msra.mxu0 0.0
    %6758 = vmatprep.subr.mxu0 0.0
    %6759 = vmatpush2.msra.mxu0 0.0
    %6760 = vmatprep.subr.mxu0 0.0
    %6761 = vmatpush2.msra.mxu0 0.0
    %6762 = vmatprep.subr.mxu0 0.0
    %6763 = vmatpush2.msra.mxu0 0.0
    %6764 = vmatprep.subr.mxu0 0.0
    %6765 = vmatpush2.msra.mxu0 0.0
    %6766 = vmatprep.subr.mxu0 0.0
    %6767 = vmatpush2.msra.mxu0 0.0
    %6768 = vmatprep.subr.mxu0 0.0
    %6769 = vmatpush2.msra.mxu0 0.0
    %6770 = vmatprep.subr.mxu0 0.0
    %6771 = vmatpush2.msra.mxu0 0.0
    %6772 = vmatprep.subr.mxu0 0.0
    %6773 = vmatpush2.msra.mxu0 0.0
    %6774 = vmatprep.subr.mxu0 0.0
    %6775 = vmatpush2.msra.mxu0 0.0
    %6776 = vmatprep.mubr.f32.mxu0 0.0
    %6777 = vmatmul.mubr.f32.gmra.mxu0 %v6707
    %v6778 = vpop.f32.mrf.mxu0
    %v6779 = vadd.f32 0.0, %v6778
    %v6780 = vpop.f32.mrf.mxu0
    %6781 = vdwg.mxu0
    %v6783 = vsel %vm6705, %v4521, 0
    %v6786 = vsel %vm1236, %v4516, 0
    %6788 = vmatprep.subr.mxu0 0.0
    %6789 = vmatpush1.msra.mxu0 0.0
    %6790 = vmatprep.subr.mxu0 0.0
    %6791 = vmatpush1.msra.mxu0 0.0
    %6792 = vmatprep.subr.mxu0 0.0
    %6793 = vmatpush1.msra.mxu0 0.0
    %6794 = vmatprep.subr.mxu0 0.0
    %6795 = vmatpush1.msra.mxu0 0.0
    %6796 = vmatprep.subr.mxu0 0.0
    %6797 = vmatpush1.msra.mxu0 0.0
    %6798 = vmatprep.subr.mxu0 0.0
    %6799 = vmatpush1.msra.mxu0 0.0
    %6800 = vmatprep.subr.mxu0 0.0
    %6801 = vmatpush1.msra.mxu0 0.0
    %6802 = vmatprep.subr.mxu0 0.0
    %6803 = vmatpush1.msra.mxu0 0.0
    %6804 = vmatprep.subr.mxu0 0.0
    %6805 = vmatpush1.msra.mxu0 0.0
    %6806 = vmatprep.subr.mxu0 0.0
    %6807 = vmatpush1.msra.mxu0 0.0
    %6808 = vmatprep.subr.mxu0 0.0
    %6809 = vmatpush1.msra.mxu0 0.0
    %6810 = vmatprep.subr.mxu0 0.0
    %6811 = vmatpush1.msra.mxu0 0.0
    %6812 = vmatprep.subr.mxu0 0.0
    %6813 = vmatpush1.msra.mxu0 0.0
    %6814 = vmatprep.subr.mxu0 0.0
    %6815 = vmatpush1.msra.mxu0 0.0
    %6816 = vmatprep.subr.mxu0 0.0
    %6817 = vmatpush1.msra.mxu0 0.0
    %6818 = vmatprep.subr.mxu0 0.0
    %6819 = vmatpush1.msra.mxu0 %v6786
    %6820 = vmatprep.subr.mxu0 0.0
    %6821 = vmatpush2.msra.mxu0 0.0
    %6822 = vmatprep.subr.mxu0 0.0
    %6823 = vmatpush2.msra.mxu0 0.0
    %6824 = vmatprep.subr.mxu0 0.0
    %6825 = vmatpush2.msra.mxu0 0.0
    %6826 = vmatprep.subr.mxu0 0.0
    %6827 = vmatpush2.msra.mxu0 0.0
    %6828 = vmatprep.subr.mxu0 0.0
    %6829 = vmatpush2.msra.mxu0 0.0
    %6830 = vmatprep.subr.mxu0 0.0
    %6831 = vmatpush2.msra.mxu0 0.0
    %6832 = vmatprep.subr.mxu0 0.0
    %6833 = vmatpush2.msra.mxu0 0.0
    %6834 = vmatprep.subr.mxu0 0.0
    %6835 = vmatpush2.msra.mxu0 0.0
    %6836 = vmatprep.subr.mxu0 0.0
    %6837 = vmatpush2.msra.mxu0 0.0
    %6838 = vmatprep.subr.mxu0 0.0
    %6839 = vmatpush2.msra.mxu0 0.0
    %6840 = vmatprep.subr.mxu0 0.0
    %6841 = vmatpush2.msra.mxu0 0.0
    %6842 = vmatprep.subr.mxu0 0.0
    %6843 = vmatpush2.msra.mxu0 0.0
    %6844 = vmatprep.subr.mxu0 0.0
    %6845 = vmatpush2.msra.mxu0 0.0
    %6846 = vmatprep.subr.mxu0 0.0
    %6847 = vmatpush2.msra.mxu0 0.0
    %6848 = vmatprep.subr.mxu0 0.0
    %6849 = vmatpush2.msra.mxu0 0.0
    %6850 = vmatprep.subr.mxu0 0.0
    %6851 = vmatpush2.msra.mxu0 0.0
    %6852 = vmatprep.mubr.f32.mxu0 0.0
    %6853 = vmatmul.mubr.f32.gmra.mxu0 %v6783
    %v6854 = vpop.f32.mrf.mxu0
    %v6855 = vadd.f32 %v6779, %v6854
    %v6856 = vpop.f32.mrf.mxu0
    %6857 = vdwg.mxu0
    %v6858 = vpack.c.bf16 %v6855, %v6855
    %v6859 = vld [vmem:[%s97] sm:$0xff]
    %v6860 = vld [vmem:[%s97 + $0x8] sm:$0xff]
    %v6861 = vld [vmem:[%s97 + $0x10] sm:$0xff]
    %v6862 = vld [vmem:[%s97 + $0x18] sm:$0xff]
    %v6863 = vld [vmem:[%s99] sm:$0xf]
    %v6865 = vlaneseq
    %v6866 = vshrl.u32 %v6865, 7
    %v6867 = vsub.s32 0, %v6866
    %v6868 = vrot.slane %v6863, %v6867
    %v6869 = vlaneseq
    %v6870 = vshrl.u32 %v6869, 7
    %v6871 = vsub.s32 1, %v6870
    %v6872 = vrot.slane %v6863, %v6871
    %v6873 = vlaneseq
    %v6874 = vshrl.u32 %v6873, 7
    %v6875 = vsub.s32 2, %v6874
    %v6876 = vrot.slane %v6863, %v6875
    %v6877 = vlaneseq
    %v6878 = vshrl.u32 %v6877, 7
    %v6879 = vsub.s32 3, %v6878
    %v6880 = vrot.slane %v6863, %v6879
    %v6889 = vunpack.c.l.b16 %v6859
    %v6890 = vunpack.c.h.b16 %v6859
    %v6891 = vunpack.c.l.b16 %v6860
    %v6892 = vunpack.c.h.b16 %v6860
    %v6893 = vunpack.c.l.b16 %v6861
    %v6894 = vunpack.c.h.b16 %v6861
    %v6895 = vunpack.c.l.b16 %v6862
    %v6896 = vunpack.c.h.b16 %v6862
    %v6897 = vpack.c.b16 %v6893, %v6889
    %v6898 = vpack.c.b16 %v6894, %v6890
    %v6899 = vpack.c.b16 %v6895, %v6891
    %v6900 = vpack.c.b16 %v6896, %v6892
    %v6906 = vsel %vm2686, %v6858, 0
    %6908 = vmatprep.subr.bf16.mxu0 0
    %6909 = vmatpush1.bf16.msra.mxu0 0
    %6910 = vmatprep.subr.bf16.mxu0 0
    %6911 = vmatpush1.bf16.msra.mxu0 0
    %6912 = vmatprep.subr.bf16.mxu0 0
    %6913 = vmatpush1.bf16.msra.mxu0 0
    %6914 = vmatprep.subr.bf16.mxu0 0
    %6915 = vmatpush1.bf16.msra.mxu0 0
    %6916 = vmatprep.subr.bf16.mxu0 0
    %6917 = vmatpush1.bf16.msra.mxu0 0
    %6918 = vmatprep.subr.bf16.mxu0 0
    %6919 = vmatpush1.bf16.msra.mxu0 0
    %6920 = vmatprep.subr.bf16.mxu0 0
    %6921 = vmatpush1.bf16.msra.mxu0 0
    %6922 = vmatprep.subr.bf16.mxu0 %v6898
    %6923 = vmatpush1.bf16.msra.mxu0 %v6897
    %6924 = vmatprep.subr.bf16.mxu0 0
    %6925 = vmatpush2.bf16.msra.mxu0 0
    %6926 = vmatprep.subr.bf16.mxu0 0
    %6927 = vmatpush2.bf16.msra.mxu0 0
    %6928 = vmatprep.subr.bf16.mxu0 0
    %6929 = vmatpush2.bf16.msra.mxu0 0
    %6930 = vmatprep.subr.bf16.mxu0 0
    %6931 = vmatpush2.bf16.msra.mxu0 0
    %6932 = vmatprep.subr.bf16.mxu0 0
    %6933 = vmatpush2.bf16.msra.mxu0 0
    %6934 = vmatprep.subr.bf16.mxu0 0
    %6935 = vmatpush2.bf16.msra.mxu0 0
    %6936 = vmatprep.subr.bf16.mxu0 0
    %6937 = vmatpush2.bf16.msra.mxu0 0
    %6938 = vmatprep.subr.bf16.mxu0 0
    %6939 = vmatpush2.bf16.msra.mxu0 0
    %6940 = vmatprep.mubr.bf16.mxu0 0
    %6941 = vmatmul.mubr.bf16.gmra.mxu0 %v6906
    %v6942 = vpop.f32.mrf.mxu0
    %v6943 = vadd.f32 %v6868, %v6942
    %v6944 = vpop.f32.mrf.mxu0
    %v6945 = vadd.f32 %v6872, %v6944
    %v6946 = vpop.f32.mrf.mxu0
    %v6947 = vpop.f32.mrf.mxu0
    %6948 = vdwg.mxu0
    %6949 = vmatprep.subr.bf16.mxu0 0
    %6950 = vmatpush1.bf16.msra.mxu0 0
    %6951 = vmatprep.subr.bf16.mxu0 0
    %6952 = vmatpush1.bf16.msra.mxu0 0
    %6953 = vmatprep.subr.bf16.mxu0 0
    %6954 = vmatpush1.bf16.msra.mxu0 0
    %6955 = vmatprep.subr.bf16.mxu0 0
    %6956 = vmatpush1.bf16.msra.mxu0 0
    %6957 = vmatprep.subr.bf16.mxu0 0
    %6958 = vmatpush1.bf16.msra.mxu0 0
    %6959 = vmatprep.subr.bf16.mxu0 0
    %6960 = vmatpush1.bf16.msra.mxu0 0
    %6961 = vmatprep.subr.bf16.mxu0 0
    %6962 = vmatpush1.bf16.msra.mxu0 0
    %6963 = vmatprep.subr.bf16.mxu0 %v6900
    %6964 = vmatpush1.bf16.msra.mxu0 %v6899
    %6965 = vmatprep.subr.bf16.mxu0 0
    %6966 = vmatpush2.bf16.msra.mxu0 0
    %6967 = vmatprep.subr.bf16.mxu0 0
    %6968 = vmatpush2.bf16.msra.mxu0 0
    %6969 = vmatprep.subr.bf16.mxu0 0
    %6970 = vmatpush2.bf16.msra.mxu0 0
    %6971 = vmatprep.subr.bf16.mxu0 0
    %6972 = vmatpush2.bf16.msra.mxu0 0
    %6973 = vmatprep.subr.bf16.mxu0 0
    %6974 = vmatpush2.bf16.msra.mxu0 0
    %6975 = vmatprep.subr.bf16.mxu0 0
    %6976 = vmatpush2.bf16.msra.mxu0 0
    %6977 = vmatprep.subr.bf16.mxu0 0
    %6978 = vmatpush2.bf16.msra.mxu0 0
    %6979 = vmatprep.subr.bf16.mxu0 0
    %6980 = vmatpush2.bf16.msra.mxu0 0
    %6981 = vmatprep.mubr.bf16.mxu0 0
    %6982 = vmatmul.mubr.bf16.gmra.mxu0 %v6906
    %v6983 = vpop.f32.mrf.mxu0
    %v6984 = vadd.f32 %v6876, %v6983
    %v6985 = vpop.f32.mrf.mxu0
    %v6986 = vadd.f32 %v6880, %v6985
    %v6987 = vpop.f32.mrf.mxu0
    %v6988 = vpop.f32.mrf.mxu0
    %6989 = vdwg.mxu0
    %vm6990 = vcmp.gt.f32.partialorder %v6943, 0.0
    %vm6991 = vcmp.gt.f32.partialorder %v6945, 0.0
    %vm6992 = vcmp.gt.f32.partialorder %v6984, 0.0
    %vm6993 = vcmp.gt.f32.partialorder %v6986, 0.0
    %v6994 = vmul.f32 %v6943, 0.2
    %v6995 = vmul.f32 %v6945, 0.2
    %v6996 = vmul.f32 %v6984, 0.2
    %v6997 = vmul.f32 %v6986, 0.2
    %v6998 = vsel %vm6990, %v6943, %v6994
    %v6999 = vsel %vm6991, %v6945, %v6995
    %v7000 = vsel %vm6992, %v6984, %v6996
    %v7001 = vsel %vm6993, %v6986, %v6997
    %v7002 = vpack.c.bf16 %v6998, %v6998
    %v7003 = vpack.c.bf16 %v6999, %v6999
    %v7004 = vld [vmem:[#allocation46] sm:$0xff]
    %v7005 = vld [vmem:[#allocation46 + $0x8] sm:$0xff]
    %v7006 = vld [vmem:[#allocation46 + $0x10] sm:$0xff]
    %v7007 = vld [vmem:[#allocation46 + $0x18] sm:$0xff]
    %v7008 = vld [vmem:[#allocation46 + $0x20] sm:$0xff]
    %v7009 = vld [vmem:[#allocation46 + $0x28] sm:$0xff]
    %v7010 = vld [vmem:[#allocation46 + $0x30] sm:$0xff]
    %v7011 = vld [vmem:[#allocation46 + $0x38] sm:$0xff]
    %v7012 = vld [vmem:[#allocation46 + $0x40] sm:$0xff]
    %v7013 = vld [vmem:[#allocation46 + $0x48] sm:$0xff]
    %v7014 = vld [vmem:[#allocation46 + $0x50] sm:$0xff]
    %v7015 = vld [vmem:[#allocation46 + $0x58] sm:$0xff]
    %v7016 = vld [vmem:[#allocation46 + $0x60] sm:$0xff]
    %v7017 = vld [vmem:[#allocation46 + $0x68] sm:$0xff]
    %v7018 = vld [vmem:[#allocation46 + $0x70] sm:$0xff]
    %v7019 = vld [vmem:[#allocation46 + $0x78] sm:$0xff]
    %v7020 = vld [vmem:[#allocation46 + $0x80] sm:$0xff]
    %v7021 = vld [vmem:[#allocation46 + $0x88] sm:$0xff]
    %v7022 = vld [vmem:[#allocation46 + $0x90] sm:$0xff]
    %v7023 = vld [vmem:[#allocation46 + $0x98] sm:$0xff]
    %v7024 = vld [vmem:[#allocation46 + $0xa0] sm:$0xff]
    %v7025 = vld [vmem:[#allocation46 + $0xa8] sm:$0xff]
    %v7026 = vld [vmem:[#allocation46 + $0xb0] sm:$0xff]
    %v7027 = vld [vmem:[#allocation46 + $0xb8] sm:$0xff]
    %v7028 = vld [vmem:[#allocation46 + $0xc0] sm:$0xff]
    %v7029 = vld [vmem:[#allocation46 + $0xc8] sm:$0xff]
    %v7030 = vld [vmem:[#allocation46 + $0xd0] sm:$0xff]
    %v7031 = vld [vmem:[#allocation46 + $0xd8] sm:$0xff]
    %v7032 = vld [vmem:[#allocation46 + $0xe0] sm:$0xff]
    %v7033 = vld [vmem:[#allocation46 + $0xe8] sm:$0xff]
    %v7034 = vld [vmem:[#allocation46 + $0xf0] sm:$0xff]
    %v7035 = vld [vmem:[#allocation46 + $0xf8] sm:$0xff]
    %v7036 = vld [vmem:[%s103] sm:$0x3]
    %v7038 = vlaneseq
    %v7039 = vshrl.u32 %v7038, 7
    %v7040 = vsub.s32 0, %v7039
    %v7041 = vrot.slane %v7036, %v7040
    %v7042 = vlaneseq
    %v7043 = vshrl.u32 %v7042, 7
    %v7044 = vsub.s32 1, %v7043
    %v7045 = vrot.slane %v7036, %v7044
    %v7080 = vunpack.c.l.b16 %v7004
    %v7081 = vunpack.c.h.b16 %v7004
    %v7082 = vunpack.c.l.b16 %v7005
    %v7083 = vunpack.c.h.b16 %v7005
    %v7084 = vunpack.c.l.b16 %v7006
    %v7085 = vunpack.c.h.b16 %v7006
    %v7086 = vunpack.c.l.b16 %v7007
    %v7087 = vunpack.c.h.b16 %v7007
    %v7088 = vunpack.c.l.b16 %v7008
    %v7089 = vunpack.c.h.b16 %v7008
    %v7090 = vunpack.c.l.b16 %v7009
    %v7091 = vunpack.c.h.b16 %v7009
    %v7092 = vunpack.c.l.b16 %v7010
    %v7093 = vunpack.c.h.b16 %v7010
    %v7094 = vunpack.c.l.b16 %v7011
    %v7095 = vunpack.c.h.b16 %v7011
    %v7096 = vunpack.c.l.b16 %v7012
    %v7097 = vunpack.c.h.b16 %v7012
    %v7098 = vunpack.c.l.b16 %v7013
    %v7099 = vunpack.c.h.b16 %v7013
    %v7100 = vunpack.c.l.b16 %v7014
    %v7101 = vunpack.c.h.b16 %v7014
    %v7102 = vunpack.c.l.b16 %v7015
    %v7103 = vunpack.c.h.b16 %v7015
    %v7104 = vunpack.c.l.b16 %v7016
    %v7105 = vunpack.c.h.b16 %v7016
    %v7106 = vunpack.c.l.b16 %v7017
    %v7107 = vunpack.c.h.b16 %v7017
    %v7108 = vunpack.c.l.b16 %v7018
    %v7109 = vunpack.c.h.b16 %v7018
    %v7110 = vunpack.c.l.b16 %v7019
    %v7111 = vunpack.c.h.b16 %v7019
    %v7112 = vunpack.c.l.b16 %v7020
    %v7113 = vunpack.c.h.b16 %v7020
    %v7114 = vunpack.c.l.b16 %v7021
    %v7115 = vunpack.c.h.b16 %v7021
    %v7116 = vunpack.c.l.b16 %v7022
    %v7117 = vunpack.c.h.b16 %v7022
    %v7118 = vunpack.c.l.b16 %v7023
    %v7119 = vunpack.c.h.b16 %v7023
    %v7120 = vunpack.c.l.b16 %v7024
    %v7121 = vunpack.c.h.b16 %v7024
    %v7122 = vunpack.c.l.b16 %v7025
    %v7123 = vunpack.c.h.b16 %v7025
    %v7124 = vunpack.c.l.b16 %v7026
    %v7125 = vunpack.c.h.b16 %v7026
    %v7126 = vunpack.c.l.b16 %v7027
    %v7127 = vunpack.c.h.b16 %v7027
    %v7128 = vunpack.c.l.b16 %v7028
    %v7129 = vunpack.c.h.b16 %v7028
    %v7130 = vunpack.c.l.b16 %v7029
    %v7131 = vunpack.c.h.b16 %v7029
    %v7132 = vunpack.c.l.b16 %v7030
    %v7133 = vunpack.c.h.b16 %v7030
    %v7134 = vunpack.c.l.b16 %v7031
    %v7135 = vunpack.c.h.b16 %v7031
    %v7136 = vunpack.c.l.b16 %v7032
    %v7137 = vunpack.c.h.b16 %v7032
    %v7138 = vunpack.c.l.b16 %v7033
    %v7139 = vunpack.c.h.b16 %v7033
    %v7140 = vunpack.c.l.b16 %v7034
    %v7141 = vunpack.c.h.b16 %v7034
    %v7142 = vunpack.c.l.b16 %v7035
    %v7143 = vunpack.c.h.b16 %v7035
    %v7144 = vpack.c.b16 %v7082, %v7080
    %v7145 = vpack.c.b16 %v7083, %v7081
    %v7146 = vpack.c.b16 %v7086, %v7084
    %v7147 = vpack.c.b16 %v7087, %v7085
    %v7148 = vpack.c.b16 %v7090, %v7088
    %v7149 = vpack.c.b16 %v7091, %v7089
    %v7150 = vpack.c.b16 %v7094, %v7092
    %v7151 = vpack.c.b16 %v7095, %v7093
    %v7152 = vpack.c.b16 %v7098, %v7096
    %v7153 = vpack.c.b16 %v7099, %v7097
    %v7154 = vpack.c.b16 %v7102, %v7100
    %v7155 = vpack.c.b16 %v7103, %v7101
    %v7156 = vpack.c.b16 %v7106, %v7104
    %v7157 = vpack.c.b16 %v7107, %v7105
    %v7158 = vpack.c.b16 %v7110, %v7108
    %v7159 = vpack.c.b16 %v7111, %v7109
    %v7160 = vpack.c.b16 %v7114, %v7112
    %v7161 = vpack.c.b16 %v7115, %v7113
    %v7162 = vpack.c.b16 %v7118, %v7116
    %v7163 = vpack.c.b16 %v7119, %v7117
    %v7164 = vpack.c.b16 %v7122, %v7120
    %v7165 = vpack.c.b16 %v7123, %v7121
    %v7166 = vpack.c.b16 %v7126, %v7124
    %v7167 = vpack.c.b16 %v7127, %v7125
    %v7168 = vpack.c.b16 %v7130, %v7128
    %v7169 = vpack.c.b16 %v7131, %v7129
    %v7170 = vpack.c.b16 %v7134, %v7132
    %v7171 = vpack.c.b16 %v7135, %v7133
    %v7172 = vpack.c.b16 %v7138, %v7136
    %v7173 = vpack.c.b16 %v7139, %v7137
    %v7174 = vpack.c.b16 %v7142, %v7140
    %v7175 = vpack.c.b16 %v7143, %v7141
    %7208 = vmatprep.subr.bf16.mxu0 %v7159
    %7209 = vmatpush1.bf16.msra.mxu0 %v7158
    %7210 = vmatprep.subr.bf16.mxu0 %v7157
    %7211 = vmatpush1.bf16.msra.mxu0 %v7156
    %7212 = vmatprep.subr.bf16.mxu0 %v7155
    %7213 = vmatpush1.bf16.msra.mxu0 %v7154
    %7214 = vmatprep.subr.bf16.mxu0 %v7153
    %7215 = vmatpush1.bf16.msra.mxu0 %v7152
    %7216 = vmatprep.subr.bf16.mxu0 %v7151
    %7217 = vmatpush1.bf16.msra.mxu0 %v7150
    %7218 = vmatprep.subr.bf16.mxu0 %v7149
    %7219 = vmatpush1.bf16.msra.mxu0 %v7148
    %7220 = vmatprep.subr.bf16.mxu0 %v7147
    %7221 = vmatpush1.bf16.msra.mxu0 %v7146
    %7222 = vmatprep.subr.bf16.mxu0 %v7145
    %7223 = vmatpush1.bf16.msra.mxu0 %v7144
    %7224 = vmatprep.subr.bf16.mxu0 %v7175
    %7225 = vmatpush2.bf16.msra.mxu0 %v7174
    %7226 = vmatprep.subr.bf16.mxu0 %v7173
    %7227 = vmatpush2.bf16.msra.mxu0 %v7172
    %7228 = vmatprep.subr.bf16.mxu0 %v7171
    %7229 = vmatpush2.bf16.msra.mxu0 %v7170
    %7230 = vmatprep.subr.bf16.mxu0 %v7169
    %7231 = vmatpush2.bf16.msra.mxu0 %v7168
    %7232 = vmatprep.subr.bf16.mxu0 %v7167
    %7233 = vmatpush2.bf16.msra.mxu0 %v7166
    %7234 = vmatprep.subr.bf16.mxu0 %v7165
    %7235 = vmatpush2.bf16.msra.mxu0 %v7164
    %7236 = vmatprep.subr.bf16.mxu0 %v7163
    %7237 = vmatpush2.bf16.msra.mxu0 %v7162
    %7238 = vmatprep.subr.bf16.mxu0 %v7161
    %7239 = vmatpush2.bf16.msra.mxu0 %v7160
    %7240 = vmatprep.mubr.bf16.mxu0 %v7003
    %7241 = vmatmul.mubr.bf16.gmra.mxu0 %v7002
    %v7242 = vpop.f32.mrf.mxu0
    %v7243 = vadd.f32 %v7041, %v7242
    %v7244 = vpop.f32.mrf.mxu0
    %v7245 = vadd.f32 %v7045, %v7244
    %v7246 = vpop.f32.mrf.mxu0
    %v7247 = vpop.f32.mrf.mxu0
    %7248 = vdwg.mxu0
    %vm7249 = vcmp.gt.f32.partialorder %v7243, 0.0
    %vm7250 = vcmp.gt.f32.partialorder %v7245, 0.0
    %v7251 = vmul.f32 %v7243, 0.2
    %v7252 = vmul.f32 %v7245, 0.2
    %v7253 = vsel %vm7249, %v7243, %v7251
    %v7254 = vsel %vm7250, %v7245, %v7252
    %v7255 = vpack.c.bf16 %v7253, %v7253
    %v7256 = vpack.c.bf16 %v7254, %v7254
    %v7257 = vld [vmem:[#allocation48] sm:$0xff]
    %v7258 = vld [vmem:[#allocation48 + $0x8] sm:$0xff]
    %v7259 = vld [vmem:[#allocation48 + $0x10] sm:$0xff]
    %v7260 = vld [vmem:[#allocation48 + $0x18] sm:$0xff]
    %v7261 = vld [vmem:[#allocation48 + $0x20] sm:$0xff]
    %v7262 = vld [vmem:[#allocation48 + $0x28] sm:$0xff]
    %v7263 = vld [vmem:[#allocation48 + $0x30] sm:$0xff]
    %v7264 = vld [vmem:[#allocation48 + $0x38] sm:$0xff]
    %v7265 = vld [vmem:[#allocation48 + $0x40] sm:$0xff]
    %v7266 = vld [vmem:[#allocation48 + $0x48] sm:$0xff]
    %v7267 = vld [vmem:[#allocation48 + $0x50] sm:$0xff]
    %v7268 = vld [vmem:[#allocation48 + $0x58] sm:$0xff]
    %v7269 = vld [vmem:[#allocation48 + $0x60] sm:$0xff]
    %v7270 = vld [vmem:[#allocation48 + $0x68] sm:$0xff]
    %v7271 = vld [vmem:[#allocation48 + $0x70] sm:$0xff]
    %v7272 = vld [vmem:[#allocation48 + $0x78] sm:$0xff]
    %v7273 = vld [vmem:[#allocation48 + $0x80] sm:$0xff]
    %v7274 = vld [vmem:[#allocation48 + $0x88] sm:$0xff]
    %v7275 = vld [vmem:[#allocation48 + $0x90] sm:$0xff]
    %v7276 = vld [vmem:[#allocation48 + $0x98] sm:$0xff]
    %v7277 = vld [vmem:[#allocation48 + $0xa0] sm:$0xff]
    %v7278 = vld [vmem:[#allocation48 + $0xa8] sm:$0xff]
    %v7279 = vld [vmem:[#allocation48 + $0xb0] sm:$0xff]
    %v7280 = vld [vmem:[#allocation48 + $0xb8] sm:$0xff]
    %v7281 = vld [vmem:[#allocation48 + $0xc0] sm:$0xff]
    %v7282 = vld [vmem:[#allocation48 + $0xc8] sm:$0xff]
    %v7283 = vld [vmem:[#allocation48 + $0xd0] sm:$0xff]
    %v7284 = vld [vmem:[#allocation48 + $0xd8] sm:$0xff]
    %v7285 = vld [vmem:[#allocation48 + $0xe0] sm:$0xff]
    %v7286 = vld [vmem:[#allocation48 + $0xe8] sm:$0xff]
    %v7287 = vld [vmem:[#allocation48 + $0xf0] sm:$0xff]
    %v7288 = vld [vmem:[#allocation48 + $0xf8] sm:$0xff]
    %v7289 = vld [vmem:[%s107] sm:$0x3]
    %v7291 = vlaneseq
    %v7292 = vshrl.u32 %v7291, 7
    %v7293 = vsub.s32 0, %v7292
    %v7294 = vrot.slane %v7289, %v7293
    %v7295 = vlaneseq
    %v7296 = vshrl.u32 %v7295, 7
    %v7297 = vsub.s32 1, %v7296
    %v7298 = vrot.slane %v7289, %v7297
    %v7333 = vunpack.c.l.b16 %v7257
    %v7334 = vunpack.c.h.b16 %v7257
    %v7335 = vunpack.c.l.b16 %v7258
    %v7336 = vunpack.c.h.b16 %v7258
    %v7337 = vunpack.c.l.b16 %v7259
    %v7338 = vunpack.c.h.b16 %v7259
    %v7339 = vunpack.c.l.b16 %v7260
    %v7340 = vunpack.c.h.b16 %v7260
    %v7341 = vunpack.c.l.b16 %v7261
    %v7342 = vunpack.c.h.b16 %v7261
    %v7343 = vunpack.c.l.b16 %v7262
    %v7344 = vunpack.c.h.b16 %v7262
    %v7345 = vunpack.c.l.b16 %v7263
    %v7346 = vunpack.c.h.b16 %v7263
    %v7347 = vunpack.c.l.b16 %v7264
    %v7348 = vunpack.c.h.b16 %v7264
    %v7349 = vunpack.c.l.b16 %v7265
    %v7350 = vunpack.c.h.b16 %v7265
    %v7351 = vunpack.c.l.b16 %v7266
    %v7352 = vunpack.c.h.b16 %v7266
    %v7353 = vunpack.c.l.b16 %v7267
    %v7354 = vunpack.c.h.b16 %v7267
    %v7355 = vunpack.c.l.b16 %v7268
    %v7356 = vunpack.c.h.b16 %v7268
    %v7357 = vunpack.c.l.b16 %v7269
    %v7358 = vunpack.c.h.b16 %v7269
    %v7359 = vunpack.c.l.b16 %v7270
    %v7360 = vunpack.c.h.b16 %v7270
    %v7361 = vunpack.c.l.b16 %v7271
    %v7362 = vunpack.c.h.b16 %v7271
    %v7363 = vunpack.c.l.b16 %v7272
    %v7364 = vunpack.c.h.b16 %v7272
    %v7365 = vunpack.c.l.b16 %v7273
    %v7366 = vunpack.c.h.b16 %v7273
    %v7367 = vunpack.c.l.b16 %v7274
    %v7368 = vunpack.c.h.b16 %v7274
    %v7369 = vunpack.c.l.b16 %v7275
    %v7370 = vunpack.c.h.b16 %v7275
    %v7371 = vunpack.c.l.b16 %v7276
    %v7372 = vunpack.c.h.b16 %v7276
    %v7373 = vunpack.c.l.b16 %v7277
    %v7374 = vunpack.c.h.b16 %v7277
    %v7375 = vunpack.c.l.b16 %v7278
    %v7376 = vunpack.c.h.b16 %v7278
    %v7377 = vunpack.c.l.b16 %v7279
    %v7378 = vunpack.c.h.b16 %v7279
    %v7379 = vunpack.c.l.b16 %v7280
    %v7380 = vunpack.c.h.b16 %v7280
    %v7381 = vunpack.c.l.b16 %v7281
    %v7382 = vunpack.c.h.b16 %v7281
    %v7383 = vunpack.c.l.b16 %v7282
    %v7384 = vunpack.c.h.b16 %v7282
    %v7385 = vunpack.c.l.b16 %v7283
    %v7386 = vunpack.c.h.b16 %v7283
    %v7387 = vunpack.c.l.b16 %v7284
    %v7388 = vunpack.c.h.b16 %v7284
    %v7389 = vunpack.c.l.b16 %v7285
    %v7390 = vunpack.c.h.b16 %v7285
    %v7391 = vunpack.c.l.b16 %v7286
    %v7392 = vunpack.c.h.b16 %v7286
    %v7393 = vunpack.c.l.b16 %v7287
    %v7394 = vunpack.c.h.b16 %v7287
    %v7395 = vunpack.c.l.b16 %v7288
    %v7396 = vunpack.c.h.b16 %v7288
    %v7397 = vpack.c.b16 %v7335, %v7333
    %v7398 = vpack.c.b16 %v7336, %v7334
    %v7399 = vpack.c.b16 %v7339, %v7337
    %v7400 = vpack.c.b16 %v7340, %v7338
    %v7401 = vpack.c.b16 %v7343, %v7341
    %v7402 = vpack.c.b16 %v7344, %v7342
    %v7403 = vpack.c.b16 %v7347, %v7345
    %v7404 = vpack.c.b16 %v7348, %v7346
    %v7405 = vpack.c.b16 %v7351, %v7349
    %v7406 = vpack.c.b16 %v7352, %v7350
    %v7407 = vpack.c.b16 %v7355, %v7353
    %v7408 = vpack.c.b16 %v7356, %v7354
    %v7409 = vpack.c.b16 %v7359, %v7357
    %v7410 = vpack.c.b16 %v7360, %v7358
    %v7411 = vpack.c.b16 %v7363, %v7361
    %v7412 = vpack.c.b16 %v7364, %v7362
    %v7413 = vpack.c.b16 %v7367, %v7365
    %v7414 = vpack.c.b16 %v7368, %v7366
    %v7415 = vpack.c.b16 %v7371, %v7369
    %v7416 = vpack.c.b16 %v7372, %v7370
    %v7417 = vpack.c.b16 %v7375, %v7373
    %v7418 = vpack.c.b16 %v7376, %v7374
    %v7419 = vpack.c.b16 %v7379, %v7377
    %v7420 = vpack.c.b16 %v7380, %v7378
    %v7421 = vpack.c.b16 %v7383, %v7381
    %v7422 = vpack.c.b16 %v7384, %v7382
    %v7423 = vpack.c.b16 %v7387, %v7385
    %v7424 = vpack.c.b16 %v7388, %v7386
    %v7425 = vpack.c.b16 %v7391, %v7389
    %v7426 = vpack.c.b16 %v7392, %v7390
    %v7427 = vpack.c.b16 %v7395, %v7393
    %v7428 = vpack.c.b16 %v7396, %v7394
    %7461 = vmatprep.subr.bf16.mxu0 %v7412
    %7462 = vmatpush1.bf16.msra.mxu0 %v7411
    %7463 = vmatprep.subr.bf16.mxu0 %v7410
    %7464 = vmatpush1.bf16.msra.mxu0 %v7409
    %7465 = vmatprep.subr.bf16.mxu0 %v7408
    %7466 = vmatpush1.bf16.msra.mxu0 %v7407
    %7467 = vmatprep.subr.bf16.mxu0 %v7406
    %7468 = vmatpush1.bf16.msra.mxu0 %v7405
    %7469 = vmatprep.subr.bf16.mxu0 %v7404
    %7470 = vmatpush1.bf16.msra.mxu0 %v7403
    %7471 = vmatprep.subr.bf16.mxu0 %v7402
    %7472 = vmatpush1.bf16.msra.mxu0 %v7401
    %7473 = vmatprep.subr.bf16.mxu0 %v7400
    %7474 = vmatpush1.bf16.msra.mxu0 %v7399
    %7475 = vmatprep.subr.bf16.mxu0 %v7398
    %7476 = vmatpush1.bf16.msra.mxu0 %v7397
    %7477 = vmatprep.subr.bf16.mxu0 %v7428
    %7478 = vmatpush2.bf16.msra.mxu0 %v7427
    %7479 = vmatprep.subr.bf16.mxu0 %v7426
    %7480 = vmatpush2.bf16.msra.mxu0 %v7425
    %7481 = vmatprep.subr.bf16.mxu0 %v7424
    %7482 = vmatpush2.bf16.msra.mxu0 %v7423
    %7483 = vmatprep.subr.bf16.mxu0 %v7422
    %7484 = vmatpush2.bf16.msra.mxu0 %v7421
    %7485 = vmatprep.subr.bf16.mxu0 %v7420
    %7486 = vmatpush2.bf16.msra.mxu0 %v7419
    %7487 = vmatprep.subr.bf16.mxu0 %v7418
    %7488 = vmatpush2.bf16.msra.mxu0 %v7417
    %7489 = vmatprep.subr.bf16.mxu0 %v7416
    %7490 = vmatpush2.bf16.msra.mxu0 %v7415
    %7491 = vmatprep.subr.bf16.mxu0 %v7414
    %7492 = vmatpush2.bf16.msra.mxu0 %v7413
    %7493 = vmatprep.mubr.bf16.mxu0 %v7256
    %7494 = vmatmul.mubr.bf16.gmra.mxu0 %v7255
    %v7495 = vpop.f32.mrf.mxu0
    %v7496 = vadd.f32 %v7294, %v7495
    %v7497 = vpop.f32.mrf.mxu0
    %v7498 = vadd.f32 %v7298, %v7497
    %v7499 = vpop.f32.mrf.mxu0
    %v7500 = vpop.f32.mrf.mxu0
    %7501 = vdwg.mxu0
    %vm7502 = vcmp.gt.f32.partialorder %v7496, 0.0
    %vm7503 = vcmp.gt.f32.partialorder %v7498, 0.0
    %v7504 = vmul.f32 %v7496, 0.2
    %v7505 = vmul.f32 %v7498, 0.2
    %v7506 = vsel %vm7502, %v7496, %v7504
    %v7507 = vsel %vm7503, %v7498, %v7505
    %v7508 = vpack.c.bf16 %v7506, %v7506
    %v7509 = vpack.c.bf16 %v7507, %v7507
    %v7510 = vld [vmem:[#allocation49] sm:$0xff]
    %v7511 = vld [vmem:[#allocation49 + $0x8] sm:$0xff]
    %v7512 = vld [vmem:[#allocation49 + $0x10] sm:$0xff]
    %v7513 = vld [vmem:[#allocation49 + $0x18] sm:$0xff]
    %v7514 = vld [vmem:[#allocation49 + $0x20] sm:$0xff]
    %v7515 = vld [vmem:[#allocation49 + $0x28] sm:$0xff]
    %v7516 = vld [vmem:[#allocation49 + $0x30] sm:$0xff]
    %v7517 = vld [vmem:[#allocation49 + $0x38] sm:$0xff]
    %v7518 = vld [vmem:[#allocation49 + $0x40] sm:$0xff]
    %v7519 = vld [vmem:[#allocation49 + $0x48] sm:$0xff]
    %v7520 = vld [vmem:[#allocation49 + $0x50] sm:$0xff]
    %v7521 = vld [vmem:[#allocation49 + $0x58] sm:$0xff]
    %v7522 = vld [vmem:[#allocation49 + $0x60] sm:$0xff]
    %v7523 = vld [vmem:[#allocation49 + $0x68] sm:$0xff]
    %v7524 = vld [vmem:[#allocation49 + $0x70] sm:$0xff]
    %v7525 = vld [vmem:[#allocation49 + $0x78] sm:$0xff]
    %v7526 = vld [vmem:[#allocation49 + $0x80] sm:$0xff]
    %v7527 = vld [vmem:[#allocation49 + $0x88] sm:$0xff]
    %v7528 = vld [vmem:[#allocation49 + $0x90] sm:$0xff]
    %v7529 = vld [vmem:[#allocation49 + $0x98] sm:$0xff]
    %v7530 = vld [vmem:[#allocation49 + $0xa0] sm:$0xff]
    %v7531 = vld [vmem:[#allocation49 + $0xa8] sm:$0xff]
    %v7532 = vld [vmem:[#allocation49 + $0xb0] sm:$0xff]
    %v7533 = vld [vmem:[#allocation49 + $0xb8] sm:$0xff]
    %v7534 = vld [vmem:[#allocation49 + $0xc0] sm:$0xff]
    %v7535 = vld [vmem:[#allocation49 + $0xc8] sm:$0xff]
    %v7536 = vld [vmem:[#allocation49 + $0xd0] sm:$0xff]
    %v7537 = vld [vmem:[#allocation49 + $0xd8] sm:$0xff]
    %v7538 = vld [vmem:[#allocation49 + $0xe0] sm:$0xff]
    %v7539 = vld [vmem:[#allocation49 + $0xe8] sm:$0xff]
    %v7540 = vld [vmem:[#allocation49 + $0xf0] sm:$0xff]
    %v7541 = vld [vmem:[#allocation49 + $0xf8] sm:$0xff]
    %v7542 = vld [vmem:[#allocation49 + $0x100] sm:$0xff]
    %v7543 = vld [vmem:[#allocation49 + $0x108] sm:$0xff]
    %v7544 = vld [vmem:[#allocation49 + $0x110] sm:$0xff]
    %v7545 = vld [vmem:[#allocation49 + $0x118] sm:$0xff]
    %v7546 = vld [vmem:[#allocation49 + $0x120] sm:$0xff]
    %v7547 = vld [vmem:[#allocation49 + $0x128] sm:$0xff]
    %v7548 = vld [vmem:[#allocation49 + $0x130] sm:$0xff]
    %v7549 = vld [vmem:[#allocation49 + $0x138] sm:$0xff]
    %v7550 = vld [vmem:[#allocation49 + $0x140] sm:$0xff]
    %v7551 = vld [vmem:[#allocation49 + $0x148] sm:$0xff]
    %v7552 = vld [vmem:[#allocation49 + $0x150] sm:$0xff]
    %v7553 = vld [vmem:[#allocation49 + $0x158] sm:$0xff]
    %v7554 = vld [vmem:[#allocation49 + $0x160] sm:$0xff]
    %v7555 = vld [vmem:[#allocation49 + $0x168] sm:$0xff]
    %v7556 = vld [vmem:[#allocation49 + $0x170] sm:$0xff]
    %v7557 = vld [vmem:[#allocation49 + $0x178] sm:$0xff]
    %v7558 = vld [vmem:[#allocation49 + $0x180] sm:$0xff]
    %v7559 = vld [vmem:[#allocation49 + $0x188] sm:$0xff]
    %v7560 = vld [vmem:[#allocation49 + $0x190] sm:$0xff]
    %v7561 = vld [vmem:[#allocation49 + $0x198] sm:$0xff]
    %v7562 = vld [vmem:[#allocation49 + $0x1a0] sm:$0xff]
    %v7563 = vld [vmem:[#allocation49 + $0x1a8] sm:$0xff]
    %v7564 = vld [vmem:[#allocation49 + $0x1b0] sm:$0xff]
    %v7565 = vld [vmem:[#allocation49 + $0x1b8] sm:$0xff]
    %v7566 = vld [vmem:[#allocation49 + $0x1c0] sm:$0xff]
    %v7567 = vld [vmem:[#allocation49 + $0x1c8] sm:$0xff]
    %v7568 = vld [vmem:[#allocation49 + $0x1d0] sm:$0xff]
    %v7569 = vld [vmem:[#allocation49 + $0x1d8] sm:$0xff]
    %v7570 = vld [vmem:[#allocation49 + $0x1e0] sm:$0xff]
    %v7571 = vld [vmem:[#allocation49 + $0x1e8] sm:$0xff]
    %v7572 = vld [vmem:[#allocation49 + $0x1f0] sm:$0xff]
    %v7573 = vld [vmem:[#allocation49 + $0x1f8] sm:$0xff]
    %v7574 = vld [vmem:[%s111] sm:$0xf]
    %v7576 = vlaneseq
    %v7577 = vshrl.u32 %v7576, 7
    %v7578 = vsub.s32 0, %v7577
    %v7579 = vrot.slane %v7574, %v7578
    %v7580 = vlaneseq
    %v7581 = vshrl.u32 %v7580, 7
    %v7582 = vsub.s32 1, %v7581
    %v7583 = vrot.slane %v7574, %v7582
    %v7584 = vlaneseq
    %v7585 = vshrl.u32 %v7584, 7
    %v7586 = vsub.s32 2, %v7585
    %v7587 = vrot.slane %v7574, %v7586
    %v7588 = vlaneseq
    %v7589 = vshrl.u32 %v7588, 7
    %v7590 = vsub.s32 3, %v7589
    %v7591 = vrot.slane %v7574, %v7590
    %v7660 = vunpack.c.l.b16 %v7510
    %v7661 = vunpack.c.h.b16 %v7510
    %v7662 = vunpack.c.l.b16 %v7511
    %v7663 = vunpack.c.h.b16 %v7511
    %v7664 = vunpack.c.l.b16 %v7512
    %v7665 = vunpack.c.h.b16 %v7512
    %v7666 = vunpack.c.l.b16 %v7513
    %v7667 = vunpack.c.h.b16 %v7513
    %v7668 = vunpack.c.l.b16 %v7514
    %v7669 = vunpack.c.h.b16 %v7514
    %v7670 = vunpack.c.l.b16 %v7515
    %v7671 = vunpack.c.h.b16 %v7515
    %v7672 = vunpack.c.l.b16 %v7516
    %v7673 = vunpack.c.h.b16 %v7516
    %v7674 = vunpack.c.l.b16 %v7517
    %v7675 = vunpack.c.h.b16 %v7517
    %v7676 = vunpack.c.l.b16 %v7518
    %v7677 = vunpack.c.h.b16 %v7518
    %v7678 = vunpack.c.l.b16 %v7519
    %v7679 = vunpack.c.h.b16 %v7519
    %v7680 = vunpack.c.l.b16 %v7520
    %v7681 = vunpack.c.h.b16 %v7520
    %v7682 = vunpack.c.l.b16 %v7521
    %v7683 = vunpack.c.h.b16 %v7521
    %v7684 = vunpack.c.l.b16 %v7522
    %v7685 = vunpack.c.h.b16 %v7522
    %v7686 = vunpack.c.l.b16 %v7523
    %v7687 = vunpack.c.h.b16 %v7523
    %v7688 = vunpack.c.l.b16 %v7524
    %v7689 = vunpack.c.h.b16 %v7524
    %v7690 = vunpack.c.l.b16 %v7525
    %v7691 = vunpack.c.h.b16 %v7525
    %v7692 = vunpack.c.l.b16 %v7526
    %v7693 = vunpack.c.h.b16 %v7526
    %v7694 = vunpack.c.l.b16 %v7527
    %v7695 = vunpack.c.h.b16 %v7527
    %v7696 = vunpack.c.l.b16 %v7528
    %v7697 = vunpack.c.h.b16 %v7528
    %v7698 = vunpack.c.l.b16 %v7529
    %v7699 = vunpack.c.h.b16 %v7529
    %v7700 = vunpack.c.l.b16 %v7530
    %v7701 = vunpack.c.h.b16 %v7530
    %v7702 = vunpack.c.l.b16 %v7531
    %v7703 = vunpack.c.h.b16 %v7531
    %v7704 = vunpack.c.l.b16 %v7532
    %v7705 = vunpack.c.h.b16 %v7532
    %v7706 = vunpack.c.l.b16 %v7533
    %v7707 = vunpack.c.h.b16 %v7533
    %v7708 = vunpack.c.l.b16 %v7534
    %v7709 = vunpack.c.h.b16 %v7534
    %v7710 = vunpack.c.l.b16 %v7535
    %v7711 = vunpack.c.h.b16 %v7535
    %v7712 = vunpack.c.l.b16 %v7536
    %v7713 = vunpack.c.h.b16 %v7536
    %v7714 = vunpack.c.l.b16 %v7537
    %v7715 = vunpack.c.h.b16 %v7537
    %v7716 = vunpack.c.l.b16 %v7538
    %v7717 = vunpack.c.h.b16 %v7538
    %v7718 = vunpack.c.l.b16 %v7539
    %v7719 = vunpack.c.h.b16 %v7539
    %v7720 = vunpack.c.l.b16 %v7540
    %v7721 = vunpack.c.h.b16 %v7540
    %v7722 = vunpack.c.l.b16 %v7541
    %v7723 = vunpack.c.h.b16 %v7541
    %v7724 = vunpack.c.l.b16 %v7542
    %v7725 = vunpack.c.h.b16 %v7542
    %v7726 = vunpack.c.l.b16 %v7543
    %v7727 = vunpack.c.h.b16 %v7543
    %v7728 = vunpack.c.l.b16 %v7544
    %v7729 = vunpack.c.h.b16 %v7544
    %v7730 = vunpack.c.l.b16 %v7545
    %v7731 = vunpack.c.h.b16 %v7545
    %v7732 = vunpack.c.l.b16 %v7546
    %v7733 = vunpack.c.h.b16 %v7546
    %v7734 = vunpack.c.l.b16 %v7547
    %v7735 = vunpack.c.h.b16 %v7547
    %v7736 = vunpack.c.l.b16 %v7548
    %v7737 = vunpack.c.h.b16 %v7548
    %v7738 = vunpack.c.l.b16 %v7549
    %v7739 = vunpack.c.h.b16 %v7549
    %v7740 = vunpack.c.l.b16 %v7550
    %v7741 = vunpack.c.h.b16 %v7550
    %v7742 = vunpack.c.l.b16 %v7551
    %v7743 = vunpack.c.h.b16 %v7551
    %v7744 = vunpack.c.l.b16 %v7552
    %v7745 = vunpack.c.h.b16 %v7552
    %v7746 = vunpack.c.l.b16 %v7553
    %v7747 = vunpack.c.h.b16 %v7553
    %v7748 = vunpack.c.l.b16 %v7554
    %v7749 = vunpack.c.h.b16 %v7554
    %v7750 = vunpack.c.l.b16 %v7555
    %v7751 = vunpack.c.h.b16 %v7555
    %v7752 = vunpack.c.l.b16 %v7556
    %v7753 = vunpack.c.h.b16 %v7556
    %v7754 = vunpack.c.l.b16 %v7557
    %v7755 = vunpack.c.h.b16 %v7557
    %v7756 = vunpack.c.l.b16 %v7558
    %v7757 = vunpack.c.h.b16 %v7558
    %v7758 = vunpack.c.l.b16 %v7559
    %v7759 = vunpack.c.h.b16 %v7559
    %v7760 = vunpack.c.l.b16 %v7560
    %v7761 = vunpack.c.h.b16 %v7560
    %v7762 = vunpack.c.l.b16 %v7561
    %v7763 = vunpack.c.h.b16 %v7561
    %v7764 = vunpack.c.l.b16 %v7562
    %v7765 = vunpack.c.h.b16 %v7562
    %v7766 = vunpack.c.l.b16 %v7563
    %v7767 = vunpack.c.h.b16 %v7563
    %v7768 = vunpack.c.l.b16 %v7564
    %v7769 = vunpack.c.h.b16 %v7564
    %v7770 = vunpack.c.l.b16 %v7565
    %v7771 = vunpack.c.h.b16 %v7565
    %v7772 = vunpack.c.l.b16 %v7566
    %v7773 = vunpack.c.h.b16 %v7566
    %v7774 = vunpack.c.l.b16 %v7567
    %v7775 = vunpack.c.h.b16 %v7567
    %v7776 = vunpack.c.l.b16 %v7568
    %v7777 = vunpack.c.h.b16 %v7568
    %v7778 = vunpack.c.l.b16 %v7569
    %v7779 = vunpack.c.h.b16 %v7569
    %v7780 = vunpack.c.l.b16 %v7570
    %v7781 = vunpack.c.h.b16 %v7570
    %v7782 = vunpack.c.l.b16 %v7571
    %v7783 = vunpack.c.h.b16 %v7571
    %v7784 = vunpack.c.l.b16 %v7572
    %v7785 = vunpack.c.h.b16 %v7572
    %v7786 = vunpack.c.l.b16 %v7573
    %v7787 = vunpack.c.h.b16 %v7573
    %v7788 = vpack.c.b16 %v7664, %v7660
    %v7789 = vpack.c.b16 %v7665, %v7661
    %v7790 = vpack.c.b16 %v7666, %v7662
    %v7791 = vpack.c.b16 %v7667, %v7663
    %v7792 = vpack.c.b16 %v7672, %v7668
    %v7793 = vpack.c.b16 %v7673, %v7669
    %v7794 = vpack.c.b16 %v7674, %v7670
    %v7795 = vpack.c.b16 %v7675, %v7671
    %v7796 = vpack.c.b16 %v7680, %v7676
    %v7797 = vpack.c.b16 %v7681, %v7677
    %v7798 = vpack.c.b16 %v7682, %v7678
    %v7799 = vpack.c.b16 %v7683, %v7679
    %v7800 = vpack.c.b16 %v7688, %v7684
    %v7801 = vpack.c.b16 %v7689, %v7685
    %v7802 = vpack.c.b16 %v7690, %v7686
    %v7803 = vpack.c.b16 %v7691, %v7687
    %v7804 = vpack.c.b16 %v7696, %v7692
    %v7805 = vpack.c.b16 %v7697, %v7693
    %v7806 = vpack.c.b16 %v7698, %v7694
    %v7807 = vpack.c.b16 %v7699, %v7695
    %v7808 = vpack.c.b16 %v7704, %v7700
    %v7809 = vpack.c.b16 %v7705, %v7701
    %v7810 = vpack.c.b16 %v7706, %v7702
    %v7811 = vpack.c.b16 %v7707, %v7703
    %v7812 = vpack.c.b16 %v7712, %v7708
    %v7813 = vpack.c.b16 %v7713, %v7709
    %v7814 = vpack.c.b16 %v7714, %v7710
    %v7815 = vpack.c.b16 %v7715, %v7711
    %v7816 = vpack.c.b16 %v7720, %v7716
    %v7817 = vpack.c.b16 %v7721, %v7717
    %v7818 = vpack.c.b16 %v7722, %v7718
    %v7819 = vpack.c.b16 %v7723, %v7719
    %v7820 = vpack.c.b16 %v7728, %v7724
    %v7821 = vpack.c.b16 %v7729, %v7725
    %v7822 = vpack.c.b16 %v7730, %v7726
    %v7823 = vpack.c.b16 %v7731, %v7727
    %v7824 = vpack.c.b16 %v7736, %v7732
    %v7825 = vpack.c.b16 %v7737, %v7733
    %v7826 = vpack.c.b16 %v7738, %v7734
    %v7827 = vpack.c.b16 %v7739, %v7735
    %v7828 = vpack.c.b16 %v7744, %v7740
    %v7829 = vpack.c.b16 %v7745, %v7741
    %v7830 = vpack.c.b16 %v7746, %v7742
    %v7831 = vpack.c.b16 %v7747, %v7743
    %v7832 = vpack.c.b16 %v7752, %v7748
    %v7833 = vpack.c.b16 %v7753, %v7749
    %v7834 = vpack.c.b16 %v7754, %v7750
    %v7835 = vpack.c.b16 %v7755, %v7751
    %v7836 = vpack.c.b16 %v7760, %v7756
    %v7837 = vpack.c.b16 %v7761, %v7757
    %v7838 = vpack.c.b16 %v7762, %v7758
    %v7839 = vpack.c.b16 %v7763, %v7759
    %v7840 = vpack.c.b16 %v7768, %v7764
    %v7841 = vpack.c.b16 %v7769, %v7765
    %v7842 = vpack.c.b16 %v7770, %v7766
    %v7843 = vpack.c.b16 %v7771, %v7767
    %v7844 = vpack.c.b16 %v7776, %v7772
    %v7845 = vpack.c.b16 %v7777, %v7773
    %v7846 = vpack.c.b16 %v7778, %v7774
    %v7847 = vpack.c.b16 %v7779, %v7775
    %v7848 = vpack.c.b16 %v7784, %v7780
    %v7849 = vpack.c.b16 %v7785, %v7781
    %v7850 = vpack.c.b16 %v7786, %v7782
    %v7851 = vpack.c.b16 %v7787, %v7783
    %7916 = vmatprep.subr.bf16.mxu0 %v7817
    %7917 = vmatpush1.bf16.msra.mxu0 %v7816
    %7918 = vmatprep.subr.bf16.mxu0 %v7813
    %7919 = vmatpush1.bf16.msra.mxu0 %v7812
    %7920 = vmatprep.subr.bf16.mxu0 %v7809
    %7921 = vmatpush1.bf16.msra.mxu0 %v7808
    %7922 = vmatprep.subr.bf16.mxu0 %v7805
    %7923 = vmatpush1.bf16.msra.mxu0 %v7804
    %7924 = vmatprep.subr.bf16.mxu0 %v7801
    %7925 = vmatpush1.bf16.msra.mxu0 %v7800
    %7926 = vmatprep.subr.bf16.mxu0 %v7797
    %7927 = vmatpush1.bf16.msra.mxu0 %v7796
    %7928 = vmatprep.subr.bf16.mxu0 %v7793
    %7929 = vmatpush1.bf16.msra.mxu0 %v7792
    %7930 = vmatprep.subr.bf16.mxu0 %v7789
    %7931 = vmatpush1.bf16.msra.mxu0 %v7788
    %7932 = vmatprep.subr.bf16.mxu0 %v7849
    %7933 = vmatpush2.bf16.msra.mxu0 %v7848
    %7934 = vmatprep.subr.bf16.mxu0 %v7845
    %7935 = vmatpush2.bf16.msra.mxu0 %v7844
    %7936 = vmatprep.subr.bf16.mxu0 %v7841
    %7937 = vmatpush2.bf16.msra.mxu0 %v7840
    %7938 = vmatprep.subr.bf16.mxu0 %v7837
    %7939 = vmatpush2.bf16.msra.mxu0 %v7836
    %7940 = vmatprep.subr.bf16.mxu0 %v7833
    %7941 = vmatpush2.bf16.msra.mxu0 %v7832
    %7942 = vmatprep.subr.bf16.mxu0 %v7829
    %7943 = vmatpush2.bf16.msra.mxu0 %v7828
    %7944 = vmatprep.subr.bf16.mxu0 %v7825
    %7945 = vmatpush2.bf16.msra.mxu0 %v7824
    %7946 = vmatprep.subr.bf16.mxu0 %v7821
    %7947 = vmatpush2.bf16.msra.mxu0 %v7820
    %7948 = vmatprep.mubr.bf16.mxu0 %v7509
    %7949 = vmatmul.mubr.bf16.gmra.mxu0 %v7508
    %v7950 = vpop.f32.mrf.mxu0
    %v7951 = vadd.f32 %v7579, %v7950
    %v7952 = vpop.f32.mrf.mxu0
    %v7953 = vadd.f32 %v7583, %v7952
    %v7954 = vpop.f32.mrf.mxu0
    %v7955 = vpop.f32.mrf.mxu0
    %7956 = vdwg.mxu0
    %7957 = vmatprep.subr.bf16.mxu0 %v7819
    %7958 = vmatpush1.bf16.msra.mxu0 %v7818
    %7959 = vmatprep.subr.bf16.mxu0 %v7815
    %7960 = vmatpush1.bf16.msra.mxu0 %v7814
    %7961 = vmatprep.subr.bf16.mxu0 %v7811
    %7962 = vmatpush1.bf16.msra.mxu0 %v7810
    %7963 = vmatprep.subr.bf16.mxu0 %v7807
    %7964 = vmatpush1.bf16.msra.mxu0 %v7806
    %7965 = vmatprep.subr.bf16.mxu0 %v7803
    %7966 = vmatpush1.bf16.msra.mxu0 %v7802
    %7967 = vmatprep.subr.bf16.mxu0 %v7799
    %7968 = vmatpush1.bf16.msra.mxu0 %v7798
    %7969 = vmatprep.subr.bf16.mxu0 %v7795
    %7970 = vmatpush1.bf16.msra.mxu0 %v7794
    %7971 = vmatprep.subr.bf16.mxu0 %v7791
    %7972 = vmatpush1.bf16.msra.mxu0 %v7790
    %7973 = vmatprep.subr.bf16.mxu0 %v7851
    %7974 = vmatpush2.bf16.msra.mxu0 %v7850
    %7975 = vmatprep.subr.bf16.mxu0 %v7847
    %7976 = vmatpush2.bf16.msra.mxu0 %v7846
    %7977 = vmatprep.subr.bf16.mxu0 %v7843
    %7978 = vmatpush2.bf16.msra.mxu0 %v7842
    %7979 = vmatprep.subr.bf16.mxu0 %v7839
    %7980 = vmatpush2.bf16.msra.mxu0 %v7838
    %7981 = vmatprep.subr.bf16.mxu0 %v7835
    %7982 = vmatpush2.bf16.msra.mxu0 %v7834
    %7983 = vmatprep.subr.bf16.mxu0 %v7831
    %7984 = vmatpush2.bf16.msra.mxu0 %v7830
    %7985 = vmatprep.subr.bf16.mxu0 %v7827
    %7986 = vmatpush2.bf16.msra.mxu0 %v7826
    %7987 = vmatprep.subr.bf16.mxu0 %v7823
    %7988 = vmatpush2.bf16.msra.mxu0 %v7822
    %7989 = vmatprep.mubr.bf16.mxu0 %v7509
    %7990 = vmatmul.mubr.bf16.gmra.mxu0 %v7508
    %v7991 = vpop.f32.mrf.mxu0
    %v7992 = vadd.f32 %v7587, %v7991
    %v7993 = vpop.f32.mrf.mxu0
    %v7994 = vadd.f32 %v7591, %v7993
    %v7995 = vpop.f32.mrf.mxu0
    %v7996 = vpop.f32.mrf.mxu0
    %7997 = vdwg.mxu0
    %v7998 = vpack.c.bf16 %v7000, %v7000
    %v7999 = vpack.c.bf16 %v7001, %v7001
    %v8000 = vld [vmem:[#allocation51] sm:$0xff]
    %v8001 = vld [vmem:[#allocation51 + $0x8] sm:$0xff]
    %v8002 = vld [vmem:[#allocation51 + $0x10] sm:$0xff]
    %v8003 = vld [vmem:[#allocation51 + $0x18] sm:$0xff]
    %v8004 = vld [vmem:[#allocation51 + $0x20] sm:$0xff]
    %v8005 = vld [vmem:[#allocation51 + $0x28] sm:$0xff]
    %v8006 = vld [vmem:[#allocation51 + $0x30] sm:$0xff]
    %v8007 = vld [vmem:[#allocation51 + $0x38] sm:$0xff]
    %v8008 = vld [vmem:[#allocation51 + $0x40] sm:$0xff]
    %v8009 = vld [vmem:[#allocation51 + $0x48] sm:$0xff]
    %v8010 = vld [vmem:[#allocation51 + $0x50] sm:$0xff]
    %v8011 = vld [vmem:[#allocation51 + $0x58] sm:$0xff]
    %v8012 = vld [vmem:[#allocation51 + $0x60] sm:$0xff]
    %v8013 = vld [vmem:[#allocation51 + $0x68] sm:$0xff]
    %v8014 = vld [vmem:[#allocation51 + $0x70] sm:$0xff]
    %v8015 = vld [vmem:[#allocation51 + $0x78] sm:$0xff]
    %v8016 = vld [vmem:[#allocation51 + $0x80] sm:$0xff]
    %v8017 = vld [vmem:[#allocation51 + $0x88] sm:$0xff]
    %v8018 = vld [vmem:[#allocation51 + $0x90] sm:$0xff]
    %v8019 = vld [vmem:[#allocation51 + $0x98] sm:$0xff]
    %v8020 = vld [vmem:[#allocation51 + $0xa0] sm:$0xff]
    %v8021 = vld [vmem:[#allocation51 + $0xa8] sm:$0xff]
    %v8022 = vld [vmem:[#allocation51 + $0xb0] sm:$0xff]
    %v8023 = vld [vmem:[#allocation51 + $0xb8] sm:$0xff]
    %v8024 = vld [vmem:[#allocation51 + $0xc0] sm:$0xff]
    %v8025 = vld [vmem:[#allocation51 + $0xc8] sm:$0xff]
    %v8026 = vld [vmem:[#allocation51 + $0xd0] sm:$0xff]
    %v8027 = vld [vmem:[#allocation51 + $0xd8] sm:$0xff]
    %v8028 = vld [vmem:[#allocation51 + $0xe0] sm:$0xff]
    %v8029 = vld [vmem:[#allocation51 + $0xe8] sm:$0xff]
    %v8030 = vld [vmem:[#allocation51 + $0xf0] sm:$0xff]
    %v8031 = vld [vmem:[#allocation51 + $0xf8] sm:$0xff]
    %v8032 = vld [vmem:[%s115] sm:$0x3]
    %v8034 = vlaneseq
    %v8035 = vshrl.u32 %v8034, 7
    %v8036 = vsub.s32 0, %v8035
    %v8037 = vrot.slane %v8032, %v8036
    %v8038 = vlaneseq
    %v8039 = vshrl.u32 %v8038, 7
    %v8040 = vsub.s32 1, %v8039
    %v8041 = vrot.slane %v8032, %v8040
    %v8076 = vunpack.c.l.b16 %v8000
    %v8077 = vunpack.c.h.b16 %v8000
    %v8078 = vunpack.c.l.b16 %v8001
    %v8079 = vunpack.c.h.b16 %v8001
    %v8080 = vunpack.c.l.b16 %v8002
    %v8081 = vunpack.c.h.b16 %v8002
    %v8082 = vunpack.c.l.b16 %v8003
    %v8083 = vunpack.c.h.b16 %v8003
    %v8084 = vunpack.c.l.b16 %v8004
    %v8085 = vunpack.c.h.b16 %v8004
    %v8086 = vunpack.c.l.b16 %v8005
    %v8087 = vunpack.c.h.b16 %v8005
    %v8088 = vunpack.c.l.b16 %v8006
    %v8089 = vunpack.c.h.b16 %v8006
    %v8090 = vunpack.c.l.b16 %v8007
    %v8091 = vunpack.c.h.b16 %v8007
    %v8092 = vunpack.c.l.b16 %v8008
    %v8093 = vunpack.c.h.b16 %v8008
    %v8094 = vunpack.c.l.b16 %v8009
    %v8095 = vunpack.c.h.b16 %v8009
    %v8096 = vunpack.c.l.b16 %v8010
    %v8097 = vunpack.c.h.b16 %v8010
    %v8098 = vunpack.c.l.b16 %v8011
    %v8099 = vunpack.c.h.b16 %v8011
    %v8100 = vunpack.c.l.b16 %v8012
    %v8101 = vunpack.c.h.b16 %v8012
    %v8102 = vunpack.c.l.b16 %v8013
    %v8103 = vunpack.c.h.b16 %v8013
    %v8104 = vunpack.c.l.b16 %v8014
    %v8105 = vunpack.c.h.b16 %v8014
    %v8106 = vunpack.c.l.b16 %v8015
    %v8107 = vunpack.c.h.b16 %v8015
    %v8108 = vunpack.c.l.b16 %v8016
    %v8109 = vunpack.c.h.b16 %v8016
    %v8110 = vunpack.c.l.b16 %v8017
    %v8111 = vunpack.c.h.b16 %v8017
    %v8112 = vunpack.c.l.b16 %v8018
    %v8113 = vunpack.c.h.b16 %v8018
    %v8114 = vunpack.c.l.b16 %v8019
    %v8115 = vunpack.c.h.b16 %v8019
    %v8116 = vunpack.c.l.b16 %v8020
    %v8117 = vunpack.c.h.b16 %v8020
    %v8118 = vunpack.c.l.b16 %v8021
    %v8119 = vunpack.c.h.b16 %v8021
    %v8120 = vunpack.c.l.b16 %v8022
    %v8121 = vunpack.c.h.b16 %v8022
    %v8122 = vunpack.c.l.b16 %v8023
    %v8123 = vunpack.c.h.b16 %v8023
    %v8124 = vunpack.c.l.b16 %v8024
    %v8125 = vunpack.c.h.b16 %v8024
    %v8126 = vunpack.c.l.b16 %v8025
    %v8127 = vunpack.c.h.b16 %v8025
    %v8128 = vunpack.c.l.b16 %v8026
    %v8129 = vunpack.c.h.b16 %v8026
    %v8130 = vunpack.c.l.b16 %v8027
    %v8131 = vunpack.c.h.b16 %v8027
    %v8132 = vunpack.c.l.b16 %v8028
    %v8133 = vunpack.c.h.b16 %v8028
    %v8134 = vunpack.c.l.b16 %v8029
    %v8135 = vunpack.c.h.b16 %v8029
    %v8136 = vunpack.c.l.b16 %v8030
    %v8137 = vunpack.c.h.b16 %v8030
    %v8138 = vunpack.c.l.b16 %v8031
    %v8139 = vunpack.c.h.b16 %v8031
    %v8140 = vpack.c.b16 %v8078, %v8076
    %v8141 = vpack.c.b16 %v8079, %v8077
    %v8142 = vpack.c.b16 %v8082, %v8080
    %v8143 = vpack.c.b16 %v8083, %v8081
    %v8144 = vpack.c.b16 %v8086, %v8084
    %v8145 = vpack.c.b16 %v8087, %v8085
    %v8146 = vpack.c.b16 %v8090, %v8088
    %v8147 = vpack.c.b16 %v8091, %v8089
    %v8148 = vpack.c.b16 %v8094, %v8092
    %v8149 = vpack.c.b16 %v8095, %v8093
    %v8150 = vpack.c.b16 %v8098, %v8096
    %v8151 = vpack.c.b16 %v8099, %v8097
    %v8152 = vpack.c.b16 %v8102, %v8100
    %v8153 = vpack.c.b16 %v8103, %v8101
    %v8154 = vpack.c.b16 %v8106, %v8104
    %v8155 = vpack.c.b16 %v8107, %v8105
    %v8156 = vpack.c.b16 %v8110, %v8108
    %v8157 = vpack.c.b16 %v8111, %v8109
    %v8158 = vpack.c.b16 %v8114, %v8112
    %v8159 = vpack.c.b16 %v8115, %v8113
    %v8160 = vpack.c.b16 %v8118, %v8116
    %v8161 = vpack.c.b16 %v8119, %v8117
    %v8162 = vpack.c.b16 %v8122, %v8120
    %v8163 = vpack.c.b16 %v8123, %v8121
    %v8164 = vpack.c.b16 %v8126, %v8124
    %v8165 = vpack.c.b16 %v8127, %v8125
    %v8166 = vpack.c.b16 %v8130, %v8128
    %v8167 = vpack.c.b16 %v8131, %v8129
    %v8168 = vpack.c.b16 %v8134, %v8132
    %v8169 = vpack.c.b16 %v8135, %v8133
    %v8170 = vpack.c.b16 %v8138, %v8136
    %v8171 = vpack.c.b16 %v8139, %v8137
    %8204 = vmatprep.subr.bf16.mxu0 %v8155
    %8205 = vmatpush1.bf16.msra.mxu0 %v8154
    %8206 = vmatprep.subr.bf16.mxu0 %v8153
    %8207 = vmatpush1.bf16.msra.mxu0 %v8152
    %8208 = vmatprep.subr.bf16.mxu0 %v8151
    %8209 = vmatpush1.bf16.msra.mxu0 %v8150
    %8210 = vmatprep.subr.bf16.mxu0 %v8149
    %8211 = vmatpush1.bf16.msra.mxu0 %v8148
    %8212 = vmatprep.subr.bf16.mxu0 %v8147
    %8213 = vmatpush1.bf16.msra.mxu0 %v8146
    %8214 = vmatprep.subr.bf16.mxu0 %v8145
    %8215 = vmatpush1.bf16.msra.mxu0 %v8144
    %8216 = vmatprep.subr.bf16.mxu0 %v8143
    %8217 = vmatpush1.bf16.msra.mxu0 %v8142
    %8218 = vmatprep.subr.bf16.mxu0 %v8141
    %8219 = vmatpush1.bf16.msra.mxu0 %v8140
    %8220 = vmatprep.subr.bf16.mxu0 %v8171
    %8221 = vmatpush2.bf16.msra.mxu0 %v8170
    %8222 = vmatprep.subr.bf16.mxu0 %v8169
    %8223 = vmatpush2.bf16.msra.mxu0 %v8168
    %8224 = vmatprep.subr.bf16.mxu0 %v8167
    %8225 = vmatpush2.bf16.msra.mxu0 %v8166
    %8226 = vmatprep.subr.bf16.mxu0 %v8165
    %8227 = vmatpush2.bf16.msra.mxu0 %v8164
    %8228 = vmatprep.subr.bf16.mxu0 %v8163
    %8229 = vmatpush2.bf16.msra.mxu0 %v8162
    %8230 = vmatprep.subr.bf16.mxu0 %v8161
    %8231 = vmatpush2.bf16.msra.mxu0 %v8160
    %8232 = vmatprep.subr.bf16.mxu0 %v8159
    %8233 = vmatpush2.bf16.msra.mxu0 %v8158
    %8234 = vmatprep.subr.bf16.mxu0 %v8157
    %8235 = vmatpush2.bf16.msra.mxu0 %v8156
    %8236 = vmatprep.mubr.bf16.mxu0 %v7999
    %8237 = vmatmul.mubr.bf16.gmra.mxu0 %v7998
    %v8238 = vpop.f32.mrf.mxu0
    %v8239 = vadd.f32 %v8037, %v8238
    %v8240 = vpop.f32.mrf.mxu0
    %v8241 = vadd.f32 %v8041, %v8240
    %v8242 = vpop.f32.mrf.mxu0
    %v8243 = vpop.f32.mrf.mxu0
    %8244 = vdwg.mxu0
    %vm8245 = vcmp.gt.f32.partialorder %v8239, 0.0
    %vm8246 = vcmp.gt.f32.partialorder %v8241, 0.0
    %v8247 = vmul.f32 %v8239, 0.2
    %v8248 = vmul.f32 %v8241, 0.2
    %v8249 = vsel %vm8245, %v8239, %v8247
    %v8250 = vsel %vm8246, %v8241, %v8248
    %v8251 = vpack.c.bf16 %v8249, %v8249
    %v8252 = vpack.c.bf16 %v8250, %v8250
    %v8253 = vld [vmem:[#allocation52] sm:$0xff]
    %v8254 = vld [vmem:[#allocation52 + $0x8] sm:$0xff]
    %v8255 = vld [vmem:[#allocation52 + $0x10] sm:$0xff]
    %v8256 = vld [vmem:[#allocation52 + $0x18] sm:$0xff]
    %v8257 = vld [vmem:[#allocation52 + $0x20] sm:$0xff]
    %v8258 = vld [vmem:[#allocation52 + $0x28] sm:$0xff]
    %v8259 = vld [vmem:[#allocation52 + $0x30] sm:$0xff]
    %v8260 = vld [vmem:[#allocation52 + $0x38] sm:$0xff]
    %v8261 = vld [vmem:[#allocation52 + $0x40] sm:$0xff]
    %v8262 = vld [vmem:[#allocation52 + $0x48] sm:$0xff]
    %v8263 = vld [vmem:[#allocation52 + $0x50] sm:$0xff]
    %v8264 = vld [vmem:[#allocation52 + $0x58] sm:$0xff]
    %v8265 = vld [vmem:[#allocation52 + $0x60] sm:$0xff]
    %v8266 = vld [vmem:[#allocation52 + $0x68] sm:$0xff]
    %v8267 = vld [vmem:[#allocation52 + $0x70] sm:$0xff]
    %v8268 = vld [vmem:[#allocation52 + $0x78] sm:$0xff]
    %v8269 = vld [vmem:[#allocation52 + $0x80] sm:$0xff]
    %v8270 = vld [vmem:[#allocation52 + $0x88] sm:$0xff]
    %v8271 = vld [vmem:[#allocation52 + $0x90] sm:$0xff]
    %v8272 = vld [vmem:[#allocation52 + $0x98] sm:$0xff]
    %v8273 = vld [vmem:[#allocation52 + $0xa0] sm:$0xff]
    %v8274 = vld [vmem:[#allocation52 + $0xa8] sm:$0xff]
    %v8275 = vld [vmem:[#allocation52 + $0xb0] sm:$0xff]
    %v8276 = vld [vmem:[#allocation52 + $0xb8] sm:$0xff]
    %v8277 = vld [vmem:[#allocation52 + $0xc0] sm:$0xff]
    %v8278 = vld [vmem:[#allocation52 + $0xc8] sm:$0xff]
    %v8279 = vld [vmem:[#allocation52 + $0xd0] sm:$0xff]
    %v8280 = vld [vmem:[#allocation52 + $0xd8] sm:$0xff]
    %v8281 = vld [vmem:[#allocation52 + $0xe0] sm:$0xff]
    %v8282 = vld [vmem:[#allocation52 + $0xe8] sm:$0xff]
    %v8283 = vld [vmem:[#allocation52 + $0xf0] sm:$0xff]
    %v8284 = vld [vmem:[#allocation52 + $0xf8] sm:$0xff]
    %v8285 = vld [vmem:[%s119] sm:$0x3]
    %v8287 = vlaneseq
    %v8288 = vshrl.u32 %v8287, 7
    %v8289 = vsub.s32 0, %v8288
    %v8290 = vrot.slane %v8285, %v8289
    %v8291 = vlaneseq
    %v8292 = vshrl.u32 %v8291, 7
    %v8293 = vsub.s32 1, %v8292
    %v8294 = vrot.slane %v8285, %v8293
    %v8329 = vunpack.c.l.b16 %v8253
    %v8330 = vunpack.c.h.b16 %v8253
    %v8331 = vunpack.c.l.b16 %v8254
    %v8332 = vunpack.c.h.b16 %v8254
    %v8333 = vunpack.c.l.b16 %v8255
    %v8334 = vunpack.c.h.b16 %v8255
    %v8335 = vunpack.c.l.b16 %v8256
    %v8336 = vunpack.c.h.b16 %v8256
    %v8337 = vunpack.c.l.b16 %v8257
    %v8338 = vunpack.c.h.b16 %v8257
    %v8339 = vunpack.c.l.b16 %v8258
    %v8340 = vunpack.c.h.b16 %v8258
    %v8341 = vunpack.c.l.b16 %v8259
    %v8342 = vunpack.c.h.b16 %v8259
    %v8343 = vunpack.c.l.b16 %v8260
    %v8344 = vunpack.c.h.b16 %v8260
    %v8345 = vunpack.c.l.b16 %v8261
    %v8346 = vunpack.c.h.b16 %v8261
    %v8347 = vunpack.c.l.b16 %v8262
    %v8348 = vunpack.c.h.b16 %v8262
    %v8349 = vunpack.c.l.b16 %v8263
    %v8350 = vunpack.c.h.b16 %v8263
    %v8351 = vunpack.c.l.b16 %v8264
    %v8352 = vunpack.c.h.b16 %v8264
    %v8353 = vunpack.c.l.b16 %v8265
    %v8354 = vunpack.c.h.b16 %v8265
    %v8355 = vunpack.c.l.b16 %v8266
    %v8356 = vunpack.c.h.b16 %v8266
    %v8357 = vunpack.c.l.b16 %v8267
    %v8358 = vunpack.c.h.b16 %v8267
    %v8359 = vunpack.c.l.b16 %v8268
    %v8360 = vunpack.c.h.b16 %v8268
    %v8361 = vunpack.c.l.b16 %v8269
    %v8362 = vunpack.c.h.b16 %v8269
    %v8363 = vunpack.c.l.b16 %v8270
    %v8364 = vunpack.c.h.b16 %v8270
    %v8365 = vunpack.c.l.b16 %v8271
    %v8366 = vunpack.c.h.b16 %v8271
    %v8367 = vunpack.c.l.b16 %v8272
    %v8368 = vunpack.c.h.b16 %v8272
    %v8369 = vunpack.c.l.b16 %v8273
    %v8370 = vunpack.c.h.b16 %v8273
    %v8371 = vunpack.c.l.b16 %v8274
    %v8372 = vunpack.c.h.b16 %v8274
    %v8373 = vunpack.c.l.b16 %v8275
    %v8374 = vunpack.c.h.b16 %v8275
    %v8375 = vunpack.c.l.b16 %v8276
    %v8376 = vunpack.c.h.b16 %v8276
    %v8377 = vunpack.c.l.b16 %v8277
    %v8378 = vunpack.c.h.b16 %v8277
    %v8379 = vunpack.c.l.b16 %v8278
    %v8380 = vunpack.c.h.b16 %v8278
    %v8381 = vunpack.c.l.b16 %v8279
    %v8382 = vunpack.c.h.b16 %v8279
    %v8383 = vunpack.c.l.b16 %v8280
    %v8384 = vunpack.c.h.b16 %v8280
    %v8385 = vunpack.c.l.b16 %v8281
    %v8386 = vunpack.c.h.b16 %v8281
    %v8387 = vunpack.c.l.b16 %v8282
    %v8388 = vunpack.c.h.b16 %v8282
    %v8389 = vunpack.c.l.b16 %v8283
    %v8390 = vunpack.c.h.b16 %v8283
    %v8391 = vunpack.c.l.b16 %v8284
    %v8392 = vunpack.c.h.b16 %v8284
    %v8393 = vpack.c.b16 %v8331, %v8329
    %v8394 = vpack.c.b16 %v8332, %v8330
    %v8395 = vpack.c.b16 %v8335, %v8333
    %v8396 = vpack.c.b16 %v8336, %v8334
    %v8397 = vpack.c.b16 %v8339, %v8337
    %v8398 = vpack.c.b16 %v8340, %v8338
    %v8399 = vpack.c.b16 %v8343, %v8341
    %v8400 = vpack.c.b16 %v8344, %v8342
    %v8401 = vpack.c.b16 %v8347, %v8345
    %v8402 = vpack.c.b16 %v8348, %v8346
    %v8403 = vpack.c.b16 %v8351, %v8349
    %v8404 = vpack.c.b16 %v8352, %v8350
    %v8405 = vpack.c.b16 %v8355, %v8353
    %v8406 = vpack.c.b16 %v8356, %v8354
    %v8407 = vpack.c.b16 %v8359, %v8357
    %v8408 = vpack.c.b16 %v8360, %v8358
    %v8409 = vpack.c.b16 %v8363, %v8361
    %v8410 = vpack.c.b16 %v8364, %v8362
    %v8411 = vpack.c.b16 %v8367, %v8365
    %v8412 = vpack.c.b16 %v8368, %v8366
    %v8413 = vpack.c.b16 %v8371, %v8369
    %v8414 = vpack.c.b16 %v8372, %v8370
    %v8415 = vpack.c.b16 %v8375, %v8373
    %v8416 = vpack.c.b16 %v8376, %v8374
    %v8417 = vpack.c.b16 %v8379, %v8377
    %v8418 = vpack.c.b16 %v8380, %v8378
    %v8419 = vpack.c.b16 %v8383, %v8381
    %v8420 = vpack.c.b16 %v8384, %v8382
    %v8421 = vpack.c.b16 %v8387, %v8385
    %v8422 = vpack.c.b16 %v8388, %v8386
    %v8423 = vpack.c.b16 %v8391, %v8389
    %v8424 = vpack.c.b16 %v8392, %v8390
    %8457 = vmatprep.subr.bf16.mxu0 %v8408
    %8458 = vmatpush1.bf16.msra.mxu0 %v8407
    %8459 = vmatprep.subr.bf16.mxu0 %v8406
    %8460 = vmatpush1.bf16.msra.mxu0 %v8405
    %8461 = vmatprep.subr.bf16.mxu0 %v8404
    %8462 = vmatpush1.bf16.msra.mxu0 %v8403
    %8463 = vmatprep.subr.bf16.mxu0 %v8402
    %8464 = vmatpush1.bf16.msra.mxu0 %v8401
    %8465 = vmatprep.subr.bf16.mxu0 %v8400
    %8466 = vmatpush1.bf16.msra.mxu0 %v8399
    %8467 = vmatprep.subr.bf16.mxu0 %v8398
    %8468 = vmatpush1.bf16.msra.mxu0 %v8397
    %8469 = vmatprep.subr.bf16.mxu0 %v8396
    %8470 = vmatpush1.bf16.msra.mxu0 %v8395
    %8471 = vmatprep.subr.bf16.mxu0 %v8394
    %8472 = vmatpush1.bf16.msra.mxu0 %v8393
    %8473 = vmatprep.subr.bf16.mxu0 %v8424
    %8474 = vmatpush2.bf16.msra.mxu0 %v8423
    %8475 = vmatprep.subr.bf16.mxu0 %v8422
    %8476 = vmatpush2.bf16.msra.mxu0 %v8421
    %8477 = vmatprep.subr.bf16.mxu0 %v8420
    %8478 = vmatpush2.bf16.msra.mxu0 %v8419
    %8479 = vmatprep.subr.bf16.mxu0 %v8418
    %8480 = vmatpush2.bf16.msra.mxu0 %v8417
    %8481 = vmatprep.subr.bf16.mxu0 %v8416
    %8482 = vmatpush2.bf16.msra.mxu0 %v8415
    %8483 = vmatprep.subr.bf16.mxu0 %v8414
    %8484 = vmatpush2.bf16.msra.mxu0 %v8413
    %8485 = vmatprep.subr.bf16.mxu0 %v8412
    %8486 = vmatpush2.bf16.msra.mxu0 %v8411
    %8487 = vmatprep.subr.bf16.mxu0 %v8410
    %8488 = vmatpush2.bf16.msra.mxu0 %v8409
    %8489 = vmatprep.mubr.bf16.mxu0 %v8252
    %8490 = vmatmul.mubr.bf16.gmra.mxu0 %v8251
    %v8491 = vpop.f32.mrf.mxu0
    %v8492 = vadd.f32 %v8290, %v8491
    %v8493 = vpop.f32.mrf.mxu0
    %v8494 = vadd.f32 %v8294, %v8493
    %v8495 = vpop.f32.mrf.mxu0
    %v8496 = vpop.f32.mrf.mxu0
    %8497 = vdwg.mxu0
    %vm8498 = vcmp.gt.f32.partialorder %v8492, 0.0
    %vm8499 = vcmp.gt.f32.partialorder %v8494, 0.0
    %v8500 = vmul.f32 %v8492, 0.2
    %v8501 = vmul.f32 %v8494, 0.2
    %v8502 = vsel %vm8498, %v8492, %v8500
    %v8503 = vsel %vm8499, %v8494, %v8501
    %v8504 = vpack.c.bf16 %v8502, %v8502
    %v8505 = vpack.c.bf16 %v8503, %v8503
    %v8506 = vld [vmem:[%s121] sm:$0xf]
    %v8507 = vld [vmem:[%s121 + $0x4] sm:$0xf]
    %v8508 = vld [vmem:[%s121 + $0x8] sm:$0xf]
    %v8509 = vld [vmem:[%s121 + $0xc] sm:$0xf]
    %v8510 = vld [vmem:[%s121 + $0x10] sm:$0xf]
    %v8511 = vld [vmem:[%s121 + $0x14] sm:$0xf]
    %v8512 = vld [vmem:[%s121 + $0x18] sm:$0xf]
    %v8513 = vld [vmem:[%s121 + $0x1c] sm:$0xf]
    %v8514 = vld [vmem:[%s121 + $0x20] sm:$0xf]
    %v8515 = vld [vmem:[%s121 + $0x24] sm:$0xf]
    %v8516 = vld [vmem:[%s121 + $0x28] sm:$0xf]
    %v8517 = vld [vmem:[%s121 + $0x2c] sm:$0xf]
    %v8518 = vld [vmem:[%s121 + $0x30] sm:$0xf]
    %v8519 = vld [vmem:[%s121 + $0x34] sm:$0xf]
    %v8520 = vld [vmem:[%s121 + $0x38] sm:$0xf]
    %v8521 = vld [vmem:[%s121 + $0x3c] sm:$0xf]
    %v8522 = vld [vmem:[%s121 + $0x40] sm:$0xf]
    %v8523 = vld [vmem:[%s121 + $0x44] sm:$0xf]
    %v8524 = vld [vmem:[%s121 + $0x48] sm:$0xf]
    %v8525 = vld [vmem:[%s121 + $0x4c] sm:$0xf]
    %v8526 = vld [vmem:[%s121 + $0x50] sm:$0xf]
    %v8527 = vld [vmem:[%s121 + $0x54] sm:$0xf]
    %v8528 = vld [vmem:[%s121 + $0x58] sm:$0xf]
    %v8529 = vld [vmem:[%s121 + $0x5c] sm:$0xf]
    %v8530 = vld [vmem:[%s121 + $0x60] sm:$0xf]
    %v8531 = vld [vmem:[%s121 + $0x64] sm:$0xf]
    %v8532 = vld [vmem:[%s121 + $0x68] sm:$0xf]
    %v8533 = vld [vmem:[%s121 + $0x6c] sm:$0xf]
    %v8534 = vld [vmem:[%s121 + $0x70] sm:$0xf]
    %v8535 = vld [vmem:[%s121 + $0x74] sm:$0xf]
    %v8536 = vld [vmem:[%s121 + $0x78] sm:$0xf]
    %v8537 = vld [vmem:[%s121 + $0x7c] sm:$0xf]
    %v8538 = vld [vmem:[#allocation3] sm:$0x1]
    %v8540 = vlaneseq
    %v8541 = vshrl.u32 %v8540, 7
    %v8542 = vsub.s32 0, %v8541
    %v8543 = vrot.slane %v8538, %v8542
    %v8577 = vunpack.c.l.b16 %v8506
    %v8578 = vunpack.c.l.b16 %v8507
    %v8579 = vunpack.c.l.b16 %v8508
    %v8580 = vunpack.c.l.b16 %v8509
    %v8581 = vunpack.c.l.b16 %v8510
    %v8582 = vunpack.c.l.b16 %v8511
    %v8583 = vunpack.c.l.b16 %v8512
    %v8584 = vunpack.c.l.b16 %v8513
    %v8585 = vunpack.c.l.b16 %v8514
    %v8586 = vunpack.c.l.b16 %v8515
    %v8587 = vunpack.c.l.b16 %v8516
    %v8588 = vunpack.c.l.b16 %v8517
    %v8589 = vunpack.c.l.b16 %v8518
    %v8590 = vunpack.c.l.b16 %v8519
    %v8591 = vunpack.c.l.b16 %v8520
    %v8592 = vunpack.c.l.b16 %v8521
    %v8593 = vunpack.c.l.b16 %v8522
    %v8594 = vunpack.c.l.b16 %v8523
    %v8595 = vunpack.c.l.b16 %v8524
    %v8596 = vunpack.c.l.b16 %v8525
    %v8597 = vunpack.c.l.b16 %v8526
    %v8598 = vunpack.c.l.b16 %v8527
    %v8599 = vunpack.c.l.b16 %v8528
    %v8600 = vunpack.c.l.b16 %v8529
    %v8601 = vunpack.c.l.b16 %v8530
    %v8602 = vunpack.c.l.b16 %v8531
    %v8603 = vunpack.c.l.b16 %v8532
    %v8604 = vunpack.c.l.b16 %v8533
    %v8605 = vunpack.c.l.b16 %v8534
    %v8606 = vunpack.c.l.b16 %v8535
    %v8607 = vunpack.c.l.b16 %v8536
    %v8608 = vunpack.c.l.b16 %v8537
    %v8609 = vpack.c.b16 %v8578, %v8577
    %v8610 = vpack.c.b16 %v8580, %v8579
    %v8611 = vpack.c.b16 %v8582, %v8581
    %v8612 = vpack.c.b16 %v8584, %v8583
    %v8613 = vpack.c.b16 %v8586, %v8585
    %v8614 = vpack.c.b16 %v8588, %v8587
    %v8615 = vpack.c.b16 %v8590, %v8589
    %v8616 = vpack.c.b16 %v8592, %v8591
    %v8617 = vpack.c.b16 %v8594, %v8593
    %v8618 = vpack.c.b16 %v8596, %v8595
    %v8619 = vpack.c.b16 %v8598, %v8597
    %v8620 = vpack.c.b16 %v8600, %v8599
    %v8621 = vpack.c.b16 %v8602, %v8601
    %v8622 = vpack.c.b16 %v8604, %v8603
    %v8623 = vpack.c.b16 %v8606, %v8605
    %v8624 = vpack.c.b16 %v8608, %v8607
    %8641 = vmatprep.subr.bf16.mxu0 0
    %8642 = vmatpush1.bf16.msra.mxu0 %v8616
    %8643 = vmatprep.subr.bf16.mxu0 0
    %8644 = vmatpush1.bf16.msra.mxu0 %v8615
    %8645 = vmatprep.subr.bf16.mxu0 0
    %8646 = vmatpush1.bf16.msra.mxu0 %v8614
    %8647 = vmatprep.subr.bf16.mxu0 0
    %8648 = vmatpush1.bf16.msra.mxu0 %v8613
    %8649 = vmatprep.subr.bf16.mxu0 0
    %8650 = vmatpush1.bf16.msra.mxu0 %v8612
    %8651 = vmatprep.subr.bf16.mxu0 0
    %8652 = vmatpush1.bf16.msra.mxu0 %v8611
    %8653 = vmatprep.subr.bf16.mxu0 0
    %8654 = vmatpush1.bf16.msra.mxu0 %v8610
    %8655 = vmatprep.subr.bf16.mxu0 0
    %8656 = vmatpush1.bf16.msra.mxu0 %v8609
    %8657 = vmatprep.subr.bf16.mxu0 0
    %8658 = vmatpush2.bf16.msra.mxu0 %v8624
    %8659 = vmatprep.subr.bf16.mxu0 0
    %8660 = vmatpush2.bf16.msra.mxu0 %v8623
    %8661 = vmatprep.subr.bf16.mxu0 0
    %8662 = vmatpush2.bf16.msra.mxu0 %v8622
    %8663 = vmatprep.subr.bf16.mxu0 0
    %8664 = vmatpush2.bf16.msra.mxu0 %v8621
    %8665 = vmatprep.subr.bf16.mxu0 0
    %8666 = vmatpush2.bf16.msra.mxu0 %v8620
    %8667 = vmatprep.subr.bf16.mxu0 0
    %8668 = vmatpush2.bf16.msra.mxu0 %v8619
    %8669 = vmatprep.subr.bf16.mxu0 0
    %8670 = vmatpush2.bf16.msra.mxu0 %v8618
    %8671 = vmatprep.subr.bf16.mxu0 0
    %8672 = vmatpush2.bf16.msra.mxu0 %v8617
    %8673 = vmatprep.mubr.bf16.mxu0 %v8505
    %8674 = vmatmul.mubr.bf16.gmra.mxu0 %v8504
    %v8675 = vpop.f32.mrf.mxu0
    %v8676 = vadd.f32 %v8543, %v8675
    %v8677 = vpop.f32.mrf.mxu0
    %v8678 = vpop.f32.mrf.mxu0
    %v8679 = vpop.f32.mrf.mxu0
    %8680 = vdwg.mxu0
    %v8682 = vsel %vm6705, %v4525, 0
    %v8685 = vsel %vm1236, %v5975, 0
    %v8688 = vsel %vm1236, %v5977, 0
    %v8691 = vsel %vm1236, %v6016, 0
    %v8694 = vsel %vm1236, %v6018, 0
    %8696 = vmatprep.subr.mxu0 0.0
    %8697 = vmatpush1.msra.mxu0 0.0
    %8698 = vmatprep.subr.mxu0 0.0
    %8699 = vmatpush1.msra.mxu0 0.0
    %8700 = vmatprep.subr.mxu0 0.0
    %8701 = vmatpush1.msra.mxu0 0.0
    %8702 = vmatprep.subr.mxu0 0.0
    %8703 = vmatpush1.msra.mxu0 0.0
    %8704 = vmatprep.subr.mxu0 0.0
    %8705 = vmatpush1.msra.mxu0 0.0
    %8706 = vmatprep.subr.mxu0 0.0
    %8707 = vmatpush1.msra.mxu0 0.0
    %8708 = vmatprep.subr.mxu0 0.0
    %8709 = vmatpush1.msra.mxu0 0.0
    %8710 = vmatprep.subr.mxu0 0.0
    %8711 = vmatpush1.msra.mxu0 0.0
    %8712 = vmatprep.subr.mxu0 0.0
    %8713 = vmatpush1.msra.mxu0 0.0
    %8714 = vmatprep.subr.mxu0 0.0
    %8715 = vmatpush1.msra.mxu0 0.0
    %8716 = vmatprep.subr.mxu0 0.0
    %8717 = vmatpush1.msra.mxu0 0.0
    %8718 = vmatprep.subr.mxu0 0.0
    %8719 = vmatpush1.msra.mxu0 0.0
    %8720 = vmatprep.subr.mxu0 0.0
    %8721 = vmatpush1.msra.mxu0 0.0
    %8722 = vmatprep.subr.mxu0 0.0
    %8723 = vmatpush1.msra.mxu0 0.0
    %8724 = vmatprep.subr.mxu0 0.0
    %8725 = vmatpush1.msra.mxu0 0.0
    %8726 = vmatprep.subr.mxu0 %v8688
    %8727 = vmatpush1.msra.mxu0 %v8685
    %8728 = vmatprep.subr.mxu0 0.0
    %8729 = vmatpush2.msra.mxu0 0.0
    %8730 = vmatprep.subr.mxu0 0.0
    %8731 = vmatpush2.msra.mxu0 0.0
    %8732 = vmatprep.subr.mxu0 0.0
    %8733 = vmatpush2.msra.mxu0 0.0
    %8734 = vmatprep.subr.mxu0 0.0
    %8735 = vmatpush2.msra.mxu0 0.0
    %8736 = vmatprep.subr.mxu0 0.0
    %8737 = vmatpush2.msra.mxu0 0.0
    %8738 = vmatprep.subr.mxu0 0.0
    %8739 = vmatpush2.msra.mxu0 0.0
    %8740 = vmatprep.subr.mxu0 0.0
    %8741 = vmatpush2.msra.mxu0 0.0
    %8742 = vmatprep.subr.mxu0 0.0
    %8743 = vmatpush2.msra.mxu0 0.0
    %8744 = vmatprep.subr.mxu0 0.0
    %8745 = vmatpush2.msra.mxu0 0.0
    %8746 = vmatprep.subr.mxu0 0.0
    %8747 = vmatpush2.msra.mxu0 0.0
    %8748 = vmatprep.subr.mxu0 0.0
    %8749 = vmatpush2.msra.mxu0 0.0
    %8750 = vmatprep.subr.mxu0 0.0
    %8751 = vmatpush2.msra.mxu0 0.0
    %8752 = vmatprep.subr.mxu0 0.0
    %8753 = vmatpush2.msra.mxu0 0.0
    %8754 = vmatprep.subr.mxu0 0.0
    %8755 = vmatpush2.msra.mxu0 0.0
    %8756 = vmatprep.subr.mxu0 0.0
    %8757 = vmatpush2.msra.mxu0 0.0
    %8758 = vmatprep.subr.mxu0 0.0
    %8759 = vmatpush2.msra.mxu0 0.0
    %8760 = vmatprep.mubr.f32.mxu0 0.0
    %8761 = vmatmul.mubr.f32.gmra.mxu0 %v8682
    %v8762 = vpop.f32.mrf.mxu0
    %v8763 = vadd.f32 0.0, %v8762
    %v8764 = vpop.f32.mrf.mxu0
    %v8765 = vadd.f32 0.0, %v8764
    %8766 = vdwg.mxu0
    %8767 = vmatprep.subr.mxu0 0.0
    %8768 = vmatpush1.msra.mxu0 0.0
    %8769 = vmatprep.subr.mxu0 0.0
    %8770 = vmatpush1.msra.mxu0 0.0
    %8771 = vmatprep.subr.mxu0 0.0
    %8772 = vmatpush1.msra.mxu0 0.0
    %8773 = vmatprep.subr.mxu0 0.0
    %8774 = vmatpush1.msra.mxu0 0.0
    %8775 = vmatprep.subr.mxu0 0.0
    %8776 = vmatpush1.msra.mxu0 0.0
    %8777 = vmatprep.subr.mxu0 0.0
    %8778 = vmatpush1.msra.mxu0 0.0
    %8779 = vmatprep.subr.mxu0 0.0
    %8780 = vmatpush1.msra.mxu0 0.0
    %8781 = vmatprep.subr.mxu0 0.0
    %8782 = vmatpush1.msra.mxu0 0.0
    %8783 = vmatprep.subr.mxu0 0.0
    %8784 = vmatpush1.msra.mxu0 0.0
    %8785 = vmatprep.subr.mxu0 0.0
    %8786 = vmatpush1.msra.mxu0 0.0
    %8787 = vmatprep.subr.mxu0 0.0
    %8788 = vmatpush1.msra.mxu0 0.0
    %8789 = vmatprep.subr.mxu0 0.0
    %8790 = vmatpush1.msra.mxu0 0.0
    %8791 = vmatprep.subr.mxu0 0.0
    %8792 = vmatpush1.msra.mxu0 0.0
    %8793 = vmatprep.subr.mxu0 0.0
    %8794 = vmatpush1.msra.mxu0 0.0
    %8795 = vmatprep.subr.mxu0 0.0
    %8796 = vmatpush1.msra.mxu0 0.0
    %8797 = vmatprep.subr.mxu0 %v8694
    %8798 = vmatpush1.msra.mxu0 %v8691
    %8799 = vmatprep.subr.mxu0 0.0
    %8800 = vmatpush2.msra.mxu0 0.0
    %8801 = vmatprep.subr.mxu0 0.0
    %8802 = vmatpush2.msra.mxu0 0.0
    %8803 = vmatprep.subr.mxu0 0.0
    %8804 = vmatpush2.msra.mxu0 0.0
    %8805 = vmatprep.subr.mxu0 0.0
    %8806 = vmatpush2.msra.mxu0 0.0
    %8807 = vmatprep.subr.mxu0 0.0
    %8808 = vmatpush2.msra.mxu0 0.0
    %8809 = vmatprep.subr.mxu0 0.0
    %8810 = vmatpush2.msra.mxu0 0.0
    %8811 = vmatprep.subr.mxu0 0.0
    %8812 = vmatpush2.msra.mxu0 0.0
    %8813 = vmatprep.subr.mxu0 0.0
    %8814 = vmatpush2.msra.mxu0 0.0
    %8815 = vmatprep.subr.mxu0 0.0
    %8816 = vmatpush2.msra.mxu0 0.0
    %8817 = vmatprep.subr.mxu0 0.0
    %8818 = vmatpush2.msra.mxu0 0.0
    %8819 = vmatprep.subr.mxu0 0.0
    %8820 = vmatpush2.msra.mxu0 0.0
    %8821 = vmatprep.subr.mxu0 0.0
    %8822 = vmatpush2.msra.mxu0 0.0
    %8823 = vmatprep.subr.mxu0 0.0
    %8824 = vmatpush2.msra.mxu0 0.0
    %8825 = vmatprep.subr.mxu0 0.0
    %8826 = vmatpush2.msra.mxu0 0.0
    %8827 = vmatprep.subr.mxu0 0.0
    %8828 = vmatpush2.msra.mxu0 0.0
    %8829 = vmatprep.subr.mxu0 0.0
    %8830 = vmatpush2.msra.mxu0 0.0
    %8831 = vmatprep.mubr.f32.mxu0 0.0
    %8832 = vmatmul.mubr.f32.gmra.mxu0 %v8682
    %v8833 = vpop.f32.mrf.mxu0
    %v8834 = vadd.f32 0.0, %v8833
    %v8835 = vpop.f32.mrf.mxu0
    %v8836 = vadd.f32 0.0, %v8835
    %8837 = vdwg.mxu0
    %v8839 = vsel %vm1236, %v6700, 0
    %8841 = vmatprep.subr.mxu0 0.0
    %8842 = vmatpush1.msra.mxu0 0.0
    %8843 = vmatprep.subr.mxu0 0.0
    %8844 = vmatpush1.msra.mxu0 0.0
    %8845 = vmatprep.subr.mxu0 0.0
    %8846 = vmatpush1.msra.mxu0 0.0
    %8847 = vmatprep.subr.mxu0 0.0
    %8848 = vmatpush1.msra.mxu0 0.0
    %8849 = vmatprep.subr.mxu0 0.0
    %8850 = vmatpush1.msra.mxu0 0.0
    %8851 = vmatprep.subr.mxu0 0.0
    %8852 = vmatpush1.msra.mxu0 0.0
    %8853 = vmatprep.subr.mxu0 0.0
    %8854 = vmatpush1.msra.mxu0 0.0
    %8855 = vmatprep.subr.mxu0 0.0
    %8856 = vmatpush1.msra.mxu0 0.0
    %8857 = vmatprep.subr.mxu0 0.0
    %8858 = vmatpush1.msra.mxu0 0.0
    %8859 = vmatprep.subr.mxu0 0.0
    %8860 = vmatpush1.msra.mxu0 0.0
    %8861 = vmatprep.subr.mxu0 0.0
    %8862 = vmatpush1.msra.mxu0 0.0
    %8863 = vmatprep.subr.mxu0 0.0
    %8864 = vmatpush1.msra.mxu0 0.0
    %8865 = vmatprep.subr.mxu0 0.0
    %8866 = vmatpush1.msra.mxu0 0.0
    %8867 = vmatprep.subr.mxu0 0.0
    %8868 = vmatpush1.msra.mxu0 0.0
    %8869 = vmatprep.subr.mxu0 0.0
    %8870 = vmatpush1.msra.mxu0 0.0
    %8871 = vmatprep.subr.mxu0 0.0
    %8872 = vmatpush1.msra.mxu0 %v8839
    %8873 = vmatprep.subr.mxu0 0.0
    %8874 = vmatpush2.msra.mxu0 0.0
    %8875 = vmatprep.subr.mxu0 0.0
    %8876 = vmatpush2.msra.mxu0 0.0
    %8877 = vmatprep.subr.mxu0 0.0
    %8878 = vmatpush2.msra.mxu0 0.0
    %8879 = vmatprep.subr.mxu0 0.0
    %8880 = vmatpush2.msra.mxu0 0.0
    %8881 = vmatprep.subr.mxu0 0.0
    %8882 = vmatpush2.msra.mxu0 0.0
    %8883 = vmatprep.subr.mxu0 0.0
    %8884 = vmatpush2.msra.mxu0 0.0
    %8885 = vmatprep.subr.mxu0 0.0
    %8886 = vmatpush2.msra.mxu0 0.0
    %8887 = vmatprep.subr.mxu0 0.0
    %8888 = vmatpush2.msra.mxu0 0.0
    %8889 = vmatprep.subr.mxu0 0.0
    %8890 = vmatpush2.msra.mxu0 0.0
    %8891 = vmatprep.subr.mxu0 0.0
    %8892 = vmatpush2.msra.mxu0 0.0
    %8893 = vmatprep.subr.mxu0 0.0
    %8894 = vmatpush2.msra.mxu0 0.0
    %8895 = vmatprep.subr.mxu0 0.0
    %8896 = vmatpush2.msra.mxu0 0.0
    %8897 = vmatprep.subr.mxu0 0.0
    %8898 = vmatpush2.msra.mxu0 0.0
    %8899 = vmatprep.subr.mxu0 0.0
    %8900 = vmatpush2.msra.mxu0 0.0
    %8901 = vmatprep.subr.mxu0 0.0
    %8902 = vmatpush2.msra.mxu0 0.0
    %8903 = vmatprep.subr.mxu0 0.0
    %8904 = vmatpush2.msra.mxu0 0.0
    %8905 = vmatprep.mubr.f32.mxu0 0.0
    %8906 = vmatmul.mubr.f32.gmra.mxu0 %v8682
    %v8907 = vpop.f32.mrf.mxu0
    %v8908 = vadd.f32 0.0, %v8907
    %v8909 = vpop.f32.mrf.mxu0
    %8910 = vdwg.mxu0
    %v8911 = vmul.f32 %v8763, %v7951
    %v8912 = vmul.f32 %v8765, %v7953
    %v8913 = vmul.f32 %v8834, %v7992
    %v8914 = vmul.f32 %v8836, %v7994
    %vm8915 = vcmask 1043456
    %v8916 = vsel %vm8915, %v8911, 0.0
    %v8917 = vsel %vm8915, %v8912, 0.0
    %v8918 = vadd.f32 %v8916, %v8917
    %v8919 = vsel %vm8915, %v8913, 0.0
    %v8920 = vadd.f32 %v8918, %v8919
    %v8921 = vsel %vm8915, %v8914, 0.0
    %v8922 = vadd.f32 %v8920, %v8921
    %8923 = vadd.xlane.f32.xlu0 %v8922
    %v8924 = vpop.xlane.xlu0 %8923
    %v8925 = vadd.f32 %v8924, %v8908
    %v8926 = vadd.f32 %v8925, %v8676
    %vm8927 = vcmask 31744
    %v8929 = vsel %vm8927, %v4523, 0
    %v8932 = vsel %vm8915, %v8926, 0
    %8934 = vmatprep.subr.mxu0 0.0
    %8935 = vmatpush1.msra.mxu0 0.0
    %8936 = vmatprep.subr.mxu0 0.0
    %8937 = vmatpush1.msra.mxu0 0.0
    %8938 = vmatprep.subr.mxu0 0.0
    %8939 = vmatpush1.msra.mxu0 0.0
    %8940 = vmatprep.subr.mxu0 0.0
    %8941 = vmatpush1.msra.mxu0 0.0
    %8942 = vmatprep.subr.mxu0 0.0
    %8943 = vmatpush1.msra.mxu0 0.0
    %8944 = vmatprep.subr.mxu0 0.0
    %8945 = vmatpush1.msra.mxu0 0.0
    %8946 = vmatprep.subr.mxu0 0.0
    %8947 = vmatpush1.msra.mxu0 0.0
    %8948 = vmatprep.subr.mxu0 0.0
    %8949 = vmatpush1.msra.mxu0 0.0
    %8950 = vmatprep.subr.mxu0 0.0
    %8951 = vmatpush1.msra.mxu0 0.0
    %8952 = vmatprep.subr.mxu0 0.0
    %8953 = vmatpush1.msra.mxu0 0.0
    %8954 = vmatprep.subr.mxu0 0.0
    %8955 = vmatpush1.msra.mxu0 0.0
    %8956 = vmatprep.subr.mxu0 0.0
    %8957 = vmatpush1.msra.mxu0 0.0
    %8958 = vmatprep.subr.mxu0 0.0
    %8959 = vmatpush1.msra.mxu0 0.0
    %8960 = vmatprep.subr.mxu0 0.0
    %8961 = vmatpush1.msra.mxu0 0.0
    %8962 = vmatprep.subr.mxu0 0.0
    %8963 = vmatpush1.msra.mxu0 0.0
    %8964 = vmatprep.subr.mxu0 0.0
    %8965 = vmatpush1.msra.mxu0 %v8932
    %8966 = vmatprep.subr.mxu0 0.0
    %8967 = vmatpush2.msra.mxu0 0.0
    %8968 = vmatprep.subr.mxu0 0.0
    %8969 = vmatpush2.msra.mxu0 0.0
    %8970 = vmatprep.subr.mxu0 0.0
    %8971 = vmatpush2.msra.mxu0 0.0
    %8972 = vmatprep.subr.mxu0 0.0
    %8973 = vmatpush2.msra.mxu0 0.0
    %8974 = vmatprep.subr.mxu0 0.0
    %8975 = vmatpush2.msra.mxu0 0.0
    %8976 = vmatprep.subr.mxu0 0.0
    %8977 = vmatpush2.msra.mxu0 0.0
    %8978 = vmatprep.subr.mxu0 0.0
    %8979 = vmatpush2.msra.mxu0 0.0
    %8980 = vmatprep.subr.mxu0 0.0
    %8981 = vmatpush2.msra.mxu0 0.0
    %8982 = vmatprep.subr.mxu0 0.0
    %8983 = vmatpush2.msra.mxu0 0.0
    %8984 = vmatprep.subr.mxu0 0.0
    %8985 = vmatpush2.msra.mxu0 0.0
    %8986 = vmatprep.subr.mxu0 0.0
    %8987 = vmatpush2.msra.mxu0 0.0
    %8988 = vmatprep.subr.mxu0 0.0
    %8989 = vmatpush2.msra.mxu0 0.0
    %8990 = vmatprep.subr.mxu0 0.0
    %8991 = vmatpush2.msra.mxu0 0.0
    %8992 = vmatprep.subr.mxu0 0.0
    %8993 = vmatpush2.msra.mxu0 0.0
    %8994 = vmatprep.subr.mxu0 0.0
    %8995 = vmatpush2.msra.mxu0 0.0
    %8996 = vmatprep.subr.mxu0 0.0
    %8997 = vmatpush2.msra.mxu0 0.0
    %8998 = vmatprep.mubr.f32.mxu0 0.0
    %8999 = vmatmul.mubr.f32.gmra.mxu0 %v8929
    %v9000 = vpop.f32.mrf.mxu0
    %v9001 = vadd.f32 0.0, %v9000
    %v9002 = vpop.f32.mrf.mxu0
    %9003 = vdwg.mxu0
    %v9005 = vsel %vm8927, %v4524, 0
    %9007 = vmatprep.subr.mxu0 0.0
    %9008 = vmatpush1.msra.mxu0 0.0
    %9009 = vmatprep.subr.mxu0 0.0
    %9010 = vmatpush1.msra.mxu0 0.0
    %9011 = vmatprep.subr.mxu0 0.0
    %9012 = vmatpush1.msra.mxu0 0.0
    %9013 = vmatprep.subr.mxu0 0.0
    %9014 = vmatpush1.msra.mxu0 0.0
    %9015 = vmatprep.subr.mxu0 0.0
    %9016 = vmatpush1.msra.mxu0 0.0
    %9017 = vmatprep.subr.mxu0 0.0
    %9018 = vmatpush1.msra.mxu0 0.0
    %9019 = vmatprep.subr.mxu0 0.0
    %9020 = vmatpush1.msra.mxu0 0.0
    %9021 = vmatprep.subr.mxu0 0.0
    %9022 = vmatpush1.msra.mxu0 0.0
    %9023 = vmatprep.subr.mxu0 0.0
    %9024 = vmatpush1.msra.mxu0 0.0
    %9025 = vmatprep.subr.mxu0 0.0
    %9026 = vmatpush1.msra.mxu0 0.0
    %9027 = vmatprep.subr.mxu0 0.0
    %9028 = vmatpush1.msra.mxu0 0.0
    %9029 = vmatprep.subr.mxu0 0.0
    %9030 = vmatpush1.msra.mxu0 0.0
    %9031 = vmatprep.subr.mxu0 0.0
    %9032 = vmatpush1.msra.mxu0 0.0
    %9033 = vmatprep.subr.mxu0 0.0
    %9034 = vmatpush1.msra.mxu0 0.0
    %9035 = vmatprep.subr.mxu0 0.0
    %9036 = vmatpush1.msra.mxu0 0.0
    %9037 = vmatprep.subr.mxu0 0.0
    %9038 = vmatpush1.msra.mxu0 %v8932
    %9039 = vmatprep.subr.mxu0 0.0
    %9040 = vmatpush2.msra.mxu0 0.0
    %9041 = vmatprep.subr.mxu0 0.0
    %9042 = vmatpush2.msra.mxu0 0.0
    %9043 = vmatprep.subr.mxu0 0.0
    %9044 = vmatpush2.msra.mxu0 0.0
    %9045 = vmatprep.subr.mxu0 0.0
    %9046 = vmatpush2.msra.mxu0 0.0
    %9047 = vmatprep.subr.mxu0 0.0
    %9048 = vmatpush2.msra.mxu0 0.0
    %9049 = vmatprep.subr.mxu0 0.0
    %9050 = vmatpush2.msra.mxu0 0.0
    %9051 = vmatprep.subr.mxu0 0.0
    %9052 = vmatpush2.msra.mxu0 0.0
    %9053 = vmatprep.subr.mxu0 0.0
    %9054 = vmatpush2.msra.mxu0 0.0
    %9055 = vmatprep.subr.mxu0 0.0
    %9056 = vmatpush2.msra.mxu0 0.0
    %9057 = vmatprep.subr.mxu0 0.0
    %9058 = vmatpush2.msra.mxu0 0.0
    %9059 = vmatprep.subr.mxu0 0.0
    %9060 = vmatpush2.msra.mxu0 0.0
    %9061 = vmatprep.subr.mxu0 0.0
    %9062 = vmatpush2.msra.mxu0 0.0
    %9063 = vmatprep.subr.mxu0 0.0
    %9064 = vmatpush2.msra.mxu0 0.0
    %9065 = vmatprep.subr.mxu0 0.0
    %9066 = vmatpush2.msra.mxu0 0.0
    %9067 = vmatprep.subr.mxu0 0.0
    %9068 = vmatpush2.msra.mxu0 0.0
    %9069 = vmatprep.subr.mxu0 0.0
    %9070 = vmatpush2.msra.mxu0 0.0
    %9071 = vmatprep.mubr.f32.mxu0 0.0
    %9072 = vmatmul.mubr.f32.gmra.mxu0 %v9005
    %v9073 = vpop.f32.mrf.mxu0
    %v9074 = vadd.f32 0.0, %v9073
    %v9075 = vpop.f32.mrf.mxu0
    %9076 = vdwg.mxu0
    %v9077 = vpack.c.bf16 %v4516, %v4516
    %v9078 = vld [vmem:[%s125] sm:$0xff]
    %v9079 = vld [vmem:[%s125 + $0x8] sm:$0xff]
    %v9080 = vld [vmem:[%s127] sm:$0x3]
    %v9082 = vlaneseq
    %v9083 = vshrl.u32 %v9082, 7
    %v9084 = vsub.s32 0, %v9083
    %v9085 = vrot.slane %v9080, %v9084
    %v9086 = vlaneseq
    %v9087 = vshrl.u32 %v9086, 7
    %v9088 = vsub.s32 1, %v9087
    %v9089 = vrot.slane %v9080, %v9088
    %v9094 = vunpack.c.l.b16 %v9078
    %v9095 = vunpack.c.h.b16 %v9078
    %v9096 = vunpack.c.l.b16 %v9079
    %v9097 = vunpack.c.h.b16 %v9079
    %v9098 = vpack.c.b16 %v9096, %v9094
    %v9099 = vpack.c.b16 %v9097, %v9095
    %v9103 = vsel %vm2686, %v9077, 0
    %9105 = vmatprep.subr.bf16.mxu0 0
    %9106 = vmatpush1.bf16.msra.mxu0 0
    %9107 = vmatprep.subr.bf16.mxu0 0
    %9108 = vmatpush1.bf16.msra.mxu0 0
    %9109 = vmatprep.subr.bf16.mxu0 0
    %9110 = vmatpush1.bf16.msra.mxu0 0
    %9111 = vmatprep.subr.bf16.mxu0 0
    %9112 = vmatpush1.bf16.msra.mxu0 0
    %9113 = vmatprep.subr.bf16.mxu0 0
    %9114 = vmatpush1.bf16.msra.mxu0 0
    %9115 = vmatprep.subr.bf16.mxu0 0
    %9116 = vmatpush1.bf16.msra.mxu0 0
    %9117 = vmatprep.subr.bf16.mxu0 0
    %9118 = vmatpush1.bf16.msra.mxu0 0
    %9119 = vmatprep.subr.bf16.mxu0 %v9099
    %9120 = vmatpush1.bf16.msra.mxu0 %v9098
    %9121 = vmatprep.subr.bf16.mxu0 0
    %9122 = vmatpush2.bf16.msra.mxu0 0
    %9123 = vmatprep.subr.bf16.mxu0 0
    %9124 = vmatpush2.bf16.msra.mxu0 0
    %9125 = vmatprep.subr.bf16.mxu0 0
    %9126 = vmatpush2.bf16.msra.mxu0 0
    %9127 = vmatprep.subr.bf16.mxu0 0
    %9128 = vmatpush2.bf16.msra.mxu0 0
    %9129 = vmatprep.subr.bf16.mxu0 0
    %9130 = vmatpush2.bf16.msra.mxu0 0
    %9131 = vmatprep.subr.bf16.mxu0 0
    %9132 = vmatpush2.bf16.msra.mxu0 0
    %9133 = vmatprep.subr.bf16.mxu0 0
    %9134 = vmatpush2.bf16.msra.mxu0 0
    %9135 = vmatprep.subr.bf16.mxu0 0
    %9136 = vmatpush2.bf16.msra.mxu0 0
    %9137 = vmatprep.mubr.bf16.mxu0 0
    %9138 = vmatmul.mubr.bf16.gmra.mxu0 %v9103
    %v9139 = vpop.f32.mrf.mxu0
    %v9140 = vadd.f32 %v9085, %v9139
    %v9141 = vpop.f32.mrf.mxu0
    %v9142 = vadd.f32 %v9089, %v9141
    %v9143 = vpop.f32.mrf.mxu0
    %v9144 = vpop.f32.mrf.mxu0
    %9145 = vdwg.mxu0
    %vm9146 = vcmp.gt.f32.partialorder %v9140, 0.0
    %vm9147 = vcmp.gt.f32.partialorder %v9142, 0.0
    %v9148 = vmul.f32 %v9140, 0.2
    %v9149 = vmul.f32 %v9142, 0.2
    %v9150 = vsel %vm9146, %v9140, %v9148
    %v9151 = vsel %vm9147, %v9142, %v9149
    %v9152 = vpack.c.bf16 %v9150, %v9150
    %v9153 = vpack.c.bf16 %v9151, %v9151
    %v9154 = vld [vmem:[#allocation54] sm:$0xff]
    %v9155 = vld [vmem:[#allocation54 + $0x8] sm:$0xff]
    %v9156 = vld [vmem:[#allocation54 + $0x10] sm:$0xff]
    %v9157 = vld [vmem:[#allocation54 + $0x18] sm:$0xff]
    %v9158 = vld [vmem:[#allocation54 + $0x20] sm:$0xff]
    %v9159 = vld [vmem:[#allocation54 + $0x28] sm:$0xff]
    %v9160 = vld [vmem:[#allocation54 + $0x30] sm:$0xff]
    %v9161 = vld [vmem:[#allocation54 + $0x38] sm:$0xff]
    %v9162 = vld [vmem:[#allocation54 + $0x40] sm:$0xff]
    %v9163 = vld [vmem:[#allocation54 + $0x48] sm:$0xff]
    %v9164 = vld [vmem:[#allocation54 + $0x50] sm:$0xff]
    %v9165 = vld [vmem:[#allocation54 + $0x58] sm:$0xff]
    %v9166 = vld [vmem:[#allocation54 + $0x60] sm:$0xff]
    %v9167 = vld [vmem:[#allocation54 + $0x68] sm:$0xff]
    %v9168 = vld [vmem:[#allocation54 + $0x70] sm:$0xff]
    %v9169 = vld [vmem:[#allocation54 + $0x78] sm:$0xff]
    %v9170 = vld [vmem:[#allocation54 + $0x80] sm:$0xff]
    %v9171 = vld [vmem:[#allocation54 + $0x88] sm:$0xff]
    %v9172 = vld [vmem:[#allocation54 + $0x90] sm:$0xff]
    %v9173 = vld [vmem:[#allocation54 + $0x98] sm:$0xff]
    %v9174 = vld [vmem:[#allocation54 + $0xa0] sm:$0xff]
    %v9175 = vld [vmem:[#allocation54 + $0xa8] sm:$0xff]
    %v9176 = vld [vmem:[#allocation54 + $0xb0] sm:$0xff]
    %v9177 = vld [vmem:[#allocation54 + $0xb8] sm:$0xff]
    %v9178 = vld [vmem:[#allocation54 + $0xc0] sm:$0xff]
    %v9179 = vld [vmem:[#allocation54 + $0xc8] sm:$0xff]
    %v9180 = vld [vmem:[#allocation54 + $0xd0] sm:$0xff]
    %v9181 = vld [vmem:[#allocation54 + $0xd8] sm:$0xff]
    %v9182 = vld [vmem:[#allocation54 + $0xe0] sm:$0xff]
    %v9183 = vld [vmem:[#allocation54 + $0xe8] sm:$0xff]
    %v9184 = vld [vmem:[#allocation54 + $0xf0] sm:$0xff]
    %v9185 = vld [vmem:[#allocation54 + $0xf8] sm:$0xff]
    %v9186 = vld [vmem:[%s131] sm:$0x3]
    %v9188 = vlaneseq
    %v9189 = vshrl.u32 %v9188, 7
    %v9190 = vsub.s32 0, %v9189
    %v9191 = vrot.slane %v9186, %v9190
    %v9192 = vlaneseq
    %v9193 = vshrl.u32 %v9192, 7
    %v9194 = vsub.s32 1, %v9193
    %v9195 = vrot.slane %v9186, %v9194
    %v9230 = vunpack.c.l.b16 %v9154
    %v9231 = vunpack.c.h.b16 %v9154
    %v9232 = vunpack.c.l.b16 %v9155
    %v9233 = vunpack.c.h.b16 %v9155
    %v9234 = vunpack.c.l.b16 %v9156
    %v9235 = vunpack.c.h.b16 %v9156
    %v9236 = vunpack.c.l.b16 %v9157
    %v9237 = vunpack.c.h.b16 %v9157
    %v9238 = vunpack.c.l.b16 %v9158
    %v9239 = vunpack.c.h.b16 %v9158
    %v9240 = vunpack.c.l.b16 %v9159
    %v9241 = vunpack.c.h.b16 %v9159
    %v9242 = vunpack.c.l.b16 %v9160
    %v9243 = vunpack.c.h.b16 %v9160
    %v9244 = vunpack.c.l.b16 %v9161
    %v9245 = vunpack.c.h.b16 %v9161
    %v9246 = vunpack.c.l.b16 %v9162
    %v9247 = vunpack.c.h.b16 %v9162
    %v9248 = vunpack.c.l.b16 %v9163
    %v9249 = vunpack.c.h.b16 %v9163
    %v9250 = vunpack.c.l.b16 %v9164
    %v9251 = vunpack.c.h.b16 %v9164
    %v9252 = vunpack.c.l.b16 %v9165
    %v9253 = vunpack.c.h.b16 %v9165
    %v9254 = vunpack.c.l.b16 %v9166
    %v9255 = vunpack.c.h.b16 %v9166
    %v9256 = vunpack.c.l.b16 %v9167
    %v9257 = vunpack.c.h.b16 %v9167
    %v9258 = vunpack.c.l.b16 %v9168
    %v9259 = vunpack.c.h.b16 %v9168
    %v9260 = vunpack.c.l.b16 %v9169
    %v9261 = vunpack.c.h.b16 %v9169
    %v9262 = vunpack.c.l.b16 %v9170
    %v9263 = vunpack.c.h.b16 %v9170
    %v9264 = vunpack.c.l.b16 %v9171
    %v9265 = vunpack.c.h.b16 %v9171
    %v9266 = vunpack.c.l.b16 %v9172
    %v9267 = vunpack.c.h.b16 %v9172
    %v9268 = vunpack.c.l.b16 %v9173
    %v9269 = vunpack.c.h.b16 %v9173
    %v9270 = vunpack.c.l.b16 %v9174
    %v9271 = vunpack.c.h.b16 %v9174
    %v9272 = vunpack.c.l.b16 %v9175
    %v9273 = vunpack.c.h.b16 %v9175
    %v9274 = vunpack.c.l.b16 %v9176
    %v9275 = vunpack.c.h.b16 %v9176
    %v9276 = vunpack.c.l.b16 %v9177
    %v9277 = vunpack.c.h.b16 %v9177
    %v9278 = vunpack.c.l.b16 %v9178
    %v9279 = vunpack.c.h.b16 %v9178
    %v9280 = vunpack.c.l.b16 %v9179
    %v9281 = vunpack.c.h.b16 %v9179
    %v9282 = vunpack.c.l.b16 %v9180
    %v9283 = vunpack.c.h.b16 %v9180
    %v9284 = vunpack.c.l.b16 %v9181
    %v9285 = vunpack.c.h.b16 %v9181
    %v9286 = vunpack.c.l.b16 %v9182
    %v9287 = vunpack.c.h.b16 %v9182
    %v9288 = vunpack.c.l.b16 %v9183
    %v9289 = vunpack.c.h.b16 %v9183
    %v9290 = vunpack.c.l.b16 %v9184
    %v9291 = vunpack.c.h.b16 %v9184
    %v9292 = vunpack.c.l.b16 %v9185
    %v9293 = vunpack.c.h.b16 %v9185
    %v9294 = vpack.c.b16 %v9232, %v9230
    %v9295 = vpack.c.b16 %v9233, %v9231
    %v9296 = vpack.c.b16 %v9236, %v9234
    %v9297 = vpack.c.b16 %v9237, %v9235
    %v9298 = vpack.c.b16 %v9240, %v9238
    %v9299 = vpack.c.b16 %v9241, %v9239
    %v9300 = vpack.c.b16 %v9244, %v9242
    %v9301 = vpack.c.b16 %v9245, %v9243
    %v9302 = vpack.c.b16 %v9248, %v9246
    %v9303 = vpack.c.b16 %v9249, %v9247
    %v9304 = vpack.c.b16 %v9252, %v9250
    %v9305 = vpack.c.b16 %v9253, %v9251
    %v9306 = vpack.c.b16 %v9256, %v9254
    %v9307 = vpack.c.b16 %v9257, %v9255
    %v9308 = vpack.c.b16 %v9260, %v9258
    %v9309 = vpack.c.b16 %v9261, %v9259
    %v9310 = vpack.c.b16 %v9264, %v9262
    %v9311 = vpack.c.b16 %v9265, %v9263
    %v9312 = vpack.c.b16 %v9268, %v9266
    %v9313 = vpack.c.b16 %v9269, %v9267
    %v9314 = vpack.c.b16 %v9272, %v9270
    %v9315 = vpack.c.b16 %v9273, %v9271
    %v9316 = vpack.c.b16 %v9276, %v9274
    %v9317 = vpack.c.b16 %v9277, %v9275
    %v9318 = vpack.c.b16 %v9280, %v9278
    %v9319 = vpack.c.b16 %v9281, %v9279
    %v9320 = vpack.c.b16 %v9284, %v9282
    %v9321 = vpack.c.b16 %v9285, %v9283
    %v9322 = vpack.c.b16 %v9288, %v9286
    %v9323 = vpack.c.b16 %v9289, %v9287
    %v9324 = vpack.c.b16 %v9292, %v9290
    %v9325 = vpack.c.b16 %v9293, %v9291
    %9358 = vmatprep.subr.bf16.mxu0 %v9309
    %9359 = vmatpush1.bf16.msra.mxu0 %v9308
    %9360 = vmatprep.subr.bf16.mxu0 %v9307
    %9361 = vmatpush1.bf16.msra.mxu0 %v9306
    %9362 = vmatprep.subr.bf16.mxu0 %v9305
    %9363 = vmatpush1.bf16.msra.mxu0 %v9304
    %9364 = vmatprep.subr.bf16.mxu0 %v9303
    %9365 = vmatpush1.bf16.msra.mxu0 %v9302
    %9366 = vmatprep.subr.bf16.mxu0 %v9301
    %9367 = vmatpush1.bf16.msra.mxu0 %v9300
    %9368 = vmatprep.subr.bf16.mxu0 %v9299
    %9369 = vmatpush1.bf16.msra.mxu0 %v9298
    %9370 = vmatprep.subr.bf16.mxu0 %v9297
    %9371 = vmatpush1.bf16.msra.mxu0 %v9296
    %9372 = vmatprep.subr.bf16.mxu0 %v9295
    %9373 = vmatpush1.bf16.msra.mxu0 %v9294
    %9374 = vmatprep.subr.bf16.mxu0 %v9325
    %9375 = vmatpush2.bf16.msra.mxu0 %v9324
    %9376 = vmatprep.subr.bf16.mxu0 %v9323
    %9377 = vmatpush2.bf16.msra.mxu0 %v9322
    %9378 = vmatprep.subr.bf16.mxu0 %v9321
    %9379 = vmatpush2.bf16.msra.mxu0 %v9320
    %9380 = vmatprep.subr.bf16.mxu0 %v9319
    %9381 = vmatpush2.bf16.msra.mxu0 %v9318
    %9382 = vmatprep.subr.bf16.mxu0 %v9317
    %9383 = vmatpush2.bf16.msra.mxu0 %v9316
    %9384 = vmatprep.subr.bf16.mxu0 %v9315
    %9385 = vmatpush2.bf16.msra.mxu0 %v9314
    %9386 = vmatprep.subr.bf16.mxu0 %v9313
    %9387 = vmatpush2.bf16.msra.mxu0 %v9312
    %9388 = vmatprep.subr.bf16.mxu0 %v9311
    %9389 = vmatpush2.bf16.msra.mxu0 %v9310
    %9390 = vmatprep.mubr.bf16.mxu0 %v9153
    %9391 = vmatmul.mubr.bf16.gmra.mxu0 %v9152
    %v9392 = vpop.f32.mrf.mxu0
    %v9393 = vadd.f32 %v9191, %v9392
    %v9394 = vpop.f32.mrf.mxu0
    %v9395 = vadd.f32 %v9195, %v9394
    %v9396 = vpop.f32.mrf.mxu0
    %v9397 = vpop.f32.mrf.mxu0
    %9398 = vdwg.mxu0
    %vm9399 = vcmp.gt.f32.partialorder %v9393, 0.0
    %vm9400 = vcmp.gt.f32.partialorder %v9395, 0.0
    %v9401 = vmul.f32 %v9393, 0.2
    %v9402 = vmul.f32 %v9395, 0.2
    %v9403 = vsel %vm9399, %v9393, %v9401
    %v9404 = vsel %vm9400, %v9395, %v9402
    %v9405 = vpack.c.bf16 %v9403, %v9403
    %v9406 = vpack.c.bf16 %v9404, %v9404
    %v9407 = vld [vmem:[#allocation55] sm:$0xff]
    %v9408 = vld [vmem:[#allocation55 + $0x8] sm:$0xff]
    %v9409 = vld [vmem:[#allocation55 + $0x10] sm:$0xff]
    %v9410 = vld [vmem:[#allocation55 + $0x18] sm:$0xff]
    %v9411 = vld [vmem:[#allocation55 + $0x20] sm:$0xff]
    %v9412 = vld [vmem:[#allocation55 + $0x28] sm:$0xff]
    %v9413 = vld [vmem:[#allocation55 + $0x30] sm:$0xff]
    %v9414 = vld [vmem:[#allocation55 + $0x38] sm:$0xff]
    %v9415 = vld [vmem:[#allocation55 + $0x40] sm:$0xff]
    %v9416 = vld [vmem:[#allocation55 + $0x48] sm:$0xff]
    %v9417 = vld [vmem:[#allocation55 + $0x50] sm:$0xff]
    %v9418 = vld [vmem:[#allocation55 + $0x58] sm:$0xff]
    %v9419 = vld [vmem:[#allocation55 + $0x60] sm:$0xff]
    %v9420 = vld [vmem:[#allocation55 + $0x68] sm:$0xff]
    %v9421 = vld [vmem:[#allocation55 + $0x70] sm:$0xff]
    %v9422 = vld [vmem:[#allocation55 + $0x78] sm:$0xff]
    %v9423 = vld [vmem:[#allocation55 + $0x80] sm:$0xff]
    %v9424 = vld [vmem:[#allocation55 + $0x88] sm:$0xff]
    %v9425 = vld [vmem:[#allocation55 + $0x90] sm:$0xff]
    %v9426 = vld [vmem:[#allocation55 + $0x98] sm:$0xff]
    %v9427 = vld [vmem:[#allocation55 + $0xa0] sm:$0xff]
    %v9428 = vld [vmem:[#allocation55 + $0xa8] sm:$0xff]
    %v9429 = vld [vmem:[#allocation55 + $0xb0] sm:$0xff]
    %v9430 = vld [vmem:[#allocation55 + $0xb8] sm:$0xff]
    %v9431 = vld [vmem:[#allocation55 + $0xc0] sm:$0xff]
    %v9432 = vld [vmem:[#allocation55 + $0xc8] sm:$0xff]
    %v9433 = vld [vmem:[#allocation55 + $0xd0] sm:$0xff]
    %v9434 = vld [vmem:[#allocation55 + $0xd8] sm:$0xff]
    %v9435 = vld [vmem:[#allocation55 + $0xe0] sm:$0xff]
    %v9436 = vld [vmem:[#allocation55 + $0xe8] sm:$0xff]
    %v9437 = vld [vmem:[#allocation55 + $0xf0] sm:$0xff]
    %v9438 = vld [vmem:[#allocation55 + $0xf8] sm:$0xff]
    %v9439 = vld [vmem:[%s135] sm:$0x3]
    %v9441 = vlaneseq
    %v9442 = vshrl.u32 %v9441, 7
    %v9443 = vsub.s32 0, %v9442
    %v9444 = vrot.slane %v9439, %v9443
    %v9445 = vlaneseq
    %v9446 = vshrl.u32 %v9445, 7
    %v9447 = vsub.s32 1, %v9446
    %v9448 = vrot.slane %v9439, %v9447
    %v9483 = vunpack.c.l.b16 %v9407
    %v9484 = vunpack.c.h.b16 %v9407
    %v9485 = vunpack.c.l.b16 %v9408
    %v9486 = vunpack.c.h.b16 %v9408
    %v9487 = vunpack.c.l.b16 %v9409
    %v9488 = vunpack.c.h.b16 %v9409
    %v9489 = vunpack.c.l.b16 %v9410
    %v9490 = vunpack.c.h.b16 %v9410
    %v9491 = vunpack.c.l.b16 %v9411
    %v9492 = vunpack.c.h.b16 %v9411
    %v9493 = vunpack.c.l.b16 %v9412
    %v9494 = vunpack.c.h.b16 %v9412
    %v9495 = vunpack.c.l.b16 %v9413
    %v9496 = vunpack.c.h.b16 %v9413
    %v9497 = vunpack.c.l.b16 %v9414
    %v9498 = vunpack.c.h.b16 %v9414
    %v9499 = vunpack.c.l.b16 %v9415
    %v9500 = vunpack.c.h.b16 %v9415
    %v9501 = vunpack.c.l.b16 %v9416
    %v9502 = vunpack.c.h.b16 %v9416
    %v9503 = vunpack.c.l.b16 %v9417
    %v9504 = vunpack.c.h.b16 %v9417
    %v9505 = vunpack.c.l.b16 %v9418
    %v9506 = vunpack.c.h.b16 %v9418
    %v9507 = vunpack.c.l.b16 %v9419
    %v9508 = vunpack.c.h.b16 %v9419
    %v9509 = vunpack.c.l.b16 %v9420
    %v9510 = vunpack.c.h.b16 %v9420
    %v9511 = vunpack.c.l.b16 %v9421
    %v9512 = vunpack.c.h.b16 %v9421
    %v9513 = vunpack.c.l.b16 %v9422
    %v9514 = vunpack.c.h.b16 %v9422
    %v9515 = vunpack.c.l.b16 %v9423
    %v9516 = vunpack.c.h.b16 %v9423
    %v9517 = vunpack.c.l.b16 %v9424
    %v9518 = vunpack.c.h.b16 %v9424
    %v9519 = vunpack.c.l.b16 %v9425
    %v9520 = vunpack.c.h.b16 %v9425
    %v9521 = vunpack.c.l.b16 %v9426
    %v9522 = vunpack.c.h.b16 %v9426
    %v9523 = vunpack.c.l.b16 %v9427
    %v9524 = vunpack.c.h.b16 %v9427
    %v9525 = vunpack.c.l.b16 %v9428
    %v9526 = vunpack.c.h.b16 %v9428
    %v9527 = vunpack.c.l.b16 %v9429
    %v9528 = vunpack.c.h.b16 %v9429
    %v9529 = vunpack.c.l.b16 %v9430
    %v9530 = vunpack.c.h.b16 %v9430
    %v9531 = vunpack.c.l.b16 %v9431
    %v9532 = vunpack.c.h.b16 %v9431
    %v9533 = vunpack.c.l.b16 %v9432
    %v9534 = vunpack.c.h.b16 %v9432
    %v9535 = vunpack.c.l.b16 %v9433
    %v9536 = vunpack.c.h.b16 %v9433
    %v9537 = vunpack.c.l.b16 %v9434
    %v9538 = vunpack.c.h.b16 %v9434
    %v9539 = vunpack.c.l.b16 %v9435
    %v9540 = vunpack.c.h.b16 %v9435
    %v9541 = vunpack.c.l.b16 %v9436
    %v9542 = vunpack.c.h.b16 %v9436
    %v9543 = vunpack.c.l.b16 %v9437
    %v9544 = vunpack.c.h.b16 %v9437
    %v9545 = vunpack.c.l.b16 %v9438
    %v9546 = vunpack.c.h.b16 %v9438
    %v9547 = vpack.c.b16 %v9485, %v9483
    %v9548 = vpack.c.b16 %v9486, %v9484
    %v9549 = vpack.c.b16 %v9489, %v9487
    %v9550 = vpack.c.b16 %v9490, %v9488
    %v9551 = vpack.c.b16 %v9493, %v9491
    %v9552 = vpack.c.b16 %v9494, %v9492
    %v9553 = vpack.c.b16 %v9497, %v9495
    %v9554 = vpack.c.b16 %v9498, %v9496
    %v9555 = vpack.c.b16 %v9501, %v9499
    %v9556 = vpack.c.b16 %v9502, %v9500
    %v9557 = vpack.c.b16 %v9505, %v9503
    %v9558 = vpack.c.b16 %v9506, %v9504
    %v9559 = vpack.c.b16 %v9509, %v9507
    %v9560 = vpack.c.b16 %v9510, %v9508
    %v9561 = vpack.c.b16 %v9513, %v9511
    %v9562 = vpack.c.b16 %v9514, %v9512
    %v9563 = vpack.c.b16 %v9517, %v9515
    %v9564 = vpack.c.b16 %v9518, %v9516
    %v9565 = vpack.c.b16 %v9521, %v9519
    %v9566 = vpack.c.b16 %v9522, %v9520
    %v9567 = vpack.c.b16 %v9525, %v9523
    %v9568 = vpack.c.b16 %v9526, %v9524
    %v9569 = vpack.c.b16 %v9529, %v9527
    %v9570 = vpack.c.b16 %v9530, %v9528
    %v9571 = vpack.c.b16 %v9533, %v9531
    %v9572 = vpack.c.b16 %v9534, %v9532
    %v9573 = vpack.c.b16 %v9537, %v9535
    %v9574 = vpack.c.b16 %v9538, %v9536
    %v9575 = vpack.c.b16 %v9541, %v9539
    %v9576 = vpack.c.b16 %v9542, %v9540
    %v9577 = vpack.c.b16 %v9545, %v9543
    %v9578 = vpack.c.b16 %v9546, %v9544
    %9611 = vmatprep.subr.bf16.mxu0 %v9562
    %9612 = vmatpush1.bf16.msra.mxu0 %v9561
    %9613 = vmatprep.subr.bf16.mxu0 %v9560
    %9614 = vmatpush1.bf16.msra.mxu0 %v9559
    %9615 = vmatprep.subr.bf16.mxu0 %v9558
    %9616 = vmatpush1.bf16.msra.mxu0 %v9557
    %9617 = vmatprep.subr.bf16.mxu0 %v9556
    %9618 = vmatpush1.bf16.msra.mxu0 %v9555
    %9619 = vmatprep.subr.bf16.mxu0 %v9554
    %9620 = vmatpush1.bf16.msra.mxu0 %v9553
    %9621 = vmatprep.subr.bf16.mxu0 %v9552
    %9622 = vmatpush1.bf16.msra.mxu0 %v9551
    %9623 = vmatprep.subr.bf16.mxu0 %v9550
    %9624 = vmatpush1.bf16.msra.mxu0 %v9549
    %9625 = vmatprep.subr.bf16.mxu0 %v9548
    %9626 = vmatpush1.bf16.msra.mxu0 %v9547
    %9627 = vmatprep.subr.bf16.mxu0 %v9578
    %9628 = vmatpush2.bf16.msra.mxu0 %v9577
    %9629 = vmatprep.subr.bf16.mxu0 %v9576
    %9630 = vmatpush2.bf16.msra.mxu0 %v9575
    %9631 = vmatprep.subr.bf16.mxu0 %v9574
    %9632 = vmatpush2.bf16.msra.mxu0 %v9573
    %9633 = vmatprep.subr.bf16.mxu0 %v9572
    %9634 = vmatpush2.bf16.msra.mxu0 %v9571
    %9635 = vmatprep.subr.bf16.mxu0 %v9570
    %9636 = vmatpush2.bf16.msra.mxu0 %v9569
    %9637 = vmatprep.subr.bf16.mxu0 %v9568
    %9638 = vmatpush2.bf16.msra.mxu0 %v9567
    %9639 = vmatprep.subr.bf16.mxu0 %v9566
    %9640 = vmatpush2.bf16.msra.mxu0 %v9565
    %9641 = vmatprep.subr.bf16.mxu0 %v9564
    %9642 = vmatpush2.bf16.msra.mxu0 %v9563
    %9643 = vmatprep.mubr.bf16.mxu0 %v9406
    %9644 = vmatmul.mubr.bf16.gmra.mxu0 %v9405
    %v9645 = vpop.f32.mrf.mxu0
    %v9646 = vadd.f32 %v9444, %v9645
    %v9647 = vpop.f32.mrf.mxu0
    %v9648 = vadd.f32 %v9448, %v9647
    %v9649 = vpop.f32.mrf.mxu0
    %v9650 = vpop.f32.mrf.mxu0
    %9651 = vdwg.mxu0
    %v9652 = vsub.f32 0.0, %v9646
    %v9653 = vsub.f32 0.0, %v9648
    %v9654 = vmul.f32 %v9652, 1.442695
    %v9655 = vpow.pop %v9654
    %v9656 = vmul.f32 %v9653, 1.442695
    %v9657 = vpow.pop %v9656
    %v9658 = vadd.f32 %v9655, 1.0
    %v9659 = vadd.f32 %v9657, 1.0
    %v9660 = vrcp.pop %v9658
    %v9661 = vmul.f32 1.0, %v9660
    %v9662 = vrcp.pop %v9659
    %v9663 = vmul.f32 1.0, %v9662
    %v9666 = vcombine.low %v9661, %v9663
    %v9668 = vunpack.c.l.s4 1983009808
    %v9669 = vunpack.c.0.s8 %v9668
    %v9670 = vlaneseq
    %v9671 = vshrl.u32 %v9670, 7
    %v9672 = vsub.s32 %v9669, %v9671
    %v9673 = vrot.slane %v9666, %v9672
    %v9675 = vsub.f32 %v717, %v9673
    %v9676 = vmul.f32 %v9675, %v9675
    %v9677 = vadd.f32 %v9676, 1.837877
    %v9680 = vunpack.c.l.s4 1983009808
    %v9681 = vunpack.c.0.s8 %v9680
    %v9682 = vlaneseq
    %v9683 = vshrl.u32 %v9682, 7
    %v9684 = vsub.s32 %v9681, %v9683
    %v9685 = vrot.slane %v9677, %v9684
    %v9686 = vcombine.high %v9685, %v9685
    %v9689 = vsel %vm1236, %v9685, 0.0
    %v9690 = vsel %vm1236, %v9686, 0.0
    %v9691 = vadd.f32 %v9689, %v9690
    %9692 = vadd.xlane.f32.xlu0 %v9691
    %v9693 = vpop.xlane.xlu0 %9692
    %v9694 = vmul.f32 %v9693, 0.5
    %v9695 = vmax.f32 %v4520, 1e-06
    %v9696 = vsub.f32 %v4516, %v4518
    %v9697 = vmul.f32 %v9696, %v9696
    %v9698 = vrcp.pop %v9695
    %v9699 = vmul.f32 %v9697, %v9698
    %v9700 = vlog2.pop %v9695
    %v9701 = vmul.f32 %v9700, 0.6931472
    %v9702 = vadd.f32 %v9699, %v9701
    %v9703 = vadd.f32 %v9702, 1.837877
    %vm9704 = vcmask 123904
    %v9705 = vsel %vm9704, %v9703, 0.0
    %9706 = vadd.xlane.f32.xlu0 %v9705
    %v9707 = vpop.xlane.xlu0 %9706
    %v9708 = vmul.f32 %v9707, 0.5
    %v9709 = vadd.f32 %v9001, %v9708
    %v9710 = vsub.f32 0.0, %v9001
    %v9711 = vmax.f32 %v9710, 0.0
    %v9712 = vand.u32 2147483647, %v9710
    %v9713 = vsub.f32 0.0, %v9712
    %v9714 = vmul.f32 %v9713, 1.442695
    %v9715 = vpow.pop %v9714
    %v9716 = vadd.f32 %v9715, 1.0
    %v9717 = vlog2.pop %v9716
    %v9718 = vmul.f32 %v9717, 0.6931472
    %v9719 = vadd.f32 %v9711, %v9718
    %vm9720 = vcmask 1024
    %v9721 = vsel %vm9720, %v9719, 0.0
    %v9722 = vrot.slane %v9721, 4
    %v9723 = vadd.f32 %v9721, %v9722
    %v9724 = vrot.slane %v9723, 2
    %v9725 = vadd.f32 %v9723, %v9724
    %v9726 = vrot.slane %v9725, 1
    %v9727 = vadd.f32 %v9725, %v9726
    %v9728 = vmul.f32 %v9727, %v3588
    %v9729 = vmax.f32 %v9074, 0.0
    %v9730 = vand.u32 2147483647, %v9074
    %v9731 = vsub.f32 0.0, %v9730
    %v9732 = vmul.f32 %v9731, 1.442695
    %v9733 = vpow.pop %v9732
    %v9734 = vadd.f32 %v9733, 1.0
    %v9735 = vlog2.pop %v9734
    %v9736 = vmul.f32 %v9735, 0.6931472
    %v9737 = vadd.f32 %v9729, %v9736
    %v9738 = vsel %vm9720, %v9737, 0.0
    %v9739 = vrot.slane %v9738, 4
    %v9740 = vadd.f32 %v9738, %v9739
    %v9741 = vrot.slane %v9740, 2
    %v9742 = vadd.f32 %v9740, %v9741
    %v9743 = vrot.slane %v9742, 1
    %v9744 = vadd.f32 %v9742, %v9743
    %v9745 = vmul.f32 %v9744, %v3588
    %v9746 = vadd.f32 %v9728, %v9745
    %9747 = vst [vmem:[%s137] sm:$0xf] %v9673
    %9748 = vst.msk [vmem:[%s139] sm:$0x3] %vm9720, %v9694
    %9749 = vst.msk [vmem:[%s141] sm:$0x3] %vm9720, %v9709
    %vm9750 = vcmask 0
    %9751 = vst.msk [vmem:[#allocation57] sm:$0x1] %vm9750, %v9746
    // Predicated region
    $region410: #{mnist_avae_forward.1} parent=1 // pred_check
      _
    $region411: #{mnist_avae_forward.1} parent=1 // pred_check_branch
      %9753 = sbr.rel (0) target = $region413
    $region412: #{mnist_avae_forward.1} parent=1 // pred_region
      _
    $region413: #{mnist_avae_forward.1} parent=1 // pred_fallthru
      _
    // Predicated region
    $region414: #{mnist_avae_forward.1} parent=1 // pred_check
      _
    $region415: #{mnist_avae_forward.1} parent=1 // pred_check_branch
      %9755 = sbr.rel (0) target = $region417
    $region416: #{mnist_avae_forward.1} parent=1 // pred_region
      _
    $region417: #{mnist_avae_forward.1} parent=1 // pred_fallthru
      _
    // Predicated region
    $region418: #{mnist_avae_forward.1} parent=1 // pred_check
      _
    $region419: #{mnist_avae_forward.1} parent=1 // pred_check_branch
      %9757 = sbr.rel (0) target = $region421
    $region420: #{mnist_avae_forward.1} parent=1 // pred_region
      _
    $region421: #{mnist_avae_forward.1} parent=1 // pred_fallthru
      _
    // Predicated region
    $region422: #{mnist_avae_forward.1} parent=1 // pred_check
      _
    $region423: #{mnist_avae_forward.1} parent=1 // pred_check_branch
      %9759 = sbr.rel (0) target = $region425
    $region424: #{mnist_avae_forward.1} parent=1 // pred_region
      %s9761 = ssub.s32 16, 16
      %9762 = vsyncadd [#allocation6], %s9761
      %s9764 = sshll.u32 [#allocation57], 4
      %s9765 = int_to_ptr.vmem [resolvable:$true] %s9764
      %9767 = dma.vmem_to_hbm [thread:$0]  %s9765, 16, %s143, [#allocation6]
    $region425: #{mnist_avae_forward.1} parent=1 // pred_fallthru
      _
    // Predicated region
    $region426: #{mnist_avae_forward.1} parent=1 // pred_check
      _
    $region427: #{mnist_avae_forward.1} parent=1 // pred_check_branch
      %9769 = sbr.rel (0) target = $region429
    $region428: #{mnist_avae_forward.1} parent=1 // pred_region
      _
    $region429: #{mnist_avae_forward.1} parent=1 // pred_fallthru
      _
    // Predicated region
    $region430: #{mnist_avae_forward.1} parent=1 // pred_check
      _
    $region431: #{mnist_avae_forward.1} parent=1 // pred_check_branch
      %9771 = sbr.rel (0) target = $region433
    $region432: #{mnist_avae_forward.1} parent=1 // pred_region
      _
    $region433: #{mnist_avae_forward.1} parent=1 // pred_fallthru
      _
    // Predicated region
    $region434: #{mnist_avae_forward.1} parent=1 // pred_check
      _
    $region435: #{mnist_avae_forward.1} parent=1 // pred_check_branch
      %9773 = sbr.rel (0) target = $region437
    $region436: #{mnist_avae_forward.1} parent=1 // pred_region
      _
    $region437: #{mnist_avae_forward.1} parent=1 // pred_fallthru
      _
    // Predicated region
    $region438: #{mnist_avae_forward.1} parent=1 // pred_check
      _
    $region439: #{mnist_avae_forward.1} parent=1 // pred_check_branch
      %9775 = sbr.rel (0) target = $region441
    $region440: #{mnist_avae_forward.1} parent=1 // pred_region
      %9776 = dma.done [#allocation6], 16
    $region441: #{mnist_avae_forward.1} parent=1 // pred_fallthru
      _
    %9777 = vsyncpa [#allocation5], 1
    %9778 = vsyncpa [#allocation8], 1
    %9779 = vsyncpa [#allocation11], 1
    %9780 = vsyncpa [#allocation14], 1
    %9781 = vsyncpa [#allocation17], 1
    %9782 = vsyncpa [#allocation20], 1
    %9783 = vsyncpa [#allocation23], 1
    %9784 = vsyncpa [#allocation26], 1
    %9785 = vsyncpa [#allocation29], 1
    %9786 = vsyncpa [#allocation32], 1
    %9787 = vsyncpa [#allocation35], 1
    %9788 = vsyncpa [#allocation38], 1
    %9789 = vsyncpa [#allocation41], 1
    %9790 = vsyncpa [#allocation44], 1
    %9791 = vsyncpa [#allocation47], 1
    %9792 = vsyncpa [#allocation50], 1
    %9793 = vsyncpa [#allocation53], 1
    %9794 = vsyncpa [#allocation56], 1
    %9795 = vsyncpa [#allocation6], 1

</llo_original>
